<compile_context>
chip_gen: v7x
topology: tpu7x:2x2x1
jax: 0.10.0
libtpu: 0.0.40
codegen_flags: <defaults>
</compile_context>

<pallas_src>
import jax
import jax.numpy as jnp
from jax.experimental import pallas as pl
from jax.experimental.pallas import tpu as pltpu

TEMPERATURE = 0.05
EPS_NORMALIZE = 1e-12  # matches F.normalize default eps
LANE = 128


def _round_up(n, m):
    return ((n + m - 1) // m) * m


def dpn_kernel(x_ref, m1_ref, m2_ref,
               wb_ref, bb_ref, wct_ref,
               w1_ref, b1_ref, w2_ref, b2_ref, w3_ref, b3_ref,
               feat_ref, cls_ref, dom_ref):
    # ---- bottleneck: Linear(2048, 256); bf16 MXU inputs, f32 accumulation ----
    x = x_ref[...].astype(jnp.bfloat16)                                # [TB, 2048]
    feat = jnp.dot(x, wb_ref[...],
                   preferred_element_type=jnp.float32) + bb_ref[...]   # [TB, 256] f32
    feat_ref[...] = feat

    # ---- F.normalize(x_feat, dim=1): rsqrt (EUP) instead of sqrt + divide ----
    sumsq = jnp.sum(feat * feat, axis=1, keepdims=True)
    inv = jax.lax.rsqrt(jnp.maximum(sumsq, EPS_NORMALIZE * EPS_NORMALIZE))
    feat_n = (feat * inv).astype(jnp.bfloat16)

    # ---- weight-normalised classifier (pre-normalised, pre-transposed, lane-padded) ----
    logits = jnp.dot(feat_n, wct_ref[...],
                     preferred_element_type=jnp.float32)               # [TB, C_pad]
    cls_ref[...] = logits * (1.0 / TEMPERATURE)

    # ---- domain classifier (gradient-reverse is identity in forward) ----
    fb = feat.astype(jnp.bfloat16)
    h1 = jnp.dot(fb, w1_ref[...],
                 preferred_element_type=jnp.float32) + b1_ref[...]     # [TB, 1024]
    h1 = jnp.maximum(h1, 0.0) * m1_ref[...].astype(jnp.float32)        # inverted dropout (0 / 2)

    h2 = jnp.dot(h1.astype(jnp.bfloat16), w2_ref[...],
                 preferred_element_type=jnp.float32) + b2_ref[...]     # [TB, 1024]
    h2 = jnp.maximum(h2, 0.0) * m2_ref[...].astype(jnp.float32)

    dom_ref[...] = jnp.dot(h2.astype(jnp.bfloat16), w3_ref[...],
                           preferred_element_type=jnp.float32) + b3_ref[...]  # [TB, 128]


def init_params(key, num_classes):
    """Deterministic parameter init in f32, matching the PyTorch module's shapes."""
    ks = jax.random.split(key, 10)

    def lin_w(k, fan_in, fan_out):
        bound = 1.0 / jnp.sqrt(fan_in)
        # stored as [in_features, out_features] so the kernel does x @ W
        return jax.random.uniform(k, (fan_in, fan_out), jnp.float32, -bound, bound)

    def lin_b(k, fan_in, fan_out):
        bound = 1.0 / jnp.sqrt(fan_in)
        return jax.random.uniform(k, (1, fan_out), jnp.float32, -bound, bound)

    return {
        "wb": lin_w(ks[0], 2048, 256),
        "bb": lin_b(ks[1], 2048, 256),
        # class classifier in PyTorch layout [num_classes, 256]; normalised in prepare_params
        "wc": jax.random.uniform(ks[2], (num_classes, 256), jnp.float32,
                                 -1.0 / 256 ** 0.5, 1.0 / 256 ** 0.5),
        "w1": lin_w(ks[3], 256, 1024),
        "b1": lin_b(ks[4], 256, 1024),
        "w2": lin_w(ks[5], 1024, 1024),
        "b2": lin_b(ks[6], 1024, 1024),
        "w3": lin_w(ks[7], 1024, 2),
        "b3": lin_b(ks[8], 1024, 2),
    }


def prepare_params(params, num_classes):
    """Wrapper-side layout plumbing: row-normalise + transpose + lane-pad the classifier,
    lane-pad the 2-wide domain head, cast streamed weights to bf16."""
    c_pad = _round_up(num_classes, LANE)

    wc = params["wc"]                                            # [C, 256]
    norm = jnp.sqrt(jnp.sum(wc * wc, axis=1, keepdims=True))
    wc_n = wc / jnp.maximum(norm, EPS_NORMALIZE)
    wct = jnp.zeros((256, c_pad), jnp.bfloat16).at[:, :num_classes].set(
        wc_n.T.astype(jnp.bfloat16))                             # [256, C_pad]

    w3 = jnp.zeros((1024, LANE), jnp.bfloat16).at[:, :2].set(
        params["w3"].astype(jnp.bfloat16))                       # [1024, 128]
    b3 = jnp.zeros((1, LANE), jnp.float32).at[:, :2].set(params["b3"])

    return {
        "wb": params["wb"].astype(jnp.bfloat16),
        "bb": params["bb"].astype(jnp.float32),
        "wct": wct,
        "w1": params["w1"].astype(jnp.bfloat16),
        "b1": params["b1"].astype(jnp.float32),
        "w2": params["w2"].astype(jnp.bfloat16),
        "b2": params["b2"].astype(jnp.float32),
        "w3": w3,
        "b3": b3,
        "num_classes": num_classes,
    }


def dpn_forward(x, prep, key=None, training=True):
    """x: [B, 2048] f32 backbone features. Returns (x_feat, class_output, domain_output)."""
    B = x.shape[0]
    C = prep["num_classes"]
    c_pad = prep["wct"].shape[1]

    # Batch tile: 128 rows for real batches, shrink (multiple of 8) for tiny ones.
    TB = min(128, _round_up(B, 8))
    B_pad = _round_up(B, TB)
    n_tiles = B_pad // TB

    # Dropout masks as inverted-dropout scale factors (0.0 / 2.0), p = 0.5.
    if training:
        if key is None:
            key = jax.random.PRNGKey(0)
        k1, k2 = jax.random.split(key)
        m1 = jnp.where(jax.random.bernoulli(k1, 0.5, (B, 1024)), 2.0, 0.0).astype(jnp.bfloat16)
        m2 = jnp.where(jax.random.bernoulli(k2, 0.5, (B, 1024)), 2.0, 0.0).astype(jnp.bfloat16)
    else:
        m1 = jnp.ones((B, 1024), jnp.bfloat16)
        m2 = jnp.ones((B, 1024), jnp.bfloat16)

    if B_pad != B:
        pad = ((0, B_pad - B), (0, 0))
        x_p = jnp.pad(x, pad)
        m1 = jnp.pad(m1, pad)
        m2 = jnp.pad(m2, pad)
    else:
        x_p = x

    batch_tile = lambda i: (i, 0)   # tiled along batch
    const = lambda i: (0, 0)        # VMEM-resident weights

    grid_spec = pltpu.PrefetchScalarGridSpec(
        num_scalar_prefetch=0,
        grid=(n_tiles,),
        in_specs=[
            pl.BlockSpec((TB, 2048), batch_tile),    # x
            pl.BlockSpec((TB, 1024), batch_tile),    # dropout mask 1
            pl.BlockSpec((TB, 1024), batch_tile),    # dropout mask 2
            pl.BlockSpec((2048, 256), const),        # wb
            pl.BlockSpec((1, 256), const),           # bb
            pl.BlockSpec((256, c_pad), const),       # wct (normalised, transposed)
            pl.BlockSpec((256, 1024), const),        # w1
            pl.BlockSpec((1, 1024), const),          # b1
            pl.BlockSpec((1024, 1024), const),       # w2
            pl.BlockSpec((1, 1024), const),          # b2
            pl.BlockSpec((1024, LANE), const),       # w3 (lane-padded)
            pl.BlockSpec((1, LANE), const),          # b3 (lane-padded)
        ],
        out_specs=(
            pl.BlockSpec((TB, 256), batch_tile),     # x_feat
            pl.BlockSpec((TB, c_pad), batch_tile),   # class logits (lane-padded)
            pl.BlockSpec((TB, LANE), batch_tile),    # domain logits (lane-padded)
        ),
    )

    out_shapes = (
        jax.ShapeDtypeStruct((B_pad, 256), jnp.float32),
        jax.ShapeDtypeStruct((B_pad, c_pad), jnp.float32),
        jax.ShapeDtypeStruct((B_pad, LANE), jnp.float32),
    )

    feat, cls, dom = pl.pallas_call(
        dpn_kernel,
        out_shape=out_shapes,
        grid_spec=grid_spec,
        compiler_params=pltpu.CompilerParams(
            dimension_semantics=("parallel",),   # megacore split on v7x
            vmem_limit_bytes=32 << 20,           # ~12 MiB actually needed; safe on v5e/v6e/v7x
        ),
    )(x_p, m1, m2,
      prep["wb"], prep["bb"], prep["wct"],
      prep["w1"], prep["b1"], prep["w2"], prep["b2"],
      prep["w3"], prep["b3"])

    x_feat = feat[:B]
    class_out = cls[:B, :C]
    domain_out = dom[:B, :2] if training else 0   # PyTorch eval path returns 0
    return x_feat, class_out, domain_out


if __name__ == "__main__":
    key = jax.random.PRNGKey(0)
    k_params, k_x, k_drop = jax.random.split(key, 3)

    B = 8
    NUM_CLASSES = 10

    params = init_params(k_params, NUM_CLASSES)
    prep = prepare_params(params, NUM_CLASSES)

    # backbone features stand-in (ResNet50 output dim = 2048)
    x = jax.random.normal(k_x, (B, 2048), jnp.float32)

    x_feat, class_out, domain_out = dpn_forward(x, prep, key=k_drop, training=True)
    jax.block_until_ready((x_feat, class_out, domain_out))

    assert x_feat.shape == (B, 256)
    assert class_out.shape == (B, NUM_CLASSES)
    assert domain_out.shape == (B, 2)
    assert bool(jnp.all(jnp.isfinite(x_feat)))
    assert bool(jnp.all(jnp.isfinite(class_out)))
    assert bool(jnp.all(jnp.isfinite(domain_out)))

    print("KERNEL_OK")
</pallas_src>

<mosaic_0001>
module attributes {stable_mosaic.version = 11 : i64} {
  func.func @dpn_kernel(%arg0: i32, %arg1: memref<8x2048xf32, #tpu.memory_space<vmem>>, %arg2: memref<8x1024xbf16, #tpu.memory_space<vmem>>, %arg3: memref<8x1024xbf16, #tpu.memory_space<vmem>>, %arg4: memref<2048x256xbf16, #tpu.memory_space<vmem>>, %arg5: memref<1x256xf32, #tpu.memory_space<vmem>>, %arg6: memref<256x128xbf16, #tpu.memory_space<vmem>>, %arg7: memref<256x1024xbf16, #tpu.memory_space<vmem>>, %arg8: memref<1x1024xf32, #tpu.memory_space<vmem>>, %arg9: memref<1024x1024xbf16, #tpu.memory_space<vmem>>, %arg10: memref<1x1024xf32, #tpu.memory_space<vmem>>, %arg11: memref<1024x128xbf16, #tpu.memory_space<vmem>>, %arg12: memref<1x128xf32, #tpu.memory_space<vmem>>, %arg13: memref<8x256xf32, #tpu.memory_space<vmem>>, %arg14: memref<8x128xf32, #tpu.memory_space<vmem>>, %arg15: memref<8x128xf32, #tpu.memory_space<vmem>>) attributes {dimension_semantics = [#tpu.dimension_semantics<parallel>], iteration_bounds = array<i64: 1>, scalar_prefetch = 0 : i64, scratch_operands = 0 : i64, tpu.core_type = #tpu.core_type<tc>, window_params = [{transform_indices = @transform_0, window_bounds = array<i64: 8, 2048>}, {transform_indices = @transform_1, window_bounds = array<i64: 8, 1024>}, {transform_indices = @transform_2, window_bounds = array<i64: 8, 1024>}, {pipeline_mode = #tpu.pipeline_mode<synchronous>, transform_indices = @transform_3, window_bounds = array<i64: 2048, 256>}, {pipeline_mode = #tpu.pipeline_mode<synchronous>, transform_indices = @transform_4, window_bounds = array<i64: 1, 256>}, {pipeline_mode = #tpu.pipeline_mode<synchronous>, transform_indices = @transform_5, window_bounds = array<i64: 256, 128>}, {pipeline_mode = #tpu.pipeline_mode<synchronous>, transform_indices = @transform_6, window_bounds = array<i64: 256, 1024>}, {pipeline_mode = #tpu.pipeline_mode<synchronous>, transform_indices = @transform_7, window_bounds = array<i64: 1, 1024>}, {pipeline_mode = #tpu.pipeline_mode<synchronous>, transform_indices = @transform_8, window_bounds = array<i64: 1024, 1024>}, {pipeline_mode = #tpu.pipeline_mode<synchronous>, transform_indices = @transform_9, window_bounds = array<i64: 1, 1024>}, {pipeline_mode = #tpu.pipeline_mode<synchronous>, transform_indices = @transform_10, window_bounds = array<i64: 1024, 128>}, {pipeline_mode = #tpu.pipeline_mode<synchronous>, transform_indices = @transform_11, window_bounds = array<i64: 1, 128>}, {transform_indices = @transform_12, window_bounds = array<i64: 8, 256>}, {transform_indices = @transform_13, window_bounds = array<i64: 8, 128>}, {transform_indices = @transform_14, window_bounds = array<i64: 8, 128>}]} {
    %c0 = arith.constant 0 : index
    %c0_0 = arith.constant 0 : index
    %0 = vector.load %arg1[%c0, %c0_0] : memref<8x2048xf32, #tpu.memory_space<vmem>>, vector<8x2048xf32>
    %1 = arith.truncf %0 : vector<8x2048xf32> to vector<8x2048xbf16>
    %c0_1 = arith.constant 0 : index
    %c0_2 = arith.constant 0 : index
    %2 = vector.load %arg4[%c0_1, %c0_2] : memref<2048x256xbf16, #tpu.memory_space<vmem>>, vector<2048x256xbf16>
    %cst = arith.constant dense<0.000000e+00> : vector<8x256xf32>
    %3 = tpu.matmul %1, %2, %cst {dimension_numbers = #tpu.dot_dimension_numbers<[1], [0], [0], [1], [0, 0, 1, 1], [], []>} : vector<8x2048xbf16>, vector<2048x256xbf16>, vector<8x256xf32> -> vector<8x256xf32>
    %c0_3 = arith.constant 0 : index
    %c0_4 = arith.constant 0 : index
    %4 = vector.load %arg5[%c0_3, %c0_4] : memref<1x256xf32, #tpu.memory_space<vmem>>, vector<1x256xf32>
    %5 = vector.broadcast %4 : vector<1x256xf32> to vector<8x256xf32>
    %6 = arith.addf %3, %5 : vector<8x256xf32>
    %c0_5 = arith.constant 0 : index
    %c0_6 = arith.constant 0 : index
    %7 = vector.load %arg13[%c0_5, %c0_6] : memref<8x256xf32, #tpu.memory_space<vmem>>, vector<8x256xf32>
    tpu.vector_store %arg13[%c0_5, %c0_6], %6 {strides = array<i32>} : memref<8x256xf32, #tpu.memory_space<vmem>>, vector<8x256xf32>,
    %8 = arith.mulf %6, %6 : vector<8x256xf32>
    %cst_7 = arith.constant dense<0.000000e+00> : vector<8xf32>
    %9 = vector.multi_reduction <add>, %8, %cst_7 [1] : vector<8x256xf32> to vector<8xf32>
    %10 = vector.shape_cast %9 : vector<8xf32> to vector<8x1xf32>
    %cst_8 = arith.constant 1.000000e-24 : f32
    %11 = vector.broadcast %cst_8 : f32 to vector<8x1xf32>
    %12 = arith.maximumf %10, %11 : vector<8x1xf32>
    %13 = math.rsqrt %12 : vector<8x1xf32>
    %14 = vector.broadcast %13 : vector<8x1xf32> to vector<8x256xf32>
    %15 = arith.mulf %6, %14 : vector<8x256xf32>
    %16 = arith.truncf %15 : vector<8x256xf32> to vector<8x256xbf16>
    %c0_9 = arith.constant 0 : index
    %c0_10 = arith.constant 0 : index
    %17 = vector.load %arg6[%c0_9, %c0_10] : memref<256x128xbf16, #tpu.memory_space<vmem>>, vector<256x128xbf16>
    %cst_11 = arith.constant dense<0.000000e+00> : vector<8x128xf32>
    %18 = tpu.matmul %16, %17, %cst_11 {dimension_numbers = #tpu.dot_dimension_numbers<[1], [0], [0], [1], [0, 0, 1, 1], [], []>} : vector<8x256xbf16>, vector<256x128xbf16>, vector<8x128xf32> -> vector<8x128xf32>
    %cst_12 = arith.constant 2.000000e+01 : f32
    %19 = vector.broadcast %cst_12 : f32 to vector<8x128xf32>
    %20 = arith.mulf %18, %19 : vector<8x128xf32>
    %c0_13 = arith.constant 0 : index
    %c0_14 = arith.constant 0 : index
    %21 = vector.load %arg14[%c0_13, %c0_14] : memref<8x128xf32, #tpu.memory_space<vmem>>, vector<8x128xf32>
    tpu.vector_store %arg14[%c0_13, %c0_14], %20 {strides = array<i32>} : memref<8x128xf32, #tpu.memory_space<vmem>>, vector<8x128xf32>,
    %22 = arith.truncf %6 : vector<8x256xf32> to vector<8x256xbf16>
    %c0_15 = arith.constant 0 : index
    %c0_16 = arith.constant 0 : index
    %23 = vector.load %arg7[%c0_15, %c0_16] : memref<256x1024xbf16, #tpu.memory_space<vmem>>, vector<256x1024xbf16>
    %cst_17 = arith.constant dense<0.000000e+00> : vector<8x1024xf32>
    %24 = tpu.matmul %22, %23, %cst_17 {dimension_numbers = #tpu.dot_dimension_numbers<[1], [0], [0], [1], [0, 0, 1, 1], [], []>} : vector<8x256xbf16>, vector<256x1024xbf16>, vector<8x1024xf32> -> vector<8x1024xf32>
    %c0_18 = arith.constant 0 : index
    %c0_19 = arith.constant 0 : index
    %25 = vector.load %arg8[%c0_18, %c0_19] : memref<1x1024xf32, #tpu.memory_space<vmem>>, vector<1x1024xf32>
    %26 = vector.broadcast %25 : vector<1x1024xf32> to vector<8x1024xf32>
    %27 = arith.addf %24, %26 : vector<8x1024xf32>
    %cst_20 = arith.constant 0.000000e+00 : f32
    %28 = vector.broadcast %cst_20 : f32 to vector<8x1024xf32>
    %29 = arith.maximumf %27, %28 : vector<8x1024xf32>
    %c0_21 = arith.constant 0 : index
    %c0_22 = arith.constant 0 : index
    %30 = vector.load %arg2[%c0_21, %c0_22] : memref<8x1024xbf16, #tpu.memory_space<vmem>>, vector<8x1024xbf16>
    %31 = arith.extf %30 : vector<8x1024xbf16> to vector<8x1024xf32>
    %32 = arith.mulf %29, %31 : vector<8x1024xf32>
    %33 = arith.truncf %32 : vector<8x1024xf32> to vector<8x1024xbf16>
    %c0_23 = arith.constant 0 : index
    %c0_24 = arith.constant 0 : index
    %34 = vector.load %arg9[%c0_23, %c0_24] : memref<1024x1024xbf16, #tpu.memory_space<vmem>>, vector<1024x1024xbf16>
    %cst_25 = arith.constant dense<0.000000e+00> : vector<8x1024xf32>
    %35 = tpu.matmul %33, %34, %cst_25 {dimension_numbers = #tpu.dot_dimension_numbers<[1], [0], [0], [1], [0, 0, 1, 1], [], []>} : vector<8x1024xbf16>, vector<1024x1024xbf16>, vector<8x1024xf32> -> vector<8x1024xf32>
    %c0_26 = arith.constant 0 : index
    %c0_27 = arith.constant 0 : index
    %36 = vector.load %arg10[%c0_26, %c0_27] : memref<1x1024xf32, #tpu.memory_space<vmem>>, vector<1x1024xf32>
    %37 = vector.broadcast %36 : vector<1x1024xf32> to vector<8x1024xf32>
    %38 = arith.addf %35, %37 : vector<8x1024xf32>
    %cst_28 = arith.constant 0.000000e+00 : f32
    %39 = vector.broadcast %cst_28 : f32 to vector<8x1024xf32>
    %40 = arith.maximumf %38, %39 : vector<8x1024xf32>
    %c0_29 = arith.constant 0 : index
    %c0_30 = arith.constant 0 : index
    %41 = vector.load %arg3[%c0_29, %c0_30] : memref<8x1024xbf16, #tpu.memory_space<vmem>>, vector<8x1024xbf16>
    %42 = arith.extf %41 : vector<8x1024xbf16> to vector<8x1024xf32>
    %43 = arith.mulf %40, %42 : vector<8x1024xf32>
    %44 = arith.truncf %43 : vector<8x1024xf32> to vector<8x1024xbf16>
    %c0_31 = arith.constant 0 : index
    %c0_32 = arith.constant 0 : index
    %45 = vector.load %arg11[%c0_31, %c0_32] : memref<1024x128xbf16, #tpu.memory_space<vmem>>, vector<1024x128xbf16>
    %cst_33 = arith.constant dense<0.000000e+00> : vector<8x128xf32>
    %46 = tpu.matmul %44, %45, %cst_33 {dimension_numbers = #tpu.dot_dimension_numbers<[1], [0], [0], [1], [0, 0, 1, 1], [], []>} : vector<8x1024xbf16>, vector<1024x128xbf16>, vector<8x128xf32> -> vector<8x128xf32>
    %c0_34 = arith.constant 0 : index
    %c0_35 = arith.constant 0 : index
    %47 = vector.load %arg12[%c0_34, %c0_35] : memref<1x128xf32, #tpu.memory_space<vmem>>, vector<1x128xf32>
    %48 = vector.broadcast %47 : vector<1x128xf32> to vector<8x128xf32>
    %49 = arith.addf %46, %48 : vector<8x128xf32>
    %c0_36 = arith.constant 0 : index
    %c0_37 = arith.constant 0 : index
    %50 = vector.load %arg15[%c0_36, %c0_37] : memref<8x128xf32, #tpu.memory_space<vmem>>, vector<8x128xf32>
    tpu.vector_store %arg15[%c0_36, %c0_37], %49 {strides = array<i32>} : memref<8x128xf32, #tpu.memory_space<vmem>>, vector<8x128xf32>,
    return
  }
  func.func @transform_0(%arg0: i32) -> (i32, i32) {
    %c0_i32 = arith.constant 0 : i32
    %c0_i32_0 = arith.constant 0 : i32
    return %arg0, %c0_i32 : i32, i32
  }
  func.func @transform_1(%arg0: i32) -> (i32, i32) {
    %c0_i32 = arith.constant 0 : i32
    %c0_i32_0 = arith.constant 0 : i32
    return %arg0, %c0_i32 : i32, i32
  }
  func.func @transform_2(%arg0: i32) -> (i32, i32) {
    %c0_i32 = arith.constant 0 : i32
    %c0_i32_0 = arith.constant 0 : i32
    return %arg0, %c0_i32 : i32, i32
  }
  func.func @transform_3(%arg0: i32) -> (i32, i32) {
    %c0_i32 = arith.constant 0 : i32
    %c0_i32_0 = arith.constant 0 : i32
    %c0_i32_1 = arith.constant 0 : i32
    return %c0_i32, %c0_i32_0 : i32, i32
  }
  func.func @transform_4(%arg0: i32) -> (i32, i32) {
    %c0_i32 = arith.constant 0 : i32
    %c0_i32_0 = arith.constant 0 : i32
    %c0_i32_1 = arith.constant 0 : i32
    return %c0_i32, %c0_i32_0 : i32, i32
  }
  func.func @transform_5(%arg0: i32) -> (i32, i32) {
    %c0_i32 = arith.constant 0 : i32
    %c0_i32_0 = arith.constant 0 : i32
    %c0_i32_1 = arith.constant 0 : i32
    return %c0_i32, %c0_i32_0 : i32, i32
  }
  func.func @transform_6(%arg0: i32) -> (i32, i32) {
    %c0_i32 = arith.constant 0 : i32
    %c0_i32_0 = arith.constant 0 : i32
    %c0_i32_1 = arith.constant 0 : i32
    return %c0_i32, %c0_i32_0 : i32, i32
  }
  func.func @transform_7(%arg0: i32) -> (i32, i32) {
    %c0_i32 = arith.constant 0 : i32
    %c0_i32_0 = arith.constant 0 : i32
    %c0_i32_1 = arith.constant 0 : i32
    return %c0_i32, %c0_i32_0 : i32, i32
  }
  func.func @transform_8(%arg0: i32) -> (i32, i32) {
    %c0_i32 = arith.constant 0 : i32
    %c0_i32_0 = arith.constant 0 : i32
    %c0_i32_1 = arith.constant 0 : i32
    return %c0_i32, %c0_i32_0 : i32, i32
  }
  func.func @transform_9(%arg0: i32) -> (i32, i32) {
    %c0_i32 = arith.constant 0 : i32
    %c0_i32_0 = arith.constant 0 : i32
    %c0_i32_1 = arith.constant 0 : i32
    return %c0_i32, %c0_i32_0 : i32, i32
  }
  func.func @transform_10(%arg0: i32) -> (i32, i32) {
    %c0_i32 = arith.constant 0 : i32
    %c0_i32_0 = arith.constant 0 : i32
    %c0_i32_1 = arith.constant 0 : i32
    return %c0_i32, %c0_i32_0 : i32, i32
  }
  func.func @transform_11(%arg0: i32) -> (i32, i32) {
    %c0_i32 = arith.constant 0 : i32
    %c0_i32_0 = arith.constant 0 : i32
    %c0_i32_1 = arith.constant 0 : i32
    return %c0_i32, %c0_i32_0 : i32, i32
  }
  func.func @transform_12(%arg0: i32) -> (i32, i32) {
    %c0_i32 = arith.constant 0 : i32
    %c0_i32_0 = arith.constant 0 : i32
    return %arg0, %c0_i32 : i32, i32
  }
  func.func @transform_13(%arg0: i32) -> (i32, i32) {
    %c0_i32 = arith.constant 0 : i32
    %c0_i32_0 = arith.constant 0 : i32
    return %arg0, %c0_i32 : i32, i32
  }
  func.func @transform_14(%arg0: i32) -> (i32, i32) {
    %c0_i32 = arith.constant 0 : i32
    %c0_i32_0 = arith.constant 0 : i32
    return %arg0, %c0_i32 : i32, i32
  }
}

</mosaic_0001>

<llo_original>
// kernel: tpu_custom_call.1
$region0: #{tpu_custom_call.1}
  #allocation0 [shape = 'u32[]', space=smem, size = 0x4, offset = 0x4, fixed_abs, tag = 'smem constant byte address 0x4 - core index']
  #allocation1 [shape = 'u32[144,128]{1,0:T(1,128)}', space=vmem, size = 0x12000, scoped, tag = 'internal scratch']
  %s0 = inlined_call_operand.hbm [shape: f32[8,2048], index: 0, kind: input, shape index: {}]
  %s1 = inlined_call_operand.hbm [shape: bf16[8,1024], index: 1, kind: input, shape index: {}]
  %s2 = inlined_call_operand.hbm [shape: bf16[8,1024], index: 2, kind: input, shape index: {}]
  %s3 = inlined_call_operand.hbm [shape: bf16[2048,256], index: 3, kind: input, shape index: {}]
  %s4 = inlined_call_operand.hbm [shape: f32[1,256], index: 4, kind: input, shape index: {}]
  %s5 = inlined_call_operand.hbm [shape: bf16[256,128], index: 5, kind: input, shape index: {}]
  %s6 = inlined_call_operand.hbm [shape: bf16[256,1024], index: 6, kind: input, shape index: {}]
  %s7 = inlined_call_operand.hbm [shape: f32[1,1024], index: 7, kind: input, shape index: {}]
  %s8 = inlined_call_operand.hbm [shape: bf16[1024,1024], index: 8, kind: input, shape index: {}]
  %s9 = inlined_call_operand.hbm [shape: f32[1,1024], index: 9, kind: input, shape index: {}]
  %s10 = inlined_call_operand.hbm [shape: bf16[1024,128], index: 10, kind: input, shape index: {}]
  %s11 = inlined_call_operand.hbm [shape: f32[1,128], index: 11, kind: input, shape index: {}]
  %s12 = inlined_call_operand.hbm [shape: f32[8,256], index: 12, kind: output, shape index: {0}]
  %s13 = inlined_call_operand.hbm [shape: f32[8,128], index: 13, kind: output, shape index: {1}]
  %s14 = inlined_call_operand.hbm [shape: f32[8,128], index: 14, kind: output, shape index: {2}]
  %15 = xla_tuple %s12, %s13, %s14
  %s16 = sld [smem:[#allocation0]]
  $region122: #{tpu_custom_call.1} parent=0
    _
  %s18 = ssub.s32 1, %s16
  %s19 = scalar_select 0, %s18, %s16
  $region1: #{tpu_custom_call.1} parent=0
    #allocation2 [shape = 'u8[65536]{0}', space=vmem, size = 0x10000, scoped, tag = 'input window, operand 0, single buffered']
    #allocation3 [shape = 's32[1]{0}', space=sflag, size = 0x4, scoped, tag = 'scoped memory for tpu_custom_call.1']
    #allocation4 [shape = 's32[1]{0}', space=sflag, size = 0x4, scoped, tag = 'scoped memory for tpu_custom_call.1']
    #allocation5 [shape = 'u8[16384]{0}', space=vmem, size = 0x4000, scoped, tag = 'input window, operand 1, single buffered']
    #allocation6 [shape = 's32[1]{0}', space=sflag, size = 0x4, scoped, tag = 'scoped memory for tpu_custom_call.1']
    #allocation7 [shape = 'u8[16384]{0}', space=vmem, size = 0x4000, scoped, tag = 'input window, operand 2, single buffered']
    #allocation8 [shape = 'u8[1048576]{0}', space=vmem, size = 0x100000, scoped, tag = 'input window, operand 3, single buffered']
    #allocation9 [shape = 's32[1]{0}', space=sflag, size = 0x4, scoped, tag = 'scoped memory for tpu_custom_call.1']
    #allocation10 [shape = 'u8[1024]{0}', space=vmem, size = 0x400, scoped, tag = 'input window, operand 4, single buffered']
    #allocation11 [shape = 'u8[65536]{0}', space=vmem, size = 0x10000, scoped, tag = 'input window, operand 5, single buffered']
    #allocation12 [shape = 's32[1]{0}', space=sflag, size = 0x4, scoped, tag = 'scoped memory for tpu_custom_call.1']
    #allocation13 [shape = 'u8[524288]{0}', space=vmem, size = 0x80000, scoped, tag = 'input window, operand 6, single buffered']
    #allocation14 [shape = 'u8[4096]{0}', space=vmem, size = 0x1000, scoped, tag = 'input window, operand 7, single buffered']
    #allocation15 [shape = 's32[1]{0}', space=sflag, size = 0x4, scoped, tag = 'scoped memory for tpu_custom_call.1']
    #allocation16 [shape = 'u8[2097152]{0}', space=vmem, size = 0x200000, scoped, tag = 'input window, operand 8, single buffered']
    #allocation17 [shape = 'u8[4096]{0}', space=vmem, size = 0x1000, scoped, tag = 'input window, operand 9, single buffered']
    #allocation18 [shape = 's32[1]{0}', space=sflag, size = 0x4, scoped, tag = 'scoped memory for tpu_custom_call.1']
    #allocation19 [shape = 'u8[262144]{0}', space=vmem, size = 0x40000, scoped, tag = 'input window, operand 10, single buffered']
    #allocation20 [shape = 'u8[512]{0}', space=vmem, size = 0x400, scoped, tag = 'input window, operand 11, single buffered']
    #allocation21 [shape = 's32[1]{0}', space=sflag, size = 0x4, scoped, tag = 'scoped memory for tpu_custom_call.1']
    #allocation22 [shape = 'u8[8192]{0}', space=vmem, size = 0x2000, scoped, tag = 'output window, operand 0, single buffered']
    #allocation23 [shape = 'u8[4096]{0}', space=vmem, size = 0x1000, scoped, tag = 'output window, operand 1, single buffered']
    #allocation24 [shape = 's32[1]{0}', space=sflag, size = 0x4, scoped, tag = 'scoped memory for tpu_custom_call.1']
    #allocation25 [shape = 'u8[4096]{0}', space=vmem, size = 0x1000, scoped, tag = 'output window, operand 2, single buffered']
    %20 = vsyncpa [#allocation3], 0
    %21 = vsyncpa [#allocation6], 0
    %22 = vsyncpa [#allocation9], 0
    %23 = vsyncpa [#allocation12], 0
    %24 = vsyncpa [#allocation15], 0
    %25 = vsyncpa [#allocation18], 0
    %26 = vsyncpa [#allocation21], 0
    %27 = vsyncpa [#allocation4], 0
    %28 = vsyncpa [#allocation24], 0
    // Predicated region
    $region2: #{tpu_custom_call.1} parent=1 // pred_check
      _
    $region3: #{tpu_custom_call.1} parent=1 // pred_check_branch
      %30 = sbr.rel (0) target = $region5
    $region4: #{tpu_custom_call.1} parent=1 // pred_region
      %s32 = ssub.s32 2048, 2048
      %33 = vsyncadd [#allocation3], %s32
      %s35 = sshll.u32 [#allocation2], 4
      %s36 = int_to_ptr.vmem [resolvable:$true] %s35
      %38 = dma.hbm_to_vmem [thread:$0]  %s0, 2048, %s36, [#allocation3]
    $region5: #{tpu_custom_call.1} parent=1 // pred_fallthru
      _
    // Predicated region
    $region6: #{tpu_custom_call.1} parent=1 // pred_check
      _
    $region7: #{tpu_custom_call.1} parent=1 // pred_check_branch
      %40 = sbr.rel (0) target = $region9
    $region8: #{tpu_custom_call.1} parent=1 // pred_region
      %s42 = ssub.s32 512, 512
      %43 = vsyncadd [#allocation6], %s42
      %s45 = sshll.u32 [#allocation5], 4
      %s46 = int_to_ptr.vmem [resolvable:$true] %s45
      %48 = dma.hbm_to_vmem [thread:$0]  %s1, 512, %s46, [#allocation6]
    $region9: #{tpu_custom_call.1} parent=1 // pred_fallthru
      _
    // Predicated region
    $region10: #{tpu_custom_call.1} parent=1 // pred_check
      _
    $region11: #{tpu_custom_call.1} parent=1 // pred_check_branch
      %50 = sbr.rel (0) target = $region13
    $region12: #{tpu_custom_call.1} parent=1 // pred_region
      %s52 = ssub.s32 512, 512
      %53 = vsyncadd [#allocation6], %s52
      %s55 = sshll.u32 [#allocation7], 4
      %s56 = int_to_ptr.vmem [resolvable:$true] %s55
      %58 = dma.hbm_to_vmem [thread:$0]  %s2, 512, %s56, [#allocation6]
    $region13: #{tpu_custom_call.1} parent=1 // pred_fallthru
      _
    // Predicated region
    $region14: #{tpu_custom_call.1} parent=1 // pred_check
      _
    $region15: #{tpu_custom_call.1} parent=1 // pred_check_branch
      %60 = sbr.rel (0) target = $region17
    $region16: #{tpu_custom_call.1} parent=1 // pred_region
      %s62 = ssub.s32 32768, 32768
      %63 = vsyncadd [#allocation9], %s62
      %s64 = sshll.u32 [#allocation8], 4
      %s65 = int_to_ptr.vmem [resolvable:$true] %s64
      %70 = dma.hbm_to_vmem [thread:$0]  %s3, 32768, %s65, [#allocation9], 128, 128, 8
    $region17: #{tpu_custom_call.1} parent=1 // pred_fallthru
      _
    // Predicated region
    $region18: #{tpu_custom_call.1} parent=1 // pred_check
      _
    $region19: #{tpu_custom_call.1} parent=1 // pred_check_branch
      %72 = sbr.rel (0) target = $region21
    $region20: #{tpu_custom_call.1} parent=1 // pred_region
      %s74 = ssub.s32 32, 32
      %75 = vsyncadd [#allocation9], %s74
      %s77 = sshll.u32 [#allocation10], 4
      %s78 = int_to_ptr.vmem [resolvable:$true] %s77
      %80 = dma.hbm_to_vmem [thread:$0]  %s4, 32, %s78, [#allocation9]
    $region21: #{tpu_custom_call.1} parent=1 // pred_fallthru
      _
    // Predicated region
    $region22: #{tpu_custom_call.1} parent=1 // pred_check
      _
    $region23: #{tpu_custom_call.1} parent=1 // pred_check_branch
      %82 = sbr.rel (0) target = $region25
    $region24: #{tpu_custom_call.1} parent=1 // pred_region
      %s84 = ssub.s32 2048, 2048
      %85 = vsyncadd [#allocation12], %s84
      %s86 = sshll.u32 [#allocation11], 4
      %s87 = int_to_ptr.vmem [resolvable:$true] %s86
      %92 = dma.hbm_to_vmem [thread:$0]  %s5, 2048, %s87, [#allocation12], 64, 64, 4
    $region25: #{tpu_custom_call.1} parent=1 // pred_fallthru
      _
    // Predicated region
    $region26: #{tpu_custom_call.1} parent=1 // pred_check
      _
    $region27: #{tpu_custom_call.1} parent=1 // pred_check_branch
      %94 = sbr.rel (0) target = $region29
    $region28: #{tpu_custom_call.1} parent=1 // pred_region
      %s96 = ssub.s32 16384, 16384
      %97 = vsyncadd [#allocation12], %s96
      %s98 = sshll.u32 [#allocation13], 4
      %s99 = int_to_ptr.vmem [resolvable:$true] %s98
      %104 = dma.hbm_to_vmem [thread:$0]  %s6, 16384, %s99, [#allocation12], 512, 512, 32
    $region29: #{tpu_custom_call.1} parent=1 // pred_fallthru
      _
    // Predicated region
    $region30: #{tpu_custom_call.1} parent=1 // pred_check
      _
    $region31: #{tpu_custom_call.1} parent=1 // pred_check_branch
      %106 = sbr.rel (0) target = $region33
    $region32: #{tpu_custom_call.1} parent=1 // pred_region
      %s108 = ssub.s32 128, 128
      %109 = vsyncadd [#allocation15], %s108
      %s111 = sshll.u32 [#allocation14], 4
      %s112 = int_to_ptr.vmem [resolvable:$true] %s111
      %114 = dma.hbm_to_vmem [thread:$0]  %s7, 128, %s112, [#allocation15]
    $region33: #{tpu_custom_call.1} parent=1 // pred_fallthru
      _
    // Predicated region
    $region34: #{tpu_custom_call.1} parent=1 // pred_check
      _
    $region35: #{tpu_custom_call.1} parent=1 // pred_check_branch
      %116 = sbr.rel (0) target = $region37
    $region36: #{tpu_custom_call.1} parent=1 // pred_region
      %s118 = ssub.s32 65536, 65536
      %119 = vsyncadd [#allocation15], %s118
      %s120 = sshll.u32 [#allocation16], 4
      %s121 = int_to_ptr.vmem [resolvable:$true] %s120
      %126 = dma.hbm_to_vmem [thread:$0]  %s8, 65536, %s121, [#allocation15], 512, 512, 32
    $region37: #{tpu_custom_call.1} parent=1 // pred_fallthru
      _
    // Predicated region
    $region38: #{tpu_custom_call.1} parent=1 // pred_check
      _
    $region39: #{tpu_custom_call.1} parent=1 // pred_check_branch
      %128 = sbr.rel (0) target = $region41
    $region40: #{tpu_custom_call.1} parent=1 // pred_region
      %s130 = ssub.s32 128, 128
      %131 = vsyncadd [#allocation18], %s130
      %s133 = sshll.u32 [#allocation17], 4
      %s134 = int_to_ptr.vmem [resolvable:$true] %s133
      %136 = dma.hbm_to_vmem [thread:$0]  %s9, 128, %s134, [#allocation18]
    $region41: #{tpu_custom_call.1} parent=1 // pred_fallthru
      _
    // Predicated region
    $region42: #{tpu_custom_call.1} parent=1 // pred_check
      _
    $region43: #{tpu_custom_call.1} parent=1 // pred_check_branch
      %138 = sbr.rel (0) target = $region45
    $region44: #{tpu_custom_call.1} parent=1 // pred_region
      %s140 = ssub.s32 8192, 8192
      %141 = vsyncadd [#allocation18], %s140
      %s142 = sshll.u32 [#allocation19], 4
      %s143 = int_to_ptr.vmem [resolvable:$true] %s142
      %148 = dma.hbm_to_vmem [thread:$0]  %s10, 8192, %s143, [#allocation18], 64, 64, 4
    $region45: #{tpu_custom_call.1} parent=1 // pred_fallthru
      _
    // Predicated region
    $region46: #{tpu_custom_call.1} parent=1 // pred_check
      _
    $region47: #{tpu_custom_call.1} parent=1 // pred_check_branch
      %150 = sbr.rel (0) target = $region49
    $region48: #{tpu_custom_call.1} parent=1 // pred_region
      %s152 = ssub.s32 16, 16
      %153 = vsyncadd [#allocation21], %s152
      %s155 = sshll.u32 [#allocation20], 4
      %s156 = int_to_ptr.vmem [resolvable:$true] %s155
      %158 = dma.hbm_to_vmem [thread:$0]  %s11, 16, %s156, [#allocation21]
    $region49: #{tpu_custom_call.1} parent=1 // pred_fallthru
      _
    // Predicated region
    $region50: #{tpu_custom_call.1} parent=1 // pred_check
      _
    $region51: #{tpu_custom_call.1} parent=1 // pred_check_branch
      %160 = sbr.rel (0) target = $region53
    $region52: #{tpu_custom_call.1} parent=1 // pred_region
      %161 = dma.done [#allocation3], 2048
    $region53: #{tpu_custom_call.1} parent=1 // pred_fallthru
      _
    // Predicated region
    $region54: #{tpu_custom_call.1} parent=1 // pred_check
      _
    $region55: #{tpu_custom_call.1} parent=1 // pred_check_branch
      %163 = sbr.rel (0) target = $region57
    $region56: #{tpu_custom_call.1} parent=1 // pred_region
      %164 = dma.done [#allocation6], 512
    $region57: #{tpu_custom_call.1} parent=1 // pred_fallthru
      _
    // Predicated region
    $region58: #{tpu_custom_call.1} parent=1 // pred_check
      _
    $region59: #{tpu_custom_call.1} parent=1 // pred_check_branch
      %166 = sbr.rel (0) target = $region61
    $region60: #{tpu_custom_call.1} parent=1 // pred_region
      %167 = dma.done [#allocation6], 512
    $region61: #{tpu_custom_call.1} parent=1 // pred_fallthru
      _
    // Predicated region
    $region62: #{tpu_custom_call.1} parent=1 // pred_check
      _
    $region63: #{tpu_custom_call.1} parent=1 // pred_check_branch
      %169 = sbr.rel (0) target = $region65
    $region64: #{tpu_custom_call.1} parent=1 // pred_region
      %170 = dma.done [#allocation9], 32768
    $region65: #{tpu_custom_call.1} parent=1 // pred_fallthru
      _
    // Predicated region
    $region66: #{tpu_custom_call.1} parent=1 // pred_check
      _
    $region67: #{tpu_custom_call.1} parent=1 // pred_check_branch
      %172 = sbr.rel (0) target = $region69
    $region68: #{tpu_custom_call.1} parent=1 // pred_region
      %173 = dma.done [#allocation9], 32
    $region69: #{tpu_custom_call.1} parent=1 // pred_fallthru
      _
    // Predicated region
    $region70: #{tpu_custom_call.1} parent=1 // pred_check
      _
    $region71: #{tpu_custom_call.1} parent=1 // pred_check_branch
      %175 = sbr.rel (0) target = $region73
    $region72: #{tpu_custom_call.1} parent=1 // pred_region
      %176 = dma.done [#allocation12], 2048
    $region73: #{tpu_custom_call.1} parent=1 // pred_fallthru
      _
    // Predicated region
    $region74: #{tpu_custom_call.1} parent=1 // pred_check
      _
    $region75: #{tpu_custom_call.1} parent=1 // pred_check_branch
      %178 = sbr.rel (0) target = $region77
    $region76: #{tpu_custom_call.1} parent=1 // pred_region
      %179 = dma.done [#allocation12], 16384
    $region77: #{tpu_custom_call.1} parent=1 // pred_fallthru
      _
    // Predicated region
    $region78: #{tpu_custom_call.1} parent=1 // pred_check
      _
    $region79: #{tpu_custom_call.1} parent=1 // pred_check_branch
      %181 = sbr.rel (0) target = $region81
    $region80: #{tpu_custom_call.1} parent=1 // pred_region
      %182 = dma.done [#allocation15], 128
    $region81: #{tpu_custom_call.1} parent=1 // pred_fallthru
      _
    // Predicated region
    $region82: #{tpu_custom_call.1} parent=1 // pred_check
      _
    $region83: #{tpu_custom_call.1} parent=1 // pred_check_branch
      %184 = sbr.rel (0) target = $region85
    $region84: #{tpu_custom_call.1} parent=1 // pred_region
      %185 = dma.done [#allocation15], 65536
    $region85: #{tpu_custom_call.1} parent=1 // pred_fallthru
      _
    // Predicated region
    $region86: #{tpu_custom_call.1} parent=1 // pred_check
      _
    $region87: #{tpu_custom_call.1} parent=1 // pred_check_branch
      %187 = sbr.rel (0) target = $region89
    $region88: #{tpu_custom_call.1} parent=1 // pred_region
      %188 = dma.done [#allocation18], 128
    $region89: #{tpu_custom_call.1} parent=1 // pred_fallthru
      _
    // Predicated region
    $region90: #{tpu_custom_call.1} parent=1 // pred_check
      _
    $region91: #{tpu_custom_call.1} parent=1 // pred_check_branch
      %190 = sbr.rel (0) target = $region93
    $region92: #{tpu_custom_call.1} parent=1 // pred_region
      %191 = dma.done [#allocation18], 8192
    $region93: #{tpu_custom_call.1} parent=1 // pred_fallthru
      _
    // Predicated region
    $region94: #{tpu_custom_call.1} parent=1 // pred_check
      _
    $region95: #{tpu_custom_call.1} parent=1 // pred_check_branch
      %193 = sbr.rel (0) target = $region97
    $region96: #{tpu_custom_call.1} parent=1 // pred_region
      %194 = dma.done [#allocation21], 16
    $region97: #{tpu_custom_call.1} parent=1 // pred_fallthru
      _
    %v196 = vld [vmem:[#allocation2] sm:$0xff]
    %v197 = vld [vmem:[#allocation2 + $0x8] sm:$0xff]
    %v198 = vld [vmem:[#allocation2 + $0x10] sm:$0xff]
    %v199 = vld [vmem:[#allocation2 + $0x18] sm:$0xff]
    %v200 = vld [vmem:[#allocation2 + $0x20] sm:$0xff]
    %v201 = vld [vmem:[#allocation2 + $0x28] sm:$0xff]
    %v202 = vld [vmem:[#allocation2 + $0x30] sm:$0xff]
    %v203 = vld [vmem:[#allocation2 + $0x38] sm:$0xff]
    %v204 = vld [vmem:[#allocation2 + $0x40] sm:$0xff]
    %v205 = vld [vmem:[#allocation2 + $0x48] sm:$0xff]
    %v206 = vld [vmem:[#allocation2 + $0x50] sm:$0xff]
    %v207 = vld [vmem:[#allocation2 + $0x58] sm:$0xff]
    %v208 = vld [vmem:[#allocation2 + $0x60] sm:$0xff]
    %v209 = vld [vmem:[#allocation2 + $0x68] sm:$0xff]
    %v210 = vld [vmem:[#allocation2 + $0x70] sm:$0xff]
    %v211 = vld [vmem:[#allocation2 + $0x78] sm:$0xff]
    %v212 = vpack.c.bf16 %v196, %v196
    %v213 = vpack.c.bf16 %v197, %v197
    %v214 = vpack.c.bf16 %v198, %v198
    %v215 = vpack.c.bf16 %v199, %v199
    %v216 = vpack.c.bf16 %v200, %v200
    %v217 = vpack.c.bf16 %v201, %v201
    %v218 = vpack.c.bf16 %v202, %v202
    %v219 = vpack.c.bf16 %v203, %v203
    %v220 = vpack.c.bf16 %v204, %v204
    %v221 = vpack.c.bf16 %v205, %v205
    %v222 = vpack.c.bf16 %v206, %v206
    %v223 = vpack.c.bf16 %v207, %v207
    %v224 = vpack.c.bf16 %v208, %v208
    %v225 = vpack.c.bf16 %v209, %v209
    %v226 = vpack.c.bf16 %v210, %v210
    %v227 = vpack.c.bf16 %v211, %v211
    %v228 = vld [vmem:[#allocation8] sm:$0xff]
    %v229 = vld [vmem:[#allocation8 + $0x8] sm:$0xff]
    %v230 = vld [vmem:[#allocation8 + $0x10] sm:$0xff]
    %v231 = vld [vmem:[#allocation8 + $0x18] sm:$0xff]
    %v232 = vld [vmem:[#allocation8 + $0x20] sm:$0xff]
    %v233 = vld [vmem:[#allocation8 + $0x28] sm:$0xff]
    %v234 = vld [vmem:[#allocation8 + $0x30] sm:$0xff]
    %v235 = vld [vmem:[#allocation8 + $0x38] sm:$0xff]
    %v236 = vld [vmem:[#allocation8 + $0x40] sm:$0xff]
    %v237 = vld [vmem:[#allocation8 + $0x48] sm:$0xff]
    %v238 = vld [vmem:[#allocation8 + $0x50] sm:$0xff]
    %v239 = vld [vmem:[#allocation8 + $0x58] sm:$0xff]
    %v240 = vld [vmem:[#allocation8 + $0x60] sm:$0xff]
    %v241 = vld [vmem:[#allocation8 + $0x68] sm:$0xff]
    %v242 = vld [vmem:[#allocation8 + $0x70] sm:$0xff]
    %v243 = vld [vmem:[#allocation8 + $0x78] sm:$0xff]
    %v244 = vld [vmem:[#allocation8 + $0x80] sm:$0xff]
    %v245 = vld [vmem:[#allocation8 + $0x88] sm:$0xff]
    %v246 = vld [vmem:[#allocation8 + $0x90] sm:$0xff]
    %v247 = vld [vmem:[#allocation8 + $0x98] sm:$0xff]
    %v248 = vld [vmem:[#allocation8 + $0xa0] sm:$0xff]
    %v249 = vld [vmem:[#allocation8 + $0xa8] sm:$0xff]
    %v250 = vld [vmem:[#allocation8 + $0xb0] sm:$0xff]
    %v251 = vld [vmem:[#allocation8 + $0xb8] sm:$0xff]
    %v252 = vld [vmem:[#allocation8 + $0xc0] sm:$0xff]
    %v253 = vld [vmem:[#allocation8 + $0xc8] sm:$0xff]
    %v254 = vld [vmem:[#allocation8 + $0xd0] sm:$0xff]
    %v255 = vld [vmem:[#allocation8 + $0xd8] sm:$0xff]
    %v256 = vld [vmem:[#allocation8 + $0xe0] sm:$0xff]
    %v257 = vld [vmem:[#allocation8 + $0xe8] sm:$0xff]
    %v258 = vld [vmem:[#allocation8 + $0xf0] sm:$0xff]
    %v259 = vld [vmem:[#allocation8 + $0xf8] sm:$0xff]
    %v260 = vld [vmem:[#allocation8 + $0x100] sm:$0xff]
    %v261 = vld [vmem:[#allocation8 + $0x108] sm:$0xff]
    %v262 = vld [vmem:[#allocation8 + $0x110] sm:$0xff]
    %v263 = vld [vmem:[#allocation8 + $0x118] sm:$0xff]
    %v264 = vld [vmem:[#allocation8 + $0x120] sm:$0xff]
    %v265 = vld [vmem:[#allocation8 + $0x128] sm:$0xff]
    %v266 = vld [vmem:[#allocation8 + $0x130] sm:$0xff]
    %v267 = vld [vmem:[#allocation8 + $0x138] sm:$0xff]
    %v268 = vld [vmem:[#allocation8 + $0x140] sm:$0xff]
    %v269 = vld [vmem:[#allocation8 + $0x148] sm:$0xff]
    %v270 = vld [vmem:[#allocation8 + $0x150] sm:$0xff]
    %v271 = vld [vmem:[#allocation8 + $0x158] sm:$0xff]
    %v272 = vld [vmem:[#allocation8 + $0x160] sm:$0xff]
    %v273 = vld [vmem:[#allocation8 + $0x168] sm:$0xff]
    %v274 = vld [vmem:[#allocation8 + $0x170] sm:$0xff]
    %v275 = vld [vmem:[#allocation8 + $0x178] sm:$0xff]
    %v276 = vld [vmem:[#allocation8 + $0x180] sm:$0xff]
    %v277 = vld [vmem:[#allocation8 + $0x188] sm:$0xff]
    %v278 = vld [vmem:[#allocation8 + $0x190] sm:$0xff]
    %v279 = vld [vmem:[#allocation8 + $0x198] sm:$0xff]
    %v280 = vld [vmem:[#allocation8 + $0x1a0] sm:$0xff]
    %v281 = vld [vmem:[#allocation8 + $0x1a8] sm:$0xff]
    %v282 = vld [vmem:[#allocation8 + $0x1b0] sm:$0xff]
    %v283 = vld [vmem:[#allocation8 + $0x1b8] sm:$0xff]
    %v284 = vld [vmem:[#allocation8 + $0x1c0] sm:$0xff]
    %v285 = vld [vmem:[#allocation8 + $0x1c8] sm:$0xff]
    %v286 = vld [vmem:[#allocation8 + $0x1d0] sm:$0xff]
    %v287 = vld [vmem:[#allocation8 + $0x1d8] sm:$0xff]
    %v288 = vld [vmem:[#allocation8 + $0x1e0] sm:$0xff]
    %v289 = vld [vmem:[#allocation8 + $0x1e8] sm:$0xff]
    %v290 = vld [vmem:[#allocation8 + $0x1f0] sm:$0xff]
    %v291 = vld [vmem:[#allocation8 + $0x1f8] sm:$0xff]
    %v292 = vld [vmem:[#allocation8 + $0x200] sm:$0xff]
    %v293 = vld [vmem:[#allocation8 + $0x208] sm:$0xff]
    %v294 = vld [vmem:[#allocation8 + $0x210] sm:$0xff]
    %v295 = vld [vmem:[#allocation8 + $0x218] sm:$0xff]
    %v296 = vld [vmem:[#allocation8 + $0x220] sm:$0xff]
    %v297 = vld [vmem:[#allocation8 + $0x228] sm:$0xff]
    %v298 = vld [vmem:[#allocation8 + $0x230] sm:$0xff]
    %v299 = vld [vmem:[#allocation8 + $0x238] sm:$0xff]
    %v300 = vld [vmem:[#allocation8 + $0x240] sm:$0xff]
    %v301 = vld [vmem:[#allocation8 + $0x248] sm:$0xff]
    %v302 = vld [vmem:[#allocation8 + $0x250] sm:$0xff]
    %v303 = vld [vmem:[#allocation8 + $0x258] sm:$0xff]
    %v304 = vld [vmem:[#allocation8 + $0x260] sm:$0xff]
    %v305 = vld [vmem:[#allocation8 + $0x268] sm:$0xff]
    %v306 = vld [vmem:[#allocation8 + $0x270] sm:$0xff]
    %v307 = vld [vmem:[#allocation8 + $0x278] sm:$0xff]
    %v308 = vld [vmem:[#allocation8 + $0x280] sm:$0xff]
    %v309 = vld [vmem:[#allocation8 + $0x288] sm:$0xff]
    %v310 = vld [vmem:[#allocation8 + $0x290] sm:$0xff]
    %v311 = vld [vmem:[#allocation8 + $0x298] sm:$0xff]
    %v312 = vld [vmem:[#allocation8 + $0x2a0] sm:$0xff]
    %v313 = vld [vmem:[#allocation8 + $0x2a8] sm:$0xff]
    %v314 = vld [vmem:[#allocation8 + $0x2b0] sm:$0xff]
    %v315 = vld [vmem:[#allocation8 + $0x2b8] sm:$0xff]
    %v316 = vld [vmem:[#allocation8 + $0x2c0] sm:$0xff]
    %v317 = vld [vmem:[#allocation8 + $0x2c8] sm:$0xff]
    %v318 = vld [vmem:[#allocation8 + $0x2d0] sm:$0xff]
    %v319 = vld [vmem:[#allocation8 + $0x2d8] sm:$0xff]
    %v320 = vld [vmem:[#allocation8 + $0x2e0] sm:$0xff]
    %v321 = vld [vmem:[#allocation8 + $0x2e8] sm:$0xff]
    %v322 = vld [vmem:[#allocation8 + $0x2f0] sm:$0xff]
    %v323 = vld [vmem:[#allocation8 + $0x2f8] sm:$0xff]
    %v324 = vld [vmem:[#allocation8 + $0x300] sm:$0xff]
    %v325 = vld [vmem:[#allocation8 + $0x308] sm:$0xff]
    %v326 = vld [vmem:[#allocation8 + $0x310] sm:$0xff]
    %v327 = vld [vmem:[#allocation8 + $0x318] sm:$0xff]
    %v328 = vld [vmem:[#allocation8 + $0x320] sm:$0xff]
    %v329 = vld [vmem:[#allocation8 + $0x328] sm:$0xff]
    %v330 = vld [vmem:[#allocation8 + $0x330] sm:$0xff]
    %v331 = vld [vmem:[#allocation8 + $0x338] sm:$0xff]
    %v332 = vld [vmem:[#allocation8 + $0x340] sm:$0xff]
    %v333 = vld [vmem:[#allocation8 + $0x348] sm:$0xff]
    %v334 = vld [vmem:[#allocation8 + $0x350] sm:$0xff]
    %v335 = vld [vmem:[#allocation8 + $0x358] sm:$0xff]
    %v336 = vld [vmem:[#allocation8 + $0x360] sm:$0xff]
    %v337 = vld [vmem:[#allocation8 + $0x368] sm:$0xff]
    %v338 = vld [vmem:[#allocation8 + $0x370] sm:$0xff]
    %v339 = vld [vmem:[#allocation8 + $0x378] sm:$0xff]
    %v340 = vld [vmem:[#allocation8 + $0x380] sm:$0xff]
    %v341 = vld [vmem:[#allocation8 + $0x388] sm:$0xff]
    %v342 = vld [vmem:[#allocation8 + $0x390] sm:$0xff]
    %v343 = vld [vmem:[#allocation8 + $0x398] sm:$0xff]
    %v344 = vld [vmem:[#allocation8 + $0x3a0] sm:$0xff]
    %v345 = vld [vmem:[#allocation8 + $0x3a8] sm:$0xff]
    %v346 = vld [vmem:[#allocation8 + $0x3b0] sm:$0xff]
    %v347 = vld [vmem:[#allocation8 + $0x3b8] sm:$0xff]
    %v348 = vld [vmem:[#allocation8 + $0x3c0] sm:$0xff]
    %v349 = vld [vmem:[#allocation8 + $0x3c8] sm:$0xff]
    %v350 = vld [vmem:[#allocation8 + $0x3d0] sm:$0xff]
    %v351 = vld [vmem:[#allocation8 + $0x3d8] sm:$0xff]
    %v352 = vld [vmem:[#allocation8 + $0x3e0] sm:$0xff]
    %v353 = vld [vmem:[#allocation8 + $0x3e8] sm:$0xff]
    %v354 = vld [vmem:[#allocation8 + $0x3f0] sm:$0xff]
    %v355 = vld [vmem:[#allocation8 + $0x3f8] sm:$0xff]
    %v356 = vld [vmem:[#allocation8 + $0x400] sm:$0xff]
    %v357 = vld [vmem:[#allocation8 + $0x408] sm:$0xff]
    %v358 = vld [vmem:[#allocation8 + $0x410] sm:$0xff]
    %v359 = vld [vmem:[#allocation8 + $0x418] sm:$0xff]
    %v360 = vld [vmem:[#allocation8 + $0x420] sm:$0xff]
    %v361 = vld [vmem:[#allocation8 + $0x428] sm:$0xff]
    %v362 = vld [vmem:[#allocation8 + $0x430] sm:$0xff]
    %v363 = vld [vmem:[#allocation8 + $0x438] sm:$0xff]
    %v364 = vld [vmem:[#allocation8 + $0x440] sm:$0xff]
    %v365 = vld [vmem:[#allocation8 + $0x448] sm:$0xff]
    %v366 = vld [vmem:[#allocation8 + $0x450] sm:$0xff]
    %v367 = vld [vmem:[#allocation8 + $0x458] sm:$0xff]
    %v368 = vld [vmem:[#allocation8 + $0x460] sm:$0xff]
    %v369 = vld [vmem:[#allocation8 + $0x468] sm:$0xff]
    %v370 = vld [vmem:[#allocation8 + $0x470] sm:$0xff]
    %v371 = vld [vmem:[#allocation8 + $0x478] sm:$0xff]
    %v372 = vld [vmem:[#allocation8 + $0x480] sm:$0xff]
    %v373 = vld [vmem:[#allocation8 + $0x488] sm:$0xff]
    %v374 = vld [vmem:[#allocation8 + $0x490] sm:$0xff]
    %v375 = vld [vmem:[#allocation8 + $0x498] sm:$0xff]
    %v376 = vld [vmem:[#allocation8 + $0x4a0] sm:$0xff]
    %v377 = vld [vmem:[#allocation8 + $0x4a8] sm:$0xff]
    %v378 = vld [vmem:[#allocation8 + $0x4b0] sm:$0xff]
    %v379 = vld [vmem:[#allocation8 + $0x4b8] sm:$0xff]
    %v380 = vld [vmem:[#allocation8 + $0x4c0] sm:$0xff]
    %v381 = vld [vmem:[#allocation8 + $0x4c8] sm:$0xff]
    %v382 = vld [vmem:[#allocation8 + $0x4d0] sm:$0xff]
    %v383 = vld [vmem:[#allocation8 + $0x4d8] sm:$0xff]
    %v384 = vld [vmem:[#allocation8 + $0x4e0] sm:$0xff]
    %v385 = vld [vmem:[#allocation8 + $0x4e8] sm:$0xff]
    %v386 = vld [vmem:[#allocation8 + $0x4f0] sm:$0xff]
    %v387 = vld [vmem:[#allocation8 + $0x4f8] sm:$0xff]
    %v388 = vld [vmem:[#allocation8 + $0x500] sm:$0xff]
    %v389 = vld [vmem:[#allocation8 + $0x508] sm:$0xff]
    %v390 = vld [vmem:[#allocation8 + $0x510] sm:$0xff]
    %v391 = vld [vmem:[#allocation8 + $0x518] sm:$0xff]
    %v392 = vld [vmem:[#allocation8 + $0x520] sm:$0xff]
    %v393 = vld [vmem:[#allocation8 + $0x528] sm:$0xff]
    %v394 = vld [vmem:[#allocation8 + $0x530] sm:$0xff]
    %v395 = vld [vmem:[#allocation8 + $0x538] sm:$0xff]
    %v396 = vld [vmem:[#allocation8 + $0x540] sm:$0xff]
    %v397 = vld [vmem:[#allocation8 + $0x548] sm:$0xff]
    %v398 = vld [vmem:[#allocation8 + $0x550] sm:$0xff]
    %v399 = vld [vmem:[#allocation8 + $0x558] sm:$0xff]
    %v400 = vld [vmem:[#allocation8 + $0x560] sm:$0xff]
    %v401 = vld [vmem:[#allocation8 + $0x568] sm:$0xff]
    %v402 = vld [vmem:[#allocation8 + $0x570] sm:$0xff]
    %v403 = vld [vmem:[#allocation8 + $0x578] sm:$0xff]
    %v404 = vld [vmem:[#allocation8 + $0x580] sm:$0xff]
    %v405 = vld [vmem:[#allocation8 + $0x588] sm:$0xff]
    %v406 = vld [vmem:[#allocation8 + $0x590] sm:$0xff]
    %v407 = vld [vmem:[#allocation8 + $0x598] sm:$0xff]
    %v408 = vld [vmem:[#allocation8 + $0x5a0] sm:$0xff]
    %v409 = vld [vmem:[#allocation8 + $0x5a8] sm:$0xff]
    %v410 = vld [vmem:[#allocation8 + $0x5b0] sm:$0xff]
    %v411 = vld [vmem:[#allocation8 + $0x5b8] sm:$0xff]
    %v412 = vld [vmem:[#allocation8 + $0x5c0] sm:$0xff]
    %v413 = vld [vmem:[#allocation8 + $0x5c8] sm:$0xff]
    %v414 = vld [vmem:[#allocation8 + $0x5d0] sm:$0xff]
    %v415 = vld [vmem:[#allocation8 + $0x5d8] sm:$0xff]
    %v416 = vld [vmem:[#allocation8 + $0x5e0] sm:$0xff]
    %v417 = vld [vmem:[#allocation8 + $0x5e8] sm:$0xff]
    %v418 = vld [vmem:[#allocation8 + $0x5f0] sm:$0xff]
    %v419 = vld [vmem:[#allocation8 + $0x5f8] sm:$0xff]
    %v420 = vld [vmem:[#allocation8 + $0x600] sm:$0xff]
    %v421 = vld [vmem:[#allocation8 + $0x608] sm:$0xff]
    %v422 = vld [vmem:[#allocation8 + $0x610] sm:$0xff]
    %v423 = vld [vmem:[#allocation8 + $0x618] sm:$0xff]
    %v424 = vld [vmem:[#allocation8 + $0x620] sm:$0xff]
    %v425 = vld [vmem:[#allocation8 + $0x628] sm:$0xff]
    %v426 = vld [vmem:[#allocation8 + $0x630] sm:$0xff]
    %v427 = vld [vmem:[#allocation8 + $0x638] sm:$0xff]
    %v428 = vld [vmem:[#allocation8 + $0x640] sm:$0xff]
    %v429 = vld [vmem:[#allocation8 + $0x648] sm:$0xff]
    %v430 = vld [vmem:[#allocation8 + $0x650] sm:$0xff]
    %v431 = vld [vmem:[#allocation8 + $0x658] sm:$0xff]
    %v432 = vld [vmem:[#allocation8 + $0x660] sm:$0xff]
    %v433 = vld [vmem:[#allocation8 + $0x668] sm:$0xff]
    %v434 = vld [vmem:[#allocation8 + $0x670] sm:$0xff]
    %v435 = vld [vmem:[#allocation8 + $0x678] sm:$0xff]
    %v436 = vld [vmem:[#allocation8 + $0x680] sm:$0xff]
    %v437 = vld [vmem:[#allocation8 + $0x688] sm:$0xff]
    %v438 = vld [vmem:[#allocation8 + $0x690] sm:$0xff]
    %v439 = vld [vmem:[#allocation8 + $0x698] sm:$0xff]
    %v440 = vld [vmem:[#allocation8 + $0x6a0] sm:$0xff]
    %v441 = vld [vmem:[#allocation8 + $0x6a8] sm:$0xff]
    %v442 = vld [vmem:[#allocation8 + $0x6b0] sm:$0xff]
    %v443 = vld [vmem:[#allocation8 + $0x6b8] sm:$0xff]
    %v444 = vld [vmem:[#allocation8 + $0x6c0] sm:$0xff]
    %v445 = vld [vmem:[#allocation8 + $0x6c8] sm:$0xff]
    %v446 = vld [vmem:[#allocation8 + $0x6d0] sm:$0xff]
    %v447 = vld [vmem:[#allocation8 + $0x6d8] sm:$0xff]
    %v448 = vld [vmem:[#allocation8 + $0x6e0] sm:$0xff]
    %v449 = vld [vmem:[#allocation8 + $0x6e8] sm:$0xff]
    %v450 = vld [vmem:[#allocation8 + $0x6f0] sm:$0xff]
    %v451 = vld [vmem:[#allocation8 + $0x6f8] sm:$0xff]
    %v452 = vld [vmem:[#allocation8 + $0x700] sm:$0xff]
    %v453 = vld [vmem:[#allocation8 + $0x708] sm:$0xff]
    %v454 = vld [vmem:[#allocation8 + $0x710] sm:$0xff]
    %v455 = vld [vmem:[#allocation8 + $0x718] sm:$0xff]
    %v456 = vld [vmem:[#allocation8 + $0x720] sm:$0xff]
    %v457 = vld [vmem:[#allocation8 + $0x728] sm:$0xff]
    %v458 = vld [vmem:[#allocation8 + $0x730] sm:$0xff]
    %v459 = vld [vmem:[#allocation8 + $0x738] sm:$0xff]
    %v460 = vld [vmem:[#allocation8 + $0x740] sm:$0xff]
    %v461 = vld [vmem:[#allocation8 + $0x748] sm:$0xff]
    %v462 = vld [vmem:[#allocation8 + $0x750] sm:$0xff]
    %v463 = vld [vmem:[#allocation8 + $0x758] sm:$0xff]
    %v464 = vld [vmem:[#allocation8 + $0x760] sm:$0xff]
    %v465 = vld [vmem:[#allocation8 + $0x768] sm:$0xff]
    %v466 = vld [vmem:[#allocation8 + $0x770] sm:$0xff]
    %v467 = vld [vmem:[#allocation8 + $0x778] sm:$0xff]
    %v468 = vld [vmem:[#allocation8 + $0x780] sm:$0xff]
    %v469 = vld [vmem:[#allocation8 + $0x788] sm:$0xff]
    %v470 = vld [vmem:[#allocation8 + $0x790] sm:$0xff]
    %v471 = vld [vmem:[#allocation8 + $0x798] sm:$0xff]
    %v472 = vld [vmem:[#allocation8 + $0x7a0] sm:$0xff]
    %v473 = vld [vmem:[#allocation8 + $0x7a8] sm:$0xff]
    %v474 = vld [vmem:[#allocation8 + $0x7b0] sm:$0xff]
    %v475 = vld [vmem:[#allocation8 + $0x7b8] sm:$0xff]
    %v476 = vld [vmem:[#allocation8 + $0x7c0] sm:$0xff]
    %v477 = vld [vmem:[#allocation8 + $0x7c8] sm:$0xff]
    %v478 = vld [vmem:[#allocation8 + $0x7d0] sm:$0xff]
    %v479 = vld [vmem:[#allocation8 + $0x7d8] sm:$0xff]
    %v480 = vld [vmem:[#allocation8 + $0x7e0] sm:$0xff]
    %v481 = vld [vmem:[#allocation8 + $0x7e8] sm:$0xff]
    %v482 = vld [vmem:[#allocation8 + $0x7f0] sm:$0xff]
    %v483 = vld [vmem:[#allocation8 + $0x7f8] sm:$0xff]
    %v484 = vld [vmem:[#allocation10] sm:$0x3]
    %v486 = vlaneseq
    %v487 = vshrl.u32 %v486, 7
    %v488 = vsub.s32 0, %v487
    %v489 = vrot.slane %v484, %v488
    %v490 = vlaneseq
    %v491 = vshrl.u32 %v490, 7
    %v492 = vsub.s32 1, %v491
    %v493 = vrot.slane %v484, %v492
    %v752 = vunpack.c.l.b16 %v228
    %v753 = vunpack.c.h.b16 %v228
    %v754 = vunpack.c.l.b16 %v229
    %v755 = vunpack.c.h.b16 %v229
    %v756 = vunpack.c.l.b16 %v230
    %v757 = vunpack.c.h.b16 %v230
    %v758 = vunpack.c.l.b16 %v231
    %v759 = vunpack.c.h.b16 %v231
    %v760 = vunpack.c.l.b16 %v232
    %v761 = vunpack.c.h.b16 %v232
    %v762 = vunpack.c.l.b16 %v233
    %v763 = vunpack.c.h.b16 %v233
    %v764 = vunpack.c.l.b16 %v234
    %v765 = vunpack.c.h.b16 %v234
    %v766 = vunpack.c.l.b16 %v235
    %v767 = vunpack.c.h.b16 %v235
    %v768 = vunpack.c.l.b16 %v236
    %v769 = vunpack.c.h.b16 %v236
    %v770 = vunpack.c.l.b16 %v237
    %v771 = vunpack.c.h.b16 %v237
    %v772 = vunpack.c.l.b16 %v238
    %v773 = vunpack.c.h.b16 %v238
    %v774 = vunpack.c.l.b16 %v239
    %v775 = vunpack.c.h.b16 %v239
    %v776 = vunpack.c.l.b16 %v240
    %v777 = vunpack.c.h.b16 %v240
    %v778 = vunpack.c.l.b16 %v241
    %v779 = vunpack.c.h.b16 %v241
    %v780 = vunpack.c.l.b16 %v242
    %v781 = vunpack.c.h.b16 %v242
    %v782 = vunpack.c.l.b16 %v243
    %v783 = vunpack.c.h.b16 %v243
    %v784 = vunpack.c.l.b16 %v244
    %v785 = vunpack.c.h.b16 %v244
    %v786 = vunpack.c.l.b16 %v245
    %v787 = vunpack.c.h.b16 %v245
    %v788 = vunpack.c.l.b16 %v246
    %v789 = vunpack.c.h.b16 %v246
    %v790 = vunpack.c.l.b16 %v247
    %v791 = vunpack.c.h.b16 %v247
    %v792 = vunpack.c.l.b16 %v248
    %v793 = vunpack.c.h.b16 %v248
    %v794 = vunpack.c.l.b16 %v249
    %v795 = vunpack.c.h.b16 %v249
    %v796 = vunpack.c.l.b16 %v250
    %v797 = vunpack.c.h.b16 %v250
    %v798 = vunpack.c.l.b16 %v251
    %v799 = vunpack.c.h.b16 %v251
    %v800 = vunpack.c.l.b16 %v252
    %v801 = vunpack.c.h.b16 %v252
    %v802 = vunpack.c.l.b16 %v253
    %v803 = vunpack.c.h.b16 %v253
    %v804 = vunpack.c.l.b16 %v254
    %v805 = vunpack.c.h.b16 %v254
    %v806 = vunpack.c.l.b16 %v255
    %v807 = vunpack.c.h.b16 %v255
    %v808 = vunpack.c.l.b16 %v256
    %v809 = vunpack.c.h.b16 %v256
    %v810 = vunpack.c.l.b16 %v257
    %v811 = vunpack.c.h.b16 %v257
    %v812 = vunpack.c.l.b16 %v258
    %v813 = vunpack.c.h.b16 %v258
    %v814 = vunpack.c.l.b16 %v259
    %v815 = vunpack.c.h.b16 %v259
    %v816 = vunpack.c.l.b16 %v260
    %v817 = vunpack.c.h.b16 %v260
    %v818 = vunpack.c.l.b16 %v261
    %v819 = vunpack.c.h.b16 %v261
    %v820 = vunpack.c.l.b16 %v262
    %v821 = vunpack.c.h.b16 %v262
    %v822 = vunpack.c.l.b16 %v263
    %v823 = vunpack.c.h.b16 %v263
    %v824 = vunpack.c.l.b16 %v264
    %v825 = vunpack.c.h.b16 %v264
    %v826 = vunpack.c.l.b16 %v265
    %v827 = vunpack.c.h.b16 %v265
    %v828 = vunpack.c.l.b16 %v266
    %v829 = vunpack.c.h.b16 %v266
    %v830 = vunpack.c.l.b16 %v267
    %v831 = vunpack.c.h.b16 %v267
    %v832 = vunpack.c.l.b16 %v268
    %v833 = vunpack.c.h.b16 %v268
    %v834 = vunpack.c.l.b16 %v269
    %v835 = vunpack.c.h.b16 %v269
    %v836 = vunpack.c.l.b16 %v270
    %v837 = vunpack.c.h.b16 %v270
    %v838 = vunpack.c.l.b16 %v271
    %v839 = vunpack.c.h.b16 %v271
    %v840 = vunpack.c.l.b16 %v272
    %v841 = vunpack.c.h.b16 %v272
    %v842 = vunpack.c.l.b16 %v273
    %v843 = vunpack.c.h.b16 %v273
    %v844 = vunpack.c.l.b16 %v274
    %v845 = vunpack.c.h.b16 %v274
    %v846 = vunpack.c.l.b16 %v275
    %v847 = vunpack.c.h.b16 %v275
    %v848 = vunpack.c.l.b16 %v276
    %v849 = vunpack.c.h.b16 %v276
    %v850 = vunpack.c.l.b16 %v277
    %v851 = vunpack.c.h.b16 %v277
    %v852 = vunpack.c.l.b16 %v278
    %v853 = vunpack.c.h.b16 %v278
    %v854 = vunpack.c.l.b16 %v279
    %v855 = vunpack.c.h.b16 %v279
    %v856 = vunpack.c.l.b16 %v280
    %v857 = vunpack.c.h.b16 %v280
    %v858 = vunpack.c.l.b16 %v281
    %v859 = vunpack.c.h.b16 %v281
    %v860 = vunpack.c.l.b16 %v282
    %v861 = vunpack.c.h.b16 %v282
    %v862 = vunpack.c.l.b16 %v283
    %v863 = vunpack.c.h.b16 %v283
    %v864 = vunpack.c.l.b16 %v284
    %v865 = vunpack.c.h.b16 %v284
    %v866 = vunpack.c.l.b16 %v285
    %v867 = vunpack.c.h.b16 %v285
    %v868 = vunpack.c.l.b16 %v286
    %v869 = vunpack.c.h.b16 %v286
    %v870 = vunpack.c.l.b16 %v287
    %v871 = vunpack.c.h.b16 %v287
    %v872 = vunpack.c.l.b16 %v288
    %v873 = vunpack.c.h.b16 %v288
    %v874 = vunpack.c.l.b16 %v289
    %v875 = vunpack.c.h.b16 %v289
    %v876 = vunpack.c.l.b16 %v290
    %v877 = vunpack.c.h.b16 %v290
    %v878 = vunpack.c.l.b16 %v291
    %v879 = vunpack.c.h.b16 %v291
    %v880 = vunpack.c.l.b16 %v292
    %v881 = vunpack.c.h.b16 %v292
    %v882 = vunpack.c.l.b16 %v293
    %v883 = vunpack.c.h.b16 %v293
    %v884 = vunpack.c.l.b16 %v294
    %v885 = vunpack.c.h.b16 %v294
    %v886 = vunpack.c.l.b16 %v295
    %v887 = vunpack.c.h.b16 %v295
    %v888 = vunpack.c.l.b16 %v296
    %v889 = vunpack.c.h.b16 %v296
    %v890 = vunpack.c.l.b16 %v297
    %v891 = vunpack.c.h.b16 %v297
    %v892 = vunpack.c.l.b16 %v298
    %v893 = vunpack.c.h.b16 %v298
    %v894 = vunpack.c.l.b16 %v299
    %v895 = vunpack.c.h.b16 %v299
    %v896 = vunpack.c.l.b16 %v300
    %v897 = vunpack.c.h.b16 %v300
    %v898 = vunpack.c.l.b16 %v301
    %v899 = vunpack.c.h.b16 %v301
    %v900 = vunpack.c.l.b16 %v302
    %v901 = vunpack.c.h.b16 %v302
    %v902 = vunpack.c.l.b16 %v303
    %v903 = vunpack.c.h.b16 %v303
    %v904 = vunpack.c.l.b16 %v304
    %v905 = vunpack.c.h.b16 %v304
    %v906 = vunpack.c.l.b16 %v305
    %v907 = vunpack.c.h.b16 %v305
    %v908 = vunpack.c.l.b16 %v306
    %v909 = vunpack.c.h.b16 %v306
    %v910 = vunpack.c.l.b16 %v307
    %v911 = vunpack.c.h.b16 %v307
    %v912 = vunpack.c.l.b16 %v308
    %v913 = vunpack.c.h.b16 %v308
    %v914 = vunpack.c.l.b16 %v309
    %v915 = vunpack.c.h.b16 %v309
    %v916 = vunpack.c.l.b16 %v310
    %v917 = vunpack.c.h.b16 %v310
    %v918 = vunpack.c.l.b16 %v311
    %v919 = vunpack.c.h.b16 %v311
    %v920 = vunpack.c.l.b16 %v312
    %v921 = vunpack.c.h.b16 %v312
    %v922 = vunpack.c.l.b16 %v313
    %v923 = vunpack.c.h.b16 %v313
    %v924 = vunpack.c.l.b16 %v314
    %v925 = vunpack.c.h.b16 %v314
    %v926 = vunpack.c.l.b16 %v315
    %v927 = vunpack.c.h.b16 %v315
    %v928 = vunpack.c.l.b16 %v316
    %v929 = vunpack.c.h.b16 %v316
    %v930 = vunpack.c.l.b16 %v317
    %v931 = vunpack.c.h.b16 %v317
    %v932 = vunpack.c.l.b16 %v318
    %v933 = vunpack.c.h.b16 %v318
    %v934 = vunpack.c.l.b16 %v319
    %v935 = vunpack.c.h.b16 %v319
    %v936 = vunpack.c.l.b16 %v320
    %v937 = vunpack.c.h.b16 %v320
    %v938 = vunpack.c.l.b16 %v321
    %v939 = vunpack.c.h.b16 %v321
    %v940 = vunpack.c.l.b16 %v322
    %v941 = vunpack.c.h.b16 %v322
    %v942 = vunpack.c.l.b16 %v323
    %v943 = vunpack.c.h.b16 %v323
    %v944 = vunpack.c.l.b16 %v324
    %v945 = vunpack.c.h.b16 %v324
    %v946 = vunpack.c.l.b16 %v325
    %v947 = vunpack.c.h.b16 %v325
    %v948 = vunpack.c.l.b16 %v326
    %v949 = vunpack.c.h.b16 %v326
    %v950 = vunpack.c.l.b16 %v327
    %v951 = vunpack.c.h.b16 %v327
    %v952 = vunpack.c.l.b16 %v328
    %v953 = vunpack.c.h.b16 %v328
    %v954 = vunpack.c.l.b16 %v329
    %v955 = vunpack.c.h.b16 %v329
    %v956 = vunpack.c.l.b16 %v330
    %v957 = vunpack.c.h.b16 %v330
    %v958 = vunpack.c.l.b16 %v331
    %v959 = vunpack.c.h.b16 %v331
    %v960 = vunpack.c.l.b16 %v332
    %v961 = vunpack.c.h.b16 %v332
    %v962 = vunpack.c.l.b16 %v333
    %v963 = vunpack.c.h.b16 %v333
    %v964 = vunpack.c.l.b16 %v334
    %v965 = vunpack.c.h.b16 %v334
    %v966 = vunpack.c.l.b16 %v335
    %v967 = vunpack.c.h.b16 %v335
    %v968 = vunpack.c.l.b16 %v336
    %v969 = vunpack.c.h.b16 %v336
    %v970 = vunpack.c.l.b16 %v337
    %v971 = vunpack.c.h.b16 %v337
    %v972 = vunpack.c.l.b16 %v338
    %v973 = vunpack.c.h.b16 %v338
    %v974 = vunpack.c.l.b16 %v339
    %v975 = vunpack.c.h.b16 %v339
    %v976 = vunpack.c.l.b16 %v340
    %v977 = vunpack.c.h.b16 %v340
    %v978 = vunpack.c.l.b16 %v341
    %v979 = vunpack.c.h.b16 %v341
    %v980 = vunpack.c.l.b16 %v342
    %v981 = vunpack.c.h.b16 %v342
    %v982 = vunpack.c.l.b16 %v343
    %v983 = vunpack.c.h.b16 %v343
    %v984 = vunpack.c.l.b16 %v344
    %v985 = vunpack.c.h.b16 %v344
    %v986 = vunpack.c.l.b16 %v345
    %v987 = vunpack.c.h.b16 %v345
    %v988 = vunpack.c.l.b16 %v346
    %v989 = vunpack.c.h.b16 %v346
    %v990 = vunpack.c.l.b16 %v347
    %v991 = vunpack.c.h.b16 %v347
    %v992 = vunpack.c.l.b16 %v348
    %v993 = vunpack.c.h.b16 %v348
    %v994 = vunpack.c.l.b16 %v349
    %v995 = vunpack.c.h.b16 %v349
    %v996 = vunpack.c.l.b16 %v350
    %v997 = vunpack.c.h.b16 %v350
    %v998 = vunpack.c.l.b16 %v351
    %v999 = vunpack.c.h.b16 %v351
    %v1000 = vunpack.c.l.b16 %v352
    %v1001 = vunpack.c.h.b16 %v352
    %v1002 = vunpack.c.l.b16 %v353
    %v1003 = vunpack.c.h.b16 %v353
    %v1004 = vunpack.c.l.b16 %v354
    %v1005 = vunpack.c.h.b16 %v354
    %v1006 = vunpack.c.l.b16 %v355
    %v1007 = vunpack.c.h.b16 %v355
    %v1008 = vunpack.c.l.b16 %v356
    %v1009 = vunpack.c.h.b16 %v356
    %v1010 = vunpack.c.l.b16 %v357
    %v1011 = vunpack.c.h.b16 %v357
    %v1012 = vunpack.c.l.b16 %v358
    %v1013 = vunpack.c.h.b16 %v358
    %v1014 = vunpack.c.l.b16 %v359
    %v1015 = vunpack.c.h.b16 %v359
    %v1016 = vunpack.c.l.b16 %v360
    %v1017 = vunpack.c.h.b16 %v360
    %v1018 = vunpack.c.l.b16 %v361
    %v1019 = vunpack.c.h.b16 %v361
    %v1020 = vunpack.c.l.b16 %v362
    %v1021 = vunpack.c.h.b16 %v362
    %v1022 = vunpack.c.l.b16 %v363
    %v1023 = vunpack.c.h.b16 %v363
    %v1024 = vunpack.c.l.b16 %v364
    %v1025 = vunpack.c.h.b16 %v364
    %v1026 = vunpack.c.l.b16 %v365
    %v1027 = vunpack.c.h.b16 %v365
    %v1028 = vunpack.c.l.b16 %v366
    %v1029 = vunpack.c.h.b16 %v366
    %v1030 = vunpack.c.l.b16 %v367
    %v1031 = vunpack.c.h.b16 %v367
    %v1032 = vunpack.c.l.b16 %v368
    %v1033 = vunpack.c.h.b16 %v368
    %v1034 = vunpack.c.l.b16 %v369
    %v1035 = vunpack.c.h.b16 %v369
    %v1036 = vunpack.c.l.b16 %v370
    %v1037 = vunpack.c.h.b16 %v370
    %v1038 = vunpack.c.l.b16 %v371
    %v1039 = vunpack.c.h.b16 %v371
    %v1040 = vunpack.c.l.b16 %v372
    %v1041 = vunpack.c.h.b16 %v372
    %v1042 = vunpack.c.l.b16 %v373
    %v1043 = vunpack.c.h.b16 %v373
    %v1044 = vunpack.c.l.b16 %v374
    %v1045 = vunpack.c.h.b16 %v374
    %v1046 = vunpack.c.l.b16 %v375
    %v1047 = vunpack.c.h.b16 %v375
    %v1048 = vunpack.c.l.b16 %v376
    %v1049 = vunpack.c.h.b16 %v376
    %v1050 = vunpack.c.l.b16 %v377
    %v1051 = vunpack.c.h.b16 %v377
    %v1052 = vunpack.c.l.b16 %v378
    %v1053 = vunpack.c.h.b16 %v378
    %v1054 = vunpack.c.l.b16 %v379
    %v1055 = vunpack.c.h.b16 %v379
    %v1056 = vunpack.c.l.b16 %v380
    %v1057 = vunpack.c.h.b16 %v380
    %v1058 = vunpack.c.l.b16 %v381
    %v1059 = vunpack.c.h.b16 %v381
    %v1060 = vunpack.c.l.b16 %v382
    %v1061 = vunpack.c.h.b16 %v382
    %v1062 = vunpack.c.l.b16 %v383
    %v1063 = vunpack.c.h.b16 %v383
    %v1064 = vunpack.c.l.b16 %v384
    %v1065 = vunpack.c.h.b16 %v384
    %v1066 = vunpack.c.l.b16 %v385
    %v1067 = vunpack.c.h.b16 %v385
    %v1068 = vunpack.c.l.b16 %v386
    %v1069 = vunpack.c.h.b16 %v386
    %v1070 = vunpack.c.l.b16 %v387
    %v1071 = vunpack.c.h.b16 %v387
    %v1072 = vunpack.c.l.b16 %v388
    %v1073 = vunpack.c.h.b16 %v388
    %v1074 = vunpack.c.l.b16 %v389
    %v1075 = vunpack.c.h.b16 %v389
    %v1076 = vunpack.c.l.b16 %v390
    %v1077 = vunpack.c.h.b16 %v390
    %v1078 = vunpack.c.l.b16 %v391
    %v1079 = vunpack.c.h.b16 %v391
    %v1080 = vunpack.c.l.b16 %v392
    %v1081 = vunpack.c.h.b16 %v392
    %v1082 = vunpack.c.l.b16 %v393
    %v1083 = vunpack.c.h.b16 %v393
    %v1084 = vunpack.c.l.b16 %v394
    %v1085 = vunpack.c.h.b16 %v394
    %v1086 = vunpack.c.l.b16 %v395
    %v1087 = vunpack.c.h.b16 %v395
    %v1088 = vunpack.c.l.b16 %v396
    %v1089 = vunpack.c.h.b16 %v396
    %v1090 = vunpack.c.l.b16 %v397
    %v1091 = vunpack.c.h.b16 %v397
    %v1092 = vunpack.c.l.b16 %v398
    %v1093 = vunpack.c.h.b16 %v398
    %v1094 = vunpack.c.l.b16 %v399
    %v1095 = vunpack.c.h.b16 %v399
    %v1096 = vunpack.c.l.b16 %v400
    %v1097 = vunpack.c.h.b16 %v400
    %v1098 = vunpack.c.l.b16 %v401
    %v1099 = vunpack.c.h.b16 %v401
    %v1100 = vunpack.c.l.b16 %v402
    %v1101 = vunpack.c.h.b16 %v402
    %v1102 = vunpack.c.l.b16 %v403
    %v1103 = vunpack.c.h.b16 %v403
    %v1104 = vunpack.c.l.b16 %v404
    %v1105 = vunpack.c.h.b16 %v404
    %v1106 = vunpack.c.l.b16 %v405
    %v1107 = vunpack.c.h.b16 %v405
    %v1108 = vunpack.c.l.b16 %v406
    %v1109 = vunpack.c.h.b16 %v406
    %v1110 = vunpack.c.l.b16 %v407
    %v1111 = vunpack.c.h.b16 %v407
    %v1112 = vunpack.c.l.b16 %v408
    %v1113 = vunpack.c.h.b16 %v408
    %v1114 = vunpack.c.l.b16 %v409
    %v1115 = vunpack.c.h.b16 %v409
    %v1116 = vunpack.c.l.b16 %v410
    %v1117 = vunpack.c.h.b16 %v410
    %v1118 = vunpack.c.l.b16 %v411
    %v1119 = vunpack.c.h.b16 %v411
    %v1120 = vunpack.c.l.b16 %v412
    %v1121 = vunpack.c.h.b16 %v412
    %v1122 = vunpack.c.l.b16 %v413
    %v1123 = vunpack.c.h.b16 %v413
    %v1124 = vunpack.c.l.b16 %v414
    %v1125 = vunpack.c.h.b16 %v414
    %v1126 = vunpack.c.l.b16 %v415
    %v1127 = vunpack.c.h.b16 %v415
    %v1128 = vunpack.c.l.b16 %v416
    %v1129 = vunpack.c.h.b16 %v416
    %v1130 = vunpack.c.l.b16 %v417
    %v1131 = vunpack.c.h.b16 %v417
    %v1132 = vunpack.c.l.b16 %v418
    %v1133 = vunpack.c.h.b16 %v418
    %v1134 = vunpack.c.l.b16 %v419
    %v1135 = vunpack.c.h.b16 %v419
    %v1136 = vunpack.c.l.b16 %v420
    %v1137 = vunpack.c.h.b16 %v420
    %v1138 = vunpack.c.l.b16 %v421
    %v1139 = vunpack.c.h.b16 %v421
    %v1140 = vunpack.c.l.b16 %v422
    %v1141 = vunpack.c.h.b16 %v422
    %v1142 = vunpack.c.l.b16 %v423
    %v1143 = vunpack.c.h.b16 %v423
    %v1144 = vunpack.c.l.b16 %v424
    %v1145 = vunpack.c.h.b16 %v424
    %v1146 = vunpack.c.l.b16 %v425
    %v1147 = vunpack.c.h.b16 %v425
    %v1148 = vunpack.c.l.b16 %v426
    %v1149 = vunpack.c.h.b16 %v426
    %v1150 = vunpack.c.l.b16 %v427
    %v1151 = vunpack.c.h.b16 %v427
    %v1152 = vunpack.c.l.b16 %v428
    %v1153 = vunpack.c.h.b16 %v428
    %v1154 = vunpack.c.l.b16 %v429
    %v1155 = vunpack.c.h.b16 %v429
    %v1156 = vunpack.c.l.b16 %v430
    %v1157 = vunpack.c.h.b16 %v430
    %v1158 = vunpack.c.l.b16 %v431
    %v1159 = vunpack.c.h.b16 %v431
    %v1160 = vunpack.c.l.b16 %v432
    %v1161 = vunpack.c.h.b16 %v432
    %v1162 = vunpack.c.l.b16 %v433
    %v1163 = vunpack.c.h.b16 %v433
    %v1164 = vunpack.c.l.b16 %v434
    %v1165 = vunpack.c.h.b16 %v434
    %v1166 = vunpack.c.l.b16 %v435
    %v1167 = vunpack.c.h.b16 %v435
    %v1168 = vunpack.c.l.b16 %v436
    %v1169 = vunpack.c.h.b16 %v436
    %v1170 = vunpack.c.l.b16 %v437
    %v1171 = vunpack.c.h.b16 %v437
    %v1172 = vunpack.c.l.b16 %v438
    %v1173 = vunpack.c.h.b16 %v438
    %v1174 = vunpack.c.l.b16 %v439
    %v1175 = vunpack.c.h.b16 %v439
    %v1176 = vunpack.c.l.b16 %v440
    %v1177 = vunpack.c.h.b16 %v440
    %v1178 = vunpack.c.l.b16 %v441
    %v1179 = vunpack.c.h.b16 %v441
    %v1180 = vunpack.c.l.b16 %v442
    %v1181 = vunpack.c.h.b16 %v442
    %v1182 = vunpack.c.l.b16 %v443
    %v1183 = vunpack.c.h.b16 %v443
    %v1184 = vunpack.c.l.b16 %v444
    %v1185 = vunpack.c.h.b16 %v444
    %v1186 = vunpack.c.l.b16 %v445
    %v1187 = vunpack.c.h.b16 %v445
    %v1188 = vunpack.c.l.b16 %v446
    %v1189 = vunpack.c.h.b16 %v446
    %v1190 = vunpack.c.l.b16 %v447
    %v1191 = vunpack.c.h.b16 %v447
    %v1192 = vunpack.c.l.b16 %v448
    %v1193 = vunpack.c.h.b16 %v448
    %v1194 = vunpack.c.l.b16 %v449
    %v1195 = vunpack.c.h.b16 %v449
    %v1196 = vunpack.c.l.b16 %v450
    %v1197 = vunpack.c.h.b16 %v450
    %v1198 = vunpack.c.l.b16 %v451
    %v1199 = vunpack.c.h.b16 %v451
    %v1200 = vunpack.c.l.b16 %v452
    %v1201 = vunpack.c.h.b16 %v452
    %v1202 = vunpack.c.l.b16 %v453
    %v1203 = vunpack.c.h.b16 %v453
    %v1204 = vunpack.c.l.b16 %v454
    %v1205 = vunpack.c.h.b16 %v454
    %v1206 = vunpack.c.l.b16 %v455
    %v1207 = vunpack.c.h.b16 %v455
    %v1208 = vunpack.c.l.b16 %v456
    %v1209 = vunpack.c.h.b16 %v456
    %v1210 = vunpack.c.l.b16 %v457
    %v1211 = vunpack.c.h.b16 %v457
    %v1212 = vunpack.c.l.b16 %v458
    %v1213 = vunpack.c.h.b16 %v458
    %v1214 = vunpack.c.l.b16 %v459
    %v1215 = vunpack.c.h.b16 %v459
    %v1216 = vunpack.c.l.b16 %v460
    %v1217 = vunpack.c.h.b16 %v460
    %v1218 = vunpack.c.l.b16 %v461
    %v1219 = vunpack.c.h.b16 %v461
    %v1220 = vunpack.c.l.b16 %v462
    %v1221 = vunpack.c.h.b16 %v462
    %v1222 = vunpack.c.l.b16 %v463
    %v1223 = vunpack.c.h.b16 %v463
    %v1224 = vunpack.c.l.b16 %v464
    %v1225 = vunpack.c.h.b16 %v464
    %v1226 = vunpack.c.l.b16 %v465
    %v1227 = vunpack.c.h.b16 %v465
    %v1228 = vunpack.c.l.b16 %v466
    %v1229 = vunpack.c.h.b16 %v466
    %v1230 = vunpack.c.l.b16 %v467
    %v1231 = vunpack.c.h.b16 %v467
    %v1232 = vunpack.c.l.b16 %v468
    %v1233 = vunpack.c.h.b16 %v468
    %v1234 = vunpack.c.l.b16 %v469
    %v1235 = vunpack.c.h.b16 %v469
    %v1236 = vunpack.c.l.b16 %v470
    %v1237 = vunpack.c.h.b16 %v470
    %v1238 = vunpack.c.l.b16 %v471
    %v1239 = vunpack.c.h.b16 %v471
    %v1240 = vunpack.c.l.b16 %v472
    %v1241 = vunpack.c.h.b16 %v472
    %v1242 = vunpack.c.l.b16 %v473
    %v1243 = vunpack.c.h.b16 %v473
    %v1244 = vunpack.c.l.b16 %v474
    %v1245 = vunpack.c.h.b16 %v474
    %v1246 = vunpack.c.l.b16 %v475
    %v1247 = vunpack.c.h.b16 %v475
    %v1248 = vunpack.c.l.b16 %v476
    %v1249 = vunpack.c.h.b16 %v476
    %v1250 = vunpack.c.l.b16 %v477
    %v1251 = vunpack.c.h.b16 %v477
    %v1252 = vunpack.c.l.b16 %v478
    %v1253 = vunpack.c.h.b16 %v478
    %v1254 = vunpack.c.l.b16 %v479
    %v1255 = vunpack.c.h.b16 %v479
    %v1256 = vunpack.c.l.b16 %v480
    %v1257 = vunpack.c.h.b16 %v480
    %v1258 = vunpack.c.l.b16 %v481
    %v1259 = vunpack.c.h.b16 %v481
    %v1260 = vunpack.c.l.b16 %v482
    %v1261 = vunpack.c.h.b16 %v482
    %v1262 = vunpack.c.l.b16 %v483
    %v1263 = vunpack.c.h.b16 %v483
    %v1264 = vpack.c.b16 %v754, %v752
    %v1265 = vpack.c.b16 %v755, %v753
    %v1266 = vpack.c.b16 %v758, %v756
    %v1267 = vpack.c.b16 %v759, %v757
    %v1268 = vpack.c.b16 %v762, %v760
    %v1269 = vpack.c.b16 %v763, %v761
    %v1270 = vpack.c.b16 %v766, %v764
    %v1271 = vpack.c.b16 %v767, %v765
    %v1272 = vpack.c.b16 %v770, %v768
    %v1273 = vpack.c.b16 %v771, %v769
    %v1274 = vpack.c.b16 %v774, %v772
    %v1275 = vpack.c.b16 %v775, %v773
    %v1276 = vpack.c.b16 %v778, %v776
    %v1277 = vpack.c.b16 %v779, %v777
    %v1278 = vpack.c.b16 %v782, %v780
    %v1279 = vpack.c.b16 %v783, %v781
    %v1280 = vpack.c.b16 %v786, %v784
    %v1281 = vpack.c.b16 %v787, %v785
    %v1282 = vpack.c.b16 %v790, %v788
    %v1283 = vpack.c.b16 %v791, %v789
    %v1284 = vpack.c.b16 %v794, %v792
    %v1285 = vpack.c.b16 %v795, %v793
    %v1286 = vpack.c.b16 %v798, %v796
    %v1287 = vpack.c.b16 %v799, %v797
    %v1288 = vpack.c.b16 %v802, %v800
    %v1289 = vpack.c.b16 %v803, %v801
    %v1290 = vpack.c.b16 %v806, %v804
    %v1291 = vpack.c.b16 %v807, %v805
    %v1292 = vpack.c.b16 %v810, %v808
    %v1293 = vpack.c.b16 %v811, %v809
    %v1294 = vpack.c.b16 %v814, %v812
    %v1295 = vpack.c.b16 %v815, %v813
    %v1296 = vpack.c.b16 %v818, %v816
    %v1297 = vpack.c.b16 %v819, %v817
    %v1298 = vpack.c.b16 %v822, %v820
    %v1299 = vpack.c.b16 %v823, %v821
    %v1300 = vpack.c.b16 %v826, %v824
    %v1301 = vpack.c.b16 %v827, %v825
    %v1302 = vpack.c.b16 %v830, %v828
    %v1303 = vpack.c.b16 %v831, %v829
    %v1304 = vpack.c.b16 %v834, %v832
    %v1305 = vpack.c.b16 %v835, %v833
    %v1306 = vpack.c.b16 %v838, %v836
    %v1307 = vpack.c.b16 %v839, %v837
    %v1308 = vpack.c.b16 %v842, %v840
    %v1309 = vpack.c.b16 %v843, %v841
    %v1310 = vpack.c.b16 %v846, %v844
    %v1311 = vpack.c.b16 %v847, %v845
    %v1312 = vpack.c.b16 %v850, %v848
    %v1313 = vpack.c.b16 %v851, %v849
    %v1314 = vpack.c.b16 %v854, %v852
    %v1315 = vpack.c.b16 %v855, %v853
    %v1316 = vpack.c.b16 %v858, %v856
    %v1317 = vpack.c.b16 %v859, %v857
    %v1318 = vpack.c.b16 %v862, %v860
    %v1319 = vpack.c.b16 %v863, %v861
    %v1320 = vpack.c.b16 %v866, %v864
    %v1321 = vpack.c.b16 %v867, %v865
    %v1322 = vpack.c.b16 %v870, %v868
    %v1323 = vpack.c.b16 %v871, %v869
    %v1324 = vpack.c.b16 %v874, %v872
    %v1325 = vpack.c.b16 %v875, %v873
    %v1326 = vpack.c.b16 %v878, %v876
    %v1327 = vpack.c.b16 %v879, %v877
    %v1328 = vpack.c.b16 %v882, %v880
    %v1329 = vpack.c.b16 %v883, %v881
    %v1330 = vpack.c.b16 %v886, %v884
    %v1331 = vpack.c.b16 %v887, %v885
    %v1332 = vpack.c.b16 %v890, %v888
    %v1333 = vpack.c.b16 %v891, %v889
    %v1334 = vpack.c.b16 %v894, %v892
    %v1335 = vpack.c.b16 %v895, %v893
    %v1336 = vpack.c.b16 %v898, %v896
    %v1337 = vpack.c.b16 %v899, %v897
    %v1338 = vpack.c.b16 %v902, %v900
    %v1339 = vpack.c.b16 %v903, %v901
    %v1340 = vpack.c.b16 %v906, %v904
    %v1341 = vpack.c.b16 %v907, %v905
    %v1342 = vpack.c.b16 %v910, %v908
    %v1343 = vpack.c.b16 %v911, %v909
    %v1344 = vpack.c.b16 %v914, %v912
    %v1345 = vpack.c.b16 %v915, %v913
    %v1346 = vpack.c.b16 %v918, %v916
    %v1347 = vpack.c.b16 %v919, %v917
    %v1348 = vpack.c.b16 %v922, %v920
    %v1349 = vpack.c.b16 %v923, %v921
    %v1350 = vpack.c.b16 %v926, %v924
    %v1351 = vpack.c.b16 %v927, %v925
    %v1352 = vpack.c.b16 %v930, %v928
    %v1353 = vpack.c.b16 %v931, %v929
    %v1354 = vpack.c.b16 %v934, %v932
    %v1355 = vpack.c.b16 %v935, %v933
    %v1356 = vpack.c.b16 %v938, %v936
    %v1357 = vpack.c.b16 %v939, %v937
    %v1358 = vpack.c.b16 %v942, %v940
    %v1359 = vpack.c.b16 %v943, %v941
    %v1360 = vpack.c.b16 %v946, %v944
    %v1361 = vpack.c.b16 %v947, %v945
    %v1362 = vpack.c.b16 %v950, %v948
    %v1363 = vpack.c.b16 %v951, %v949
    %v1364 = vpack.c.b16 %v954, %v952
    %v1365 = vpack.c.b16 %v955, %v953
    %v1366 = vpack.c.b16 %v958, %v956
    %v1367 = vpack.c.b16 %v959, %v957
    %v1368 = vpack.c.b16 %v962, %v960
    %v1369 = vpack.c.b16 %v963, %v961
    %v1370 = vpack.c.b16 %v966, %v964
    %v1371 = vpack.c.b16 %v967, %v965
    %v1372 = vpack.c.b16 %v970, %v968
    %v1373 = vpack.c.b16 %v971, %v969
    %v1374 = vpack.c.b16 %v974, %v972
    %v1375 = vpack.c.b16 %v975, %v973
    %v1376 = vpack.c.b16 %v978, %v976
    %v1377 = vpack.c.b16 %v979, %v977
    %v1378 = vpack.c.b16 %v982, %v980
    %v1379 = vpack.c.b16 %v983, %v981
    %v1380 = vpack.c.b16 %v986, %v984
    %v1381 = vpack.c.b16 %v987, %v985
    %v1382 = vpack.c.b16 %v990, %v988
    %v1383 = vpack.c.b16 %v991, %v989
    %v1384 = vpack.c.b16 %v994, %v992
    %v1385 = vpack.c.b16 %v995, %v993
    %v1386 = vpack.c.b16 %v998, %v996
    %v1387 = vpack.c.b16 %v999, %v997
    %v1388 = vpack.c.b16 %v1002, %v1000
    %v1389 = vpack.c.b16 %v1003, %v1001
    %v1390 = vpack.c.b16 %v1006, %v1004
    %v1391 = vpack.c.b16 %v1007, %v1005
    %v1392 = vpack.c.b16 %v1010, %v1008
    %v1393 = vpack.c.b16 %v1011, %v1009
    %v1394 = vpack.c.b16 %v1014, %v1012
    %v1395 = vpack.c.b16 %v1015, %v1013
    %v1396 = vpack.c.b16 %v1018, %v1016
    %v1397 = vpack.c.b16 %v1019, %v1017
    %v1398 = vpack.c.b16 %v1022, %v1020
    %v1399 = vpack.c.b16 %v1023, %v1021
    %v1400 = vpack.c.b16 %v1026, %v1024
    %v1401 = vpack.c.b16 %v1027, %v1025
    %v1402 = vpack.c.b16 %v1030, %v1028
    %v1403 = vpack.c.b16 %v1031, %v1029
    %v1404 = vpack.c.b16 %v1034, %v1032
    %v1405 = vpack.c.b16 %v1035, %v1033
    %v1406 = vpack.c.b16 %v1038, %v1036
    %v1407 = vpack.c.b16 %v1039, %v1037
    %v1408 = vpack.c.b16 %v1042, %v1040
    %v1409 = vpack.c.b16 %v1043, %v1041
    %v1410 = vpack.c.b16 %v1046, %v1044
    %v1411 = vpack.c.b16 %v1047, %v1045
    %v1412 = vpack.c.b16 %v1050, %v1048
    %v1413 = vpack.c.b16 %v1051, %v1049
    %v1414 = vpack.c.b16 %v1054, %v1052
    %v1415 = vpack.c.b16 %v1055, %v1053
    %v1416 = vpack.c.b16 %v1058, %v1056
    %v1417 = vpack.c.b16 %v1059, %v1057
    %v1418 = vpack.c.b16 %v1062, %v1060
    %v1419 = vpack.c.b16 %v1063, %v1061
    %v1420 = vpack.c.b16 %v1066, %v1064
    %v1421 = vpack.c.b16 %v1067, %v1065
    %v1422 = vpack.c.b16 %v1070, %v1068
    %v1423 = vpack.c.b16 %v1071, %v1069
    %v1424 = vpack.c.b16 %v1074, %v1072
    %v1425 = vpack.c.b16 %v1075, %v1073
    %v1426 = vpack.c.b16 %v1078, %v1076
    %v1427 = vpack.c.b16 %v1079, %v1077
    %v1428 = vpack.c.b16 %v1082, %v1080
    %v1429 = vpack.c.b16 %v1083, %v1081
    %v1430 = vpack.c.b16 %v1086, %v1084
    %v1431 = vpack.c.b16 %v1087, %v1085
    %v1432 = vpack.c.b16 %v1090, %v1088
    %v1433 = vpack.c.b16 %v1091, %v1089
    %v1434 = vpack.c.b16 %v1094, %v1092
    %v1435 = vpack.c.b16 %v1095, %v1093
    %v1436 = vpack.c.b16 %v1098, %v1096
    %v1437 = vpack.c.b16 %v1099, %v1097
    %v1438 = vpack.c.b16 %v1102, %v1100
    %v1439 = vpack.c.b16 %v1103, %v1101
    %v1440 = vpack.c.b16 %v1106, %v1104
    %v1441 = vpack.c.b16 %v1107, %v1105
    %v1442 = vpack.c.b16 %v1110, %v1108
    %v1443 = vpack.c.b16 %v1111, %v1109
    %v1444 = vpack.c.b16 %v1114, %v1112
    %v1445 = vpack.c.b16 %v1115, %v1113
    %v1446 = vpack.c.b16 %v1118, %v1116
    %v1447 = vpack.c.b16 %v1119, %v1117
    %v1448 = vpack.c.b16 %v1122, %v1120
    %v1449 = vpack.c.b16 %v1123, %v1121
    %v1450 = vpack.c.b16 %v1126, %v1124
    %v1451 = vpack.c.b16 %v1127, %v1125
    %v1452 = vpack.c.b16 %v1130, %v1128
    %v1453 = vpack.c.b16 %v1131, %v1129
    %v1454 = vpack.c.b16 %v1134, %v1132
    %v1455 = vpack.c.b16 %v1135, %v1133
    %v1456 = vpack.c.b16 %v1138, %v1136
    %v1457 = vpack.c.b16 %v1139, %v1137
    %v1458 = vpack.c.b16 %v1142, %v1140
    %v1459 = vpack.c.b16 %v1143, %v1141
    %v1460 = vpack.c.b16 %v1146, %v1144
    %v1461 = vpack.c.b16 %v1147, %v1145
    %v1462 = vpack.c.b16 %v1150, %v1148
    %v1463 = vpack.c.b16 %v1151, %v1149
    %v1464 = vpack.c.b16 %v1154, %v1152
    %v1465 = vpack.c.b16 %v1155, %v1153
    %v1466 = vpack.c.b16 %v1158, %v1156
    %v1467 = vpack.c.b16 %v1159, %v1157
    %v1468 = vpack.c.b16 %v1162, %v1160
    %v1469 = vpack.c.b16 %v1163, %v1161
    %v1470 = vpack.c.b16 %v1166, %v1164
    %v1471 = vpack.c.b16 %v1167, %v1165
    %v1472 = vpack.c.b16 %v1170, %v1168
    %v1473 = vpack.c.b16 %v1171, %v1169
    %v1474 = vpack.c.b16 %v1174, %v1172
    %v1475 = vpack.c.b16 %v1175, %v1173
    %v1476 = vpack.c.b16 %v1178, %v1176
    %v1477 = vpack.c.b16 %v1179, %v1177
    %v1478 = vpack.c.b16 %v1182, %v1180
    %v1479 = vpack.c.b16 %v1183, %v1181
    %v1480 = vpack.c.b16 %v1186, %v1184
    %v1481 = vpack.c.b16 %v1187, %v1185
    %v1482 = vpack.c.b16 %v1190, %v1188
    %v1483 = vpack.c.b16 %v1191, %v1189
    %v1484 = vpack.c.b16 %v1194, %v1192
    %v1485 = vpack.c.b16 %v1195, %v1193
    %v1486 = vpack.c.b16 %v1198, %v1196
    %v1487 = vpack.c.b16 %v1199, %v1197
    %v1488 = vpack.c.b16 %v1202, %v1200
    %v1489 = vpack.c.b16 %v1203, %v1201
    %v1490 = vpack.c.b16 %v1206, %v1204
    %v1491 = vpack.c.b16 %v1207, %v1205
    %v1492 = vpack.c.b16 %v1210, %v1208
    %v1493 = vpack.c.b16 %v1211, %v1209
    %v1494 = vpack.c.b16 %v1214, %v1212
    %v1495 = vpack.c.b16 %v1215, %v1213
    %v1496 = vpack.c.b16 %v1218, %v1216
    %v1497 = vpack.c.b16 %v1219, %v1217
    %v1498 = vpack.c.b16 %v1222, %v1220
    %v1499 = vpack.c.b16 %v1223, %v1221
    %v1500 = vpack.c.b16 %v1226, %v1224
    %v1501 = vpack.c.b16 %v1227, %v1225
    %v1502 = vpack.c.b16 %v1230, %v1228
    %v1503 = vpack.c.b16 %v1231, %v1229
    %v1504 = vpack.c.b16 %v1234, %v1232
    %v1505 = vpack.c.b16 %v1235, %v1233
    %v1506 = vpack.c.b16 %v1238, %v1236
    %v1507 = vpack.c.b16 %v1239, %v1237
    %v1508 = vpack.c.b16 %v1242, %v1240
    %v1509 = vpack.c.b16 %v1243, %v1241
    %v1510 = vpack.c.b16 %v1246, %v1244
    %v1511 = vpack.c.b16 %v1247, %v1245
    %v1512 = vpack.c.b16 %v1250, %v1248
    %v1513 = vpack.c.b16 %v1251, %v1249
    %v1514 = vpack.c.b16 %v1254, %v1252
    %v1515 = vpack.c.b16 %v1255, %v1253
    %v1516 = vpack.c.b16 %v1258, %v1256
    %v1517 = vpack.c.b16 %v1259, %v1257
    %v1518 = vpack.c.b16 %v1262, %v1260
    %v1519 = vpack.c.b16 %v1263, %v1261
    %1776 = vmatprep.subr.bf16.mxu0 %v1265
    %1777 = vmatpush1.bf16.msra.mxu0 %v1264
    %1778 = vmatprep.subr.bf16.mxu0 %v1267
    %1779 = vmatpush1.bf16.msra.mxu0 %v1266
    %1780 = vmatprep.subr.bf16.mxu0 %v1269
    %1781 = vmatpush1.bf16.msra.mxu0 %v1268
    %1782 = vmatprep.subr.bf16.mxu0 %v1271
    %1783 = vmatpush1.bf16.msra.mxu0 %v1270
    %1784 = vmatprep.subr.bf16.mxu0 %v1273
    %1785 = vmatpush1.bf16.msra.mxu0 %v1272
    %1786 = vmatprep.subr.bf16.mxu0 %v1275
    %1787 = vmatpush1.bf16.msra.mxu0 %v1274
    %1788 = vmatprep.subr.bf16.mxu0 %v1277
    %1789 = vmatpush1.bf16.msra.mxu0 %v1276
    %1790 = vmatprep.subr.bf16.mxu0 %v1279
    %1791 = vmatpush1.bf16.msra.mxu0 %v1278
    %1792 = vmatprep.subr.bf16.mxu0 %v1281
    %1793 = vmatpush1.bf16.msra.mxu0 %v1280
    %1794 = vmatprep.subr.bf16.mxu0 %v1283
    %1795 = vmatpush1.bf16.msra.mxu0 %v1282
    %1796 = vmatprep.subr.bf16.mxu0 %v1285
    %1797 = vmatpush1.bf16.msra.mxu0 %v1284
    %1798 = vmatprep.subr.bf16.mxu0 %v1287
    %1799 = vmatpush1.bf16.msra.mxu0 %v1286
    %1800 = vmatprep.subr.bf16.mxu0 %v1289
    %1801 = vmatpush1.bf16.msra.mxu0 %v1288
    %1802 = vmatprep.subr.bf16.mxu0 %v1291
    %1803 = vmatpush1.bf16.msra.mxu0 %v1290
    %1804 = vmatprep.subr.bf16.mxu0 %v1293
    %1805 = vmatpush1.bf16.msra.mxu0 %v1292
    %1806 = vmatprep.subr.bf16.mxu0 %v1295
    %1807 = vmatpush1.bf16.msra.mxu0 %v1294
    %1808 = vmatprep.mubr.bf16.mxu0 %v213
    %1809 = vmatmul.mubr.bf16.gmra.mrb[0].mxu0 %v212
    %v1810 = vpop.f32.mrb[0].mxu0
    %v1811 = vadd.f32 %v489, %v1810
    %v1812 = vpop.f32.mrb[0].mxu0
    %v1813 = vadd.f32 %v493, %v1812
    %v1814 = vpop.f32.mrb[0].mxu0
    %v1815 = vpop.f32.mrb[0].mxu0
    %1816 = vdwg.mxu0
    %1817 = vmatprep.subr.bf16.mxu0 %v1297
    %1818 = vmatpush1.bf16.msra.mxu0 %v1296
    %1819 = vmatprep.subr.bf16.mxu0 %v1299
    %1820 = vmatpush1.bf16.msra.mxu0 %v1298
    %1821 = vmatprep.subr.bf16.mxu0 %v1301
    %1822 = vmatpush1.bf16.msra.mxu0 %v1300
    %1823 = vmatprep.subr.bf16.mxu0 %v1303
    %1824 = vmatpush1.bf16.msra.mxu0 %v1302
    %1825 = vmatprep.subr.bf16.mxu0 %v1305
    %1826 = vmatpush1.bf16.msra.mxu0 %v1304
    %1827 = vmatprep.subr.bf16.mxu0 %v1307
    %1828 = vmatpush1.bf16.msra.mxu0 %v1306
    %1829 = vmatprep.subr.bf16.mxu0 %v1309
    %1830 = vmatpush1.bf16.msra.mxu0 %v1308
    %1831 = vmatprep.subr.bf16.mxu0 %v1311
    %1832 = vmatpush1.bf16.msra.mxu0 %v1310
    %1833 = vmatprep.subr.bf16.mxu0 %v1313
    %1834 = vmatpush1.bf16.msra.mxu0 %v1312
    %1835 = vmatprep.subr.bf16.mxu0 %v1315
    %1836 = vmatpush1.bf16.msra.mxu0 %v1314
    %1837 = vmatprep.subr.bf16.mxu0 %v1317
    %1838 = vmatpush1.bf16.msra.mxu0 %v1316
    %1839 = vmatprep.subr.bf16.mxu0 %v1319
    %1840 = vmatpush1.bf16.msra.mxu0 %v1318
    %1841 = vmatprep.subr.bf16.mxu0 %v1321
    %1842 = vmatpush1.bf16.msra.mxu0 %v1320
    %1843 = vmatprep.subr.bf16.mxu0 %v1323
    %1844 = vmatpush1.bf16.msra.mxu0 %v1322
    %1845 = vmatprep.subr.bf16.mxu0 %v1325
    %1846 = vmatpush1.bf16.msra.mxu0 %v1324
    %1847 = vmatprep.subr.bf16.mxu0 %v1327
    %1848 = vmatpush1.bf16.msra.mxu0 %v1326
    %1849 = vmatprep.mubr.bf16.mxu0 %v215
    %1850 = vmatmul.mubr.bf16.gmra.mrb[0].mxu0 %v214
    %v1851 = vpop.f32.mrb[0].mxu0
    %v1852 = vadd.f32 %v1811, %v1851
    %v1853 = vpop.f32.mrb[0].mxu0
    %v1854 = vadd.f32 %v1813, %v1853
    %v1855 = vpop.f32.mrb[0].mxu0
    %v1856 = vpop.f32.mrb[0].mxu0
    %1857 = vdwg.mxu0
    %1858 = vmatprep.subr.bf16.mxu0 %v1329
    %1859 = vmatpush1.bf16.msra.mxu0 %v1328
    %1860 = vmatprep.subr.bf16.mxu0 %v1331
    %1861 = vmatpush1.bf16.msra.mxu0 %v1330
    %1862 = vmatprep.subr.bf16.mxu0 %v1333
    %1863 = vmatpush1.bf16.msra.mxu0 %v1332
    %1864 = vmatprep.subr.bf16.mxu0 %v1335
    %1865 = vmatpush1.bf16.msra.mxu0 %v1334
    %1866 = vmatprep.subr.bf16.mxu0 %v1337
    %1867 = vmatpush1.bf16.msra.mxu0 %v1336
    %1868 = vmatprep.subr.bf16.mxu0 %v1339
    %1869 = vmatpush1.bf16.msra.mxu0 %v1338
    %1870 = vmatprep.subr.bf16.mxu0 %v1341
    %1871 = vmatpush1.bf16.msra.mxu0 %v1340
    %1872 = vmatprep.subr.bf16.mxu0 %v1343
    %1873 = vmatpush1.bf16.msra.mxu0 %v1342
    %1874 = vmatprep.subr.bf16.mxu0 %v1345
    %1875 = vmatpush1.bf16.msra.mxu0 %v1344
    %1876 = vmatprep.subr.bf16.mxu0 %v1347
    %1877 = vmatpush1.bf16.msra.mxu0 %v1346
    %1878 = vmatprep.subr.bf16.mxu0 %v1349
    %1879 = vmatpush1.bf16.msra.mxu0 %v1348
    %1880 = vmatprep.subr.bf16.mxu0 %v1351
    %1881 = vmatpush1.bf16.msra.mxu0 %v1350
    %1882 = vmatprep.subr.bf16.mxu0 %v1353
    %1883 = vmatpush1.bf16.msra.mxu0 %v1352
    %1884 = vmatprep.subr.bf16.mxu0 %v1355
    %1885 = vmatpush1.bf16.msra.mxu0 %v1354
    %1886 = vmatprep.subr.bf16.mxu0 %v1357
    %1887 = vmatpush1.bf16.msra.mxu0 %v1356
    %1888 = vmatprep.subr.bf16.mxu0 %v1359
    %1889 = vmatpush1.bf16.msra.mxu0 %v1358
    %1890 = vmatprep.mubr.bf16.mxu0 %v217
    %1891 = vmatmul.mubr.bf16.gmra.mrb[0].mxu0 %v216
    %v1892 = vpop.f32.mrb[0].mxu0
    %v1893 = vadd.f32 %v1852, %v1892
    %v1894 = vpop.f32.mrb[0].mxu0
    %v1895 = vadd.f32 %v1854, %v1894
    %v1896 = vpop.f32.mrb[0].mxu0
    %v1897 = vpop.f32.mrb[0].mxu0
    %1898 = vdwg.mxu0
    %1899 = vmatprep.subr.bf16.mxu0 %v1361
    %1900 = vmatpush1.bf16.msra.mxu0 %v1360
    %1901 = vmatprep.subr.bf16.mxu0 %v1363
    %1902 = vmatpush1.bf16.msra.mxu0 %v1362
    %1903 = vmatprep.subr.bf16.mxu0 %v1365
    %1904 = vmatpush1.bf16.msra.mxu0 %v1364
    %1905 = vmatprep.subr.bf16.mxu0 %v1367
    %1906 = vmatpush1.bf16.msra.mxu0 %v1366
    %1907 = vmatprep.subr.bf16.mxu0 %v1369
    %1908 = vmatpush1.bf16.msra.mxu0 %v1368
    %1909 = vmatprep.subr.bf16.mxu0 %v1371
    %1910 = vmatpush1.bf16.msra.mxu0 %v1370
    %1911 = vmatprep.subr.bf16.mxu0 %v1373
    %1912 = vmatpush1.bf16.msra.mxu0 %v1372
    %1913 = vmatprep.subr.bf16.mxu0 %v1375
    %1914 = vmatpush1.bf16.msra.mxu0 %v1374
    %1915 = vmatprep.subr.bf16.mxu0 %v1377
    %1916 = vmatpush1.bf16.msra.mxu0 %v1376
    %1917 = vmatprep.subr.bf16.mxu0 %v1379
    %1918 = vmatpush1.bf16.msra.mxu0 %v1378
    %1919 = vmatprep.subr.bf16.mxu0 %v1381
    %1920 = vmatpush1.bf16.msra.mxu0 %v1380
    %1921 = vmatprep.subr.bf16.mxu0 %v1383
    %1922 = vmatpush1.bf16.msra.mxu0 %v1382
    %1923 = vmatprep.subr.bf16.mxu0 %v1385
    %1924 = vmatpush1.bf16.msra.mxu0 %v1384
    %1925 = vmatprep.subr.bf16.mxu0 %v1387
    %1926 = vmatpush1.bf16.msra.mxu0 %v1386
    %1927 = vmatprep.subr.bf16.mxu0 %v1389
    %1928 = vmatpush1.bf16.msra.mxu0 %v1388
    %1929 = vmatprep.subr.bf16.mxu0 %v1391
    %1930 = vmatpush1.bf16.msra.mxu0 %v1390
    %1931 = vmatprep.mubr.bf16.mxu0 %v219
    %1932 = vmatmul.mubr.bf16.gmra.mrb[0].mxu0 %v218
    %v1933 = vpop.f32.mrb[0].mxu0
    %v1934 = vadd.f32 %v1893, %v1933
    %v1935 = vpop.f32.mrb[0].mxu0
    %v1936 = vadd.f32 %v1895, %v1935
    %v1937 = vpop.f32.mrb[0].mxu0
    %v1938 = vpop.f32.mrb[0].mxu0
    %1939 = vdwg.mxu0
    %1940 = vmatprep.subr.bf16.mxu0 %v1393
    %1941 = vmatpush1.bf16.msra.mxu0 %v1392
    %1942 = vmatprep.subr.bf16.mxu0 %v1395
    %1943 = vmatpush1.bf16.msra.mxu0 %v1394
    %1944 = vmatprep.subr.bf16.mxu0 %v1397
    %1945 = vmatpush1.bf16.msra.mxu0 %v1396
    %1946 = vmatprep.subr.bf16.mxu0 %v1399
    %1947 = vmatpush1.bf16.msra.mxu0 %v1398
    %1948 = vmatprep.subr.bf16.mxu0 %v1401
    %1949 = vmatpush1.bf16.msra.mxu0 %v1400
    %1950 = vmatprep.subr.bf16.mxu0 %v1403
    %1951 = vmatpush1.bf16.msra.mxu0 %v1402
    %1952 = vmatprep.subr.bf16.mxu0 %v1405
    %1953 = vmatpush1.bf16.msra.mxu0 %v1404
    %1954 = vmatprep.subr.bf16.mxu0 %v1407
    %1955 = vmatpush1.bf16.msra.mxu0 %v1406
    %1956 = vmatprep.subr.bf16.mxu0 %v1409
    %1957 = vmatpush1.bf16.msra.mxu0 %v1408
    %1958 = vmatprep.subr.bf16.mxu0 %v1411
    %1959 = vmatpush1.bf16.msra.mxu0 %v1410
    %1960 = vmatprep.subr.bf16.mxu0 %v1413
    %1961 = vmatpush1.bf16.msra.mxu0 %v1412
    %1962 = vmatprep.subr.bf16.mxu0 %v1415
    %1963 = vmatpush1.bf16.msra.mxu0 %v1414
    %1964 = vmatprep.subr.bf16.mxu0 %v1417
    %1965 = vmatpush1.bf16.msra.mxu0 %v1416
    %1966 = vmatprep.subr.bf16.mxu0 %v1419
    %1967 = vmatpush1.bf16.msra.mxu0 %v1418
    %1968 = vmatprep.subr.bf16.mxu0 %v1421
    %1969 = vmatpush1.bf16.msra.mxu0 %v1420
    %1970 = vmatprep.subr.bf16.mxu0 %v1423
    %1971 = vmatpush1.bf16.msra.mxu0 %v1422
    %1972 = vmatprep.mubr.bf16.mxu0 %v221
    %1973 = vmatmul.mubr.bf16.gmra.mrb[0].mxu0 %v220
    %v1974 = vpop.f32.mrb[0].mxu0
    %v1975 = vadd.f32 %v1934, %v1974
    %v1976 = vpop.f32.mrb[0].mxu0
    %v1977 = vadd.f32 %v1936, %v1976
    %v1978 = vpop.f32.mrb[0].mxu0
    %v1979 = vpop.f32.mrb[0].mxu0
    %1980 = vdwg.mxu0
    %1981 = vmatprep.subr.bf16.mxu0 %v1425
    %1982 = vmatpush1.bf16.msra.mxu0 %v1424
    %1983 = vmatprep.subr.bf16.mxu0 %v1427
    %1984 = vmatpush1.bf16.msra.mxu0 %v1426
    %1985 = vmatprep.subr.bf16.mxu0 %v1429
    %1986 = vmatpush1.bf16.msra.mxu0 %v1428
    %1987 = vmatprep.subr.bf16.mxu0 %v1431
    %1988 = vmatpush1.bf16.msra.mxu0 %v1430
    %1989 = vmatprep.subr.bf16.mxu0 %v1433
    %1990 = vmatpush1.bf16.msra.mxu0 %v1432
    %1991 = vmatprep.subr.bf16.mxu0 %v1435
    %1992 = vmatpush1.bf16.msra.mxu0 %v1434
    %1993 = vmatprep.subr.bf16.mxu0 %v1437
    %1994 = vmatpush1.bf16.msra.mxu0 %v1436
    %1995 = vmatprep.subr.bf16.mxu0 %v1439
    %1996 = vmatpush1.bf16.msra.mxu0 %v1438
    %1997 = vmatprep.subr.bf16.mxu0 %v1441
    %1998 = vmatpush1.bf16.msra.mxu0 %v1440
    %1999 = vmatprep.subr.bf16.mxu0 %v1443
    %2000 = vmatpush1.bf16.msra.mxu0 %v1442
    %2001 = vmatprep.subr.bf16.mxu0 %v1445
    %2002 = vmatpush1.bf16.msra.mxu0 %v1444
    %2003 = vmatprep.subr.bf16.mxu0 %v1447
    %2004 = vmatpush1.bf16.msra.mxu0 %v1446
    %2005 = vmatprep.subr.bf16.mxu0 %v1449
    %2006 = vmatpush1.bf16.msra.mxu0 %v1448
    %2007 = vmatprep.subr.bf16.mxu0 %v1451
    %2008 = vmatpush1.bf16.msra.mxu0 %v1450
    %2009 = vmatprep.subr.bf16.mxu0 %v1453
    %2010 = vmatpush1.bf16.msra.mxu0 %v1452
    %2011 = vmatprep.subr.bf16.mxu0 %v1455
    %2012 = vmatpush1.bf16.msra.mxu0 %v1454
    %2013 = vmatprep.mubr.bf16.mxu0 %v223
    %2014 = vmatmul.mubr.bf16.gmra.mrb[0].mxu0 %v222
    %v2015 = vpop.f32.mrb[0].mxu0
    %v2016 = vadd.f32 %v1975, %v2015
    %v2017 = vpop.f32.mrb[0].mxu0
    %v2018 = vadd.f32 %v1977, %v2017
    %v2019 = vpop.f32.mrb[0].mxu0
    %v2020 = vpop.f32.mrb[0].mxu0
    %2021 = vdwg.mxu0
    %2022 = vmatprep.subr.bf16.mxu0 %v1457
    %2023 = vmatpush1.bf16.msra.mxu0 %v1456
    %2024 = vmatprep.subr.bf16.mxu0 %v1459
    %2025 = vmatpush1.bf16.msra.mxu0 %v1458
    %2026 = vmatprep.subr.bf16.mxu0 %v1461
    %2027 = vmatpush1.bf16.msra.mxu0 %v1460
    %2028 = vmatprep.subr.bf16.mxu0 %v1463
    %2029 = vmatpush1.bf16.msra.mxu0 %v1462
    %2030 = vmatprep.subr.bf16.mxu0 %v1465
    %2031 = vmatpush1.bf16.msra.mxu0 %v1464
    %2032 = vmatprep.subr.bf16.mxu0 %v1467
    %2033 = vmatpush1.bf16.msra.mxu0 %v1466
    %2034 = vmatprep.subr.bf16.mxu0 %v1469
    %2035 = vmatpush1.bf16.msra.mxu0 %v1468
    %2036 = vmatprep.subr.bf16.mxu0 %v1471
    %2037 = vmatpush1.bf16.msra.mxu0 %v1470
    %2038 = vmatprep.subr.bf16.mxu0 %v1473
    %2039 = vmatpush1.bf16.msra.mxu0 %v1472
    %2040 = vmatprep.subr.bf16.mxu0 %v1475
    %2041 = vmatpush1.bf16.msra.mxu0 %v1474
    %2042 = vmatprep.subr.bf16.mxu0 %v1477
    %2043 = vmatpush1.bf16.msra.mxu0 %v1476
    %2044 = vmatprep.subr.bf16.mxu0 %v1479
    %2045 = vmatpush1.bf16.msra.mxu0 %v1478
    %2046 = vmatprep.subr.bf16.mxu0 %v1481
    %2047 = vmatpush1.bf16.msra.mxu0 %v1480
    %2048 = vmatprep.subr.bf16.mxu0 %v1483
    %2049 = vmatpush1.bf16.msra.mxu0 %v1482
    %2050 = vmatprep.subr.bf16.mxu0 %v1485
    %2051 = vmatpush1.bf16.msra.mxu0 %v1484
    %2052 = vmatprep.subr.bf16.mxu0 %v1487
    %2053 = vmatpush1.bf16.msra.mxu0 %v1486
    %2054 = vmatprep.mubr.bf16.mxu0 %v225
    %2055 = vmatmul.mubr.bf16.gmra.mrb[0].mxu0 %v224
    %v2056 = vpop.f32.mrb[0].mxu0
    %v2057 = vadd.f32 %v2016, %v2056
    %v2058 = vpop.f32.mrb[0].mxu0
    %v2059 = vadd.f32 %v2018, %v2058
    %v2060 = vpop.f32.mrb[0].mxu0
    %v2061 = vpop.f32.mrb[0].mxu0
    %2062 = vdwg.mxu0
    %2063 = vmatprep.subr.bf16.mxu0 %v1489
    %2064 = vmatpush1.bf16.msra.mxu0 %v1488
    %2065 = vmatprep.subr.bf16.mxu0 %v1491
    %2066 = vmatpush1.bf16.msra.mxu0 %v1490
    %2067 = vmatprep.subr.bf16.mxu0 %v1493
    %2068 = vmatpush1.bf16.msra.mxu0 %v1492
    %2069 = vmatprep.subr.bf16.mxu0 %v1495
    %2070 = vmatpush1.bf16.msra.mxu0 %v1494
    %2071 = vmatprep.subr.bf16.mxu0 %v1497
    %2072 = vmatpush1.bf16.msra.mxu0 %v1496
    %2073 = vmatprep.subr.bf16.mxu0 %v1499
    %2074 = vmatpush1.bf16.msra.mxu0 %v1498
    %2075 = vmatprep.subr.bf16.mxu0 %v1501
    %2076 = vmatpush1.bf16.msra.mxu0 %v1500
    %2077 = vmatprep.subr.bf16.mxu0 %v1503
    %2078 = vmatpush1.bf16.msra.mxu0 %v1502
    %2079 = vmatprep.subr.bf16.mxu0 %v1505
    %2080 = vmatpush1.bf16.msra.mxu0 %v1504
    %2081 = vmatprep.subr.bf16.mxu0 %v1507
    %2082 = vmatpush1.bf16.msra.mxu0 %v1506
    %2083 = vmatprep.subr.bf16.mxu0 %v1509
    %2084 = vmatpush1.bf16.msra.mxu0 %v1508
    %2085 = vmatprep.subr.bf16.mxu0 %v1511
    %2086 = vmatpush1.bf16.msra.mxu0 %v1510
    %2087 = vmatprep.subr.bf16.mxu0 %v1513
    %2088 = vmatpush1.bf16.msra.mxu0 %v1512
    %2089 = vmatprep.subr.bf16.mxu0 %v1515
    %2090 = vmatpush1.bf16.msra.mxu0 %v1514
    %2091 = vmatprep.subr.bf16.mxu0 %v1517
    %2092 = vmatpush1.bf16.msra.mxu0 %v1516
    %2093 = vmatprep.subr.bf16.mxu0 %v1519
    %2094 = vmatpush1.bf16.msra.mxu0 %v1518
    %2095 = vmatprep.mubr.bf16.mxu0 %v227
    %2096 = vmatmul.mubr.bf16.gmra.mrb[0].mxu0 %v226
    %v2097 = vpop.f32.mrb[0].mxu0
    %v2098 = vadd.f32 %v2057, %v2097
    %v2099 = vpop.f32.mrb[0].mxu0
    %v2100 = vadd.f32 %v2059, %v2099
    %v2101 = vpop.f32.mrb[0].mxu0
    %v2102 = vpop.f32.mrb[0].mxu0
    %2103 = vdwg.mxu0
    %2104 = vst [vmem:[#allocation22] sm:$0xff] %v2098
    %2105 = vst [vmem:[#allocation22 + $0x8] sm:$0xff] %v2100
    %v2106 = vmul.f32 %v2098, %v2098
    %v2107 = vmul.f32 %v2100, %v2100
    %v2108 = vadd.f32 %v2106, %v2107
    %2109 = vadd.xlane.f32.xlu0 %v2108
    %v2110 = vpop.xlane.xlu0 %2109
    %v2111 = vmax.f32 %v2110, 1e-24
    %v2112 = vrsqrt.pop %v2111
    %v2113 = vmul.f32 %v2098, %v2112
    %v2114 = vmul.f32 %v2100, %v2112
    %v2115 = vpack.c.bf16 %v2113, %v2113
    %v2116 = vpack.c.bf16 %v2114, %v2114
    %v2117 = vld [vmem:[#allocation11] sm:$0xf]
    %v2118 = vld [vmem:[#allocation11 + $0x4] sm:$0xf]
    %v2119 = vld [vmem:[#allocation11 + $0x8] sm:$0xf]
    %v2120 = vld [vmem:[#allocation11 + $0xc] sm:$0xf]
    %v2121 = vld [vmem:[#allocation11 + $0x10] sm:$0xf]
    %v2122 = vld [vmem:[#allocation11 + $0x14] sm:$0xf]
    %v2123 = vld [vmem:[#allocation11 + $0x18] sm:$0xf]
    %v2124 = vld [vmem:[#allocation11 + $0x1c] sm:$0xf]
    %v2125 = vld [vmem:[#allocation11 + $0x20] sm:$0xf]
    %v2126 = vld [vmem:[#allocation11 + $0x24] sm:$0xf]
    %v2127 = vld [vmem:[#allocation11 + $0x28] sm:$0xf]
    %v2128 = vld [vmem:[#allocation11 + $0x2c] sm:$0xf]
    %v2129 = vld [vmem:[#allocation11 + $0x30] sm:$0xf]
    %v2130 = vld [vmem:[#allocation11 + $0x34] sm:$0xf]
    %v2131 = vld [vmem:[#allocation11 + $0x38] sm:$0xf]
    %v2132 = vld [vmem:[#allocation11 + $0x3c] sm:$0xf]
    %v2133 = vld [vmem:[#allocation11 + $0x40] sm:$0xf]
    %v2134 = vld [vmem:[#allocation11 + $0x44] sm:$0xf]
    %v2135 = vld [vmem:[#allocation11 + $0x48] sm:$0xf]
    %v2136 = vld [vmem:[#allocation11 + $0x4c] sm:$0xf]
    %v2137 = vld [vmem:[#allocation11 + $0x50] sm:$0xf]
    %v2138 = vld [vmem:[#allocation11 + $0x54] sm:$0xf]
    %v2139 = vld [vmem:[#allocation11 + $0x58] sm:$0xf]
    %v2140 = vld [vmem:[#allocation11 + $0x5c] sm:$0xf]
    %v2141 = vld [vmem:[#allocation11 + $0x60] sm:$0xf]
    %v2142 = vld [vmem:[#allocation11 + $0x64] sm:$0xf]
    %v2143 = vld [vmem:[#allocation11 + $0x68] sm:$0xf]
    %v2144 = vld [vmem:[#allocation11 + $0x6c] sm:$0xf]
    %v2145 = vld [vmem:[#allocation11 + $0x70] sm:$0xf]
    %v2146 = vld [vmem:[#allocation11 + $0x74] sm:$0xf]
    %v2147 = vld [vmem:[#allocation11 + $0x78] sm:$0xf]
    %v2148 = vld [vmem:[#allocation11 + $0x7c] sm:$0xf]
    %v2181 = vunpack.c.l.b16 %v2117
    %v2182 = vunpack.c.l.b16 %v2118
    %v2183 = vunpack.c.l.b16 %v2119
    %v2184 = vunpack.c.l.b16 %v2120
    %v2185 = vunpack.c.l.b16 %v2121
    %v2186 = vunpack.c.l.b16 %v2122
    %v2187 = vunpack.c.l.b16 %v2123
    %v2188 = vunpack.c.l.b16 %v2124
    %v2189 = vunpack.c.l.b16 %v2125
    %v2190 = vunpack.c.l.b16 %v2126
    %v2191 = vunpack.c.l.b16 %v2127
    %v2192 = vunpack.c.l.b16 %v2128
    %v2193 = vunpack.c.l.b16 %v2129
    %v2194 = vunpack.c.l.b16 %v2130
    %v2195 = vunpack.c.l.b16 %v2131
    %v2196 = vunpack.c.l.b16 %v2132
    %v2197 = vunpack.c.l.b16 %v2133
    %v2198 = vunpack.c.l.b16 %v2134
    %v2199 = vunpack.c.l.b16 %v2135
    %v2200 = vunpack.c.l.b16 %v2136
    %v2201 = vunpack.c.l.b16 %v2137
    %v2202 = vunpack.c.l.b16 %v2138
    %v2203 = vunpack.c.l.b16 %v2139
    %v2204 = vunpack.c.l.b16 %v2140
    %v2205 = vunpack.c.l.b16 %v2141
    %v2206 = vunpack.c.l.b16 %v2142
    %v2207 = vunpack.c.l.b16 %v2143
    %v2208 = vunpack.c.l.b16 %v2144
    %v2209 = vunpack.c.l.b16 %v2145
    %v2210 = vunpack.c.l.b16 %v2146
    %v2211 = vunpack.c.l.b16 %v2147
    %v2212 = vunpack.c.l.b16 %v2148
    %v2213 = vpack.c.b16 %v2182, %v2181
    %v2214 = vpack.c.b16 %v2184, %v2183
    %v2215 = vpack.c.b16 %v2186, %v2185
    %v2216 = vpack.c.b16 %v2188, %v2187
    %v2217 = vpack.c.b16 %v2190, %v2189
    %v2218 = vpack.c.b16 %v2192, %v2191
    %v2219 = vpack.c.b16 %v2194, %v2193
    %v2220 = vpack.c.b16 %v2196, %v2195
    %v2221 = vpack.c.b16 %v2198, %v2197
    %v2222 = vpack.c.b16 %v2200, %v2199
    %v2223 = vpack.c.b16 %v2202, %v2201
    %v2224 = vpack.c.b16 %v2204, %v2203
    %v2225 = vpack.c.b16 %v2206, %v2205
    %v2226 = vpack.c.b16 %v2208, %v2207
    %v2227 = vpack.c.b16 %v2210, %v2209
    %v2228 = vpack.c.b16 %v2212, %v2211
    %2245 = vmatprep.subr.bf16.mxu0 0
    %2246 = vmatpush1.bf16.msra.mxu0 %v2213
    %2247 = vmatprep.subr.bf16.mxu0 0
    %2248 = vmatpush1.bf16.msra.mxu0 %v2214
    %2249 = vmatprep.subr.bf16.mxu0 0
    %2250 = vmatpush1.bf16.msra.mxu0 %v2215
    %2251 = vmatprep.subr.bf16.mxu0 0
    %2252 = vmatpush1.bf16.msra.mxu0 %v2216
    %2253 = vmatprep.subr.bf16.mxu0 0
    %2254 = vmatpush1.bf16.msra.mxu0 %v2217
    %2255 = vmatprep.subr.bf16.mxu0 0
    %2256 = vmatpush1.bf16.msra.mxu0 %v2218
    %2257 = vmatprep.subr.bf16.mxu0 0
    %2258 = vmatpush1.bf16.msra.mxu0 %v2219
    %2259 = vmatprep.subr.bf16.mxu0 0
    %2260 = vmatpush1.bf16.msra.mxu0 %v2220
    %2261 = vmatprep.subr.bf16.mxu0 0
    %2262 = vmatpush1.bf16.msra.mxu0 %v2221
    %2263 = vmatprep.subr.bf16.mxu0 0
    %2264 = vmatpush1.bf16.msra.mxu0 %v2222
    %2265 = vmatprep.subr.bf16.mxu0 0
    %2266 = vmatpush1.bf16.msra.mxu0 %v2223
    %2267 = vmatprep.subr.bf16.mxu0 0
    %2268 = vmatpush1.bf16.msra.mxu0 %v2224
    %2269 = vmatprep.subr.bf16.mxu0 0
    %2270 = vmatpush1.bf16.msra.mxu0 %v2225
    %2271 = vmatprep.subr.bf16.mxu0 0
    %2272 = vmatpush1.bf16.msra.mxu0 %v2226
    %2273 = vmatprep.subr.bf16.mxu0 0
    %2274 = vmatpush1.bf16.msra.mxu0 %v2227
    %2275 = vmatprep.subr.bf16.mxu0 0
    %2276 = vmatpush1.bf16.msra.mxu0 %v2228
    %2277 = vmatprep.mubr.bf16.mxu0 %v2116
    %2278 = vmatmul.mubr.bf16.gmra.mrb[0].mxu0 %v2115
    %v2279 = vpop.f32.mrb[0].mxu0
    %v2280 = vadd.f32 0.0, %v2279
    %v2281 = vpop.f32.mrb[0].mxu0
    %v2282 = vpop.f32.mrb[0].mxu0
    %v2283 = vpop.f32.mrb[0].mxu0
    %2284 = vdwg.mxu0
    %v2285 = vmul.f32 %v2280, 20.0
    %2286 = vst [vmem:[#allocation23] sm:$0xff] %v2285
    %v2287 = vpack.c.bf16 %v2098, %v2098
    %v2288 = vpack.c.bf16 %v2100, %v2100
    %v2289 = vld [vmem:[#allocation13] sm:$0xff]
    %v2290 = vld [vmem:[#allocation13 + $0x8] sm:$0xff]
    %v2291 = vld [vmem:[#allocation13 + $0x10] sm:$0xff]
    %v2292 = vld [vmem:[#allocation13 + $0x18] sm:$0xff]
    %v2293 = vld [vmem:[#allocation13 + $0x20] sm:$0xff]
    %v2294 = vld [vmem:[#allocation13 + $0x28] sm:$0xff]
    %v2295 = vld [vmem:[#allocation13 + $0x30] sm:$0xff]
    %v2296 = vld [vmem:[#allocation13 + $0x38] sm:$0xff]
    %v2297 = vld [vmem:[#allocation13 + $0x40] sm:$0xff]
    %v2298 = vld [vmem:[#allocation13 + $0x48] sm:$0xff]
    %v2299 = vld [vmem:[#allocation13 + $0x50] sm:$0xff]
    %v2300 = vld [vmem:[#allocation13 + $0x58] sm:$0xff]
    %v2301 = vld [vmem:[#allocation13 + $0x60] sm:$0xff]
    %v2302 = vld [vmem:[#allocation13 + $0x68] sm:$0xff]
    %v2303 = vld [vmem:[#allocation13 + $0x70] sm:$0xff]
    %v2304 = vld [vmem:[#allocation13 + $0x78] sm:$0xff]
    %v2305 = vld [vmem:[#allocation13 + $0x80] sm:$0xff]
    %v2306 = vld [vmem:[#allocation13 + $0x88] sm:$0xff]
    %v2307 = vld [vmem:[#allocation13 + $0x90] sm:$0xff]
    %v2308 = vld [vmem:[#allocation13 + $0x98] sm:$0xff]
    %v2309 = vld [vmem:[#allocation13 + $0xa0] sm:$0xff]
    %v2310 = vld [vmem:[#allocation13 + $0xa8] sm:$0xff]
    %v2311 = vld [vmem:[#allocation13 + $0xb0] sm:$0xff]
    %v2312 = vld [vmem:[#allocation13 + $0xb8] sm:$0xff]
    %v2313 = vld [vmem:[#allocation13 + $0xc0] sm:$0xff]
    %v2314 = vld [vmem:[#allocation13 + $0xc8] sm:$0xff]
    %v2315 = vld [vmem:[#allocation13 + $0xd0] sm:$0xff]
    %v2316 = vld [vmem:[#allocation13 + $0xd8] sm:$0xff]
    %v2317 = vld [vmem:[#allocation13 + $0xe0] sm:$0xff]
    %v2318 = vld [vmem:[#allocation13 + $0xe8] sm:$0xff]
    %v2319 = vld [vmem:[#allocation13 + $0xf0] sm:$0xff]
    %v2320 = vld [vmem:[#allocation13 + $0xf8] sm:$0xff]
    %v2321 = vld [vmem:[#allocation13 + $0x100] sm:$0xff]
    %v2322 = vld [vmem:[#allocation13 + $0x108] sm:$0xff]
    %v2323 = vld [vmem:[#allocation13 + $0x110] sm:$0xff]
    %v2324 = vld [vmem:[#allocation13 + $0x118] sm:$0xff]
    %v2325 = vld [vmem:[#allocation13 + $0x120] sm:$0xff]
    %v2326 = vld [vmem:[#allocation13 + $0x128] sm:$0xff]
    %v2327 = vld [vmem:[#allocation13 + $0x130] sm:$0xff]
    %v2328 = vld [vmem:[#allocation13 + $0x138] sm:$0xff]
    %v2329 = vld [vmem:[#allocation13 + $0x140] sm:$0xff]
    %v2330 = vld [vmem:[#allocation13 + $0x148] sm:$0xff]
    %v2331 = vld [vmem:[#allocation13 + $0x150] sm:$0xff]
    %v2332 = vld [vmem:[#allocation13 + $0x158] sm:$0xff]
    %v2333 = vld [vmem:[#allocation13 + $0x160] sm:$0xff]
    %v2334 = vld [vmem:[#allocation13 + $0x168] sm:$0xff]
    %v2335 = vld [vmem:[#allocation13 + $0x170] sm:$0xff]
    %v2336 = vld [vmem:[#allocation13 + $0x178] sm:$0xff]
    %v2337 = vld [vmem:[#allocation13 + $0x180] sm:$0xff]
    %v2338 = vld [vmem:[#allocation13 + $0x188] sm:$0xff]
    %v2339 = vld [vmem:[#allocation13 + $0x190] sm:$0xff]
    %v2340 = vld [vmem:[#allocation13 + $0x198] sm:$0xff]
    %v2341 = vld [vmem:[#allocation13 + $0x1a0] sm:$0xff]
    %v2342 = vld [vmem:[#allocation13 + $0x1a8] sm:$0xff]
    %v2343 = vld [vmem:[#allocation13 + $0x1b0] sm:$0xff]
    %v2344 = vld [vmem:[#allocation13 + $0x1b8] sm:$0xff]
    %v2345 = vld [vmem:[#allocation13 + $0x1c0] sm:$0xff]
    %v2346 = vld [vmem:[#allocation13 + $0x1c8] sm:$0xff]
    %v2347 = vld [vmem:[#allocation13 + $0x1d0] sm:$0xff]
    %v2348 = vld [vmem:[#allocation13 + $0x1d8] sm:$0xff]
    %v2349 = vld [vmem:[#allocation13 + $0x1e0] sm:$0xff]
    %v2350 = vld [vmem:[#allocation13 + $0x1e8] sm:$0xff]
    %v2351 = vld [vmem:[#allocation13 + $0x1f0] sm:$0xff]
    %v2352 = vld [vmem:[#allocation13 + $0x1f8] sm:$0xff]
    %v2353 = vld [vmem:[#allocation13 + $0x200] sm:$0xff]
    %v2354 = vld [vmem:[#allocation13 + $0x208] sm:$0xff]
    %v2355 = vld [vmem:[#allocation13 + $0x210] sm:$0xff]
    %v2356 = vld [vmem:[#allocation13 + $0x218] sm:$0xff]
    %v2357 = vld [vmem:[#allocation13 + $0x220] sm:$0xff]
    %v2358 = vld [vmem:[#allocation13 + $0x228] sm:$0xff]
    %v2359 = vld [vmem:[#allocation13 + $0x230] sm:$0xff]
    %v2360 = vld [vmem:[#allocation13 + $0x238] sm:$0xff]
    %v2361 = vld [vmem:[#allocation13 + $0x240] sm:$0xff]
    %v2362 = vld [vmem:[#allocation13 + $0x248] sm:$0xff]
    %v2363 = vld [vmem:[#allocation13 + $0x250] sm:$0xff]
    %v2364 = vld [vmem:[#allocation13 + $0x258] sm:$0xff]
    %v2365 = vld [vmem:[#allocation13 + $0x260] sm:$0xff]
    %v2366 = vld [vmem:[#allocation13 + $0x268] sm:$0xff]
    %v2367 = vld [vmem:[#allocation13 + $0x270] sm:$0xff]
    %v2368 = vld [vmem:[#allocation13 + $0x278] sm:$0xff]
    %v2369 = vld [vmem:[#allocation13 + $0x280] sm:$0xff]
    %v2370 = vld [vmem:[#allocation13 + $0x288] sm:$0xff]
    %v2371 = vld [vmem:[#allocation13 + $0x290] sm:$0xff]
    %v2372 = vld [vmem:[#allocation13 + $0x298] sm:$0xff]
    %v2373 = vld [vmem:[#allocation13 + $0x2a0] sm:$0xff]
    %v2374 = vld [vmem:[#allocation13 + $0x2a8] sm:$0xff]
    %v2375 = vld [vmem:[#allocation13 + $0x2b0] sm:$0xff]
    %v2376 = vld [vmem:[#allocation13 + $0x2b8] sm:$0xff]
    %v2377 = vld [vmem:[#allocation13 + $0x2c0] sm:$0xff]
    %v2378 = vld [vmem:[#allocation13 + $0x2c8] sm:$0xff]
    %v2379 = vld [vmem:[#allocation13 + $0x2d0] sm:$0xff]
    %v2380 = vld [vmem:[#allocation13 + $0x2d8] sm:$0xff]
    %v2381 = vld [vmem:[#allocation13 + $0x2e0] sm:$0xff]
    %v2382 = vld [vmem:[#allocation13 + $0x2e8] sm:$0xff]
    %v2383 = vld [vmem:[#allocation13 + $0x2f0] sm:$0xff]
    %v2384 = vld [vmem:[#allocation13 + $0x2f8] sm:$0xff]
    %v2385 = vld [vmem:[#allocation13 + $0x300] sm:$0xff]
    %v2386 = vld [vmem:[#allocation13 + $0x308] sm:$0xff]
    %v2387 = vld [vmem:[#allocation13 + $0x310] sm:$0xff]
    %v2388 = vld [vmem:[#allocation13 + $0x318] sm:$0xff]
    %v2389 = vld [vmem:[#allocation13 + $0x320] sm:$0xff]
    %v2390 = vld [vmem:[#allocation13 + $0x328] sm:$0xff]
    %v2391 = vld [vmem:[#allocation13 + $0x330] sm:$0xff]
    %v2392 = vld [vmem:[#allocation13 + $0x338] sm:$0xff]
    %v2393 = vld [vmem:[#allocation13 + $0x340] sm:$0xff]
    %v2394 = vld [vmem:[#allocation13 + $0x348] sm:$0xff]
    %v2395 = vld [vmem:[#allocation13 + $0x350] sm:$0xff]
    %v2396 = vld [vmem:[#allocation13 + $0x358] sm:$0xff]
    %v2397 = vld [vmem:[#allocation13 + $0x360] sm:$0xff]
    %v2398 = vld [vmem:[#allocation13 + $0x368] sm:$0xff]
    %v2399 = vld [vmem:[#allocation13 + $0x370] sm:$0xff]
    %v2400 = vld [vmem:[#allocation13 + $0x378] sm:$0xff]
    %v2401 = vld [vmem:[#allocation13 + $0x380] sm:$0xff]
    %v2402 = vld [vmem:[#allocation13 + $0x388] sm:$0xff]
    %v2403 = vld [vmem:[#allocation13 + $0x390] sm:$0xff]
    %v2404 = vld [vmem:[#allocation13 + $0x398] sm:$0xff]
    %v2405 = vld [vmem:[#allocation13 + $0x3a0] sm:$0xff]
    %v2406 = vld [vmem:[#allocation13 + $0x3a8] sm:$0xff]
    %v2407 = vld [vmem:[#allocation13 + $0x3b0] sm:$0xff]
    %v2408 = vld [vmem:[#allocation13 + $0x3b8] sm:$0xff]
    %v2409 = vld [vmem:[#allocation13 + $0x3c0] sm:$0xff]
    %v2410 = vld [vmem:[#allocation13 + $0x3c8] sm:$0xff]
    %v2411 = vld [vmem:[#allocation13 + $0x3d0] sm:$0xff]
    %v2412 = vld [vmem:[#allocation13 + $0x3d8] sm:$0xff]
    %v2413 = vld [vmem:[#allocation13 + $0x3e0] sm:$0xff]
    %v2414 = vld [vmem:[#allocation13 + $0x3e8] sm:$0xff]
    %v2415 = vld [vmem:[#allocation13 + $0x3f0] sm:$0xff]
    %v2416 = vld [vmem:[#allocation13 + $0x3f8] sm:$0xff]
    %v2417 = vld [vmem:[#allocation14] sm:$0xff]
    %v2419 = vlaneseq
    %v2420 = vshrl.u32 %v2419, 7
    %v2421 = vsub.s32 0, %v2420
    %v2422 = vrot.slane %v2417, %v2421
    %v2423 = vlaneseq
    %v2424 = vshrl.u32 %v2423, 7
    %v2425 = vsub.s32 1, %v2424
    %v2426 = vrot.slane %v2417, %v2425
    %v2427 = vlaneseq
    %v2428 = vshrl.u32 %v2427, 7
    %v2429 = vsub.s32 2, %v2428
    %v2430 = vrot.slane %v2417, %v2429
    %v2431 = vlaneseq
    %v2432 = vshrl.u32 %v2431, 7
    %v2433 = vsub.s32 3, %v2432
    %v2434 = vrot.slane %v2417, %v2433
    %v2435 = vlaneseq
    %v2436 = vshrl.u32 %v2435, 7
    %v2437 = vsub.s32 4, %v2436
    %v2438 = vrot.slane %v2417, %v2437
    %v2439 = vlaneseq
    %v2440 = vshrl.u32 %v2439, 7
    %v2441 = vsub.s32 5, %v2440
    %v2442 = vrot.slane %v2417, %v2441
    %v2443 = vlaneseq
    %v2444 = vshrl.u32 %v2443, 7
    %v2445 = vsub.s32 6, %v2444
    %v2446 = vrot.slane %v2417, %v2445
    %v2447 = vlaneseq
    %v2448 = vshrl.u32 %v2447, 7
    %v2449 = vsub.s32 7, %v2448
    %v2450 = vrot.slane %v2417, %v2449
    %v2587 = vunpack.c.l.b16 %v2289
    %v2588 = vunpack.c.h.b16 %v2289
    %v2589 = vunpack.c.l.b16 %v2290
    %v2590 = vunpack.c.h.b16 %v2290
    %v2591 = vunpack.c.l.b16 %v2291
    %v2592 = vunpack.c.h.b16 %v2291
    %v2593 = vunpack.c.l.b16 %v2292
    %v2594 = vunpack.c.h.b16 %v2292
    %v2595 = vunpack.c.l.b16 %v2293
    %v2596 = vunpack.c.h.b16 %v2293
    %v2597 = vunpack.c.l.b16 %v2294
    %v2598 = vunpack.c.h.b16 %v2294
    %v2599 = vunpack.c.l.b16 %v2295
    %v2600 = vunpack.c.h.b16 %v2295
    %v2601 = vunpack.c.l.b16 %v2296
    %v2602 = vunpack.c.h.b16 %v2296
    %v2603 = vunpack.c.l.b16 %v2297
    %v2604 = vunpack.c.h.b16 %v2297
    %v2605 = vunpack.c.l.b16 %v2298
    %v2606 = vunpack.c.h.b16 %v2298
    %v2607 = vunpack.c.l.b16 %v2299
    %v2608 = vunpack.c.h.b16 %v2299
    %v2609 = vunpack.c.l.b16 %v2300
    %v2610 = vunpack.c.h.b16 %v2300
    %v2611 = vunpack.c.l.b16 %v2301
    %v2612 = vunpack.c.h.b16 %v2301
    %v2613 = vunpack.c.l.b16 %v2302
    %v2614 = vunpack.c.h.b16 %v2302
    %v2615 = vunpack.c.l.b16 %v2303
    %v2616 = vunpack.c.h.b16 %v2303
    %v2617 = vunpack.c.l.b16 %v2304
    %v2618 = vunpack.c.h.b16 %v2304
    %v2619 = vunpack.c.l.b16 %v2305
    %v2620 = vunpack.c.h.b16 %v2305
    %v2621 = vunpack.c.l.b16 %v2306
    %v2622 = vunpack.c.h.b16 %v2306
    %v2623 = vunpack.c.l.b16 %v2307
    %v2624 = vunpack.c.h.b16 %v2307
    %v2625 = vunpack.c.l.b16 %v2308
    %v2626 = vunpack.c.h.b16 %v2308
    %v2627 = vunpack.c.l.b16 %v2309
    %v2628 = vunpack.c.h.b16 %v2309
    %v2629 = vunpack.c.l.b16 %v2310
    %v2630 = vunpack.c.h.b16 %v2310
    %v2631 = vunpack.c.l.b16 %v2311
    %v2632 = vunpack.c.h.b16 %v2311
    %v2633 = vunpack.c.l.b16 %v2312
    %v2634 = vunpack.c.h.b16 %v2312
    %v2635 = vunpack.c.l.b16 %v2313
    %v2636 = vunpack.c.h.b16 %v2313
    %v2637 = vunpack.c.l.b16 %v2314
    %v2638 = vunpack.c.h.b16 %v2314
    %v2639 = vunpack.c.l.b16 %v2315
    %v2640 = vunpack.c.h.b16 %v2315
    %v2641 = vunpack.c.l.b16 %v2316
    %v2642 = vunpack.c.h.b16 %v2316
    %v2643 = vunpack.c.l.b16 %v2317
    %v2644 = vunpack.c.h.b16 %v2317
    %v2645 = vunpack.c.l.b16 %v2318
    %v2646 = vunpack.c.h.b16 %v2318
    %v2647 = vunpack.c.l.b16 %v2319
    %v2648 = vunpack.c.h.b16 %v2319
    %v2649 = vunpack.c.l.b16 %v2320
    %v2650 = vunpack.c.h.b16 %v2320
    %v2651 = vunpack.c.l.b16 %v2321
    %v2652 = vunpack.c.h.b16 %v2321
    %v2653 = vunpack.c.l.b16 %v2322
    %v2654 = vunpack.c.h.b16 %v2322
    %v2655 = vunpack.c.l.b16 %v2323
    %v2656 = vunpack.c.h.b16 %v2323
    %v2657 = vunpack.c.l.b16 %v2324
    %v2658 = vunpack.c.h.b16 %v2324
    %v2659 = vunpack.c.l.b16 %v2325
    %v2660 = vunpack.c.h.b16 %v2325
    %v2661 = vunpack.c.l.b16 %v2326
    %v2662 = vunpack.c.h.b16 %v2326
    %v2663 = vunpack.c.l.b16 %v2327
    %v2664 = vunpack.c.h.b16 %v2327
    %v2665 = vunpack.c.l.b16 %v2328
    %v2666 = vunpack.c.h.b16 %v2328
    %v2667 = vunpack.c.l.b16 %v2329
    %v2668 = vunpack.c.h.b16 %v2329
    %v2669 = vunpack.c.l.b16 %v2330
    %v2670 = vunpack.c.h.b16 %v2330
    %v2671 = vunpack.c.l.b16 %v2331
    %v2672 = vunpack.c.h.b16 %v2331
    %v2673 = vunpack.c.l.b16 %v2332
    %v2674 = vunpack.c.h.b16 %v2332
    %v2675 = vunpack.c.l.b16 %v2333
    %v2676 = vunpack.c.h.b16 %v2333
    %v2677 = vunpack.c.l.b16 %v2334
    %v2678 = vunpack.c.h.b16 %v2334
    %v2679 = vunpack.c.l.b16 %v2335
    %v2680 = vunpack.c.h.b16 %v2335
    %v2681 = vunpack.c.l.b16 %v2336
    %v2682 = vunpack.c.h.b16 %v2336
    %v2683 = vunpack.c.l.b16 %v2337
    %v2684 = vunpack.c.h.b16 %v2337
    %v2685 = vunpack.c.l.b16 %v2338
    %v2686 = vunpack.c.h.b16 %v2338
    %v2687 = vunpack.c.l.b16 %v2339
    %v2688 = vunpack.c.h.b16 %v2339
    %v2689 = vunpack.c.l.b16 %v2340
    %v2690 = vunpack.c.h.b16 %v2340
    %v2691 = vunpack.c.l.b16 %v2341
    %v2692 = vunpack.c.h.b16 %v2341
    %v2693 = vunpack.c.l.b16 %v2342
    %v2694 = vunpack.c.h.b16 %v2342
    %v2695 = vunpack.c.l.b16 %v2343
    %v2696 = vunpack.c.h.b16 %v2343
    %v2697 = vunpack.c.l.b16 %v2344
    %v2698 = vunpack.c.h.b16 %v2344
    %v2699 = vunpack.c.l.b16 %v2345
    %v2700 = vunpack.c.h.b16 %v2345
    %v2701 = vunpack.c.l.b16 %v2346
    %v2702 = vunpack.c.h.b16 %v2346
    %v2703 = vunpack.c.l.b16 %v2347
    %v2704 = vunpack.c.h.b16 %v2347
    %v2705 = vunpack.c.l.b16 %v2348
    %v2706 = vunpack.c.h.b16 %v2348
    %v2707 = vunpack.c.l.b16 %v2349
    %v2708 = vunpack.c.h.b16 %v2349
    %v2709 = vunpack.c.l.b16 %v2350
    %v2710 = vunpack.c.h.b16 %v2350
    %v2711 = vunpack.c.l.b16 %v2351
    %v2712 = vunpack.c.h.b16 %v2351
    %v2713 = vunpack.c.l.b16 %v2352
    %v2714 = vunpack.c.h.b16 %v2352
    %v2715 = vunpack.c.l.b16 %v2353
    %v2716 = vunpack.c.h.b16 %v2353
    %v2717 = vunpack.c.l.b16 %v2354
    %v2718 = vunpack.c.h.b16 %v2354
    %v2719 = vunpack.c.l.b16 %v2355
    %v2720 = vunpack.c.h.b16 %v2355
    %v2721 = vunpack.c.l.b16 %v2356
    %v2722 = vunpack.c.h.b16 %v2356
    %v2723 = vunpack.c.l.b16 %v2357
    %v2724 = vunpack.c.h.b16 %v2357
    %v2725 = vunpack.c.l.b16 %v2358
    %v2726 = vunpack.c.h.b16 %v2358
    %v2727 = vunpack.c.l.b16 %v2359
    %v2728 = vunpack.c.h.b16 %v2359
    %v2729 = vunpack.c.l.b16 %v2360
    %v2730 = vunpack.c.h.b16 %v2360
    %v2731 = vunpack.c.l.b16 %v2361
    %v2732 = vunpack.c.h.b16 %v2361
    %v2733 = vunpack.c.l.b16 %v2362
    %v2734 = vunpack.c.h.b16 %v2362
    %v2735 = vunpack.c.l.b16 %v2363
    %v2736 = vunpack.c.h.b16 %v2363
    %v2737 = vunpack.c.l.b16 %v2364
    %v2738 = vunpack.c.h.b16 %v2364
    %v2739 = vunpack.c.l.b16 %v2365
    %v2740 = vunpack.c.h.b16 %v2365
    %v2741 = vunpack.c.l.b16 %v2366
    %v2742 = vunpack.c.h.b16 %v2366
    %v2743 = vunpack.c.l.b16 %v2367
    %v2744 = vunpack.c.h.b16 %v2367
    %v2745 = vunpack.c.l.b16 %v2368
    %v2746 = vunpack.c.h.b16 %v2368
    %v2747 = vunpack.c.l.b16 %v2369
    %v2748 = vunpack.c.h.b16 %v2369
    %v2749 = vunpack.c.l.b16 %v2370
    %v2750 = vunpack.c.h.b16 %v2370
    %v2751 = vunpack.c.l.b16 %v2371
    %v2752 = vunpack.c.h.b16 %v2371
    %v2753 = vunpack.c.l.b16 %v2372
    %v2754 = vunpack.c.h.b16 %v2372
    %v2755 = vunpack.c.l.b16 %v2373
    %v2756 = vunpack.c.h.b16 %v2373
    %v2757 = vunpack.c.l.b16 %v2374
    %v2758 = vunpack.c.h.b16 %v2374
    %v2759 = vunpack.c.l.b16 %v2375
    %v2760 = vunpack.c.h.b16 %v2375
    %v2761 = vunpack.c.l.b16 %v2376
    %v2762 = vunpack.c.h.b16 %v2376
    %v2763 = vunpack.c.l.b16 %v2377
    %v2764 = vunpack.c.h.b16 %v2377
    %v2765 = vunpack.c.l.b16 %v2378
    %v2766 = vunpack.c.h.b16 %v2378
    %v2767 = vunpack.c.l.b16 %v2379
    %v2768 = vunpack.c.h.b16 %v2379
    %v2769 = vunpack.c.l.b16 %v2380
    %v2770 = vunpack.c.h.b16 %v2380
    %v2771 = vunpack.c.l.b16 %v2381
    %v2772 = vunpack.c.h.b16 %v2381
    %v2773 = vunpack.c.l.b16 %v2382
    %v2774 = vunpack.c.h.b16 %v2382
    %v2775 = vunpack.c.l.b16 %v2383
    %v2776 = vunpack.c.h.b16 %v2383
    %v2777 = vunpack.c.l.b16 %v2384
    %v2778 = vunpack.c.h.b16 %v2384
    %v2779 = vunpack.c.l.b16 %v2385
    %v2780 = vunpack.c.h.b16 %v2385
    %v2781 = vunpack.c.l.b16 %v2386
    %v2782 = vunpack.c.h.b16 %v2386
    %v2783 = vunpack.c.l.b16 %v2387
    %v2784 = vunpack.c.h.b16 %v2387
    %v2785 = vunpack.c.l.b16 %v2388
    %v2786 = vunpack.c.h.b16 %v2388
    %v2787 = vunpack.c.l.b16 %v2389
    %v2788 = vunpack.c.h.b16 %v2389
    %v2789 = vunpack.c.l.b16 %v2390
    %v2790 = vunpack.c.h.b16 %v2390
    %v2791 = vunpack.c.l.b16 %v2391
    %v2792 = vunpack.c.h.b16 %v2391
    %v2793 = vunpack.c.l.b16 %v2392
    %v2794 = vunpack.c.h.b16 %v2392
    %v2795 = vunpack.c.l.b16 %v2393
    %v2796 = vunpack.c.h.b16 %v2393
    %v2797 = vunpack.c.l.b16 %v2394
    %v2798 = vunpack.c.h.b16 %v2394
    %v2799 = vunpack.c.l.b16 %v2395
    %v2800 = vunpack.c.h.b16 %v2395
    %v2801 = vunpack.c.l.b16 %v2396
    %v2802 = vunpack.c.h.b16 %v2396
    %v2803 = vunpack.c.l.b16 %v2397
    %v2804 = vunpack.c.h.b16 %v2397
    %v2805 = vunpack.c.l.b16 %v2398
    %v2806 = vunpack.c.h.b16 %v2398
    %v2807 = vunpack.c.l.b16 %v2399
    %v2808 = vunpack.c.h.b16 %v2399
    %v2809 = vunpack.c.l.b16 %v2400
    %v2810 = vunpack.c.h.b16 %v2400
    %v2811 = vunpack.c.l.b16 %v2401
    %v2812 = vunpack.c.h.b16 %v2401
    %v2813 = vunpack.c.l.b16 %v2402
    %v2814 = vunpack.c.h.b16 %v2402
    %v2815 = vunpack.c.l.b16 %v2403
    %v2816 = vunpack.c.h.b16 %v2403
    %v2817 = vunpack.c.l.b16 %v2404
    %v2818 = vunpack.c.h.b16 %v2404
    %v2819 = vunpack.c.l.b16 %v2405
    %v2820 = vunpack.c.h.b16 %v2405
    %v2821 = vunpack.c.l.b16 %v2406
    %v2822 = vunpack.c.h.b16 %v2406
    %v2823 = vunpack.c.l.b16 %v2407
    %v2824 = vunpack.c.h.b16 %v2407
    %v2825 = vunpack.c.l.b16 %v2408
    %v2826 = vunpack.c.h.b16 %v2408
    %v2827 = vunpack.c.l.b16 %v2409
    %v2828 = vunpack.c.h.b16 %v2409
    %v2829 = vunpack.c.l.b16 %v2410
    %v2830 = vunpack.c.h.b16 %v2410
    %v2831 = vunpack.c.l.b16 %v2411
    %v2832 = vunpack.c.h.b16 %v2411
    %v2833 = vunpack.c.l.b16 %v2412
    %v2834 = vunpack.c.h.b16 %v2412
    %v2835 = vunpack.c.l.b16 %v2413
    %v2836 = vunpack.c.h.b16 %v2413
    %v2837 = vunpack.c.l.b16 %v2414
    %v2838 = vunpack.c.h.b16 %v2414
    %v2839 = vunpack.c.l.b16 %v2415
    %v2840 = vunpack.c.h.b16 %v2415
    %v2841 = vunpack.c.l.b16 %v2416
    %v2842 = vunpack.c.h.b16 %v2416
    %v2843 = vpack.c.b16 %v2595, %v2587
    %v2844 = vpack.c.b16 %v2596, %v2588
    %v2845 = vpack.c.b16 %v2597, %v2589
    %v2846 = vpack.c.b16 %v2598, %v2590
    %v2847 = vpack.c.b16 %v2599, %v2591
    %v2848 = vpack.c.b16 %v2600, %v2592
    %v2849 = vpack.c.b16 %v2601, %v2593
    %v2850 = vpack.c.b16 %v2602, %v2594
    %v2851 = vpack.c.b16 %v2611, %v2603
    %v2852 = vpack.c.b16 %v2612, %v2604
    %v2853 = vpack.c.b16 %v2613, %v2605
    %v2854 = vpack.c.b16 %v2614, %v2606
    %v2855 = vpack.c.b16 %v2615, %v2607
    %v2856 = vpack.c.b16 %v2616, %v2608
    %v2857 = vpack.c.b16 %v2617, %v2609
    %v2858 = vpack.c.b16 %v2618, %v2610
    %v2859 = vpack.c.b16 %v2627, %v2619
    %v2860 = vpack.c.b16 %v2628, %v2620
    %v2861 = vpack.c.b16 %v2629, %v2621
    %v2862 = vpack.c.b16 %v2630, %v2622
    %v2863 = vpack.c.b16 %v2631, %v2623
    %v2864 = vpack.c.b16 %v2632, %v2624
    %v2865 = vpack.c.b16 %v2633, %v2625
    %v2866 = vpack.c.b16 %v2634, %v2626
    %v2867 = vpack.c.b16 %v2643, %v2635
    %v2868 = vpack.c.b16 %v2644, %v2636
    %v2869 = vpack.c.b16 %v2645, %v2637
    %v2870 = vpack.c.b16 %v2646, %v2638
    %v2871 = vpack.c.b16 %v2647, %v2639
    %v2872 = vpack.c.b16 %v2648, %v2640
    %v2873 = vpack.c.b16 %v2649, %v2641
    %v2874 = vpack.c.b16 %v2650, %v2642
    %v2875 = vpack.c.b16 %v2659, %v2651
    %v2876 = vpack.c.b16 %v2660, %v2652
    %v2877 = vpack.c.b16 %v2661, %v2653
    %v2878 = vpack.c.b16 %v2662, %v2654
    %v2879 = vpack.c.b16 %v2663, %v2655
    %v2880 = vpack.c.b16 %v2664, %v2656
    %v2881 = vpack.c.b16 %v2665, %v2657
    %v2882 = vpack.c.b16 %v2666, %v2658
    %v2883 = vpack.c.b16 %v2675, %v2667
    %v2884 = vpack.c.b16 %v2676, %v2668
    %v2885 = vpack.c.b16 %v2677, %v2669
    %v2886 = vpack.c.b16 %v2678, %v2670
    %v2887 = vpack.c.b16 %v2679, %v2671
    %v2888 = vpack.c.b16 %v2680, %v2672
    %v2889 = vpack.c.b16 %v2681, %v2673
    %v2890 = vpack.c.b16 %v2682, %v2674
    %v2891 = vpack.c.b16 %v2691, %v2683
    %v2892 = vpack.c.b16 %v2692, %v2684
    %v2893 = vpack.c.b16 %v2693, %v2685
    %v2894 = vpack.c.b16 %v2694, %v2686
    %v2895 = vpack.c.b16 %v2695, %v2687
    %v2896 = vpack.c.b16 %v2696, %v2688
    %v2897 = vpack.c.b16 %v2697, %v2689
    %v2898 = vpack.c.b16 %v2698, %v2690
    %v2899 = vpack.c.b16 %v2707, %v2699
    %v2900 = vpack.c.b16 %v2708, %v2700
    %v2901 = vpack.c.b16 %v2709, %v2701
    %v2902 = vpack.c.b16 %v2710, %v2702
    %v2903 = vpack.c.b16 %v2711, %v2703
    %v2904 = vpack.c.b16 %v2712, %v2704
    %v2905 = vpack.c.b16 %v2713, %v2705
    %v2906 = vpack.c.b16 %v2714, %v2706
    %v2907 = vpack.c.b16 %v2723, %v2715
    %v2908 = vpack.c.b16 %v2724, %v2716
    %v2909 = vpack.c.b16 %v2725, %v2717
    %v2910 = vpack.c.b16 %v2726, %v2718
    %v2911 = vpack.c.b16 %v2727, %v2719
    %v2912 = vpack.c.b16 %v2728, %v2720
    %v2913 = vpack.c.b16 %v2729, %v2721
    %v2914 = vpack.c.b16 %v2730, %v2722
    %v2915 = vpack.c.b16 %v2739, %v2731
    %v2916 = vpack.c.b16 %v2740, %v2732
    %v2917 = vpack.c.b16 %v2741, %v2733
    %v2918 = vpack.c.b16 %v2742, %v2734
    %v2919 = vpack.c.b16 %v2743, %v2735
    %v2920 = vpack.c.b16 %v2744, %v2736
    %v2921 = vpack.c.b16 %v2745, %v2737
    %v2922 = vpack.c.b16 %v2746, %v2738
    %v2923 = vpack.c.b16 %v2755, %v2747
    %v2924 = vpack.c.b16 %v2756, %v2748
    %v2925 = vpack.c.b16 %v2757, %v2749
    %v2926 = vpack.c.b16 %v2758, %v2750
    %v2927 = vpack.c.b16 %v2759, %v2751
    %v2928 = vpack.c.b16 %v2760, %v2752
    %v2929 = vpack.c.b16 %v2761, %v2753
    %v2930 = vpack.c.b16 %v2762, %v2754
    %v2931 = vpack.c.b16 %v2771, %v2763
    %v2932 = vpack.c.b16 %v2772, %v2764
    %v2933 = vpack.c.b16 %v2773, %v2765
    %v2934 = vpack.c.b16 %v2774, %v2766
    %v2935 = vpack.c.b16 %v2775, %v2767
    %v2936 = vpack.c.b16 %v2776, %v2768
    %v2937 = vpack.c.b16 %v2777, %v2769
    %v2938 = vpack.c.b16 %v2778, %v2770
    %v2939 = vpack.c.b16 %v2787, %v2779
    %v2940 = vpack.c.b16 %v2788, %v2780
    %v2941 = vpack.c.b16 %v2789, %v2781
    %v2942 = vpack.c.b16 %v2790, %v2782
    %v2943 = vpack.c.b16 %v2791, %v2783
    %v2944 = vpack.c.b16 %v2792, %v2784
    %v2945 = vpack.c.b16 %v2793, %v2785
    %v2946 = vpack.c.b16 %v2794, %v2786
    %v2947 = vpack.c.b16 %v2803, %v2795
    %v2948 = vpack.c.b16 %v2804, %v2796
    %v2949 = vpack.c.b16 %v2805, %v2797
    %v2950 = vpack.c.b16 %v2806, %v2798
    %v2951 = vpack.c.b16 %v2807, %v2799
    %v2952 = vpack.c.b16 %v2808, %v2800
    %v2953 = vpack.c.b16 %v2809, %v2801
    %v2954 = vpack.c.b16 %v2810, %v2802
    %v2955 = vpack.c.b16 %v2819, %v2811
    %v2956 = vpack.c.b16 %v2820, %v2812
    %v2957 = vpack.c.b16 %v2821, %v2813
    %v2958 = vpack.c.b16 %v2822, %v2814
    %v2959 = vpack.c.b16 %v2823, %v2815
    %v2960 = vpack.c.b16 %v2824, %v2816
    %v2961 = vpack.c.b16 %v2825, %v2817
    %v2962 = vpack.c.b16 %v2826, %v2818
    %v2963 = vpack.c.b16 %v2835, %v2827
    %v2964 = vpack.c.b16 %v2836, %v2828
    %v2965 = vpack.c.b16 %v2837, %v2829
    %v2966 = vpack.c.b16 %v2838, %v2830
    %v2967 = vpack.c.b16 %v2839, %v2831
    %v2968 = vpack.c.b16 %v2840, %v2832
    %v2969 = vpack.c.b16 %v2841, %v2833
    %v2970 = vpack.c.b16 %v2842, %v2834
    %3099 = vmatprep.subr.bf16.mxu0 %v2844
    %3100 = vmatpush1.bf16.msra.mxu0 %v2843
    %3101 = vmatprep.subr.bf16.mxu0 %v2852
    %3102 = vmatpush1.bf16.msra.mxu0 %v2851
    %3103 = vmatprep.subr.bf16.mxu0 %v2860
    %3104 = vmatpush1.bf16.msra.mxu0 %v2859
    %3105 = vmatprep.subr.bf16.mxu0 %v2868
    %3106 = vmatpush1.bf16.msra.mxu0 %v2867
    %3107 = vmatprep.subr.bf16.mxu0 %v2876
    %3108 = vmatpush1.bf16.msra.mxu0 %v2875
    %3109 = vmatprep.subr.bf16.mxu0 %v2884
    %3110 = vmatpush1.bf16.msra.mxu0 %v2883
    %3111 = vmatprep.subr.bf16.mxu0 %v2892
    %3112 = vmatpush1.bf16.msra.mxu0 %v2891
    %3113 = vmatprep.subr.bf16.mxu0 %v2900
    %3114 = vmatpush1.bf16.msra.mxu0 %v2899
    %3115 = vmatprep.subr.bf16.mxu0 %v2908
    %3116 = vmatpush1.bf16.msra.mxu0 %v2907
    %3117 = vmatprep.subr.bf16.mxu0 %v2916
    %3118 = vmatpush1.bf16.msra.mxu0 %v2915
    %3119 = vmatprep.subr.bf16.mxu0 %v2924
    %3120 = vmatpush1.bf16.msra.mxu0 %v2923
    %3121 = vmatprep.subr.bf16.mxu0 %v2932
    %3122 = vmatpush1.bf16.msra.mxu0 %v2931
    %3123 = vmatprep.subr.bf16.mxu0 %v2940
    %3124 = vmatpush1.bf16.msra.mxu0 %v2939
    %3125 = vmatprep.subr.bf16.mxu0 %v2948
    %3126 = vmatpush1.bf16.msra.mxu0 %v2947
    %3127 = vmatprep.subr.bf16.mxu0 %v2956
    %3128 = vmatpush1.bf16.msra.mxu0 %v2955
    %3129 = vmatprep.subr.bf16.mxu0 %v2964
    %3130 = vmatpush1.bf16.msra.mxu0 %v2963
    %3131 = vmatprep.mubr.bf16.mxu0 %v2288
    %3132 = vmatmul.mubr.bf16.gmra.mrb[0].mxu0 %v2287
    %v3133 = vpop.f32.mrb[0].mxu0
    %v3134 = vadd.f32 %v2422, %v3133
    %v3135 = vpop.f32.mrb[0].mxu0
    %v3136 = vadd.f32 %v2426, %v3135
    %v3137 = vpop.f32.mrb[0].mxu0
    %v3138 = vpop.f32.mrb[0].mxu0
    %3139 = vdwg.mxu0
    %3140 = vmatprep.subr.bf16.mxu0 %v2846
    %3141 = vmatpush1.bf16.msra.mxu0 %v2845
    %3142 = vmatprep.subr.bf16.mxu0 %v2854
    %3143 = vmatpush1.bf16.msra.mxu0 %v2853
    %3144 = vmatprep.subr.bf16.mxu0 %v2862
    %3145 = vmatpush1.bf16.msra.mxu0 %v2861
    %3146 = vmatprep.subr.bf16.mxu0 %v2870
    %3147 = vmatpush1.bf16.msra.mxu0 %v2869
    %3148 = vmatprep.subr.bf16.mxu0 %v2878
    %3149 = vmatpush1.bf16.msra.mxu0 %v2877
    %3150 = vmatprep.subr.bf16.mxu0 %v2886
    %3151 = vmatpush1.bf16.msra.mxu0 %v2885
    %3152 = vmatprep.subr.bf16.mxu0 %v2894
    %3153 = vmatpush1.bf16.msra.mxu0 %v2893
    %3154 = vmatprep.subr.bf16.mxu0 %v2902
    %3155 = vmatpush1.bf16.msra.mxu0 %v2901
    %3156 = vmatprep.subr.bf16.mxu0 %v2910
    %3157 = vmatpush1.bf16.msra.mxu0 %v2909
    %3158 = vmatprep.subr.bf16.mxu0 %v2918
    %3159 = vmatpush1.bf16.msra.mxu0 %v2917
    %3160 = vmatprep.subr.bf16.mxu0 %v2926
    %3161 = vmatpush1.bf16.msra.mxu0 %v2925
    %3162 = vmatprep.subr.bf16.mxu0 %v2934
    %3163 = vmatpush1.bf16.msra.mxu0 %v2933
    %3164 = vmatprep.subr.bf16.mxu0 %v2942
    %3165 = vmatpush1.bf16.msra.mxu0 %v2941
    %3166 = vmatprep.subr.bf16.mxu0 %v2950
    %3167 = vmatpush1.bf16.msra.mxu0 %v2949
    %3168 = vmatprep.subr.bf16.mxu0 %v2958
    %3169 = vmatpush1.bf16.msra.mxu0 %v2957
    %3170 = vmatprep.subr.bf16.mxu0 %v2966
    %3171 = vmatpush1.bf16.msra.mxu0 %v2965
    %3172 = vmatprep.mubr.bf16.mxu0 %v2288
    %3173 = vmatmul.mubr.bf16.gmra.mrb[0].mxu0 %v2287
    %v3174 = vpop.f32.mrb[0].mxu0
    %v3175 = vadd.f32 %v2430, %v3174
    %v3176 = vpop.f32.mrb[0].mxu0
    %v3177 = vadd.f32 %v2434, %v3176
    %v3178 = vpop.f32.mrb[0].mxu0
    %v3179 = vpop.f32.mrb[0].mxu0
    %3180 = vdwg.mxu0
    %3181 = vmatprep.subr.bf16.mxu0 %v2848
    %3182 = vmatpush1.bf16.msra.mxu0 %v2847
    %3183 = vmatprep.subr.bf16.mxu0 %v2856
    %3184 = vmatpush1.bf16.msra.mxu0 %v2855
    %3185 = vmatprep.subr.bf16.mxu0 %v2864
    %3186 = vmatpush1.bf16.msra.mxu0 %v2863
    %3187 = vmatprep.subr.bf16.mxu0 %v2872
    %3188 = vmatpush1.bf16.msra.mxu0 %v2871
    %3189 = vmatprep.subr.bf16.mxu0 %v2880
    %3190 = vmatpush1.bf16.msra.mxu0 %v2879
    %3191 = vmatprep.subr.bf16.mxu0 %v2888
    %3192 = vmatpush1.bf16.msra.mxu0 %v2887
    %3193 = vmatprep.subr.bf16.mxu0 %v2896
    %3194 = vmatpush1.bf16.msra.mxu0 %v2895
    %3195 = vmatprep.subr.bf16.mxu0 %v2904
    %3196 = vmatpush1.bf16.msra.mxu0 %v2903
    %3197 = vmatprep.subr.bf16.mxu0 %v2912
    %3198 = vmatpush1.bf16.msra.mxu0 %v2911
    %3199 = vmatprep.subr.bf16.mxu0 %v2920
    %3200 = vmatpush1.bf16.msra.mxu0 %v2919
    %3201 = vmatprep.subr.bf16.mxu0 %v2928
    %3202 = vmatpush1.bf16.msra.mxu0 %v2927
    %3203 = vmatprep.subr.bf16.mxu0 %v2936
    %3204 = vmatpush1.bf16.msra.mxu0 %v2935
    %3205 = vmatprep.subr.bf16.mxu0 %v2944
    %3206 = vmatpush1.bf16.msra.mxu0 %v2943
    %3207 = vmatprep.subr.bf16.mxu0 %v2952
    %3208 = vmatpush1.bf16.msra.mxu0 %v2951
    %3209 = vmatprep.subr.bf16.mxu0 %v2960
    %3210 = vmatpush1.bf16.msra.mxu0 %v2959
    %3211 = vmatprep.subr.bf16.mxu0 %v2968
    %3212 = vmatpush1.bf16.msra.mxu0 %v2967
    %3213 = vmatprep.mubr.bf16.mxu0 %v2288
    %3214 = vmatmul.mubr.bf16.gmra.mrb[0].mxu0 %v2287
    %v3215 = vpop.f32.mrb[0].mxu0
    %v3216 = vadd.f32 %v2438, %v3215
    %v3217 = vpop.f32.mrb[0].mxu0
    %v3218 = vadd.f32 %v2442, %v3217
    %v3219 = vpop.f32.mrb[0].mxu0
    %v3220 = vpop.f32.mrb[0].mxu0
    %3221 = vdwg.mxu0
    %3222 = vmatprep.subr.bf16.mxu0 %v2850
    %3223 = vmatpush1.bf16.msra.mxu0 %v2849
    %3224 = vmatprep.subr.bf16.mxu0 %v2858
    %3225 = vmatpush1.bf16.msra.mxu0 %v2857
    %3226 = vmatprep.subr.bf16.mxu0 %v2866
    %3227 = vmatpush1.bf16.msra.mxu0 %v2865
    %3228 = vmatprep.subr.bf16.mxu0 %v2874
    %3229 = vmatpush1.bf16.msra.mxu0 %v2873
    %3230 = vmatprep.subr.bf16.mxu0 %v2882
    %3231 = vmatpush1.bf16.msra.mxu0 %v2881
    %3232 = vmatprep.subr.bf16.mxu0 %v2890
    %3233 = vmatpush1.bf16.msra.mxu0 %v2889
    %3234 = vmatprep.subr.bf16.mxu0 %v2898
    %3235 = vmatpush1.bf16.msra.mxu0 %v2897
    %3236 = vmatprep.subr.bf16.mxu0 %v2906
    %3237 = vmatpush1.bf16.msra.mxu0 %v2905
    %3238 = vmatprep.subr.bf16.mxu0 %v2914
    %3239 = vmatpush1.bf16.msra.mxu0 %v2913
    %3240 = vmatprep.subr.bf16.mxu0 %v2922
    %3241 = vmatpush1.bf16.msra.mxu0 %v2921
    %3242 = vmatprep.subr.bf16.mxu0 %v2930
    %3243 = vmatpush1.bf16.msra.mxu0 %v2929
    %3244 = vmatprep.subr.bf16.mxu0 %v2938
    %3245 = vmatpush1.bf16.msra.mxu0 %v2937
    %3246 = vmatprep.subr.bf16.mxu0 %v2946
    %3247 = vmatpush1.bf16.msra.mxu0 %v2945
    %3248 = vmatprep.subr.bf16.mxu0 %v2954
    %3249 = vmatpush1.bf16.msra.mxu0 %v2953
    %3250 = vmatprep.subr.bf16.mxu0 %v2962
    %3251 = vmatpush1.bf16.msra.mxu0 %v2961
    %3252 = vmatprep.subr.bf16.mxu0 %v2970
    %3253 = vmatpush1.bf16.msra.mxu0 %v2969
    %3254 = vmatprep.mubr.bf16.mxu0 %v2288
    %3255 = vmatmul.mubr.bf16.gmra.mrb[0].mxu0 %v2287
    %v3256 = vpop.f32.mrb[0].mxu0
    %v3257 = vadd.f32 %v2446, %v3256
    %v3258 = vpop.f32.mrb[0].mxu0
    %v3259 = vadd.f32 %v2450, %v3258
    %v3260 = vpop.f32.mrb[0].mxu0
    %v3261 = vpop.f32.mrb[0].mxu0
    %3262 = vdwg.mxu0
    %v3263 = vmax.f32 %v3134, 0.0
    %v3264 = vmax.f32 %v3136, 0.0
    %v3265 = vmax.f32 %v3175, 0.0
    %v3266 = vmax.f32 %v3177, 0.0
    %v3267 = vmax.f32 %v3216, 0.0
    %v3268 = vmax.f32 %v3218, 0.0
    %v3269 = vmax.f32 %v3257, 0.0
    %v3270 = vmax.f32 %v3259, 0.0
    %v3271 = vld [vmem:[#allocation5] sm:$0xff]
    %v3272 = vld [vmem:[#allocation5 + $0x8] sm:$0xff]
    %v3273 = vld [vmem:[#allocation5 + $0x10] sm:$0xff]
    %v3274 = vld [vmem:[#allocation5 + $0x18] sm:$0xff]
    %v3275 = vunpack.c.l.bf16 %v3271
    %v3276 = vunpack.c.h.bf16 %v3271
    %v3277 = vunpack.c.l.bf16 %v3272
    %v3278 = vunpack.c.h.bf16 %v3272
    %v3279 = vunpack.c.l.bf16 %v3273
    %v3280 = vunpack.c.h.bf16 %v3273
    %v3281 = vunpack.c.l.bf16 %v3274
    %v3282 = vunpack.c.h.bf16 %v3274
    %v3283 = vmul.f32 %v3263, %v3275
    %v3284 = vmul.f32 %v3264, %v3276
    %v3285 = vmul.f32 %v3265, %v3277
    %v3286 = vmul.f32 %v3266, %v3278
    %v3287 = vmul.f32 %v3267, %v3279
    %v3288 = vmul.f32 %v3268, %v3280
    %v3289 = vmul.f32 %v3269, %v3281
    %v3290 = vmul.f32 %v3270, %v3282
    %v3291 = vpack.c.bf16 %v3283, %v3283
    %v3292 = vpack.c.bf16 %v3284, %v3284
    %v3293 = vpack.c.bf16 %v3285, %v3285
    %v3294 = vpack.c.bf16 %v3286, %v3286
    %v3295 = vpack.c.bf16 %v3287, %v3287
    %v3296 = vpack.c.bf16 %v3288, %v3288
    %v3297 = vpack.c.bf16 %v3289, %v3289
    %v3298 = vpack.c.bf16 %v3290, %v3290
    %v3299 = vld [vmem:[#allocation16] sm:$0xff]
    %v3300 = vld [vmem:[#allocation16 + $0x8] sm:$0xff]
    %v3301 = vld [vmem:[#allocation16 + $0x10] sm:$0xff]
    %v3302 = vld [vmem:[#allocation16 + $0x18] sm:$0xff]
    %v3303 = vld [vmem:[#allocation16 + $0x20] sm:$0xff]
    %v3304 = vld [vmem:[#allocation16 + $0x28] sm:$0xff]
    %v3305 = vld [vmem:[#allocation16 + $0x30] sm:$0xff]
    %v3306 = vld [vmem:[#allocation16 + $0x38] sm:$0xff]
    %v3307 = vld [vmem:[#allocation16 + $0x40] sm:$0xff]
    %v3308 = vld [vmem:[#allocation16 + $0x48] sm:$0xff]
    %v3309 = vld [vmem:[#allocation16 + $0x50] sm:$0xff]
    %v3310 = vld [vmem:[#allocation16 + $0x58] sm:$0xff]
    %v3311 = vld [vmem:[#allocation16 + $0x60] sm:$0xff]
    %v3312 = vld [vmem:[#allocation16 + $0x68] sm:$0xff]
    %v3313 = vld [vmem:[#allocation16 + $0x70] sm:$0xff]
    %v3314 = vld [vmem:[#allocation16 + $0x78] sm:$0xff]
    %v3315 = vld [vmem:[#allocation16 + $0x80] sm:$0xff]
    %v3316 = vld [vmem:[#allocation16 + $0x88] sm:$0xff]
    %v3317 = vld [vmem:[#allocation16 + $0x90] sm:$0xff]
    %v3318 = vld [vmem:[#allocation16 + $0x98] sm:$0xff]
    %v3319 = vld [vmem:[#allocation16 + $0xa0] sm:$0xff]
    %v3320 = vld [vmem:[#allocation16 + $0xa8] sm:$0xff]
    %v3321 = vld [vmem:[#allocation16 + $0xb0] sm:$0xff]
    %v3322 = vld [vmem:[#allocation16 + $0xb8] sm:$0xff]
    %v3323 = vld [vmem:[#allocation16 + $0xc0] sm:$0xff]
    %v3324 = vld [vmem:[#allocation16 + $0xc8] sm:$0xff]
    %v3325 = vld [vmem:[#allocation16 + $0xd0] sm:$0xff]
    %v3326 = vld [vmem:[#allocation16 + $0xd8] sm:$0xff]
    %v3327 = vld [vmem:[#allocation16 + $0xe0] sm:$0xff]
    %v3328 = vld [vmem:[#allocation16 + $0xe8] sm:$0xff]
    %v3329 = vld [vmem:[#allocation16 + $0xf0] sm:$0xff]
    %v3330 = vld [vmem:[#allocation16 + $0xf8] sm:$0xff]
    %v3331 = vld [vmem:[#allocation16 + $0x100] sm:$0xff]
    %v3332 = vld [vmem:[#allocation16 + $0x108] sm:$0xff]
    %v3333 = vld [vmem:[#allocation16 + $0x110] sm:$0xff]
    %v3334 = vld [vmem:[#allocation16 + $0x118] sm:$0xff]
    %v3335 = vld [vmem:[#allocation16 + $0x120] sm:$0xff]
    %v3336 = vld [vmem:[#allocation16 + $0x128] sm:$0xff]
    %v3337 = vld [vmem:[#allocation16 + $0x130] sm:$0xff]
    %v3338 = vld [vmem:[#allocation16 + $0x138] sm:$0xff]
    %v3339 = vld [vmem:[#allocation16 + $0x140] sm:$0xff]
    %v3340 = vld [vmem:[#allocation16 + $0x148] sm:$0xff]
    %v3341 = vld [vmem:[#allocation16 + $0x150] sm:$0xff]
    %v3342 = vld [vmem:[#allocation16 + $0x158] sm:$0xff]
    %v3343 = vld [vmem:[#allocation16 + $0x160] sm:$0xff]
    %v3344 = vld [vmem:[#allocation16 + $0x168] sm:$0xff]
    %v3345 = vld [vmem:[#allocation16 + $0x170] sm:$0xff]
    %v3346 = vld [vmem:[#allocation16 + $0x178] sm:$0xff]
    %v3347 = vld [vmem:[#allocation16 + $0x180] sm:$0xff]
    %v3348 = vld [vmem:[#allocation16 + $0x188] sm:$0xff]
    %v3349 = vld [vmem:[#allocation16 + $0x190] sm:$0xff]
    %v3350 = vld [vmem:[#allocation16 + $0x198] sm:$0xff]
    %v3351 = vld [vmem:[#allocation16 + $0x1a0] sm:$0xff]
    %v3352 = vld [vmem:[#allocation16 + $0x1a8] sm:$0xff]
    %v3353 = vld [vmem:[#allocation16 + $0x1b0] sm:$0xff]
    %v3354 = vld [vmem:[#allocation16 + $0x1b8] sm:$0xff]
    %v3355 = vld [vmem:[#allocation16 + $0x1c0] sm:$0xff]
    %v3356 = vld [vmem:[#allocation16 + $0x1c8] sm:$0xff]
    %v3357 = vld [vmem:[#allocation16 + $0x1d0] sm:$0xff]
    %v3358 = vld [vmem:[#allocation16 + $0x1d8] sm:$0xff]
    %v3359 = vld [vmem:[#allocation16 + $0x1e0] sm:$0xff]
    %v3360 = vld [vmem:[#allocation16 + $0x1e8] sm:$0xff]
    %v3361 = vld [vmem:[#allocation16 + $0x1f0] sm:$0xff]
    %v3362 = vld [vmem:[#allocation16 + $0x1f8] sm:$0xff]
    %v3363 = vld [vmem:[#allocation16 + $0x200] sm:$0xff]
    %v3364 = vld [vmem:[#allocation16 + $0x208] sm:$0xff]
    %v3365 = vld [vmem:[#allocation16 + $0x210] sm:$0xff]
    %v3366 = vld [vmem:[#allocation16 + $0x218] sm:$0xff]
    %v3367 = vld [vmem:[#allocation16 + $0x220] sm:$0xff]
    %v3368 = vld [vmem:[#allocation16 + $0x228] sm:$0xff]
    %v3369 = vld [vmem:[#allocation16 + $0x230] sm:$0xff]
    %v3370 = vld [vmem:[#allocation16 + $0x238] sm:$0xff]
    %v3371 = vld [vmem:[#allocation16 + $0x240] sm:$0xff]
    %v3372 = vld [vmem:[#allocation16 + $0x248] sm:$0xff]
    %v3373 = vld [vmem:[#allocation16 + $0x250] sm:$0xff]
    %v3374 = vld [vmem:[#allocation16 + $0x258] sm:$0xff]
    %v3375 = vld [vmem:[#allocation16 + $0x260] sm:$0xff]
    %v3376 = vld [vmem:[#allocation16 + $0x268] sm:$0xff]
    %v3377 = vld [vmem:[#allocation16 + $0x270] sm:$0xff]
    %v3378 = vld [vmem:[#allocation16 + $0x278] sm:$0xff]
    %v3379 = vld [vmem:[#allocation16 + $0x280] sm:$0xff]
    %v3380 = vld [vmem:[#allocation16 + $0x288] sm:$0xff]
    %v3381 = vld [vmem:[#allocation16 + $0x290] sm:$0xff]
    %v3382 = vld [vmem:[#allocation16 + $0x298] sm:$0xff]
    %v3383 = vld [vmem:[#allocation16 + $0x2a0] sm:$0xff]
    %v3384 = vld [vmem:[#allocation16 + $0x2a8] sm:$0xff]
    %v3385 = vld [vmem:[#allocation16 + $0x2b0] sm:$0xff]
    %v3386 = vld [vmem:[#allocation16 + $0x2b8] sm:$0xff]
    %v3387 = vld [vmem:[#allocation16 + $0x2c0] sm:$0xff]
    %v3388 = vld [vmem:[#allocation16 + $0x2c8] sm:$0xff]
    %v3389 = vld [vmem:[#allocation16 + $0x2d0] sm:$0xff]
    %v3390 = vld [vmem:[#allocation16 + $0x2d8] sm:$0xff]
    %v3391 = vld [vmem:[#allocation16 + $0x2e0] sm:$0xff]
    %v3392 = vld [vmem:[#allocation16 + $0x2e8] sm:$0xff]
    %v3393 = vld [vmem:[#allocation16 + $0x2f0] sm:$0xff]
    %v3394 = vld [vmem:[#allocation16 + $0x2f8] sm:$0xff]
    %v3395 = vld [vmem:[#allocation16 + $0x300] sm:$0xff]
    %v3396 = vld [vmem:[#allocation16 + $0x308] sm:$0xff]
    %v3397 = vld [vmem:[#allocation16 + $0x310] sm:$0xff]
    %v3398 = vld [vmem:[#allocation16 + $0x318] sm:$0xff]
    %v3399 = vld [vmem:[#allocation16 + $0x320] sm:$0xff]
    %v3400 = vld [vmem:[#allocation16 + $0x328] sm:$0xff]
    %v3401 = vld [vmem:[#allocation16 + $0x330] sm:$0xff]
    %v3402 = vld [vmem:[#allocation16 + $0x338] sm:$0xff]
    %v3403 = vld [vmem:[#allocation16 + $0x340] sm:$0xff]
    %v3404 = vld [vmem:[#allocation16 + $0x348] sm:$0xff]
    %v3405 = vld [vmem:[#allocation16 + $0x350] sm:$0xff]
    %v3406 = vld [vmem:[#allocation16 + $0x358] sm:$0xff]
    %v3407 = vld [vmem:[#allocation16 + $0x360] sm:$0xff]
    %v3408 = vld [vmem:[#allocation16 + $0x368] sm:$0xff]
    %v3409 = vld [vmem:[#allocation16 + $0x370] sm:$0xff]
    %v3410 = vld [vmem:[#allocation16 + $0x378] sm:$0xff]
    %v3411 = vld [vmem:[#allocation16 + $0x380] sm:$0xff]
    %v3412 = vld [vmem:[#allocation16 + $0x388] sm:$0xff]
    %v3413 = vld [vmem:[#allocation16 + $0x390] sm:$0xff]
    %v3414 = vld [vmem:[#allocation16 + $0x398] sm:$0xff]
    %v3415 = vld [vmem:[#allocation16 + $0x3a0] sm:$0xff]
    %v3416 = vld [vmem:[#allocation16 + $0x3a8] sm:$0xff]
    %v3417 = vld [vmem:[#allocation16 + $0x3b0] sm:$0xff]
    %v3418 = vld [vmem:[#allocation16 + $0x3b8] sm:$0xff]
    %v3419 = vld [vmem:[#allocation16 + $0x3c0] sm:$0xff]
    %v3420 = vld [vmem:[#allocation16 + $0x3c8] sm:$0xff]
    %v3421 = vld [vmem:[#allocation16 + $0x3d0] sm:$0xff]
    %v3422 = vld [vmem:[#allocation16 + $0x3d8] sm:$0xff]
    %v3423 = vld [vmem:[#allocation16 + $0x3e0] sm:$0xff]
    %v3424 = vld [vmem:[#allocation16 + $0x3e8] sm:$0xff]
    %v3425 = vld [vmem:[#allocation16 + $0x3f0] sm:$0xff]
    %v3426 = vld [vmem:[#allocation16 + $0x3f8] sm:$0xff]
    %v3427 = vld [vmem:[#allocation16 + $0x400] sm:$0xff]
    %v3428 = vld [vmem:[#allocation16 + $0x408] sm:$0xff]
    %v3429 = vld [vmem:[#allocation16 + $0x410] sm:$0xff]
    %v3430 = vld [vmem:[#allocation16 + $0x418] sm:$0xff]
    %v3431 = vld [vmem:[#allocation16 + $0x420] sm:$0xff]
    %v3432 = vld [vmem:[#allocation16 + $0x428] sm:$0xff]
    %v3433 = vld [vmem:[#allocation16 + $0x430] sm:$0xff]
    %v3434 = vld [vmem:[#allocation16 + $0x438] sm:$0xff]
    %v3435 = vld [vmem:[#allocation16 + $0x440] sm:$0xff]
    %v3436 = vld [vmem:[#allocation16 + $0x448] sm:$0xff]
    %v3437 = vld [vmem:[#allocation16 + $0x450] sm:$0xff]
    %v3438 = vld [vmem:[#allocation16 + $0x458] sm:$0xff]
    %v3439 = vld [vmem:[#allocation16 + $0x460] sm:$0xff]
    %v3440 = vld [vmem:[#allocation16 + $0x468] sm:$0xff]
    %v3441 = vld [vmem:[#allocation16 + $0x470] sm:$0xff]
    %v3442 = vld [vmem:[#allocation16 + $0x478] sm:$0xff]
    %v3443 = vld [vmem:[#allocation16 + $0x480] sm:$0xff]
    %v3444 = vld [vmem:[#allocation16 + $0x488] sm:$0xff]
    %v3445 = vld [vmem:[#allocation16 + $0x490] sm:$0xff]
    %v3446 = vld [vmem:[#allocation16 + $0x498] sm:$0xff]
    %v3447 = vld [vmem:[#allocation16 + $0x4a0] sm:$0xff]
    %v3448 = vld [vmem:[#allocation16 + $0x4a8] sm:$0xff]
    %v3449 = vld [vmem:[#allocation16 + $0x4b0] sm:$0xff]
    %v3450 = vld [vmem:[#allocation16 + $0x4b8] sm:$0xff]
    %v3451 = vld [vmem:[#allocation16 + $0x4c0] sm:$0xff]
    %v3452 = vld [vmem:[#allocation16 + $0x4c8] sm:$0xff]
    %v3453 = vld [vmem:[#allocation16 + $0x4d0] sm:$0xff]
    %v3454 = vld [vmem:[#allocation16 + $0x4d8] sm:$0xff]
    %v3455 = vld [vmem:[#allocation16 + $0x4e0] sm:$0xff]
    %v3456 = vld [vmem:[#allocation16 + $0x4e8] sm:$0xff]
    %v3457 = vld [vmem:[#allocation16 + $0x4f0] sm:$0xff]
    %v3458 = vld [vmem:[#allocation16 + $0x4f8] sm:$0xff]
    %v3459 = vld [vmem:[#allocation16 + $0x500] sm:$0xff]
    %v3460 = vld [vmem:[#allocation16 + $0x508] sm:$0xff]
    %v3461 = vld [vmem:[#allocation16 + $0x510] sm:$0xff]
    %v3462 = vld [vmem:[#allocation16 + $0x518] sm:$0xff]
    %v3463 = vld [vmem:[#allocation16 + $0x520] sm:$0xff]
    %v3464 = vld [vmem:[#allocation16 + $0x528] sm:$0xff]
    %v3465 = vld [vmem:[#allocation16 + $0x530] sm:$0xff]
    %v3466 = vld [vmem:[#allocation16 + $0x538] sm:$0xff]
    %v3467 = vld [vmem:[#allocation16 + $0x540] sm:$0xff]
    %v3468 = vld [vmem:[#allocation16 + $0x548] sm:$0xff]
    %v3469 = vld [vmem:[#allocation16 + $0x550] sm:$0xff]
    %v3470 = vld [vmem:[#allocation16 + $0x558] sm:$0xff]
    %v3471 = vld [vmem:[#allocation16 + $0x560] sm:$0xff]
    %v3472 = vld [vmem:[#allocation16 + $0x568] sm:$0xff]
    %v3473 = vld [vmem:[#allocation16 + $0x570] sm:$0xff]
    %v3474 = vld [vmem:[#allocation16 + $0x578] sm:$0xff]
    %v3475 = vld [vmem:[#allocation16 + $0x580] sm:$0xff]
    %v3476 = vld [vmem:[#allocation16 + $0x588] sm:$0xff]
    %v3477 = vld [vmem:[#allocation16 + $0x590] sm:$0xff]
    %v3478 = vld [vmem:[#allocation16 + $0x598] sm:$0xff]
    %v3479 = vld [vmem:[#allocation16 + $0x5a0] sm:$0xff]
    %v3480 = vld [vmem:[#allocation16 + $0x5a8] sm:$0xff]
    %v3481 = vld [vmem:[#allocation16 + $0x5b0] sm:$0xff]
    %v3482 = vld [vmem:[#allocation16 + $0x5b8] sm:$0xff]
    %v3483 = vld [vmem:[#allocation16 + $0x5c0] sm:$0xff]
    %v3484 = vld [vmem:[#allocation16 + $0x5c8] sm:$0xff]
    %v3485 = vld [vmem:[#allocation16 + $0x5d0] sm:$0xff]
    %v3486 = vld [vmem:[#allocation16 + $0x5d8] sm:$0xff]
    %v3487 = vld [vmem:[#allocation16 + $0x5e0] sm:$0xff]
    %v3488 = vld [vmem:[#allocation16 + $0x5e8] sm:$0xff]
    %v3489 = vld [vmem:[#allocation16 + $0x5f0] sm:$0xff]
    %v3490 = vld [vmem:[#allocation16 + $0x5f8] sm:$0xff]
    %v3491 = vld [vmem:[#allocation16 + $0x600] sm:$0xff]
    %v3492 = vld [vmem:[#allocation16 + $0x608] sm:$0xff]
    %v3493 = vld [vmem:[#allocation16 + $0x610] sm:$0xff]
    %v3494 = vld [vmem:[#allocation16 + $0x618] sm:$0xff]
    %v3495 = vld [vmem:[#allocation16 + $0x620] sm:$0xff]
    %v3496 = vld [vmem:[#allocation16 + $0x628] sm:$0xff]
    %v3497 = vld [vmem:[#allocation16 + $0x630] sm:$0xff]
    %v3498 = vld [vmem:[#allocation16 + $0x638] sm:$0xff]
    %v3499 = vld [vmem:[#allocation16 + $0x640] sm:$0xff]
    %v3500 = vld [vmem:[#allocation16 + $0x648] sm:$0xff]
    %v3501 = vld [vmem:[#allocation16 + $0x650] sm:$0xff]
    %v3502 = vld [vmem:[#allocation16 + $0x658] sm:$0xff]
    %v3503 = vld [vmem:[#allocation16 + $0x660] sm:$0xff]
    %v3504 = vld [vmem:[#allocation16 + $0x668] sm:$0xff]
    %v3505 = vld [vmem:[#allocation16 + $0x670] sm:$0xff]
    %v3506 = vld [vmem:[#allocation16 + $0x678] sm:$0xff]
    %v3507 = vld [vmem:[#allocation16 + $0x680] sm:$0xff]
    %v3508 = vld [vmem:[#allocation16 + $0x688] sm:$0xff]
    %v3509 = vld [vmem:[#allocation16 + $0x690] sm:$0xff]
    %v3510 = vld [vmem:[#allocation16 + $0x698] sm:$0xff]
    %v3511 = vld [vmem:[#allocation16 + $0x6a0] sm:$0xff]
    %v3512 = vld [vmem:[#allocation16 + $0x6a8] sm:$0xff]
    %v3513 = vld [vmem:[#allocation16 + $0x6b0] sm:$0xff]
    %v3514 = vld [vmem:[#allocation16 + $0x6b8] sm:$0xff]
    %v3515 = vld [vmem:[#allocation16 + $0x6c0] sm:$0xff]
    %v3516 = vld [vmem:[#allocation16 + $0x6c8] sm:$0xff]
    %v3517 = vld [vmem:[#allocation16 + $0x6d0] sm:$0xff]
    %v3518 = vld [vmem:[#allocation16 + $0x6d8] sm:$0xff]
    %v3519 = vld [vmem:[#allocation16 + $0x6e0] sm:$0xff]
    %v3520 = vld [vmem:[#allocation16 + $0x6e8] sm:$0xff]
    %v3521 = vld [vmem:[#allocation16 + $0x6f0] sm:$0xff]
    %v3522 = vld [vmem:[#allocation16 + $0x6f8] sm:$0xff]
    %v3523 = vld [vmem:[#allocation16 + $0x700] sm:$0xff]
    %v3524 = vld [vmem:[#allocation16 + $0x708] sm:$0xff]
    %v3525 = vld [vmem:[#allocation16 + $0x710] sm:$0xff]
    %v3526 = vld [vmem:[#allocation16 + $0x718] sm:$0xff]
    %v3527 = vld [vmem:[#allocation16 + $0x720] sm:$0xff]
    %v3528 = vld [vmem:[#allocation16 + $0x728] sm:$0xff]
    %v3529 = vld [vmem:[#allocation16 + $0x730] sm:$0xff]
    %v3530 = vld [vmem:[#allocation16 + $0x738] sm:$0xff]
    %v3531 = vld [vmem:[#allocation16 + $0x740] sm:$0xff]
    %v3532 = vld [vmem:[#allocation16 + $0x748] sm:$0xff]
    %v3533 = vld [vmem:[#allocation16 + $0x750] sm:$0xff]
    %v3534 = vld [vmem:[#allocation16 + $0x758] sm:$0xff]
    %v3535 = vld [vmem:[#allocation16 + $0x760] sm:$0xff]
    %v3536 = vld [vmem:[#allocation16 + $0x768] sm:$0xff]
    %v3537 = vld [vmem:[#allocation16 + $0x770] sm:$0xff]
    %v3538 = vld [vmem:[#allocation16 + $0x778] sm:$0xff]
    %v3539 = vld [vmem:[#allocation16 + $0x780] sm:$0xff]
    %v3540 = vld [vmem:[#allocation16 + $0x788] sm:$0xff]
    %v3541 = vld [vmem:[#allocation16 + $0x790] sm:$0xff]
    %v3542 = vld [vmem:[#allocation16 + $0x798] sm:$0xff]
    %v3543 = vld [vmem:[#allocation16 + $0x7a0] sm:$0xff]
    %v3544 = vld [vmem:[#allocation16 + $0x7a8] sm:$0xff]
    %v3545 = vld [vmem:[#allocation16 + $0x7b0] sm:$0xff]
    %v3546 = vld [vmem:[#allocation16 + $0x7b8] sm:$0xff]
    %v3547 = vld [vmem:[#allocation16 + $0x7c0] sm:$0xff]
    %v3548 = vld [vmem:[#allocation16 + $0x7c8] sm:$0xff]
    %v3549 = vld [vmem:[#allocation16 + $0x7d0] sm:$0xff]
    %v3550 = vld [vmem:[#allocation16 + $0x7d8] sm:$0xff]
    %v3551 = vld [vmem:[#allocation16 + $0x7e0] sm:$0xff]
    %v3552 = vld [vmem:[#allocation16 + $0x7e8] sm:$0xff]
    %v3553 = vld [vmem:[#allocation16 + $0x7f0] sm:$0xff]
    %v3554 = vld [vmem:[#allocation16 + $0x7f8] sm:$0xff]
    %v3555 = vld [vmem:[#allocation16 + $0x800] sm:$0xff]
    %v3556 = vld [vmem:[#allocation16 + $0x808] sm:$0xff]
    %v3557 = vld [vmem:[#allocation16 + $0x810] sm:$0xff]
    %v3558 = vld [vmem:[#allocation16 + $0x818] sm:$0xff]
    %v3559 = vld [vmem:[#allocation16 + $0x820] sm:$0xff]
    %v3560 = vld [vmem:[#allocation16 + $0x828] sm:$0xff]
    %v3561 = vld [vmem:[#allocation16 + $0x830] sm:$0xff]
    %v3562 = vld [vmem:[#allocation16 + $0x838] sm:$0xff]
    %v3563 = vld [vmem:[#allocation16 + $0x840] sm:$0xff]
    %v3564 = vld [vmem:[#allocation16 + $0x848] sm:$0xff]
    %v3565 = vld [vmem:[#allocation16 + $0x850] sm:$0xff]
    %v3566 = vld [vmem:[#allocation16 + $0x858] sm:$0xff]
    %v3567 = vld [vmem:[#allocation16 + $0x860] sm:$0xff]
    %v3568 = vld [vmem:[#allocation16 + $0x868] sm:$0xff]
    %v3569 = vld [vmem:[#allocation16 + $0x870] sm:$0xff]
    %v3570 = vld [vmem:[#allocation16 + $0x878] sm:$0xff]
    %v3571 = vld [vmem:[#allocation16 + $0x880] sm:$0xff]
    %v3572 = vld [vmem:[#allocation16 + $0x888] sm:$0xff]
    %v3573 = vld [vmem:[#allocation16 + $0x890] sm:$0xff]
    %v3574 = vld [vmem:[#allocation16 + $0x898] sm:$0xff]
    %v3575 = vld [vmem:[#allocation16 + $0x8a0] sm:$0xff]
    %v3576 = vld [vmem:[#allocation16 + $0x8a8] sm:$0xff]
    %v3577 = vld [vmem:[#allocation16 + $0x8b0] sm:$0xff]
    %v3578 = vld [vmem:[#allocation16 + $0x8b8] sm:$0xff]
    %v3579 = vld [vmem:[#allocation16 + $0x8c0] sm:$0xff]
    %v3580 = vld [vmem:[#allocation16 + $0x8c8] sm:$0xff]
    %v3581 = vld [vmem:[#allocation16 + $0x8d0] sm:$0xff]
    %v3582 = vld [vmem:[#allocation16 + $0x8d8] sm:$0xff]
    %v3583 = vld [vmem:[#allocation16 + $0x8e0] sm:$0xff]
    %v3584 = vld [vmem:[#allocation16 + $0x8e8] sm:$0xff]
    %v3585 = vld [vmem:[#allocation16 + $0x8f0] sm:$0xff]
    %v3586 = vld [vmem:[#allocation16 + $0x8f8] sm:$0xff]
    %v3587 = vld [vmem:[#allocation16 + $0x900] sm:$0xff]
    %v3588 = vld [vmem:[#allocation16 + $0x908] sm:$0xff]
    %v3589 = vld [vmem:[#allocation16 + $0x910] sm:$0xff]
    %v3590 = vld [vmem:[#allocation16 + $0x918] sm:$0xff]
    %v3591 = vld [vmem:[#allocation16 + $0x920] sm:$0xff]
    %v3592 = vld [vmem:[#allocation16 + $0x928] sm:$0xff]
    %v3593 = vld [vmem:[#allocation16 + $0x930] sm:$0xff]
    %v3594 = vld [vmem:[#allocation16 + $0x938] sm:$0xff]
    %v3595 = vld [vmem:[#allocation16 + $0x940] sm:$0xff]
    %v3596 = vld [vmem:[#allocation16 + $0x948] sm:$0xff]
    %v3597 = vld [vmem:[#allocation16 + $0x950] sm:$0xff]
    %v3598 = vld [vmem:[#allocation16 + $0x958] sm:$0xff]
    %v3599 = vld [vmem:[#allocation16 + $0x960] sm:$0xff]
    %v3600 = vld [vmem:[#allocation16 + $0x968] sm:$0xff]
    %v3601 = vld [vmem:[#allocation16 + $0x970] sm:$0xff]
    %v3602 = vld [vmem:[#allocation16 + $0x978] sm:$0xff]
    %v3603 = vld [vmem:[#allocation16 + $0x980] sm:$0xff]
    %v3604 = vld [vmem:[#allocation16 + $0x988] sm:$0xff]
    %v3605 = vld [vmem:[#allocation16 + $0x990] sm:$0xff]
    %v3606 = vld [vmem:[#allocation16 + $0x998] sm:$0xff]
    %v3607 = vld [vmem:[#allocation16 + $0x9a0] sm:$0xff]
    %v3608 = vld [vmem:[#allocation16 + $0x9a8] sm:$0xff]
    %v3609 = vld [vmem:[#allocation16 + $0x9b0] sm:$0xff]
    %v3610 = vld [vmem:[#allocation16 + $0x9b8] sm:$0xff]
    %v3611 = vld [vmem:[#allocation16 + $0x9c0] sm:$0xff]
    %v3612 = vld [vmem:[#allocation16 + $0x9c8] sm:$0xff]
    %v3613 = vld [vmem:[#allocation16 + $0x9d0] sm:$0xff]
    %v3614 = vld [vmem:[#allocation16 + $0x9d8] sm:$0xff]
    %v3615 = vld [vmem:[#allocation16 + $0x9e0] sm:$0xff]
    %v3616 = vld [vmem:[#allocation16 + $0x9e8] sm:$0xff]
    %v3617 = vld [vmem:[#allocation16 + $0x9f0] sm:$0xff]
    %v3618 = vld [vmem:[#allocation16 + $0x9f8] sm:$0xff]
    %v3619 = vld [vmem:[#allocation16 + $0xa00] sm:$0xff]
    %v3620 = vld [vmem:[#allocation16 + $0xa08] sm:$0xff]
    %v3621 = vld [vmem:[#allocation16 + $0xa10] sm:$0xff]
    %v3622 = vld [vmem:[#allocation16 + $0xa18] sm:$0xff]
    %v3623 = vld [vmem:[#allocation16 + $0xa20] sm:$0xff]
    %v3624 = vld [vmem:[#allocation16 + $0xa28] sm:$0xff]
    %v3625 = vld [vmem:[#allocation16 + $0xa30] sm:$0xff]
    %v3626 = vld [vmem:[#allocation16 + $0xa38] sm:$0xff]
    %v3627 = vld [vmem:[#allocation16 + $0xa40] sm:$0xff]
    %v3628 = vld [vmem:[#allocation16 + $0xa48] sm:$0xff]
    %v3629 = vld [vmem:[#allocation16 + $0xa50] sm:$0xff]
    %v3630 = vld [vmem:[#allocation16 + $0xa58] sm:$0xff]
    %v3631 = vld [vmem:[#allocation16 + $0xa60] sm:$0xff]
    %v3632 = vld [vmem:[#allocation16 + $0xa68] sm:$0xff]
    %v3633 = vld [vmem:[#allocation16 + $0xa70] sm:$0xff]
    %v3634 = vld [vmem:[#allocation16 + $0xa78] sm:$0xff]
    %v3635 = vld [vmem:[#allocation16 + $0xa80] sm:$0xff]
    %v3636 = vld [vmem:[#allocation16 + $0xa88] sm:$0xff]
    %v3637 = vld [vmem:[#allocation16 + $0xa90] sm:$0xff]
    %v3638 = vld [vmem:[#allocation16 + $0xa98] sm:$0xff]
    %v3639 = vld [vmem:[#allocation16 + $0xaa0] sm:$0xff]
    %v3640 = vld [vmem:[#allocation16 + $0xaa8] sm:$0xff]
    %v3641 = vld [vmem:[#allocation16 + $0xab0] sm:$0xff]
    %v3642 = vld [vmem:[#allocation16 + $0xab8] sm:$0xff]
    %v3643 = vld [vmem:[#allocation16 + $0xac0] sm:$0xff]
    %v3644 = vld [vmem:[#allocation16 + $0xac8] sm:$0xff]
    %v3645 = vld [vmem:[#allocation16 + $0xad0] sm:$0xff]
    %v3646 = vld [vmem:[#allocation16 + $0xad8] sm:$0xff]
    %v3647 = vld [vmem:[#allocation16 + $0xae0] sm:$0xff]
    %v3648 = vld [vmem:[#allocation16 + $0xae8] sm:$0xff]
    %v3649 = vld [vmem:[#allocation16 + $0xaf0] sm:$0xff]
    %v3650 = vld [vmem:[#allocation16 + $0xaf8] sm:$0xff]
    %v3651 = vld [vmem:[#allocation16 + $0xb00] sm:$0xff]
    %v3652 = vld [vmem:[#allocation16 + $0xb08] sm:$0xff]
    %v3653 = vld [vmem:[#allocation16 + $0xb10] sm:$0xff]
    %v3654 = vld [vmem:[#allocation16 + $0xb18] sm:$0xff]
    %v3655 = vld [vmem:[#allocation16 + $0xb20] sm:$0xff]
    %v3656 = vld [vmem:[#allocation16 + $0xb28] sm:$0xff]
    %v3657 = vld [vmem:[#allocation16 + $0xb30] sm:$0xff]
    %v3658 = vld [vmem:[#allocation16 + $0xb38] sm:$0xff]
    %v3659 = vld [vmem:[#allocation16 + $0xb40] sm:$0xff]
    %v3660 = vld [vmem:[#allocation16 + $0xb48] sm:$0xff]
    %v3661 = vld [vmem:[#allocation16 + $0xb50] sm:$0xff]
    %v3662 = vld [vmem:[#allocation16 + $0xb58] sm:$0xff]
    %v3663 = vld [vmem:[#allocation16 + $0xb60] sm:$0xff]
    %v3664 = vld [vmem:[#allocation16 + $0xb68] sm:$0xff]
    %v3665 = vld [vmem:[#allocation16 + $0xb70] sm:$0xff]
    %v3666 = vld [vmem:[#allocation16 + $0xb78] sm:$0xff]
    %v3667 = vld [vmem:[#allocation16 + $0xb80] sm:$0xff]
    %v3668 = vld [vmem:[#allocation16 + $0xb88] sm:$0xff]
    %v3669 = vld [vmem:[#allocation16 + $0xb90] sm:$0xff]
    %v3670 = vld [vmem:[#allocation16 + $0xb98] sm:$0xff]
    %v3671 = vld [vmem:[#allocation16 + $0xba0] sm:$0xff]
    %v3672 = vld [vmem:[#allocation16 + $0xba8] sm:$0xff]
    %v3673 = vld [vmem:[#allocation16 + $0xbb0] sm:$0xff]
    %v3674 = vld [vmem:[#allocation16 + $0xbb8] sm:$0xff]
    %v3675 = vld [vmem:[#allocation16 + $0xbc0] sm:$0xff]
    %v3676 = vld [vmem:[#allocation16 + $0xbc8] sm:$0xff]
    %v3677 = vld [vmem:[#allocation16 + $0xbd0] sm:$0xff]
    %v3678 = vld [vmem:[#allocation16 + $0xbd8] sm:$0xff]
    %v3679 = vld [vmem:[#allocation16 + $0xbe0] sm:$0xff]
    %v3680 = vld [vmem:[#allocation16 + $0xbe8] sm:$0xff]
    %v3681 = vld [vmem:[#allocation16 + $0xbf0] sm:$0xff]
    %v3682 = vld [vmem:[#allocation16 + $0xbf8] sm:$0xff]
    %v3683 = vld [vmem:[#allocation16 + $0xc00] sm:$0xff]
    %v3684 = vld [vmem:[#allocation16 + $0xc08] sm:$0xff]
    %v3685 = vld [vmem:[#allocation16 + $0xc10] sm:$0xff]
    %v3686 = vld [vmem:[#allocation16 + $0xc18] sm:$0xff]
    %v3687 = vld [vmem:[#allocation16 + $0xc20] sm:$0xff]
    %v3688 = vld [vmem:[#allocation16 + $0xc28] sm:$0xff]
    %v3689 = vld [vmem:[#allocation16 + $0xc30] sm:$0xff]
    %v3690 = vld [vmem:[#allocation16 + $0xc38] sm:$0xff]
    %v3691 = vld [vmem:[#allocation16 + $0xc40] sm:$0xff]
    %v3692 = vld [vmem:[#allocation16 + $0xc48] sm:$0xff]
    %v3693 = vld [vmem:[#allocation16 + $0xc50] sm:$0xff]
    %v3694 = vld [vmem:[#allocation16 + $0xc58] sm:$0xff]
    %v3695 = vld [vmem:[#allocation16 + $0xc60] sm:$0xff]
    %v3696 = vld [vmem:[#allocation16 + $0xc68] sm:$0xff]
    %v3697 = vld [vmem:[#allocation16 + $0xc70] sm:$0xff]
    %v3698 = vld [vmem:[#allocation16 + $0xc78] sm:$0xff]
    %v3699 = vld [vmem:[#allocation16 + $0xc80] sm:$0xff]
    %v3700 = vld [vmem:[#allocation16 + $0xc88] sm:$0xff]
    %v3701 = vld [vmem:[#allocation16 + $0xc90] sm:$0xff]
    %v3702 = vld [vmem:[#allocation16 + $0xc98] sm:$0xff]
    %v3703 = vld [vmem:[#allocation16 + $0xca0] sm:$0xff]
    %v3704 = vld [vmem:[#allocation16 + $0xca8] sm:$0xff]
    %v3705 = vld [vmem:[#allocation16 + $0xcb0] sm:$0xff]
    %v3706 = vld [vmem:[#allocation16 + $0xcb8] sm:$0xff]
    %v3707 = vld [vmem:[#allocation16 + $0xcc0] sm:$0xff]
    %v3708 = vld [vmem:[#allocation16 + $0xcc8] sm:$0xff]
    %v3709 = vld [vmem:[#allocation16 + $0xcd0] sm:$0xff]
    %v3710 = vld [vmem:[#allocation16 + $0xcd8] sm:$0xff]
    %v3711 = vld [vmem:[#allocation16 + $0xce0] sm:$0xff]
    %v3712 = vld [vmem:[#allocation16 + $0xce8] sm:$0xff]
    %v3713 = vld [vmem:[#allocation16 + $0xcf0] sm:$0xff]
    %v3714 = vld [vmem:[#allocation16 + $0xcf8] sm:$0xff]
    %v3715 = vld [vmem:[#allocation16 + $0xd00] sm:$0xff]
    %v3716 = vld [vmem:[#allocation16 + $0xd08] sm:$0xff]
    %v3717 = vld [vmem:[#allocation16 + $0xd10] sm:$0xff]
    %v3718 = vld [vmem:[#allocation16 + $0xd18] sm:$0xff]
    %v3719 = vld [vmem:[#allocation16 + $0xd20] sm:$0xff]
    %v3720 = vld [vmem:[#allocation16 + $0xd28] sm:$0xff]
    %v3721 = vld [vmem:[#allocation16 + $0xd30] sm:$0xff]
    %v3722 = vld [vmem:[#allocation16 + $0xd38] sm:$0xff]
    %v3723 = vld [vmem:[#allocation16 + $0xd40] sm:$0xff]
    %v3724 = vld [vmem:[#allocation16 + $0xd48] sm:$0xff]
    %v3725 = vld [vmem:[#allocation16 + $0xd50] sm:$0xff]
    %v3726 = vld [vmem:[#allocation16 + $0xd58] sm:$0xff]
    %v3727 = vld [vmem:[#allocation16 + $0xd60] sm:$0xff]
    %v3728 = vld [vmem:[#allocation16 + $0xd68] sm:$0xff]
    %v3729 = vld [vmem:[#allocation16 + $0xd70] sm:$0xff]
    %v3730 = vld [vmem:[#allocation16 + $0xd78] sm:$0xff]
    %v3731 = vld [vmem:[#allocation16 + $0xd80] sm:$0xff]
    %v3732 = vld [vmem:[#allocation16 + $0xd88] sm:$0xff]
    %v3733 = vld [vmem:[#allocation16 + $0xd90] sm:$0xff]
    %v3734 = vld [vmem:[#allocation16 + $0xd98] sm:$0xff]
    %v3735 = vld [vmem:[#allocation16 + $0xda0] sm:$0xff]
    %v3736 = vld [vmem:[#allocation16 + $0xda8] sm:$0xff]
    %v3737 = vld [vmem:[#allocation16 + $0xdb0] sm:$0xff]
    %v3738 = vld [vmem:[#allocation16 + $0xdb8] sm:$0xff]
    %v3739 = vld [vmem:[#allocation16 + $0xdc0] sm:$0xff]
    %v3740 = vld [vmem:[#allocation16 + $0xdc8] sm:$0xff]
    %v3741 = vld [vmem:[#allocation16 + $0xdd0] sm:$0xff]
    %v3742 = vld [vmem:[#allocation16 + $0xdd8] sm:$0xff]
    %v3743 = vld [vmem:[#allocation16 + $0xde0] sm:$0xff]
    %v3744 = vld [vmem:[#allocation16 + $0xde8] sm:$0xff]
    %v3745 = vld [vmem:[#allocation16 + $0xdf0] sm:$0xff]
    %v3746 = vld [vmem:[#allocation16 + $0xdf8] sm:$0xff]
    %v3747 = vld [vmem:[#allocation16 + $0xe00] sm:$0xff]
    %v3748 = vld [vmem:[#allocation16 + $0xe08] sm:$0xff]
    %v3749 = vld [vmem:[#allocation16 + $0xe10] sm:$0xff]
    %v3750 = vld [vmem:[#allocation16 + $0xe18] sm:$0xff]
    %v3751 = vld [vmem:[#allocation16 + $0xe20] sm:$0xff]
    %v3752 = vld [vmem:[#allocation16 + $0xe28] sm:$0xff]
    %v3753 = vld [vmem:[#allocation16 + $0xe30] sm:$0xff]
    %v3754 = vld [vmem:[#allocation16 + $0xe38] sm:$0xff]
    %v3755 = vld [vmem:[#allocation16 + $0xe40] sm:$0xff]
    %v3756 = vld [vmem:[#allocation16 + $0xe48] sm:$0xff]
    %v3757 = vld [vmem:[#allocation16 + $0xe50] sm:$0xff]
    %v3758 = vld [vmem:[#allocation16 + $0xe58] sm:$0xff]
    %v3759 = vld [vmem:[#allocation16 + $0xe60] sm:$0xff]
    %v3760 = vld [vmem:[#allocation16 + $0xe68] sm:$0xff]
    %v3761 = vld [vmem:[#allocation16 + $0xe70] sm:$0xff]
    %v3762 = vld [vmem:[#allocation16 + $0xe78] sm:$0xff]
    %v3763 = vld [vmem:[#allocation16 + $0xe80] sm:$0xff]
    %v3764 = vld [vmem:[#allocation16 + $0xe88] sm:$0xff]
    %v3765 = vld [vmem:[#allocation16 + $0xe90] sm:$0xff]
    %v3766 = vld [vmem:[#allocation16 + $0xe98] sm:$0xff]
    %v3767 = vld [vmem:[#allocation16 + $0xea0] sm:$0xff]
    %v3768 = vld [vmem:[#allocation16 + $0xea8] sm:$0xff]
    %v3769 = vld [vmem:[#allocation16 + $0xeb0] sm:$0xff]
    %v3770 = vld [vmem:[#allocation16 + $0xeb8] sm:$0xff]
    %v3771 = vld [vmem:[#allocation16 + $0xec0] sm:$0xff]
    %v3772 = vld [vmem:[#allocation16 + $0xec8] sm:$0xff]
    %v3773 = vld [vmem:[#allocation16 + $0xed0] sm:$0xff]
    %v3774 = vld [vmem:[#allocation16 + $0xed8] sm:$0xff]
    %v3775 = vld [vmem:[#allocation16 + $0xee0] sm:$0xff]
    %v3776 = vld [vmem:[#allocation16 + $0xee8] sm:$0xff]
    %v3777 = vld [vmem:[#allocation16 + $0xef0] sm:$0xff]
    %v3778 = vld [vmem:[#allocation16 + $0xef8] sm:$0xff]
    %v3779 = vld [vmem:[#allocation16 + $0xf00] sm:$0xff]
    %v3780 = vld [vmem:[#allocation16 + $0xf08] sm:$0xff]
    %v3781 = vld [vmem:[#allocation16 + $0xf10] sm:$0xff]
    %v3782 = vld [vmem:[#allocation16 + $0xf18] sm:$0xff]
    %v3783 = vld [vmem:[#allocation16 + $0xf20] sm:$0xff]
    %v3784 = vld [vmem:[#allocation16 + $0xf28] sm:$0xff]
    %v3785 = vld [vmem:[#allocation16 + $0xf30] sm:$0xff]
    %v3786 = vld [vmem:[#allocation16 + $0xf38] sm:$0xff]
    %v3787 = vld [vmem:[#allocation16 + $0xf40] sm:$0xff]
    %v3788 = vld [vmem:[#allocation16 + $0xf48] sm:$0xff]
    %v3789 = vld [vmem:[#allocation16 + $0xf50] sm:$0xff]
    %v3790 = vld [vmem:[#allocation16 + $0xf58] sm:$0xff]
    %v3791 = vld [vmem:[#allocation16 + $0xf60] sm:$0xff]
    %v3792 = vld [vmem:[#allocation16 + $0xf68] sm:$0xff]
    %v3793 = vld [vmem:[#allocation16 + $0xf70] sm:$0xff]
    %v3794 = vld [vmem:[#allocation16 + $0xf78] sm:$0xff]
    %v3795 = vld [vmem:[#allocation16 + $0xf80] sm:$0xff]
    %v3796 = vld [vmem:[#allocation16 + $0xf88] sm:$0xff]
    %v3797 = vld [vmem:[#allocation16 + $0xf90] sm:$0xff]
    %v3798 = vld [vmem:[#allocation16 + $0xf98] sm:$0xff]
    %v3799 = vld [vmem:[#allocation16 + $0xfa0] sm:$0xff]
    %v3800 = vld [vmem:[#allocation16 + $0xfa8] sm:$0xff]
    %v3801 = vld [vmem:[#allocation16 + $0xfb0] sm:$0xff]
    %v3802 = vld [vmem:[#allocation16 + $0xfb8] sm:$0xff]
    %v3803 = vld [vmem:[#allocation16 + $0xfc0] sm:$0xff]
    %v3804 = vld [vmem:[#allocation16 + $0xfc8] sm:$0xff]
    %v3805 = vld [vmem:[#allocation16 + $0xfd0] sm:$0xff]
    %v3806 = vld [vmem:[#allocation16 + $0xfd8] sm:$0xff]
    %v3807 = vld [vmem:[#allocation16 + $0xfe0] sm:$0xff]
    %v3808 = vld [vmem:[#allocation16 + $0xfe8] sm:$0xff]
    %v3809 = vld [vmem:[#allocation16 + $0xff0] sm:$0xff]
    %v3810 = vld [vmem:[#allocation16 + $0xff8] sm:$0xff]
    %v3811 = vld [vmem:[#allocation17] sm:$0xff]
    %v3813 = vlaneseq
    %v3814 = vshrl.u32 %v3813, 7
    %v3815 = vsub.s32 0, %v3814
    %v3816 = vrot.slane %v3811, %v3815
    %v3817 = vlaneseq
    %v3818 = vshrl.u32 %v3817, 7
    %v3819 = vsub.s32 1, %v3818
    %v3820 = vrot.slane %v3811, %v3819
    %v3821 = vlaneseq
    %v3822 = vshrl.u32 %v3821, 7
    %v3823 = vsub.s32 2, %v3822
    %v3824 = vrot.slane %v3811, %v3823
    %v3825 = vlaneseq
    %v3826 = vshrl.u32 %v3825, 7
    %v3827 = vsub.s32 3, %v3826
    %v3828 = vrot.slane %v3811, %v3827
    %v3829 = vlaneseq
    %v3830 = vshrl.u32 %v3829, 7
    %v3831 = vsub.s32 4, %v3830
    %v3832 = vrot.slane %v3811, %v3831
    %v3833 = vlaneseq
    %v3834 = vshrl.u32 %v3833, 7
    %v3835 = vsub.s32 5, %v3834
    %v3836 = vrot.slane %v3811, %v3835
    %v3837 = vlaneseq
    %v3838 = vshrl.u32 %v3837, 7
    %v3839 = vsub.s32 6, %v3838
    %v3840 = vrot.slane %v3811, %v3839
    %v3841 = vlaneseq
    %v3842 = vshrl.u32 %v3841, 7
    %v3843 = vsub.s32 7, %v3842
    %v3844 = vrot.slane %v3811, %v3843
    %v4365 = vunpack.c.l.b16 %v3299
    %v4366 = vunpack.c.h.b16 %v3299
    %v4367 = vunpack.c.l.b16 %v3300
    %v4368 = vunpack.c.h.b16 %v3300
    %v4369 = vunpack.c.l.b16 %v3301
    %v4370 = vunpack.c.h.b16 %v3301
    %v4371 = vunpack.c.l.b16 %v3302
    %v4372 = vunpack.c.h.b16 %v3302
    %v4373 = vunpack.c.l.b16 %v3303
    %v4374 = vunpack.c.h.b16 %v3303
    %v4375 = vunpack.c.l.b16 %v3304
    %v4376 = vunpack.c.h.b16 %v3304
    %v4377 = vunpack.c.l.b16 %v3305
    %v4378 = vunpack.c.h.b16 %v3305
    %v4379 = vunpack.c.l.b16 %v3306
    %v4380 = vunpack.c.h.b16 %v3306
    %v4381 = vunpack.c.l.b16 %v3307
    %v4382 = vunpack.c.h.b16 %v3307
    %v4383 = vunpack.c.l.b16 %v3308
    %v4384 = vunpack.c.h.b16 %v3308
    %v4385 = vunpack.c.l.b16 %v3309
    %v4386 = vunpack.c.h.b16 %v3309
    %v4387 = vunpack.c.l.b16 %v3310
    %v4388 = vunpack.c.h.b16 %v3310
    %v4389 = vunpack.c.l.b16 %v3311
    %v4390 = vunpack.c.h.b16 %v3311
    %v4391 = vunpack.c.l.b16 %v3312
    %v4392 = vunpack.c.h.b16 %v3312
    %v4393 = vunpack.c.l.b16 %v3313
    %v4394 = vunpack.c.h.b16 %v3313
    %v4395 = vunpack.c.l.b16 %v3314
    %v4396 = vunpack.c.h.b16 %v3314
    %v4397 = vunpack.c.l.b16 %v3315
    %v4398 = vunpack.c.h.b16 %v3315
    %v4399 = vunpack.c.l.b16 %v3316
    %v4400 = vunpack.c.h.b16 %v3316
    %v4401 = vunpack.c.l.b16 %v3317
    %v4402 = vunpack.c.h.b16 %v3317
    %v4403 = vunpack.c.l.b16 %v3318
    %v4404 = vunpack.c.h.b16 %v3318
    %v4405 = vunpack.c.l.b16 %v3319
    %v4406 = vunpack.c.h.b16 %v3319
    %v4407 = vunpack.c.l.b16 %v3320
    %v4408 = vunpack.c.h.b16 %v3320
    %v4409 = vunpack.c.l.b16 %v3321
    %v4410 = vunpack.c.h.b16 %v3321
    %v4411 = vunpack.c.l.b16 %v3322
    %v4412 = vunpack.c.h.b16 %v3322
    %v4413 = vunpack.c.l.b16 %v3323
    %v4414 = vunpack.c.h.b16 %v3323
    %v4415 = vunpack.c.l.b16 %v3324
    %v4416 = vunpack.c.h.b16 %v3324
    %v4417 = vunpack.c.l.b16 %v3325
    %v4418 = vunpack.c.h.b16 %v3325
    %v4419 = vunpack.c.l.b16 %v3326
    %v4420 = vunpack.c.h.b16 %v3326
    %v4421 = vunpack.c.l.b16 %v3327
    %v4422 = vunpack.c.h.b16 %v3327
    %v4423 = vunpack.c.l.b16 %v3328
    %v4424 = vunpack.c.h.b16 %v3328
    %v4425 = vunpack.c.l.b16 %v3329
    %v4426 = vunpack.c.h.b16 %v3329
    %v4427 = vunpack.c.l.b16 %v3330
    %v4428 = vunpack.c.h.b16 %v3330
    %v4429 = vunpack.c.l.b16 %v3331
    %v4430 = vunpack.c.h.b16 %v3331
    %v4431 = vunpack.c.l.b16 %v3332
    %v4432 = vunpack.c.h.b16 %v3332
    %v4433 = vunpack.c.l.b16 %v3333
    %v4434 = vunpack.c.h.b16 %v3333
    %v4435 = vunpack.c.l.b16 %v3334
    %v4436 = vunpack.c.h.b16 %v3334
    %v4437 = vunpack.c.l.b16 %v3335
    %v4438 = vunpack.c.h.b16 %v3335
    %v4439 = vunpack.c.l.b16 %v3336
    %v4440 = vunpack.c.h.b16 %v3336
    %v4441 = vunpack.c.l.b16 %v3337
    %v4442 = vunpack.c.h.b16 %v3337
    %v4443 = vunpack.c.l.b16 %v3338
    %v4444 = vunpack.c.h.b16 %v3338
    %v4445 = vunpack.c.l.b16 %v3339
    %v4446 = vunpack.c.h.b16 %v3339
    %v4447 = vunpack.c.l.b16 %v3340
    %v4448 = vunpack.c.h.b16 %v3340
    %v4449 = vunpack.c.l.b16 %v3341
    %v4450 = vunpack.c.h.b16 %v3341
    %v4451 = vunpack.c.l.b16 %v3342
    %v4452 = vunpack.c.h.b16 %v3342
    %v4453 = vunpack.c.l.b16 %v3343
    %v4454 = vunpack.c.h.b16 %v3343
    %v4455 = vunpack.c.l.b16 %v3344
    %v4456 = vunpack.c.h.b16 %v3344
    %v4457 = vunpack.c.l.b16 %v3345
    %v4458 = vunpack.c.h.b16 %v3345
    %v4459 = vunpack.c.l.b16 %v3346
    %v4460 = vunpack.c.h.b16 %v3346
    %v4461 = vunpack.c.l.b16 %v3347
    %v4462 = vunpack.c.h.b16 %v3347
    %v4463 = vunpack.c.l.b16 %v3348
    %v4464 = vunpack.c.h.b16 %v3348
    %v4465 = vunpack.c.l.b16 %v3349
    %v4466 = vunpack.c.h.b16 %v3349
    %v4467 = vunpack.c.l.b16 %v3350
    %v4468 = vunpack.c.h.b16 %v3350
    %v4469 = vunpack.c.l.b16 %v3351
    %v4470 = vunpack.c.h.b16 %v3351
    %v4471 = vunpack.c.l.b16 %v3352
    %v4472 = vunpack.c.h.b16 %v3352
    %v4473 = vunpack.c.l.b16 %v3353
    %v4474 = vunpack.c.h.b16 %v3353
    %v4475 = vunpack.c.l.b16 %v3354
    %v4476 = vunpack.c.h.b16 %v3354
    %v4477 = vunpack.c.l.b16 %v3355
    %v4478 = vunpack.c.h.b16 %v3355
    %v4479 = vunpack.c.l.b16 %v3356
    %v4480 = vunpack.c.h.b16 %v3356
    %v4481 = vunpack.c.l.b16 %v3357
    %v4482 = vunpack.c.h.b16 %v3357
    %v4483 = vunpack.c.l.b16 %v3358
    %v4484 = vunpack.c.h.b16 %v3358
    %v4485 = vunpack.c.l.b16 %v3359
    %v4486 = vunpack.c.h.b16 %v3359
    %v4487 = vunpack.c.l.b16 %v3360
    %v4488 = vunpack.c.h.b16 %v3360
    %v4489 = vunpack.c.l.b16 %v3361
    %v4490 = vunpack.c.h.b16 %v3361
    %v4491 = vunpack.c.l.b16 %v3362
    %v4492 = vunpack.c.h.b16 %v3362
    %v4493 = vunpack.c.l.b16 %v3363
    %v4494 = vunpack.c.h.b16 %v3363
    %v4495 = vunpack.c.l.b16 %v3364
    %v4496 = vunpack.c.h.b16 %v3364
    %v4497 = vunpack.c.l.b16 %v3365
    %v4498 = vunpack.c.h.b16 %v3365
    %v4499 = vunpack.c.l.b16 %v3366
    %v4500 = vunpack.c.h.b16 %v3366
    %v4501 = vunpack.c.l.b16 %v3367
    %v4502 = vunpack.c.h.b16 %v3367
    %v4503 = vunpack.c.l.b16 %v3368
    %v4504 = vunpack.c.h.b16 %v3368
    %v4505 = vunpack.c.l.b16 %v3369
    %v4506 = vunpack.c.h.b16 %v3369
    %v4507 = vunpack.c.l.b16 %v3370
    %v4508 = vunpack.c.h.b16 %v3370
    %v4509 = vunpack.c.l.b16 %v3371
    %v4510 = vunpack.c.h.b16 %v3371
    %v4511 = vunpack.c.l.b16 %v3372
    %v4512 = vunpack.c.h.b16 %v3372
    %v4513 = vunpack.c.l.b16 %v3373
    %v4514 = vunpack.c.h.b16 %v3373
    %v4515 = vunpack.c.l.b16 %v3374
    %v4516 = vunpack.c.h.b16 %v3374
    %v4517 = vunpack.c.l.b16 %v3375
    %v4518 = vunpack.c.h.b16 %v3375
    %v4519 = vunpack.c.l.b16 %v3376
    %v4520 = vunpack.c.h.b16 %v3376
    %v4521 = vunpack.c.l.b16 %v3377
    %v4522 = vunpack.c.h.b16 %v3377
    %v4523 = vunpack.c.l.b16 %v3378
    %v4524 = vunpack.c.h.b16 %v3378
    %v4525 = vunpack.c.l.b16 %v3379
    %v4526 = vunpack.c.h.b16 %v3379
    %v4527 = vunpack.c.l.b16 %v3380
    %v4528 = vunpack.c.h.b16 %v3380
    %v4529 = vunpack.c.l.b16 %v3381
    %v4530 = vunpack.c.h.b16 %v3381
    %v4531 = vunpack.c.l.b16 %v3382
    %v4532 = vunpack.c.h.b16 %v3382
    %v4533 = vunpack.c.l.b16 %v3383
    %v4534 = vunpack.c.h.b16 %v3383
    %v4535 = vunpack.c.l.b16 %v3384
    %v4536 = vunpack.c.h.b16 %v3384
    %v4537 = vunpack.c.l.b16 %v3385
    %v4538 = vunpack.c.h.b16 %v3385
    %v4539 = vunpack.c.l.b16 %v3386
    %v4540 = vunpack.c.h.b16 %v3386
    %v4541 = vunpack.c.l.b16 %v3387
    %v4542 = vunpack.c.h.b16 %v3387
    %v4543 = vunpack.c.l.b16 %v3388
    %v4544 = vunpack.c.h.b16 %v3388
    %v4545 = vunpack.c.l.b16 %v3389
    %v4546 = vunpack.c.h.b16 %v3389
    %v4547 = vunpack.c.l.b16 %v3390
    %v4548 = vunpack.c.h.b16 %v3390
    %v4549 = vunpack.c.l.b16 %v3391
    %v4550 = vunpack.c.h.b16 %v3391
    %v4551 = vunpack.c.l.b16 %v3392
    %v4552 = vunpack.c.h.b16 %v3392
    %v4553 = vunpack.c.l.b16 %v3393
    %v4554 = vunpack.c.h.b16 %v3393
    %v4555 = vunpack.c.l.b16 %v3394
    %v4556 = vunpack.c.h.b16 %v3394
    %v4557 = vunpack.c.l.b16 %v3395
    %v4558 = vunpack.c.h.b16 %v3395
    %v4559 = vunpack.c.l.b16 %v3396
    %v4560 = vunpack.c.h.b16 %v3396
    %v4561 = vunpack.c.l.b16 %v3397
    %v4562 = vunpack.c.h.b16 %v3397
    %v4563 = vunpack.c.l.b16 %v3398
    %v4564 = vunpack.c.h.b16 %v3398
    %v4565 = vunpack.c.l.b16 %v3399
    %v4566 = vunpack.c.h.b16 %v3399
    %v4567 = vunpack.c.l.b16 %v3400
    %v4568 = vunpack.c.h.b16 %v3400
    %v4569 = vunpack.c.l.b16 %v3401
    %v4570 = vunpack.c.h.b16 %v3401
    %v4571 = vunpack.c.l.b16 %v3402
    %v4572 = vunpack.c.h.b16 %v3402
    %v4573 = vunpack.c.l.b16 %v3403
    %v4574 = vunpack.c.h.b16 %v3403
    %v4575 = vunpack.c.l.b16 %v3404
    %v4576 = vunpack.c.h.b16 %v3404
    %v4577 = vunpack.c.l.b16 %v3405
    %v4578 = vunpack.c.h.b16 %v3405
    %v4579 = vunpack.c.l.b16 %v3406
    %v4580 = vunpack.c.h.b16 %v3406
    %v4581 = vunpack.c.l.b16 %v3407
    %v4582 = vunpack.c.h.b16 %v3407
    %v4583 = vunpack.c.l.b16 %v3408
    %v4584 = vunpack.c.h.b16 %v3408
    %v4585 = vunpack.c.l.b16 %v3409
    %v4586 = vunpack.c.h.b16 %v3409
    %v4587 = vunpack.c.l.b16 %v3410
    %v4588 = vunpack.c.h.b16 %v3410
    %v4589 = vunpack.c.l.b16 %v3411
    %v4590 = vunpack.c.h.b16 %v3411
    %v4591 = vunpack.c.l.b16 %v3412
    %v4592 = vunpack.c.h.b16 %v3412
    %v4593 = vunpack.c.l.b16 %v3413
    %v4594 = vunpack.c.h.b16 %v3413
    %v4595 = vunpack.c.l.b16 %v3414
    %v4596 = vunpack.c.h.b16 %v3414
    %v4597 = vunpack.c.l.b16 %v3415
    %v4598 = vunpack.c.h.b16 %v3415
    %v4599 = vunpack.c.l.b16 %v3416
    %v4600 = vunpack.c.h.b16 %v3416
    %v4601 = vunpack.c.l.b16 %v3417
    %v4602 = vunpack.c.h.b16 %v3417
    %v4603 = vunpack.c.l.b16 %v3418
    %v4604 = vunpack.c.h.b16 %v3418
    %v4605 = vunpack.c.l.b16 %v3419
    %v4606 = vunpack.c.h.b16 %v3419
    %v4607 = vunpack.c.l.b16 %v3420
    %v4608 = vunpack.c.h.b16 %v3420
    %v4609 = vunpack.c.l.b16 %v3421
    %v4610 = vunpack.c.h.b16 %v3421
    %v4611 = vunpack.c.l.b16 %v3422
    %v4612 = vunpack.c.h.b16 %v3422
    %v4613 = vunpack.c.l.b16 %v3423
    %v4614 = vunpack.c.h.b16 %v3423
    %v4615 = vunpack.c.l.b16 %v3424
    %v4616 = vunpack.c.h.b16 %v3424
    %v4617 = vunpack.c.l.b16 %v3425
    %v4618 = vunpack.c.h.b16 %v3425
    %v4619 = vunpack.c.l.b16 %v3426
    %v4620 = vunpack.c.h.b16 %v3426
    %v4621 = vunpack.c.l.b16 %v3427
    %v4622 = vunpack.c.h.b16 %v3427
    %v4623 = vunpack.c.l.b16 %v3428
    %v4624 = vunpack.c.h.b16 %v3428
    %v4625 = vunpack.c.l.b16 %v3429
    %v4626 = vunpack.c.h.b16 %v3429
    %v4627 = vunpack.c.l.b16 %v3430
    %v4628 = vunpack.c.h.b16 %v3430
    %v4629 = vunpack.c.l.b16 %v3431
    %v4630 = vunpack.c.h.b16 %v3431
    %v4631 = vunpack.c.l.b16 %v3432
    %v4632 = vunpack.c.h.b16 %v3432
    %v4633 = vunpack.c.l.b16 %v3433
    %v4634 = vunpack.c.h.b16 %v3433
    %v4635 = vunpack.c.l.b16 %v3434
    %v4636 = vunpack.c.h.b16 %v3434
    %v4637 = vunpack.c.l.b16 %v3435
    %v4638 = vunpack.c.h.b16 %v3435
    %v4639 = vunpack.c.l.b16 %v3436
    %v4640 = vunpack.c.h.b16 %v3436
    %v4641 = vunpack.c.l.b16 %v3437
    %v4642 = vunpack.c.h.b16 %v3437
    %v4643 = vunpack.c.l.b16 %v3438
    %v4644 = vunpack.c.h.b16 %v3438
    %v4645 = vunpack.c.l.b16 %v3439
    %v4646 = vunpack.c.h.b16 %v3439
    %v4647 = vunpack.c.l.b16 %v3440
    %v4648 = vunpack.c.h.b16 %v3440
    %v4649 = vunpack.c.l.b16 %v3441
    %v4650 = vunpack.c.h.b16 %v3441
    %v4651 = vunpack.c.l.b16 %v3442
    %v4652 = vunpack.c.h.b16 %v3442
    %v4653 = vunpack.c.l.b16 %v3443
    %v4654 = vunpack.c.h.b16 %v3443
    %v4655 = vunpack.c.l.b16 %v3444
    %v4656 = vunpack.c.h.b16 %v3444
    %v4657 = vunpack.c.l.b16 %v3445
    %v4658 = vunpack.c.h.b16 %v3445
    %v4659 = vunpack.c.l.b16 %v3446
    %v4660 = vunpack.c.h.b16 %v3446
    %v4661 = vunpack.c.l.b16 %v3447
    %v4662 = vunpack.c.h.b16 %v3447
    %v4663 = vunpack.c.l.b16 %v3448
    %v4664 = vunpack.c.h.b16 %v3448
    %v4665 = vunpack.c.l.b16 %v3449
    %v4666 = vunpack.c.h.b16 %v3449
    %v4667 = vunpack.c.l.b16 %v3450
    %v4668 = vunpack.c.h.b16 %v3450
    %v4669 = vunpack.c.l.b16 %v3451
    %v4670 = vunpack.c.h.b16 %v3451
    %v4671 = vunpack.c.l.b16 %v3452
    %v4672 = vunpack.c.h.b16 %v3452
    %v4673 = vunpack.c.l.b16 %v3453
    %v4674 = vunpack.c.h.b16 %v3453
    %v4675 = vunpack.c.l.b16 %v3454
    %v4676 = vunpack.c.h.b16 %v3454
    %v4677 = vunpack.c.l.b16 %v3455
    %v4678 = vunpack.c.h.b16 %v3455
    %v4679 = vunpack.c.l.b16 %v3456
    %v4680 = vunpack.c.h.b16 %v3456
    %v4681 = vunpack.c.l.b16 %v3457
    %v4682 = vunpack.c.h.b16 %v3457
    %v4683 = vunpack.c.l.b16 %v3458
    %v4684 = vunpack.c.h.b16 %v3458
    %v4685 = vunpack.c.l.b16 %v3459
    %v4686 = vunpack.c.h.b16 %v3459
    %v4687 = vunpack.c.l.b16 %v3460
    %v4688 = vunpack.c.h.b16 %v3460
    %v4689 = vunpack.c.l.b16 %v3461
    %v4690 = vunpack.c.h.b16 %v3461
    %v4691 = vunpack.c.l.b16 %v3462
    %v4692 = vunpack.c.h.b16 %v3462
    %v4693 = vunpack.c.l.b16 %v3463
    %v4694 = vunpack.c.h.b16 %v3463
    %v4695 = vunpack.c.l.b16 %v3464
    %v4696 = vunpack.c.h.b16 %v3464
    %v4697 = vunpack.c.l.b16 %v3465
    %v4698 = vunpack.c.h.b16 %v3465
    %v4699 = vunpack.c.l.b16 %v3466
    %v4700 = vunpack.c.h.b16 %v3466
    %v4701 = vunpack.c.l.b16 %v3467
    %v4702 = vunpack.c.h.b16 %v3467
    %v4703 = vunpack.c.l.b16 %v3468
    %v4704 = vunpack.c.h.b16 %v3468
    %v4705 = vunpack.c.l.b16 %v3469
    %v4706 = vunpack.c.h.b16 %v3469
    %v4707 = vunpack.c.l.b16 %v3470
    %v4708 = vunpack.c.h.b16 %v3470
    %v4709 = vunpack.c.l.b16 %v3471
    %v4710 = vunpack.c.h.b16 %v3471
    %v4711 = vunpack.c.l.b16 %v3472
    %v4712 = vunpack.c.h.b16 %v3472
    %v4713 = vunpack.c.l.b16 %v3473
    %v4714 = vunpack.c.h.b16 %v3473
    %v4715 = vunpack.c.l.b16 %v3474
    %v4716 = vunpack.c.h.b16 %v3474
    %v4717 = vunpack.c.l.b16 %v3475
    %v4718 = vunpack.c.h.b16 %v3475
    %v4719 = vunpack.c.l.b16 %v3476
    %v4720 = vunpack.c.h.b16 %v3476
    %v4721 = vunpack.c.l.b16 %v3477
    %v4722 = vunpack.c.h.b16 %v3477
    %v4723 = vunpack.c.l.b16 %v3478
    %v4724 = vunpack.c.h.b16 %v3478
    %v4725 = vunpack.c.l.b16 %v3479
    %v4726 = vunpack.c.h.b16 %v3479
    %v4727 = vunpack.c.l.b16 %v3480
    %v4728 = vunpack.c.h.b16 %v3480
    %v4729 = vunpack.c.l.b16 %v3481
    %v4730 = vunpack.c.h.b16 %v3481
    %v4731 = vunpack.c.l.b16 %v3482
    %v4732 = vunpack.c.h.b16 %v3482
    %v4733 = vunpack.c.l.b16 %v3483
    %v4734 = vunpack.c.h.b16 %v3483
    %v4735 = vunpack.c.l.b16 %v3484
    %v4736 = vunpack.c.h.b16 %v3484
    %v4737 = vunpack.c.l.b16 %v3485
    %v4738 = vunpack.c.h.b16 %v3485
    %v4739 = vunpack.c.l.b16 %v3486
    %v4740 = vunpack.c.h.b16 %v3486
    %v4741 = vunpack.c.l.b16 %v3487
    %v4742 = vunpack.c.h.b16 %v3487
    %v4743 = vunpack.c.l.b16 %v3488
    %v4744 = vunpack.c.h.b16 %v3488
    %v4745 = vunpack.c.l.b16 %v3489
    %v4746 = vunpack.c.h.b16 %v3489
    %v4747 = vunpack.c.l.b16 %v3490
    %v4748 = vunpack.c.h.b16 %v3490
    %v4749 = vunpack.c.l.b16 %v3491
    %v4750 = vunpack.c.h.b16 %v3491
    %v4751 = vunpack.c.l.b16 %v3492
    %v4752 = vunpack.c.h.b16 %v3492
    %v4753 = vunpack.c.l.b16 %v3493
    %v4754 = vunpack.c.h.b16 %v3493
    %v4755 = vunpack.c.l.b16 %v3494
    %v4756 = vunpack.c.h.b16 %v3494
    %v4757 = vunpack.c.l.b16 %v3495
    %v4758 = vunpack.c.h.b16 %v3495
    %v4759 = vunpack.c.l.b16 %v3496
    %v4760 = vunpack.c.h.b16 %v3496
    %v4761 = vunpack.c.l.b16 %v3497
    %v4762 = vunpack.c.h.b16 %v3497
    %v4763 = vunpack.c.l.b16 %v3498
    %v4764 = vunpack.c.h.b16 %v3498
    %v4765 = vunpack.c.l.b16 %v3499
    %v4766 = vunpack.c.h.b16 %v3499
    %v4767 = vunpack.c.l.b16 %v3500
    %v4768 = vunpack.c.h.b16 %v3500
    %v4769 = vunpack.c.l.b16 %v3501
    %v4770 = vunpack.c.h.b16 %v3501
    %v4771 = vunpack.c.l.b16 %v3502
    %v4772 = vunpack.c.h.b16 %v3502
    %v4773 = vunpack.c.l.b16 %v3503
    %v4774 = vunpack.c.h.b16 %v3503
    %v4775 = vunpack.c.l.b16 %v3504
    %v4776 = vunpack.c.h.b16 %v3504
    %v4777 = vunpack.c.l.b16 %v3505
    %v4778 = vunpack.c.h.b16 %v3505
    %v4779 = vunpack.c.l.b16 %v3506
    %v4780 = vunpack.c.h.b16 %v3506
    %v4781 = vunpack.c.l.b16 %v3507
    %v4782 = vunpack.c.h.b16 %v3507
    %v4783 = vunpack.c.l.b16 %v3508
    %v4784 = vunpack.c.h.b16 %v3508
    %v4785 = vunpack.c.l.b16 %v3509
    %v4786 = vunpack.c.h.b16 %v3509
    %v4787 = vunpack.c.l.b16 %v3510
    %v4788 = vunpack.c.h.b16 %v3510
    %v4789 = vunpack.c.l.b16 %v3511
    %v4790 = vunpack.c.h.b16 %v3511
    %v4791 = vunpack.c.l.b16 %v3512
    %v4792 = vunpack.c.h.b16 %v3512
    %v4793 = vunpack.c.l.b16 %v3513
    %v4794 = vunpack.c.h.b16 %v3513
    %v4795 = vunpack.c.l.b16 %v3514
    %v4796 = vunpack.c.h.b16 %v3514
    %v4797 = vunpack.c.l.b16 %v3515
    %v4798 = vunpack.c.h.b16 %v3515
    %v4799 = vunpack.c.l.b16 %v3516
    %v4800 = vunpack.c.h.b16 %v3516
    %v4801 = vunpack.c.l.b16 %v3517
    %v4802 = vunpack.c.h.b16 %v3517
    %v4803 = vunpack.c.l.b16 %v3518
    %v4804 = vunpack.c.h.b16 %v3518
    %v4805 = vunpack.c.l.b16 %v3519
    %v4806 = vunpack.c.h.b16 %v3519
    %v4807 = vunpack.c.l.b16 %v3520
    %v4808 = vunpack.c.h.b16 %v3520
    %v4809 = vunpack.c.l.b16 %v3521
    %v4810 = vunpack.c.h.b16 %v3521
    %v4811 = vunpack.c.l.b16 %v3522
    %v4812 = vunpack.c.h.b16 %v3522
    %v4813 = vunpack.c.l.b16 %v3523
    %v4814 = vunpack.c.h.b16 %v3523
    %v4815 = vunpack.c.l.b16 %v3524
    %v4816 = vunpack.c.h.b16 %v3524
    %v4817 = vunpack.c.l.b16 %v3525
    %v4818 = vunpack.c.h.b16 %v3525
    %v4819 = vunpack.c.l.b16 %v3526
    %v4820 = vunpack.c.h.b16 %v3526
    %v4821 = vunpack.c.l.b16 %v3527
    %v4822 = vunpack.c.h.b16 %v3527
    %v4823 = vunpack.c.l.b16 %v3528
    %v4824 = vunpack.c.h.b16 %v3528
    %v4825 = vunpack.c.l.b16 %v3529
    %v4826 = vunpack.c.h.b16 %v3529
    %v4827 = vunpack.c.l.b16 %v3530
    %v4828 = vunpack.c.h.b16 %v3530
    %v4829 = vunpack.c.l.b16 %v3531
    %v4830 = vunpack.c.h.b16 %v3531
    %v4831 = vunpack.c.l.b16 %v3532
    %v4832 = vunpack.c.h.b16 %v3532
    %v4833 = vunpack.c.l.b16 %v3533
    %v4834 = vunpack.c.h.b16 %v3533
    %v4835 = vunpack.c.l.b16 %v3534
    %v4836 = vunpack.c.h.b16 %v3534
    %v4837 = vunpack.c.l.b16 %v3535
    %v4838 = vunpack.c.h.b16 %v3535
    %v4839 = vunpack.c.l.b16 %v3536
    %v4840 = vunpack.c.h.b16 %v3536
    %v4841 = vunpack.c.l.b16 %v3537
    %v4842 = vunpack.c.h.b16 %v3537
    %v4843 = vunpack.c.l.b16 %v3538
    %v4844 = vunpack.c.h.b16 %v3538
    %v4845 = vunpack.c.l.b16 %v3539
    %v4846 = vunpack.c.h.b16 %v3539
    %v4847 = vunpack.c.l.b16 %v3540
    %v4848 = vunpack.c.h.b16 %v3540
    %v4849 = vunpack.c.l.b16 %v3541
    %v4850 = vunpack.c.h.b16 %v3541
    %v4851 = vunpack.c.l.b16 %v3542
    %v4852 = vunpack.c.h.b16 %v3542
    %v4853 = vunpack.c.l.b16 %v3543
    %v4854 = vunpack.c.h.b16 %v3543
    %v4855 = vunpack.c.l.b16 %v3544
    %v4856 = vunpack.c.h.b16 %v3544
    %v4857 = vunpack.c.l.b16 %v3545
    %v4858 = vunpack.c.h.b16 %v3545
    %v4859 = vunpack.c.l.b16 %v3546
    %v4860 = vunpack.c.h.b16 %v3546
    %v4861 = vunpack.c.l.b16 %v3547
    %v4862 = vunpack.c.h.b16 %v3547
    %v4863 = vunpack.c.l.b16 %v3548
    %v4864 = vunpack.c.h.b16 %v3548
    %v4865 = vunpack.c.l.b16 %v3549
    %v4866 = vunpack.c.h.b16 %v3549
    %v4867 = vunpack.c.l.b16 %v3550
    %v4868 = vunpack.c.h.b16 %v3550
    %v4869 = vunpack.c.l.b16 %v3551
    %v4870 = vunpack.c.h.b16 %v3551
    %v4871 = vunpack.c.l.b16 %v3552
    %v4872 = vunpack.c.h.b16 %v3552
    %v4873 = vunpack.c.l.b16 %v3553
    %v4874 = vunpack.c.h.b16 %v3553
    %v4875 = vunpack.c.l.b16 %v3554
    %v4876 = vunpack.c.h.b16 %v3554
    %v4877 = vunpack.c.l.b16 %v3555
    %v4878 = vunpack.c.h.b16 %v3555
    %v4879 = vunpack.c.l.b16 %v3556
    %v4880 = vunpack.c.h.b16 %v3556
    %v4881 = vunpack.c.l.b16 %v3557
    %v4882 = vunpack.c.h.b16 %v3557
    %v4883 = vunpack.c.l.b16 %v3558
    %v4884 = vunpack.c.h.b16 %v3558
    %v4885 = vunpack.c.l.b16 %v3559
    %v4886 = vunpack.c.h.b16 %v3559
    %v4887 = vunpack.c.l.b16 %v3560
    %v4888 = vunpack.c.h.b16 %v3560
    %v4889 = vunpack.c.l.b16 %v3561
    %v4890 = vunpack.c.h.b16 %v3561
    %v4891 = vunpack.c.l.b16 %v3562
    %v4892 = vunpack.c.h.b16 %v3562
    %v4893 = vunpack.c.l.b16 %v3563
    %v4894 = vunpack.c.h.b16 %v3563
    %v4895 = vunpack.c.l.b16 %v3564
    %v4896 = vunpack.c.h.b16 %v3564
    %v4897 = vunpack.c.l.b16 %v3565
    %v4898 = vunpack.c.h.b16 %v3565
    %v4899 = vunpack.c.l.b16 %v3566
    %v4900 = vunpack.c.h.b16 %v3566
    %v4901 = vunpack.c.l.b16 %v3567
    %v4902 = vunpack.c.h.b16 %v3567
    %v4903 = vunpack.c.l.b16 %v3568
    %v4904 = vunpack.c.h.b16 %v3568
    %v4905 = vunpack.c.l.b16 %v3569
    %v4906 = vunpack.c.h.b16 %v3569
    %v4907 = vunpack.c.l.b16 %v3570
    %v4908 = vunpack.c.h.b16 %v3570
    %v4909 = vunpack.c.l.b16 %v3571
    %v4910 = vunpack.c.h.b16 %v3571
    %v4911 = vunpack.c.l.b16 %v3572
    %v4912 = vunpack.c.h.b16 %v3572
    %v4913 = vunpack.c.l.b16 %v3573
    %v4914 = vunpack.c.h.b16 %v3573
    %v4915 = vunpack.c.l.b16 %v3574
    %v4916 = vunpack.c.h.b16 %v3574
    %v4917 = vunpack.c.l.b16 %v3575
    %v4918 = vunpack.c.h.b16 %v3575
    %v4919 = vunpack.c.l.b16 %v3576
    %v4920 = vunpack.c.h.b16 %v3576
    %v4921 = vunpack.c.l.b16 %v3577
    %v4922 = vunpack.c.h.b16 %v3577
    %v4923 = vunpack.c.l.b16 %v3578
    %v4924 = vunpack.c.h.b16 %v3578
    %v4925 = vunpack.c.l.b16 %v3579
    %v4926 = vunpack.c.h.b16 %v3579
    %v4927 = vunpack.c.l.b16 %v3580
    %v4928 = vunpack.c.h.b16 %v3580
    %v4929 = vunpack.c.l.b16 %v3581
    %v4930 = vunpack.c.h.b16 %v3581
    %v4931 = vunpack.c.l.b16 %v3582
    %v4932 = vunpack.c.h.b16 %v3582
    %v4933 = vunpack.c.l.b16 %v3583
    %v4934 = vunpack.c.h.b16 %v3583
    %v4935 = vunpack.c.l.b16 %v3584
    %v4936 = vunpack.c.h.b16 %v3584
    %v4937 = vunpack.c.l.b16 %v3585
    %v4938 = vunpack.c.h.b16 %v3585
    %v4939 = vunpack.c.l.b16 %v3586
    %v4940 = vunpack.c.h.b16 %v3586
    %v4941 = vunpack.c.l.b16 %v3587
    %v4942 = vunpack.c.h.b16 %v3587
    %v4943 = vunpack.c.l.b16 %v3588
    %v4944 = vunpack.c.h.b16 %v3588
    %v4945 = vunpack.c.l.b16 %v3589
    %v4946 = vunpack.c.h.b16 %v3589
    %v4947 = vunpack.c.l.b16 %v3590
    %v4948 = vunpack.c.h.b16 %v3590
    %v4949 = vunpack.c.l.b16 %v3591
    %v4950 = vunpack.c.h.b16 %v3591
    %v4951 = vunpack.c.l.b16 %v3592
    %v4952 = vunpack.c.h.b16 %v3592
    %v4953 = vunpack.c.l.b16 %v3593
    %v4954 = vunpack.c.h.b16 %v3593
    %v4955 = vunpack.c.l.b16 %v3594
    %v4956 = vunpack.c.h.b16 %v3594
    %v4957 = vunpack.c.l.b16 %v3595
    %v4958 = vunpack.c.h.b16 %v3595
    %v4959 = vunpack.c.l.b16 %v3596
    %v4960 = vunpack.c.h.b16 %v3596
    %v4961 = vunpack.c.l.b16 %v3597
    %v4962 = vunpack.c.h.b16 %v3597
    %v4963 = vunpack.c.l.b16 %v3598
    %v4964 = vunpack.c.h.b16 %v3598
    %v4965 = vunpack.c.l.b16 %v3599
    %v4966 = vunpack.c.h.b16 %v3599
    %v4967 = vunpack.c.l.b16 %v3600
    %v4968 = vunpack.c.h.b16 %v3600
    %v4969 = vunpack.c.l.b16 %v3601
    %v4970 = vunpack.c.h.b16 %v3601
    %v4971 = vunpack.c.l.b16 %v3602
    %v4972 = vunpack.c.h.b16 %v3602
    %v4973 = vunpack.c.l.b16 %v3603
    %v4974 = vunpack.c.h.b16 %v3603
    %v4975 = vunpack.c.l.b16 %v3604
    %v4976 = vunpack.c.h.b16 %v3604
    %v4977 = vunpack.c.l.b16 %v3605
    %v4978 = vunpack.c.h.b16 %v3605
    %v4979 = vunpack.c.l.b16 %v3606
    %v4980 = vunpack.c.h.b16 %v3606
    %v4981 = vunpack.c.l.b16 %v3607
    %v4982 = vunpack.c.h.b16 %v3607
    %v4983 = vunpack.c.l.b16 %v3608
    %v4984 = vunpack.c.h.b16 %v3608
    %v4985 = vunpack.c.l.b16 %v3609
    %v4986 = vunpack.c.h.b16 %v3609
    %v4987 = vunpack.c.l.b16 %v3610
    %v4988 = vunpack.c.h.b16 %v3610
    %v4989 = vunpack.c.l.b16 %v3611
    %v4990 = vunpack.c.h.b16 %v3611
    %v4991 = vunpack.c.l.b16 %v3612
    %v4992 = vunpack.c.h.b16 %v3612
    %v4993 = vunpack.c.l.b16 %v3613
    %v4994 = vunpack.c.h.b16 %v3613
    %v4995 = vunpack.c.l.b16 %v3614
    %v4996 = vunpack.c.h.b16 %v3614
    %v4997 = vunpack.c.l.b16 %v3615
    %v4998 = vunpack.c.h.b16 %v3615
    %v4999 = vunpack.c.l.b16 %v3616
    %v5000 = vunpack.c.h.b16 %v3616
    %v5001 = vunpack.c.l.b16 %v3617
    %v5002 = vunpack.c.h.b16 %v3617
    %v5003 = vunpack.c.l.b16 %v3618
    %v5004 = vunpack.c.h.b16 %v3618
    %v5005 = vunpack.c.l.b16 %v3619
    %v5006 = vunpack.c.h.b16 %v3619
    %v5007 = vunpack.c.l.b16 %v3620
    %v5008 = vunpack.c.h.b16 %v3620
    %v5009 = vunpack.c.l.b16 %v3621
    %v5010 = vunpack.c.h.b16 %v3621
    %v5011 = vunpack.c.l.b16 %v3622
    %v5012 = vunpack.c.h.b16 %v3622
    %v5013 = vunpack.c.l.b16 %v3623
    %v5014 = vunpack.c.h.b16 %v3623
    %v5015 = vunpack.c.l.b16 %v3624
    %v5016 = vunpack.c.h.b16 %v3624
    %v5017 = vunpack.c.l.b16 %v3625
    %v5018 = vunpack.c.h.b16 %v3625
    %v5019 = vunpack.c.l.b16 %v3626
    %v5020 = vunpack.c.h.b16 %v3626
    %v5021 = vunpack.c.l.b16 %v3627
    %v5022 = vunpack.c.h.b16 %v3627
    %v5023 = vunpack.c.l.b16 %v3628
    %v5024 = vunpack.c.h.b16 %v3628
    %v5025 = vunpack.c.l.b16 %v3629
    %v5026 = vunpack.c.h.b16 %v3629
    %v5027 = vunpack.c.l.b16 %v3630
    %v5028 = vunpack.c.h.b16 %v3630
    %v5029 = vunpack.c.l.b16 %v3631
    %v5030 = vunpack.c.h.b16 %v3631
    %v5031 = vunpack.c.l.b16 %v3632
    %v5032 = vunpack.c.h.b16 %v3632
    %v5033 = vunpack.c.l.b16 %v3633
    %v5034 = vunpack.c.h.b16 %v3633
    %v5035 = vunpack.c.l.b16 %v3634
    %v5036 = vunpack.c.h.b16 %v3634
    %v5037 = vunpack.c.l.b16 %v3635
    %v5038 = vunpack.c.h.b16 %v3635
    %v5039 = vunpack.c.l.b16 %v3636
    %v5040 = vunpack.c.h.b16 %v3636
    %v5041 = vunpack.c.l.b16 %v3637
    %v5042 = vunpack.c.h.b16 %v3637
    %v5043 = vunpack.c.l.b16 %v3638
    %v5044 = vunpack.c.h.b16 %v3638
    %v5045 = vunpack.c.l.b16 %v3639
    %v5046 = vunpack.c.h.b16 %v3639
    %v5047 = vunpack.c.l.b16 %v3640
    %v5048 = vunpack.c.h.b16 %v3640
    %v5049 = vunpack.c.l.b16 %v3641
    %v5050 = vunpack.c.h.b16 %v3641
    %v5051 = vunpack.c.l.b16 %v3642
    %v5052 = vunpack.c.h.b16 %v3642
    %v5053 = vunpack.c.l.b16 %v3643
    %v5054 = vunpack.c.h.b16 %v3643
    %v5055 = vunpack.c.l.b16 %v3644
    %v5056 = vunpack.c.h.b16 %v3644
    %v5057 = vunpack.c.l.b16 %v3645
    %v5058 = vunpack.c.h.b16 %v3645
    %v5059 = vunpack.c.l.b16 %v3646
    %v5060 = vunpack.c.h.b16 %v3646
    %v5061 = vunpack.c.l.b16 %v3647
    %v5062 = vunpack.c.h.b16 %v3647
    %v5063 = vunpack.c.l.b16 %v3648
    %v5064 = vunpack.c.h.b16 %v3648
    %v5065 = vunpack.c.l.b16 %v3649
    %v5066 = vunpack.c.h.b16 %v3649
    %v5067 = vunpack.c.l.b16 %v3650
    %v5068 = vunpack.c.h.b16 %v3650
    %v5069 = vunpack.c.l.b16 %v3651
    %v5070 = vunpack.c.h.b16 %v3651
    %v5071 = vunpack.c.l.b16 %v3652
    %v5072 = vunpack.c.h.b16 %v3652
    %v5073 = vunpack.c.l.b16 %v3653
    %v5074 = vunpack.c.h.b16 %v3653
    %v5075 = vunpack.c.l.b16 %v3654
    %v5076 = vunpack.c.h.b16 %v3654
    %v5077 = vunpack.c.l.b16 %v3655
    %v5078 = vunpack.c.h.b16 %v3655
    %v5079 = vunpack.c.l.b16 %v3656
    %v5080 = vunpack.c.h.b16 %v3656
    %v5081 = vunpack.c.l.b16 %v3657
    %v5082 = vunpack.c.h.b16 %v3657
    %v5083 = vunpack.c.l.b16 %v3658
    %v5084 = vunpack.c.h.b16 %v3658
    %v5085 = vunpack.c.l.b16 %v3659
    %v5086 = vunpack.c.h.b16 %v3659
    %v5087 = vunpack.c.l.b16 %v3660
    %v5088 = vunpack.c.h.b16 %v3660
    %v5089 = vunpack.c.l.b16 %v3661
    %v5090 = vunpack.c.h.b16 %v3661
    %v5091 = vunpack.c.l.b16 %v3662
    %v5092 = vunpack.c.h.b16 %v3662
    %v5093 = vunpack.c.l.b16 %v3663
    %v5094 = vunpack.c.h.b16 %v3663
    %v5095 = vunpack.c.l.b16 %v3664
    %v5096 = vunpack.c.h.b16 %v3664
    %v5097 = vunpack.c.l.b16 %v3665
    %v5098 = vunpack.c.h.b16 %v3665
    %v5099 = vunpack.c.l.b16 %v3666
    %v5100 = vunpack.c.h.b16 %v3666
    %v5101 = vunpack.c.l.b16 %v3667
    %v5102 = vunpack.c.h.b16 %v3667
    %v5103 = vunpack.c.l.b16 %v3668
    %v5104 = vunpack.c.h.b16 %v3668
    %v5105 = vunpack.c.l.b16 %v3669
    %v5106 = vunpack.c.h.b16 %v3669
    %v5107 = vunpack.c.l.b16 %v3670
    %v5108 = vunpack.c.h.b16 %v3670
    %v5109 = vunpack.c.l.b16 %v3671
    %v5110 = vunpack.c.h.b16 %v3671
    %v5111 = vunpack.c.l.b16 %v3672
    %v5112 = vunpack.c.h.b16 %v3672
    %v5113 = vunpack.c.l.b16 %v3673
    %v5114 = vunpack.c.h.b16 %v3673
    %v5115 = vunpack.c.l.b16 %v3674
    %v5116 = vunpack.c.h.b16 %v3674
    %v5117 = vunpack.c.l.b16 %v3675
    %v5118 = vunpack.c.h.b16 %v3675
    %v5119 = vunpack.c.l.b16 %v3676
    %v5120 = vunpack.c.h.b16 %v3676
    %v5121 = vunpack.c.l.b16 %v3677
    %v5122 = vunpack.c.h.b16 %v3677
    %v5123 = vunpack.c.l.b16 %v3678
    %v5124 = vunpack.c.h.b16 %v3678
    %v5125 = vunpack.c.l.b16 %v3679
    %v5126 = vunpack.c.h.b16 %v3679
    %v5127 = vunpack.c.l.b16 %v3680
    %v5128 = vunpack.c.h.b16 %v3680
    %v5129 = vunpack.c.l.b16 %v3681
    %v5130 = vunpack.c.h.b16 %v3681
    %v5131 = vunpack.c.l.b16 %v3682
    %v5132 = vunpack.c.h.b16 %v3682
    %v5133 = vunpack.c.l.b16 %v3683
    %v5134 = vunpack.c.h.b16 %v3683
    %v5135 = vunpack.c.l.b16 %v3684
    %v5136 = vunpack.c.h.b16 %v3684
    %v5137 = vunpack.c.l.b16 %v3685
    %v5138 = vunpack.c.h.b16 %v3685
    %v5139 = vunpack.c.l.b16 %v3686
    %v5140 = vunpack.c.h.b16 %v3686
    %v5141 = vunpack.c.l.b16 %v3687
    %v5142 = vunpack.c.h.b16 %v3687
    %v5143 = vunpack.c.l.b16 %v3688
    %v5144 = vunpack.c.h.b16 %v3688
    %v5145 = vunpack.c.l.b16 %v3689
    %v5146 = vunpack.c.h.b16 %v3689
    %v5147 = vunpack.c.l.b16 %v3690
    %v5148 = vunpack.c.h.b16 %v3690
    %v5149 = vunpack.c.l.b16 %v3691
    %v5150 = vunpack.c.h.b16 %v3691
    %v5151 = vunpack.c.l.b16 %v3692
    %v5152 = vunpack.c.h.b16 %v3692
    %v5153 = vunpack.c.l.b16 %v3693
    %v5154 = vunpack.c.h.b16 %v3693
    %v5155 = vunpack.c.l.b16 %v3694
    %v5156 = vunpack.c.h.b16 %v3694
    %v5157 = vunpack.c.l.b16 %v3695
    %v5158 = vunpack.c.h.b16 %v3695
    %v5159 = vunpack.c.l.b16 %v3696
    %v5160 = vunpack.c.h.b16 %v3696
    %v5161 = vunpack.c.l.b16 %v3697
    %v5162 = vunpack.c.h.b16 %v3697
    %v5163 = vunpack.c.l.b16 %v3698
    %v5164 = vunpack.c.h.b16 %v3698
    %v5165 = vunpack.c.l.b16 %v3699
    %v5166 = vunpack.c.h.b16 %v3699
    %v5167 = vunpack.c.l.b16 %v3700
    %v5168 = vunpack.c.h.b16 %v3700
    %v5169 = vunpack.c.l.b16 %v3701
    %v5170 = vunpack.c.h.b16 %v3701
    %v5171 = vunpack.c.l.b16 %v3702
    %v5172 = vunpack.c.h.b16 %v3702
    %v5173 = vunpack.c.l.b16 %v3703
    %v5174 = vunpack.c.h.b16 %v3703
    %v5175 = vunpack.c.l.b16 %v3704
    %v5176 = vunpack.c.h.b16 %v3704
    %v5177 = vunpack.c.l.b16 %v3705
    %v5178 = vunpack.c.h.b16 %v3705
    %v5179 = vunpack.c.l.b16 %v3706
    %v5180 = vunpack.c.h.b16 %v3706
    %v5181 = vunpack.c.l.b16 %v3707
    %v5182 = vunpack.c.h.b16 %v3707
    %v5183 = vunpack.c.l.b16 %v3708
    %v5184 = vunpack.c.h.b16 %v3708
    %v5185 = vunpack.c.l.b16 %v3709
    %v5186 = vunpack.c.h.b16 %v3709
    %v5187 = vunpack.c.l.b16 %v3710
    %v5188 = vunpack.c.h.b16 %v3710
    %v5189 = vunpack.c.l.b16 %v3711
    %v5190 = vunpack.c.h.b16 %v3711
    %v5191 = vunpack.c.l.b16 %v3712
    %v5192 = vunpack.c.h.b16 %v3712
    %v5193 = vunpack.c.l.b16 %v3713
    %v5194 = vunpack.c.h.b16 %v3713
    %v5195 = vunpack.c.l.b16 %v3714
    %v5196 = vunpack.c.h.b16 %v3714
    %v5197 = vunpack.c.l.b16 %v3715
    %v5198 = vunpack.c.h.b16 %v3715
    %v5199 = vunpack.c.l.b16 %v3716
    %v5200 = vunpack.c.h.b16 %v3716
    %v5201 = vunpack.c.l.b16 %v3717
    %v5202 = vunpack.c.h.b16 %v3717
    %v5203 = vunpack.c.l.b16 %v3718
    %v5204 = vunpack.c.h.b16 %v3718
    %v5205 = vunpack.c.l.b16 %v3719
    %v5206 = vunpack.c.h.b16 %v3719
    %v5207 = vunpack.c.l.b16 %v3720
    %v5208 = vunpack.c.h.b16 %v3720
    %v5209 = vunpack.c.l.b16 %v3721
    %v5210 = vunpack.c.h.b16 %v3721
    %v5211 = vunpack.c.l.b16 %v3722
    %v5212 = vunpack.c.h.b16 %v3722
    %v5213 = vunpack.c.l.b16 %v3723
    %v5214 = vunpack.c.h.b16 %v3723
    %v5215 = vunpack.c.l.b16 %v3724
    %v5216 = vunpack.c.h.b16 %v3724
    %v5217 = vunpack.c.l.b16 %v3725
    %v5218 = vunpack.c.h.b16 %v3725
    %v5219 = vunpack.c.l.b16 %v3726
    %v5220 = vunpack.c.h.b16 %v3726
    %v5221 = vunpack.c.l.b16 %v3727
    %v5222 = vunpack.c.h.b16 %v3727
    %v5223 = vunpack.c.l.b16 %v3728
    %v5224 = vunpack.c.h.b16 %v3728
    %v5225 = vunpack.c.l.b16 %v3729
    %v5226 = vunpack.c.h.b16 %v3729
    %v5227 = vunpack.c.l.b16 %v3730
    %v5228 = vunpack.c.h.b16 %v3730
    %v5229 = vunpack.c.l.b16 %v3731
    %v5230 = vunpack.c.h.b16 %v3731
    %v5231 = vunpack.c.l.b16 %v3732
    %v5232 = vunpack.c.h.b16 %v3732
    %v5233 = vunpack.c.l.b16 %v3733
    %v5234 = vunpack.c.h.b16 %v3733
    %v5235 = vunpack.c.l.b16 %v3734
    %v5236 = vunpack.c.h.b16 %v3734
    %v5237 = vunpack.c.l.b16 %v3735
    %v5238 = vunpack.c.h.b16 %v3735
    %v5239 = vunpack.c.l.b16 %v3736
    %v5240 = vunpack.c.h.b16 %v3736
    %v5241 = vunpack.c.l.b16 %v3737
    %v5242 = vunpack.c.h.b16 %v3737
    %v5243 = vunpack.c.l.b16 %v3738
    %v5244 = vunpack.c.h.b16 %v3738
    %v5245 = vunpack.c.l.b16 %v3739
    %v5246 = vunpack.c.h.b16 %v3739
    %v5247 = vunpack.c.l.b16 %v3740
    %v5248 = vunpack.c.h.b16 %v3740
    %v5249 = vunpack.c.l.b16 %v3741
    %v5250 = vunpack.c.h.b16 %v3741
    %v5251 = vunpack.c.l.b16 %v3742
    %v5252 = vunpack.c.h.b16 %v3742
    %v5253 = vunpack.c.l.b16 %v3743
    %v5254 = vunpack.c.h.b16 %v3743
    %v5255 = vunpack.c.l.b16 %v3744
    %v5256 = vunpack.c.h.b16 %v3744
    %v5257 = vunpack.c.l.b16 %v3745
    %v5258 = vunpack.c.h.b16 %v3745
    %v5259 = vunpack.c.l.b16 %v3746
    %v5260 = vunpack.c.h.b16 %v3746
    %v5261 = vunpack.c.l.b16 %v3747
    %v5262 = vunpack.c.h.b16 %v3747
    %v5263 = vunpack.c.l.b16 %v3748
    %v5264 = vunpack.c.h.b16 %v3748
    %v5265 = vunpack.c.l.b16 %v3749
    %v5266 = vunpack.c.h.b16 %v3749
    %v5267 = vunpack.c.l.b16 %v3750
    %v5268 = vunpack.c.h.b16 %v3750
    %v5269 = vunpack.c.l.b16 %v3751
    %v5270 = vunpack.c.h.b16 %v3751
    %v5271 = vunpack.c.l.b16 %v3752
    %v5272 = vunpack.c.h.b16 %v3752
    %v5273 = vunpack.c.l.b16 %v3753
    %v5274 = vunpack.c.h.b16 %v3753
    %v5275 = vunpack.c.l.b16 %v3754
    %v5276 = vunpack.c.h.b16 %v3754
    %v5277 = vunpack.c.l.b16 %v3755
    %v5278 = vunpack.c.h.b16 %v3755
    %v5279 = vunpack.c.l.b16 %v3756
    %v5280 = vunpack.c.h.b16 %v3756
    %v5281 = vunpack.c.l.b16 %v3757
    %v5282 = vunpack.c.h.b16 %v3757
    %v5283 = vunpack.c.l.b16 %v3758
    %v5284 = vunpack.c.h.b16 %v3758
    %v5285 = vunpack.c.l.b16 %v3759
    %v5286 = vunpack.c.h.b16 %v3759
    %v5287 = vunpack.c.l.b16 %v3760
    %v5288 = vunpack.c.h.b16 %v3760
    %v5289 = vunpack.c.l.b16 %v3761
    %v5290 = vunpack.c.h.b16 %v3761
    %v5291 = vunpack.c.l.b16 %v3762
    %v5292 = vunpack.c.h.b16 %v3762
    %v5293 = vunpack.c.l.b16 %v3763
    %v5294 = vunpack.c.h.b16 %v3763
    %v5295 = vunpack.c.l.b16 %v3764
    %v5296 = vunpack.c.h.b16 %v3764
    %v5297 = vunpack.c.l.b16 %v3765
    %v5298 = vunpack.c.h.b16 %v3765
    %v5299 = vunpack.c.l.b16 %v3766
    %v5300 = vunpack.c.h.b16 %v3766
    %v5301 = vunpack.c.l.b16 %v3767
    %v5302 = vunpack.c.h.b16 %v3767
    %v5303 = vunpack.c.l.b16 %v3768
    %v5304 = vunpack.c.h.b16 %v3768
    %v5305 = vunpack.c.l.b16 %v3769
    %v5306 = vunpack.c.h.b16 %v3769
    %v5307 = vunpack.c.l.b16 %v3770
    %v5308 = vunpack.c.h.b16 %v3770
    %v5309 = vunpack.c.l.b16 %v3771
    %v5310 = vunpack.c.h.b16 %v3771
    %v5311 = vunpack.c.l.b16 %v3772
    %v5312 = vunpack.c.h.b16 %v3772
    %v5313 = vunpack.c.l.b16 %v3773
    %v5314 = vunpack.c.h.b16 %v3773
    %v5315 = vunpack.c.l.b16 %v3774
    %v5316 = vunpack.c.h.b16 %v3774
    %v5317 = vunpack.c.l.b16 %v3775
    %v5318 = vunpack.c.h.b16 %v3775
    %v5319 = vunpack.c.l.b16 %v3776
    %v5320 = vunpack.c.h.b16 %v3776
    %v5321 = vunpack.c.l.b16 %v3777
    %v5322 = vunpack.c.h.b16 %v3777
    %v5323 = vunpack.c.l.b16 %v3778
    %v5324 = vunpack.c.h.b16 %v3778
    %v5325 = vunpack.c.l.b16 %v3779
    %v5326 = vunpack.c.h.b16 %v3779
    %v5327 = vunpack.c.l.b16 %v3780
    %v5328 = vunpack.c.h.b16 %v3780
    %v5329 = vunpack.c.l.b16 %v3781
    %v5330 = vunpack.c.h.b16 %v3781
    %v5331 = vunpack.c.l.b16 %v3782
    %v5332 = vunpack.c.h.b16 %v3782
    %v5333 = vunpack.c.l.b16 %v3783
    %v5334 = vunpack.c.h.b16 %v3783
    %v5335 = vunpack.c.l.b16 %v3784
    %v5336 = vunpack.c.h.b16 %v3784
    %v5337 = vunpack.c.l.b16 %v3785
    %v5338 = vunpack.c.h.b16 %v3785
    %v5339 = vunpack.c.l.b16 %v3786
    %v5340 = vunpack.c.h.b16 %v3786
    %v5341 = vunpack.c.l.b16 %v3787
    %v5342 = vunpack.c.h.b16 %v3787
    %v5343 = vunpack.c.l.b16 %v3788
    %v5344 = vunpack.c.h.b16 %v3788
    %v5345 = vunpack.c.l.b16 %v3789
    %v5346 = vunpack.c.h.b16 %v3789
    %v5347 = vunpack.c.l.b16 %v3790
    %v5348 = vunpack.c.h.b16 %v3790
    %v5349 = vunpack.c.l.b16 %v3791
    %v5350 = vunpack.c.h.b16 %v3791
    %v5351 = vunpack.c.l.b16 %v3792
    %v5352 = vunpack.c.h.b16 %v3792
    %v5353 = vunpack.c.l.b16 %v3793
    %v5354 = vunpack.c.h.b16 %v3793
    %v5355 = vunpack.c.l.b16 %v3794
    %v5356 = vunpack.c.h.b16 %v3794
    %v5357 = vunpack.c.l.b16 %v3795
    %v5358 = vunpack.c.h.b16 %v3795
    %v5359 = vunpack.c.l.b16 %v3796
    %v5360 = vunpack.c.h.b16 %v3796
    %v5361 = vunpack.c.l.b16 %v3797
    %v5362 = vunpack.c.h.b16 %v3797
    %v5363 = vunpack.c.l.b16 %v3798
    %v5364 = vunpack.c.h.b16 %v3798
    %v5365 = vunpack.c.l.b16 %v3799
    %v5366 = vunpack.c.h.b16 %v3799
    %v5367 = vunpack.c.l.b16 %v3800
    %v5368 = vunpack.c.h.b16 %v3800
    %v5369 = vunpack.c.l.b16 %v3801
    %v5370 = vunpack.c.h.b16 %v3801
    %v5371 = vunpack.c.l.b16 %v3802
    %v5372 = vunpack.c.h.b16 %v3802
    %v5373 = vunpack.c.l.b16 %v3803
    %v5374 = vunpack.c.h.b16 %v3803
    %v5375 = vunpack.c.l.b16 %v3804
    %v5376 = vunpack.c.h.b16 %v3804
    %v5377 = vunpack.c.l.b16 %v3805
    %v5378 = vunpack.c.h.b16 %v3805
    %v5379 = vunpack.c.l.b16 %v3806
    %v5380 = vunpack.c.h.b16 %v3806
    %v5381 = vunpack.c.l.b16 %v3807
    %v5382 = vunpack.c.h.b16 %v3807
    %v5383 = vunpack.c.l.b16 %v3808
    %v5384 = vunpack.c.h.b16 %v3808
    %v5385 = vunpack.c.l.b16 %v3809
    %v5386 = vunpack.c.h.b16 %v3809
    %v5387 = vunpack.c.l.b16 %v3810
    %v5388 = vunpack.c.h.b16 %v3810
    %v5389 = vpack.c.b16 %v4373, %v4365
    %v5390 = vpack.c.b16 %v4374, %v4366
    %v5391 = vpack.c.b16 %v4375, %v4367
    %v5392 = vpack.c.b16 %v4376, %v4368
    %v5393 = vpack.c.b16 %v4377, %v4369
    %v5394 = vpack.c.b16 %v4378, %v4370
    %v5395 = vpack.c.b16 %v4379, %v4371
    %v5396 = vpack.c.b16 %v4380, %v4372
    %v5397 = vpack.c.b16 %v4389, %v4381
    %v5398 = vpack.c.b16 %v4390, %v4382
    %v5399 = vpack.c.b16 %v4391, %v4383
    %v5400 = vpack.c.b16 %v4392, %v4384
    %v5401 = vpack.c.b16 %v4393, %v4385
    %v5402 = vpack.c.b16 %v4394, %v4386
    %v5403 = vpack.c.b16 %v4395, %v4387
    %v5404 = vpack.c.b16 %v4396, %v4388
    %v5405 = vpack.c.b16 %v4405, %v4397
    %v5406 = vpack.c.b16 %v4406, %v4398
    %v5407 = vpack.c.b16 %v4407, %v4399
    %v5408 = vpack.c.b16 %v4408, %v4400
    %v5409 = vpack.c.b16 %v4409, %v4401
    %v5410 = vpack.c.b16 %v4410, %v4402
    %v5411 = vpack.c.b16 %v4411, %v4403
    %v5412 = vpack.c.b16 %v4412, %v4404
    %v5413 = vpack.c.b16 %v4421, %v4413
    %v5414 = vpack.c.b16 %v4422, %v4414
    %v5415 = vpack.c.b16 %v4423, %v4415
    %v5416 = vpack.c.b16 %v4424, %v4416
    %v5417 = vpack.c.b16 %v4425, %v4417
    %v5418 = vpack.c.b16 %v4426, %v4418
    %v5419 = vpack.c.b16 %v4427, %v4419
    %v5420 = vpack.c.b16 %v4428, %v4420
    %v5421 = vpack.c.b16 %v4437, %v4429
    %v5422 = vpack.c.b16 %v4438, %v4430
    %v5423 = vpack.c.b16 %v4439, %v4431
    %v5424 = vpack.c.b16 %v4440, %v4432
    %v5425 = vpack.c.b16 %v4441, %v4433
    %v5426 = vpack.c.b16 %v4442, %v4434
    %v5427 = vpack.c.b16 %v4443, %v4435
    %v5428 = vpack.c.b16 %v4444, %v4436
    %v5429 = vpack.c.b16 %v4453, %v4445
    %v5430 = vpack.c.b16 %v4454, %v4446
    %v5431 = vpack.c.b16 %v4455, %v4447
    %v5432 = vpack.c.b16 %v4456, %v4448
    %v5433 = vpack.c.b16 %v4457, %v4449
    %v5434 = vpack.c.b16 %v4458, %v4450
    %v5435 = vpack.c.b16 %v4459, %v4451
    %v5436 = vpack.c.b16 %v4460, %v4452
    %v5437 = vpack.c.b16 %v4469, %v4461
    %v5438 = vpack.c.b16 %v4470, %v4462
    %v5439 = vpack.c.b16 %v4471, %v4463
    %v5440 = vpack.c.b16 %v4472, %v4464
    %v5441 = vpack.c.b16 %v4473, %v4465
    %v5442 = vpack.c.b16 %v4474, %v4466
    %v5443 = vpack.c.b16 %v4475, %v4467
    %v5444 = vpack.c.b16 %v4476, %v4468
    %v5445 = vpack.c.b16 %v4485, %v4477
    %v5446 = vpack.c.b16 %v4486, %v4478
    %v5447 = vpack.c.b16 %v4487, %v4479
    %v5448 = vpack.c.b16 %v4488, %v4480
    %v5449 = vpack.c.b16 %v4489, %v4481
    %v5450 = vpack.c.b16 %v4490, %v4482
    %v5451 = vpack.c.b16 %v4491, %v4483
    %v5452 = vpack.c.b16 %v4492, %v4484
    %v5453 = vpack.c.b16 %v4501, %v4493
    %v5454 = vpack.c.b16 %v4502, %v4494
    %v5455 = vpack.c.b16 %v4503, %v4495
    %v5456 = vpack.c.b16 %v4504, %v4496
    %v5457 = vpack.c.b16 %v4505, %v4497
    %v5458 = vpack.c.b16 %v4506, %v4498
    %v5459 = vpack.c.b16 %v4507, %v4499
    %v5460 = vpack.c.b16 %v4508, %v4500
    %v5461 = vpack.c.b16 %v4517, %v4509
    %v5462 = vpack.c.b16 %v4518, %v4510
    %v5463 = vpack.c.b16 %v4519, %v4511
    %v5464 = vpack.c.b16 %v4520, %v4512
    %v5465 = vpack.c.b16 %v4521, %v4513
    %v5466 = vpack.c.b16 %v4522, %v4514
    %v5467 = vpack.c.b16 %v4523, %v4515
    %v5468 = vpack.c.b16 %v4524, %v4516
    %v5469 = vpack.c.b16 %v4533, %v4525
    %v5470 = vpack.c.b16 %v4534, %v4526
    %v5471 = vpack.c.b16 %v4535, %v4527
    %v5472 = vpack.c.b16 %v4536, %v4528
    %v5473 = vpack.c.b16 %v4537, %v4529
    %v5474 = vpack.c.b16 %v4538, %v4530
    %v5475 = vpack.c.b16 %v4539, %v4531
    %v5476 = vpack.c.b16 %v4540, %v4532
    %v5477 = vpack.c.b16 %v4549, %v4541
    %v5478 = vpack.c.b16 %v4550, %v4542
    %v5479 = vpack.c.b16 %v4551, %v4543
    %v5480 = vpack.c.b16 %v4552, %v4544
    %v5481 = vpack.c.b16 %v4553, %v4545
    %v5482 = vpack.c.b16 %v4554, %v4546
    %v5483 = vpack.c.b16 %v4555, %v4547
    %v5484 = vpack.c.b16 %v4556, %v4548
    %v5485 = vpack.c.b16 %v4565, %v4557
    %v5486 = vpack.c.b16 %v4566, %v4558
    %v5487 = vpack.c.b16 %v4567, %v4559
    %v5488 = vpack.c.b16 %v4568, %v4560
    %v5489 = vpack.c.b16 %v4569, %v4561
    %v5490 = vpack.c.b16 %v4570, %v4562
    %v5491 = vpack.c.b16 %v4571, %v4563
    %v5492 = vpack.c.b16 %v4572, %v4564
    %v5493 = vpack.c.b16 %v4581, %v4573
    %v5494 = vpack.c.b16 %v4582, %v4574
    %v5495 = vpack.c.b16 %v4583, %v4575
    %v5496 = vpack.c.b16 %v4584, %v4576
    %v5497 = vpack.c.b16 %v4585, %v4577
    %v5498 = vpack.c.b16 %v4586, %v4578
    %v5499 = vpack.c.b16 %v4587, %v4579
    %v5500 = vpack.c.b16 %v4588, %v4580
    %v5501 = vpack.c.b16 %v4597, %v4589
    %v5502 = vpack.c.b16 %v4598, %v4590
    %v5503 = vpack.c.b16 %v4599, %v4591
    %v5504 = vpack.c.b16 %v4600, %v4592
    %v5505 = vpack.c.b16 %v4601, %v4593
    %v5506 = vpack.c.b16 %v4602, %v4594
    %v5507 = vpack.c.b16 %v4603, %v4595
    %v5508 = vpack.c.b16 %v4604, %v4596
    %v5509 = vpack.c.b16 %v4613, %v4605
    %v5510 = vpack.c.b16 %v4614, %v4606
    %v5511 = vpack.c.b16 %v4615, %v4607
    %v5512 = vpack.c.b16 %v4616, %v4608
    %v5513 = vpack.c.b16 %v4617, %v4609
    %v5514 = vpack.c.b16 %v4618, %v4610
    %v5515 = vpack.c.b16 %v4619, %v4611
    %v5516 = vpack.c.b16 %v4620, %v4612
    %v5517 = vpack.c.b16 %v4629, %v4621
    %v5518 = vpack.c.b16 %v4630, %v4622
    %v5519 = vpack.c.b16 %v4631, %v4623
    %v5520 = vpack.c.b16 %v4632, %v4624
    %v5521 = vpack.c.b16 %v4633, %v4625
    %v5522 = vpack.c.b16 %v4634, %v4626
    %v5523 = vpack.c.b16 %v4635, %v4627
    %v5524 = vpack.c.b16 %v4636, %v4628
    %v5525 = vpack.c.b16 %v4645, %v4637
    %v5526 = vpack.c.b16 %v4646, %v4638
    %v5527 = vpack.c.b16 %v4647, %v4639
    %v5528 = vpack.c.b16 %v4648, %v4640
    %v5529 = vpack.c.b16 %v4649, %v4641
    %v5530 = vpack.c.b16 %v4650, %v4642
    %v5531 = vpack.c.b16 %v4651, %v4643
    %v5532 = vpack.c.b16 %v4652, %v4644
    %v5533 = vpack.c.b16 %v4661, %v4653
    %v5534 = vpack.c.b16 %v4662, %v4654
    %v5535 = vpack.c.b16 %v4663, %v4655
    %v5536 = vpack.c.b16 %v4664, %v4656
    %v5537 = vpack.c.b16 %v4665, %v4657
    %v5538 = vpack.c.b16 %v4666, %v4658
    %v5539 = vpack.c.b16 %v4667, %v4659
    %v5540 = vpack.c.b16 %v4668, %v4660
    %v5541 = vpack.c.b16 %v4677, %v4669
    %v5542 = vpack.c.b16 %v4678, %v4670
    %v5543 = vpack.c.b16 %v4679, %v4671
    %v5544 = vpack.c.b16 %v4680, %v4672
    %v5545 = vpack.c.b16 %v4681, %v4673
    %v5546 = vpack.c.b16 %v4682, %v4674
    %v5547 = vpack.c.b16 %v4683, %v4675
    %v5548 = vpack.c.b16 %v4684, %v4676
    %v5549 = vpack.c.b16 %v4693, %v4685
    %v5550 = vpack.c.b16 %v4694, %v4686
    %v5551 = vpack.c.b16 %v4695, %v4687
    %v5552 = vpack.c.b16 %v4696, %v4688
    %v5553 = vpack.c.b16 %v4697, %v4689
    %v5554 = vpack.c.b16 %v4698, %v4690
    %v5555 = vpack.c.b16 %v4699, %v4691
    %v5556 = vpack.c.b16 %v4700, %v4692
    %v5557 = vpack.c.b16 %v4709, %v4701
    %v5558 = vpack.c.b16 %v4710, %v4702
    %v5559 = vpack.c.b16 %v4711, %v4703
    %v5560 = vpack.c.b16 %v4712, %v4704
    %v5561 = vpack.c.b16 %v4713, %v4705
    %v5562 = vpack.c.b16 %v4714, %v4706
    %v5563 = vpack.c.b16 %v4715, %v4707
    %v5564 = vpack.c.b16 %v4716, %v4708
    %v5565 = vpack.c.b16 %v4725, %v4717
    %v5566 = vpack.c.b16 %v4726, %v4718
    %v5567 = vpack.c.b16 %v4727, %v4719
    %v5568 = vpack.c.b16 %v4728, %v4720
    %v5569 = vpack.c.b16 %v4729, %v4721
    %v5570 = vpack.c.b16 %v4730, %v4722
    %v5571 = vpack.c.b16 %v4731, %v4723
    %v5572 = vpack.c.b16 %v4732, %v4724
    %v5573 = vpack.c.b16 %v4741, %v4733
    %v5574 = vpack.c.b16 %v4742, %v4734
    %v5575 = vpack.c.b16 %v4743, %v4735
    %v5576 = vpack.c.b16 %v4744, %v4736
    %v5577 = vpack.c.b16 %v4745, %v4737
    %v5578 = vpack.c.b16 %v4746, %v4738
    %v5579 = vpack.c.b16 %v4747, %v4739
    %v5580 = vpack.c.b16 %v4748, %v4740
    %v5581 = vpack.c.b16 %v4757, %v4749
    %v5582 = vpack.c.b16 %v4758, %v4750
    %v5583 = vpack.c.b16 %v4759, %v4751
    %v5584 = vpack.c.b16 %v4760, %v4752
    %v5585 = vpack.c.b16 %v4761, %v4753
    %v5586 = vpack.c.b16 %v4762, %v4754
    %v5587 = vpack.c.b16 %v4763, %v4755
    %v5588 = vpack.c.b16 %v4764, %v4756
    %v5589 = vpack.c.b16 %v4773, %v4765
    %v5590 = vpack.c.b16 %v4774, %v4766
    %v5591 = vpack.c.b16 %v4775, %v4767
    %v5592 = vpack.c.b16 %v4776, %v4768
    %v5593 = vpack.c.b16 %v4777, %v4769
    %v5594 = vpack.c.b16 %v4778, %v4770
    %v5595 = vpack.c.b16 %v4779, %v4771
    %v5596 = vpack.c.b16 %v4780, %v4772
    %v5597 = vpack.c.b16 %v4789, %v4781
    %v5598 = vpack.c.b16 %v4790, %v4782
    %v5599 = vpack.c.b16 %v4791, %v4783
    %v5600 = vpack.c.b16 %v4792, %v4784
    %v5601 = vpack.c.b16 %v4793, %v4785
    %v5602 = vpack.c.b16 %v4794, %v4786
    %v5603 = vpack.c.b16 %v4795, %v4787
    %v5604 = vpack.c.b16 %v4796, %v4788
    %v5605 = vpack.c.b16 %v4805, %v4797
    %v5606 = vpack.c.b16 %v4806, %v4798
    %v5607 = vpack.c.b16 %v4807, %v4799
    %v5608 = vpack.c.b16 %v4808, %v4800
    %v5609 = vpack.c.b16 %v4809, %v4801
    %v5610 = vpack.c.b16 %v4810, %v4802
    %v5611 = vpack.c.b16 %v4811, %v4803
    %v5612 = vpack.c.b16 %v4812, %v4804
    %v5613 = vpack.c.b16 %v4821, %v4813
    %v5614 = vpack.c.b16 %v4822, %v4814
    %v5615 = vpack.c.b16 %v4823, %v4815
    %v5616 = vpack.c.b16 %v4824, %v4816
    %v5617 = vpack.c.b16 %v4825, %v4817
    %v5618 = vpack.c.b16 %v4826, %v4818
    %v5619 = vpack.c.b16 %v4827, %v4819
    %v5620 = vpack.c.b16 %v4828, %v4820
    %v5621 = vpack.c.b16 %v4837, %v4829
    %v5622 = vpack.c.b16 %v4838, %v4830
    %v5623 = vpack.c.b16 %v4839, %v4831
    %v5624 = vpack.c.b16 %v4840, %v4832
    %v5625 = vpack.c.b16 %v4841, %v4833
    %v5626 = vpack.c.b16 %v4842, %v4834
    %v5627 = vpack.c.b16 %v4843, %v4835
    %v5628 = vpack.c.b16 %v4844, %v4836
    %v5629 = vpack.c.b16 %v4853, %v4845
    %v5630 = vpack.c.b16 %v4854, %v4846
    %v5631 = vpack.c.b16 %v4855, %v4847
    %v5632 = vpack.c.b16 %v4856, %v4848
    %v5633 = vpack.c.b16 %v4857, %v4849
    %v5634 = vpack.c.b16 %v4858, %v4850
    %v5635 = vpack.c.b16 %v4859, %v4851
    %v5636 = vpack.c.b16 %v4860, %v4852
    %v5637 = vpack.c.b16 %v4869, %v4861
    %v5638 = vpack.c.b16 %v4870, %v4862
    %v5639 = vpack.c.b16 %v4871, %v4863
    %v5640 = vpack.c.b16 %v4872, %v4864
    %v5641 = vpack.c.b16 %v4873, %v4865
    %v5642 = vpack.c.b16 %v4874, %v4866
    %v5643 = vpack.c.b16 %v4875, %v4867
    %v5644 = vpack.c.b16 %v4876, %v4868
    %v5645 = vpack.c.b16 %v4885, %v4877
    %v5646 = vpack.c.b16 %v4886, %v4878
    %v5647 = vpack.c.b16 %v4887, %v4879
    %v5648 = vpack.c.b16 %v4888, %v4880
    %v5649 = vpack.c.b16 %v4889, %v4881
    %v5650 = vpack.c.b16 %v4890, %v4882
    %v5651 = vpack.c.b16 %v4891, %v4883
    %v5652 = vpack.c.b16 %v4892, %v4884
    %v5653 = vpack.c.b16 %v4901, %v4893
    %v5654 = vpack.c.b16 %v4902, %v4894
    %v5655 = vpack.c.b16 %v4903, %v4895
    %v5656 = vpack.c.b16 %v4904, %v4896
    %v5657 = vpack.c.b16 %v4905, %v4897
    %v5658 = vpack.c.b16 %v4906, %v4898
    %v5659 = vpack.c.b16 %v4907, %v4899
    %v5660 = vpack.c.b16 %v4908, %v4900
    %v5661 = vpack.c.b16 %v4917, %v4909
    %v5662 = vpack.c.b16 %v4918, %v4910
    %v5663 = vpack.c.b16 %v4919, %v4911
    %v5664 = vpack.c.b16 %v4920, %v4912
    %v5665 = vpack.c.b16 %v4921, %v4913
    %v5666 = vpack.c.b16 %v4922, %v4914
    %v5667 = vpack.c.b16 %v4923, %v4915
    %v5668 = vpack.c.b16 %v4924, %v4916
    %v5669 = vpack.c.b16 %v4933, %v4925
    %v5670 = vpack.c.b16 %v4934, %v4926
    %v5671 = vpack.c.b16 %v4935, %v4927
    %v5672 = vpack.c.b16 %v4936, %v4928
    %v5673 = vpack.c.b16 %v4937, %v4929
    %v5674 = vpack.c.b16 %v4938, %v4930
    %v5675 = vpack.c.b16 %v4939, %v4931
    %v5676 = vpack.c.b16 %v4940, %v4932
    %v5677 = vpack.c.b16 %v4949, %v4941
    %v5678 = vpack.c.b16 %v4950, %v4942
    %v5679 = vpack.c.b16 %v4951, %v4943
    %v5680 = vpack.c.b16 %v4952, %v4944
    %v5681 = vpack.c.b16 %v4953, %v4945
    %v5682 = vpack.c.b16 %v4954, %v4946
    %v5683 = vpack.c.b16 %v4955, %v4947
    %v5684 = vpack.c.b16 %v4956, %v4948
    %v5685 = vpack.c.b16 %v4965, %v4957
    %v5686 = vpack.c.b16 %v4966, %v4958
    %v5687 = vpack.c.b16 %v4967, %v4959
    %v5688 = vpack.c.b16 %v4968, %v4960
    %v5689 = vpack.c.b16 %v4969, %v4961
    %v5690 = vpack.c.b16 %v4970, %v4962
    %v5691 = vpack.c.b16 %v4971, %v4963
    %v5692 = vpack.c.b16 %v4972, %v4964
    %v5693 = vpack.c.b16 %v4981, %v4973
    %v5694 = vpack.c.b16 %v4982, %v4974
    %v5695 = vpack.c.b16 %v4983, %v4975
    %v5696 = vpack.c.b16 %v4984, %v4976
    %v5697 = vpack.c.b16 %v4985, %v4977
    %v5698 = vpack.c.b16 %v4986, %v4978
    %v5699 = vpack.c.b16 %v4987, %v4979
    %v5700 = vpack.c.b16 %v4988, %v4980
    %v5701 = vpack.c.b16 %v4997, %v4989
    %v5702 = vpack.c.b16 %v4998, %v4990
    %v5703 = vpack.c.b16 %v4999, %v4991
    %v5704 = vpack.c.b16 %v5000, %v4992
    %v5705 = vpack.c.b16 %v5001, %v4993
    %v5706 = vpack.c.b16 %v5002, %v4994
    %v5707 = vpack.c.b16 %v5003, %v4995
    %v5708 = vpack.c.b16 %v5004, %v4996
    %v5709 = vpack.c.b16 %v5013, %v5005
    %v5710 = vpack.c.b16 %v5014, %v5006
    %v5711 = vpack.c.b16 %v5015, %v5007
    %v5712 = vpack.c.b16 %v5016, %v5008
    %v5713 = vpack.c.b16 %v5017, %v5009
    %v5714 = vpack.c.b16 %v5018, %v5010
    %v5715 = vpack.c.b16 %v5019, %v5011
    %v5716 = vpack.c.b16 %v5020, %v5012
    %v5717 = vpack.c.b16 %v5029, %v5021
    %v5718 = vpack.c.b16 %v5030, %v5022
    %v5719 = vpack.c.b16 %v5031, %v5023
    %v5720 = vpack.c.b16 %v5032, %v5024
    %v5721 = vpack.c.b16 %v5033, %v5025
    %v5722 = vpack.c.b16 %v5034, %v5026
    %v5723 = vpack.c.b16 %v5035, %v5027
    %v5724 = vpack.c.b16 %v5036, %v5028
    %v5725 = vpack.c.b16 %v5045, %v5037
    %v5726 = vpack.c.b16 %v5046, %v5038
    %v5727 = vpack.c.b16 %v5047, %v5039
    %v5728 = vpack.c.b16 %v5048, %v5040
    %v5729 = vpack.c.b16 %v5049, %v5041
    %v5730 = vpack.c.b16 %v5050, %v5042
    %v5731 = vpack.c.b16 %v5051, %v5043
    %v5732 = vpack.c.b16 %v5052, %v5044
    %v5733 = vpack.c.b16 %v5061, %v5053
    %v5734 = vpack.c.b16 %v5062, %v5054
    %v5735 = vpack.c.b16 %v5063, %v5055
    %v5736 = vpack.c.b16 %v5064, %v5056
    %v5737 = vpack.c.b16 %v5065, %v5057
    %v5738 = vpack.c.b16 %v5066, %v5058
    %v5739 = vpack.c.b16 %v5067, %v5059
    %v5740 = vpack.c.b16 %v5068, %v5060
    %v5741 = vpack.c.b16 %v5077, %v5069
    %v5742 = vpack.c.b16 %v5078, %v5070
    %v5743 = vpack.c.b16 %v5079, %v5071
    %v5744 = vpack.c.b16 %v5080, %v5072
    %v5745 = vpack.c.b16 %v5081, %v5073
    %v5746 = vpack.c.b16 %v5082, %v5074
    %v5747 = vpack.c.b16 %v5083, %v5075
    %v5748 = vpack.c.b16 %v5084, %v5076
    %v5749 = vpack.c.b16 %v5093, %v5085
    %v5750 = vpack.c.b16 %v5094, %v5086
    %v5751 = vpack.c.b16 %v5095, %v5087
    %v5752 = vpack.c.b16 %v5096, %v5088
    %v5753 = vpack.c.b16 %v5097, %v5089
    %v5754 = vpack.c.b16 %v5098, %v5090
    %v5755 = vpack.c.b16 %v5099, %v5091
    %v5756 = vpack.c.b16 %v5100, %v5092
    %v5757 = vpack.c.b16 %v5109, %v5101
    %v5758 = vpack.c.b16 %v5110, %v5102
    %v5759 = vpack.c.b16 %v5111, %v5103
    %v5760 = vpack.c.b16 %v5112, %v5104
    %v5761 = vpack.c.b16 %v5113, %v5105
    %v5762 = vpack.c.b16 %v5114, %v5106
    %v5763 = vpack.c.b16 %v5115, %v5107
    %v5764 = vpack.c.b16 %v5116, %v5108
    %v5765 = vpack.c.b16 %v5125, %v5117
    %v5766 = vpack.c.b16 %v5126, %v5118
    %v5767 = vpack.c.b16 %v5127, %v5119
    %v5768 = vpack.c.b16 %v5128, %v5120
    %v5769 = vpack.c.b16 %v5129, %v5121
    %v5770 = vpack.c.b16 %v5130, %v5122
    %v5771 = vpack.c.b16 %v5131, %v5123
    %v5772 = vpack.c.b16 %v5132, %v5124
    %v5773 = vpack.c.b16 %v5141, %v5133
    %v5774 = vpack.c.b16 %v5142, %v5134
    %v5775 = vpack.c.b16 %v5143, %v5135
    %v5776 = vpack.c.b16 %v5144, %v5136
    %v5777 = vpack.c.b16 %v5145, %v5137
    %v5778 = vpack.c.b16 %v5146, %v5138
    %v5779 = vpack.c.b16 %v5147, %v5139
    %v5780 = vpack.c.b16 %v5148, %v5140
    %v5781 = vpack.c.b16 %v5157, %v5149
    %v5782 = vpack.c.b16 %v5158, %v5150
    %v5783 = vpack.c.b16 %v5159, %v5151
    %v5784 = vpack.c.b16 %v5160, %v5152
    %v5785 = vpack.c.b16 %v5161, %v5153
    %v5786 = vpack.c.b16 %v5162, %v5154
    %v5787 = vpack.c.b16 %v5163, %v5155
    %v5788 = vpack.c.b16 %v5164, %v5156
    %v5789 = vpack.c.b16 %v5173, %v5165
    %v5790 = vpack.c.b16 %v5174, %v5166
    %v5791 = vpack.c.b16 %v5175, %v5167
    %v5792 = vpack.c.b16 %v5176, %v5168
    %v5793 = vpack.c.b16 %v5177, %v5169
    %v5794 = vpack.c.b16 %v5178, %v5170
    %v5795 = vpack.c.b16 %v5179, %v5171
    %v5796 = vpack.c.b16 %v5180, %v5172
    %v5797 = vpack.c.b16 %v5189, %v5181
    %v5798 = vpack.c.b16 %v5190, %v5182
    %v5799 = vpack.c.b16 %v5191, %v5183
    %v5800 = vpack.c.b16 %v5192, %v5184
    %v5801 = vpack.c.b16 %v5193, %v5185
    %v5802 = vpack.c.b16 %v5194, %v5186
    %v5803 = vpack.c.b16 %v5195, %v5187
    %v5804 = vpack.c.b16 %v5196, %v5188
    %v5805 = vpack.c.b16 %v5205, %v5197
    %v5806 = vpack.c.b16 %v5206, %v5198
    %v5807 = vpack.c.b16 %v5207, %v5199
    %v5808 = vpack.c.b16 %v5208, %v5200
    %v5809 = vpack.c.b16 %v5209, %v5201
    %v5810 = vpack.c.b16 %v5210, %v5202
    %v5811 = vpack.c.b16 %v5211, %v5203
    %v5812 = vpack.c.b16 %v5212, %v5204
    %v5813 = vpack.c.b16 %v5221, %v5213
    %v5814 = vpack.c.b16 %v5222, %v5214
    %v5815 = vpack.c.b16 %v5223, %v5215
    %v5816 = vpack.c.b16 %v5224, %v5216
    %v5817 = vpack.c.b16 %v5225, %v5217
    %v5818 = vpack.c.b16 %v5226, %v5218
    %v5819 = vpack.c.b16 %v5227, %v5219
    %v5820 = vpack.c.b16 %v5228, %v5220
    %v5821 = vpack.c.b16 %v5237, %v5229
    %v5822 = vpack.c.b16 %v5238, %v5230
    %v5823 = vpack.c.b16 %v5239, %v5231
    %v5824 = vpack.c.b16 %v5240, %v5232
    %v5825 = vpack.c.b16 %v5241, %v5233
    %v5826 = vpack.c.b16 %v5242, %v5234
    %v5827 = vpack.c.b16 %v5243, %v5235
    %v5828 = vpack.c.b16 %v5244, %v5236
    %v5829 = vpack.c.b16 %v5253, %v5245
    %v5830 = vpack.c.b16 %v5254, %v5246
    %v5831 = vpack.c.b16 %v5255, %v5247
    %v5832 = vpack.c.b16 %v5256, %v5248
    %v5833 = vpack.c.b16 %v5257, %v5249
    %v5834 = vpack.c.b16 %v5258, %v5250
    %v5835 = vpack.c.b16 %v5259, %v5251
    %v5836 = vpack.c.b16 %v5260, %v5252
    %v5837 = vpack.c.b16 %v5269, %v5261
    %v5838 = vpack.c.b16 %v5270, %v5262
    %v5839 = vpack.c.b16 %v5271, %v5263
    %v5840 = vpack.c.b16 %v5272, %v5264
    %v5841 = vpack.c.b16 %v5273, %v5265
    %v5842 = vpack.c.b16 %v5274, %v5266
    %v5843 = vpack.c.b16 %v5275, %v5267
    %v5844 = vpack.c.b16 %v5276, %v5268
    %v5845 = vpack.c.b16 %v5285, %v5277
    %v5846 = vpack.c.b16 %v5286, %v5278
    %v5847 = vpack.c.b16 %v5287, %v5279
    %v5848 = vpack.c.b16 %v5288, %v5280
    %v5849 = vpack.c.b16 %v5289, %v5281
    %v5850 = vpack.c.b16 %v5290, %v5282
    %v5851 = vpack.c.b16 %v5291, %v5283
    %v5852 = vpack.c.b16 %v5292, %v5284
    %v5853 = vpack.c.b16 %v5301, %v5293
    %v5854 = vpack.c.b16 %v5302, %v5294
    %v5855 = vpack.c.b16 %v5303, %v5295
    %v5856 = vpack.c.b16 %v5304, %v5296
    %v5857 = vpack.c.b16 %v5305, %v5297
    %v5858 = vpack.c.b16 %v5306, %v5298
    %v5859 = vpack.c.b16 %v5307, %v5299
    %v5860 = vpack.c.b16 %v5308, %v5300
    %v5861 = vpack.c.b16 %v5317, %v5309
    %v5862 = vpack.c.b16 %v5318, %v5310
    %v5863 = vpack.c.b16 %v5319, %v5311
    %v5864 = vpack.c.b16 %v5320, %v5312
    %v5865 = vpack.c.b16 %v5321, %v5313
    %v5866 = vpack.c.b16 %v5322, %v5314
    %v5867 = vpack.c.b16 %v5323, %v5315
    %v5868 = vpack.c.b16 %v5324, %v5316
    %v5869 = vpack.c.b16 %v5333, %v5325
    %v5870 = vpack.c.b16 %v5334, %v5326
    %v5871 = vpack.c.b16 %v5335, %v5327
    %v5872 = vpack.c.b16 %v5336, %v5328
    %v5873 = vpack.c.b16 %v5337, %v5329
    %v5874 = vpack.c.b16 %v5338, %v5330
    %v5875 = vpack.c.b16 %v5339, %v5331
    %v5876 = vpack.c.b16 %v5340, %v5332
    %v5877 = vpack.c.b16 %v5349, %v5341
    %v5878 = vpack.c.b16 %v5350, %v5342
    %v5879 = vpack.c.b16 %v5351, %v5343
    %v5880 = vpack.c.b16 %v5352, %v5344
    %v5881 = vpack.c.b16 %v5353, %v5345
    %v5882 = vpack.c.b16 %v5354, %v5346
    %v5883 = vpack.c.b16 %v5355, %v5347
    %v5884 = vpack.c.b16 %v5356, %v5348
    %v5885 = vpack.c.b16 %v5365, %v5357
    %v5886 = vpack.c.b16 %v5366, %v5358
    %v5887 = vpack.c.b16 %v5367, %v5359
    %v5888 = vpack.c.b16 %v5368, %v5360
    %v5889 = vpack.c.b16 %v5369, %v5361
    %v5890 = vpack.c.b16 %v5370, %v5362
    %v5891 = vpack.c.b16 %v5371, %v5363
    %v5892 = vpack.c.b16 %v5372, %v5364
    %v5893 = vpack.c.b16 %v5381, %v5373
    %v5894 = vpack.c.b16 %v5382, %v5374
    %v5895 = vpack.c.b16 %v5383, %v5375
    %v5896 = vpack.c.b16 %v5384, %v5376
    %v5897 = vpack.c.b16 %v5385, %v5377
    %v5898 = vpack.c.b16 %v5386, %v5378
    %v5899 = vpack.c.b16 %v5387, %v5379
    %v5900 = vpack.c.b16 %v5388, %v5380
    %6413 = vmatprep.subr.bf16.mxu0 %v5390
    %6414 = vmatpush1.bf16.msra.mxu0 %v5389
    %6415 = vmatprep.subr.bf16.mxu0 %v5398
    %6416 = vmatpush1.bf16.msra.mxu0 %v5397
    %6417 = vmatprep.subr.bf16.mxu0 %v5406
    %6418 = vmatpush1.bf16.msra.mxu0 %v5405
    %6419 = vmatprep.subr.bf16.mxu0 %v5414
    %6420 = vmatpush1.bf16.msra.mxu0 %v5413
    %6421 = vmatprep.subr.bf16.mxu0 %v5422
    %6422 = vmatpush1.bf16.msra.mxu0 %v5421
    %6423 = vmatprep.subr.bf16.mxu0 %v5430
    %6424 = vmatpush1.bf16.msra.mxu0 %v5429
    %6425 = vmatprep.subr.bf16.mxu0 %v5438
    %6426 = vmatpush1.bf16.msra.mxu0 %v5437
    %6427 = vmatprep.subr.bf16.mxu0 %v5446
    %6428 = vmatpush1.bf16.msra.mxu0 %v5445
    %6429 = vmatprep.subr.bf16.mxu0 %v5454
    %6430 = vmatpush1.bf16.msra.mxu0 %v5453
    %6431 = vmatprep.subr.bf16.mxu0 %v5462
    %6432 = vmatpush1.bf16.msra.mxu0 %v5461
    %6433 = vmatprep.subr.bf16.mxu0 %v5470
    %6434 = vmatpush1.bf16.msra.mxu0 %v5469
    %6435 = vmatprep.subr.bf16.mxu0 %v5478
    %6436 = vmatpush1.bf16.msra.mxu0 %v5477
    %6437 = vmatprep.subr.bf16.mxu0 %v5486
    %6438 = vmatpush1.bf16.msra.mxu0 %v5485
    %6439 = vmatprep.subr.bf16.mxu0 %v5494
    %6440 = vmatpush1.bf16.msra.mxu0 %v5493
    %6441 = vmatprep.subr.bf16.mxu0 %v5502
    %6442 = vmatpush1.bf16.msra.mxu0 %v5501
    %6443 = vmatprep.subr.bf16.mxu0 %v5510
    %6444 = vmatpush1.bf16.msra.mxu0 %v5509
    %6445 = vmatprep.mubr.bf16.mxu0 %v3292
    %6446 = vmatmul.mubr.bf16.gmra.mrb[0].mxu0 %v3291
    %v6447 = vpop.f32.mrb[0].mxu0
    %v6448 = vadd.f32 %v3816, %v6447
    %v6449 = vpop.f32.mrb[0].mxu0
    %v6450 = vadd.f32 %v3820, %v6449
    %v6451 = vpop.f32.mrb[0].mxu0
    %v6452 = vpop.f32.mrb[0].mxu0
    %6453 = vdwg.mxu0
    %6454 = vmatprep.subr.bf16.mxu0 %v5518
    %6455 = vmatpush1.bf16.msra.mxu0 %v5517
    %6456 = vmatprep.subr.bf16.mxu0 %v5526
    %6457 = vmatpush1.bf16.msra.mxu0 %v5525
    %6458 = vmatprep.subr.bf16.mxu0 %v5534
    %6459 = vmatpush1.bf16.msra.mxu0 %v5533
    %6460 = vmatprep.subr.bf16.mxu0 %v5542
    %6461 = vmatpush1.bf16.msra.mxu0 %v5541
    %6462 = vmatprep.subr.bf16.mxu0 %v5550
    %6463 = vmatpush1.bf16.msra.mxu0 %v5549
    %6464 = vmatprep.subr.bf16.mxu0 %v5558
    %6465 = vmatpush1.bf16.msra.mxu0 %v5557
    %6466 = vmatprep.subr.bf16.mxu0 %v5566
    %6467 = vmatpush1.bf16.msra.mxu0 %v5565
    %6468 = vmatprep.subr.bf16.mxu0 %v5574
    %6469 = vmatpush1.bf16.msra.mxu0 %v5573
    %6470 = vmatprep.subr.bf16.mxu0 %v5582
    %6471 = vmatpush1.bf16.msra.mxu0 %v5581
    %6472 = vmatprep.subr.bf16.mxu0 %v5590
    %6473 = vmatpush1.bf16.msra.mxu0 %v5589
    %6474 = vmatprep.subr.bf16.mxu0 %v5598
    %6475 = vmatpush1.bf16.msra.mxu0 %v5597
    %6476 = vmatprep.subr.bf16.mxu0 %v5606
    %6477 = vmatpush1.bf16.msra.mxu0 %v5605
    %6478 = vmatprep.subr.bf16.mxu0 %v5614
    %6479 = vmatpush1.bf16.msra.mxu0 %v5613
    %6480 = vmatprep.subr.bf16.mxu0 %v5622
    %6481 = vmatpush1.bf16.msra.mxu0 %v5621
    %6482 = vmatprep.subr.bf16.mxu0 %v5630
    %6483 = vmatpush1.bf16.msra.mxu0 %v5629
    %6484 = vmatprep.subr.bf16.mxu0 %v5638
    %6485 = vmatpush1.bf16.msra.mxu0 %v5637
    %6486 = vmatprep.mubr.bf16.mxu0 %v3294
    %6487 = vmatmul.mubr.bf16.gmra.mrb[0].mxu0 %v3293
    %v6488 = vpop.f32.mrb[0].mxu0
    %v6489 = vadd.f32 %v6448, %v6488
    %v6490 = vpop.f32.mrb[0].mxu0
    %v6491 = vadd.f32 %v6450, %v6490
    %v6492 = vpop.f32.mrb[0].mxu0
    %v6493 = vpop.f32.mrb[0].mxu0
    %6494 = vdwg.mxu0
    %6495 = vmatprep.subr.bf16.mxu0 %v5646
    %6496 = vmatpush1.bf16.msra.mxu0 %v5645
    %6497 = vmatprep.subr.bf16.mxu0 %v5654
    %6498 = vmatpush1.bf16.msra.mxu0 %v5653
    %6499 = vmatprep.subr.bf16.mxu0 %v5662
    %6500 = vmatpush1.bf16.msra.mxu0 %v5661
    %6501 = vmatprep.subr.bf16.mxu0 %v5670
    %6502 = vmatpush1.bf16.msra.mxu0 %v5669
    %6503 = vmatprep.subr.bf16.mxu0 %v5678
    %6504 = vmatpush1.bf16.msra.mxu0 %v5677
    %6505 = vmatprep.subr.bf16.mxu0 %v5686
    %6506 = vmatpush1.bf16.msra.mxu0 %v5685
    %6507 = vmatprep.subr.bf16.mxu0 %v5694
    %6508 = vmatpush1.bf16.msra.mxu0 %v5693
    %6509 = vmatprep.subr.bf16.mxu0 %v5702
    %6510 = vmatpush1.bf16.msra.mxu0 %v5701
    %6511 = vmatprep.subr.bf16.mxu0 %v5710
    %6512 = vmatpush1.bf16.msra.mxu0 %v5709
    %6513 = vmatprep.subr.bf16.mxu0 %v5718
    %6514 = vmatpush1.bf16.msra.mxu0 %v5717
    %6515 = vmatprep.subr.bf16.mxu0 %v5726
    %6516 = vmatpush1.bf16.msra.mxu0 %v5725
    %6517 = vmatprep.subr.bf16.mxu0 %v5734
    %6518 = vmatpush1.bf16.msra.mxu0 %v5733
    %6519 = vmatprep.subr.bf16.mxu0 %v5742
    %6520 = vmatpush1.bf16.msra.mxu0 %v5741
    %6521 = vmatprep.subr.bf16.mxu0 %v5750
    %6522 = vmatpush1.bf16.msra.mxu0 %v5749
    %6523 = vmatprep.subr.bf16.mxu0 %v5758
    %6524 = vmatpush1.bf16.msra.mxu0 %v5757
    %6525 = vmatprep.subr.bf16.mxu0 %v5766
    %6526 = vmatpush1.bf16.msra.mxu0 %v5765
    %6527 = vmatprep.mubr.bf16.mxu0 %v3296
    %6528 = vmatmul.mubr.bf16.gmra.mrb[0].mxu0 %v3295
    %v6529 = vpop.f32.mrb[0].mxu0
    %v6530 = vadd.f32 %v6489, %v6529
    %v6531 = vpop.f32.mrb[0].mxu0
    %v6532 = vadd.f32 %v6491, %v6531
    %v6533 = vpop.f32.mrb[0].mxu0
    %v6534 = vpop.f32.mrb[0].mxu0
    %6535 = vdwg.mxu0
    %6536 = vmatprep.subr.bf16.mxu0 %v5774
    %6537 = vmatpush1.bf16.msra.mxu0 %v5773
    %6538 = vmatprep.subr.bf16.mxu0 %v5782
    %6539 = vmatpush1.bf16.msra.mxu0 %v5781
    %6540 = vmatprep.subr.bf16.mxu0 %v5790
    %6541 = vmatpush1.bf16.msra.mxu0 %v5789
    %6542 = vmatprep.subr.bf16.mxu0 %v5798
    %6543 = vmatpush1.bf16.msra.mxu0 %v5797
    %6544 = vmatprep.subr.bf16.mxu0 %v5806
    %6545 = vmatpush1.bf16.msra.mxu0 %v5805
    %6546 = vmatprep.subr.bf16.mxu0 %v5814
    %6547 = vmatpush1.bf16.msra.mxu0 %v5813
    %6548 = vmatprep.subr.bf16.mxu0 %v5822
    %6549 = vmatpush1.bf16.msra.mxu0 %v5821
    %6550 = vmatprep.subr.bf16.mxu0 %v5830
    %6551 = vmatpush1.bf16.msra.mxu0 %v5829
    %6552 = vmatprep.subr.bf16.mxu0 %v5838
    %6553 = vmatpush1.bf16.msra.mxu0 %v5837
    %6554 = vmatprep.subr.bf16.mxu0 %v5846
    %6555 = vmatpush1.bf16.msra.mxu0 %v5845
    %6556 = vmatprep.subr.bf16.mxu0 %v5854
    %6557 = vmatpush1.bf16.msra.mxu0 %v5853
    %6558 = vmatprep.subr.bf16.mxu0 %v5862
    %6559 = vmatpush1.bf16.msra.mxu0 %v5861
    %6560 = vmatprep.subr.bf16.mxu0 %v5870
    %6561 = vmatpush1.bf16.msra.mxu0 %v5869
    %6562 = vmatprep.subr.bf16.mxu0 %v5878
    %6563 = vmatpush1.bf16.msra.mxu0 %v5877
    %6564 = vmatprep.subr.bf16.mxu0 %v5886
    %6565 = vmatpush1.bf16.msra.mxu0 %v5885
    %6566 = vmatprep.subr.bf16.mxu0 %v5894
    %6567 = vmatpush1.bf16.msra.mxu0 %v5893
    %6568 = vmatprep.mubr.bf16.mxu0 %v3298
    %6569 = vmatmul.mubr.bf16.gmra.mrb[0].mxu0 %v3297
    %v6570 = vpop.f32.mrb[0].mxu0
    %v6571 = vadd.f32 %v6530, %v6570
    %v6572 = vpop.f32.mrb[0].mxu0
    %v6573 = vadd.f32 %v6532, %v6572
    %v6574 = vpop.f32.mrb[0].mxu0
    %v6575 = vpop.f32.mrb[0].mxu0
    %6576 = vdwg.mxu0
    %6577 = vmatprep.subr.bf16.mxu0 %v5392
    %6578 = vmatpush1.bf16.msra.mxu0 %v5391
    %6579 = vmatprep.subr.bf16.mxu0 %v5400
    %6580 = vmatpush1.bf16.msra.mxu0 %v5399
    %6581 = vmatprep.subr.bf16.mxu0 %v5408
    %6582 = vmatpush1.bf16.msra.mxu0 %v5407
    %6583 = vmatprep.subr.bf16.mxu0 %v5416
    %6584 = vmatpush1.bf16.msra.mxu0 %v5415
    %6585 = vmatprep.subr.bf16.mxu0 %v5424
    %6586 = vmatpush1.bf16.msra.mxu0 %v5423
    %6587 = vmatprep.subr.bf16.mxu0 %v5432
    %6588 = vmatpush1.bf16.msra.mxu0 %v5431
    %6589 = vmatprep.subr.bf16.mxu0 %v5440
    %6590 = vmatpush1.bf16.msra.mxu0 %v5439
    %6591 = vmatprep.subr.bf16.mxu0 %v5448
    %6592 = vmatpush1.bf16.msra.mxu0 %v5447
    %6593 = vmatprep.subr.bf16.mxu0 %v5456
    %6594 = vmatpush1.bf16.msra.mxu0 %v5455
    %6595 = vmatprep.subr.bf16.mxu0 %v5464
    %6596 = vmatpush1.bf16.msra.mxu0 %v5463
    %6597 = vmatprep.subr.bf16.mxu0 %v5472
    %6598 = vmatpush1.bf16.msra.mxu0 %v5471
    %6599 = vmatprep.subr.bf16.mxu0 %v5480
    %6600 = vmatpush1.bf16.msra.mxu0 %v5479
    %6601 = vmatprep.subr.bf16.mxu0 %v5488
    %6602 = vmatpush1.bf16.msra.mxu0 %v5487
    %6603 = vmatprep.subr.bf16.mxu0 %v5496
    %6604 = vmatpush1.bf16.msra.mxu0 %v5495
    %6605 = vmatprep.subr.bf16.mxu0 %v5504
    %6606 = vmatpush1.bf16.msra.mxu0 %v5503
    %6607 = vmatprep.subr.bf16.mxu0 %v5512
    %6608 = vmatpush1.bf16.msra.mxu0 %v5511
    %6609 = vmatprep.mubr.bf16.mxu0 %v3292
    %6610 = vmatmul.mubr.bf16.gmra.mrb[0].mxu0 %v3291
    %v6611 = vpop.f32.mrb[0].mxu0
    %v6612 = vadd.f32 %v3824, %v6611
    %v6613 = vpop.f32.mrb[0].mxu0
    %v6614 = vadd.f32 %v3828, %v6613
    %v6615 = vpop.f32.mrb[0].mxu0
    %v6616 = vpop.f32.mrb[0].mxu0
    %6617 = vdwg.mxu0
    %6618 = vmatprep.subr.bf16.mxu0 %v5520
    %6619 = vmatpush1.bf16.msra.mxu0 %v5519
    %6620 = vmatprep.subr.bf16.mxu0 %v5528
    %6621 = vmatpush1.bf16.msra.mxu0 %v5527
    %6622 = vmatprep.subr.bf16.mxu0 %v5536
    %6623 = vmatpush1.bf16.msra.mxu0 %v5535
    %6624 = vmatprep.subr.bf16.mxu0 %v5544
    %6625 = vmatpush1.bf16.msra.mxu0 %v5543
    %6626 = vmatprep.subr.bf16.mxu0 %v5552
    %6627 = vmatpush1.bf16.msra.mxu0 %v5551
    %6628 = vmatprep.subr.bf16.mxu0 %v5560
    %6629 = vmatpush1.bf16.msra.mxu0 %v5559
    %6630 = vmatprep.subr.bf16.mxu0 %v5568
    %6631 = vmatpush1.bf16.msra.mxu0 %v5567
    %6632 = vmatprep.subr.bf16.mxu0 %v5576
    %6633 = vmatpush1.bf16.msra.mxu0 %v5575
    %6634 = vmatprep.subr.bf16.mxu0 %v5584
    %6635 = vmatpush1.bf16.msra.mxu0 %v5583
    %6636 = vmatprep.subr.bf16.mxu0 %v5592
    %6637 = vmatpush1.bf16.msra.mxu0 %v5591
    %6638 = vmatprep.subr.bf16.mxu0 %v5600
    %6639 = vmatpush1.bf16.msra.mxu0 %v5599
    %6640 = vmatprep.subr.bf16.mxu0 %v5608
    %6641 = vmatpush1.bf16.msra.mxu0 %v5607
    %6642 = vmatprep.subr.bf16.mxu0 %v5616
    %6643 = vmatpush1.bf16.msra.mxu0 %v5615
    %6644 = vmatprep.subr.bf16.mxu0 %v5624
    %6645 = vmatpush1.bf16.msra.mxu0 %v5623
    %6646 = vmatprep.subr.bf16.mxu0 %v5632
    %6647 = vmatpush1.bf16.msra.mxu0 %v5631
    %6648 = vmatprep.subr.bf16.mxu0 %v5640
    %6649 = vmatpush1.bf16.msra.mxu0 %v5639
    %6650 = vmatprep.mubr.bf16.mxu0 %v3294
    %6651 = vmatmul.mubr.bf16.gmra.mrb[0].mxu0 %v3293
    %v6652 = vpop.f32.mrb[0].mxu0
    %v6653 = vadd.f32 %v6612, %v6652
    %v6654 = vpop.f32.mrb[0].mxu0
    %v6655 = vadd.f32 %v6614, %v6654
    %v6656 = vpop.f32.mrb[0].mxu0
    %v6657 = vpop.f32.mrb[0].mxu0
    %6658 = vdwg.mxu0
    %6659 = vmatprep.subr.bf16.mxu0 %v5648
    %6660 = vmatpush1.bf16.msra.mxu0 %v5647
    %6661 = vmatprep.subr.bf16.mxu0 %v5656
    %6662 = vmatpush1.bf16.msra.mxu0 %v5655
    %6663 = vmatprep.subr.bf16.mxu0 %v5664
    %6664 = vmatpush1.bf16.msra.mxu0 %v5663
    %6665 = vmatprep.subr.bf16.mxu0 %v5672
    %6666 = vmatpush1.bf16.msra.mxu0 %v5671
    %6667 = vmatprep.subr.bf16.mxu0 %v5680
    %6668 = vmatpush1.bf16.msra.mxu0 %v5679
    %6669 = vmatprep.subr.bf16.mxu0 %v5688
    %6670 = vmatpush1.bf16.msra.mxu0 %v5687
    %6671 = vmatprep.subr.bf16.mxu0 %v5696
    %6672 = vmatpush1.bf16.msra.mxu0 %v5695
    %6673 = vmatprep.subr.bf16.mxu0 %v5704
    %6674 = vmatpush1.bf16.msra.mxu0 %v5703
    %6675 = vmatprep.subr.bf16.mxu0 %v5712
    %6676 = vmatpush1.bf16.msra.mxu0 %v5711
    %6677 = vmatprep.subr.bf16.mxu0 %v5720
    %6678 = vmatpush1.bf16.msra.mxu0 %v5719
    %6679 = vmatprep.subr.bf16.mxu0 %v5728
    %6680 = vmatpush1.bf16.msra.mxu0 %v5727
    %6681 = vmatprep.subr.bf16.mxu0 %v5736
    %6682 = vmatpush1.bf16.msra.mxu0 %v5735
    %6683 = vmatprep.subr.bf16.mxu0 %v5744
    %6684 = vmatpush1.bf16.msra.mxu0 %v5743
    %6685 = vmatprep.subr.bf16.mxu0 %v5752
    %6686 = vmatpush1.bf16.msra.mxu0 %v5751
    %6687 = vmatprep.subr.bf16.mxu0 %v5760
    %6688 = vmatpush1.bf16.msra.mxu0 %v5759
    %6689 = vmatprep.subr.bf16.mxu0 %v5768
    %6690 = vmatpush1.bf16.msra.mxu0 %v5767
    %6691 = vmatprep.mubr.bf16.mxu0 %v3296
    %6692 = vmatmul.mubr.bf16.gmra.mrb[0].mxu0 %v3295
    %v6693 = vpop.f32.mrb[0].mxu0
    %v6694 = vadd.f32 %v6653, %v6693
    %v6695 = vpop.f32.mrb[0].mxu0
    %v6696 = vadd.f32 %v6655, %v6695
    %v6697 = vpop.f32.mrb[0].mxu0
    %v6698 = vpop.f32.mrb[0].mxu0
    %6699 = vdwg.mxu0
    %6700 = vmatprep.subr.bf16.mxu0 %v5776
    %6701 = vmatpush1.bf16.msra.mxu0 %v5775
    %6702 = vmatprep.subr.bf16.mxu0 %v5784
    %6703 = vmatpush1.bf16.msra.mxu0 %v5783
    %6704 = vmatprep.subr.bf16.mxu0 %v5792
    %6705 = vmatpush1.bf16.msra.mxu0 %v5791
    %6706 = vmatprep.subr.bf16.mxu0 %v5800
    %6707 = vmatpush1.bf16.msra.mxu0 %v5799
    %6708 = vmatprep.subr.bf16.mxu0 %v5808
    %6709 = vmatpush1.bf16.msra.mxu0 %v5807
    %6710 = vmatprep.subr.bf16.mxu0 %v5816
    %6711 = vmatpush1.bf16.msra.mxu0 %v5815
    %6712 = vmatprep.subr.bf16.mxu0 %v5824
    %6713 = vmatpush1.bf16.msra.mxu0 %v5823
    %6714 = vmatprep.subr.bf16.mxu0 %v5832
    %6715 = vmatpush1.bf16.msra.mxu0 %v5831
    %6716 = vmatprep.subr.bf16.mxu0 %v5840
    %6717 = vmatpush1.bf16.msra.mxu0 %v5839
    %6718 = vmatprep.subr.bf16.mxu0 %v5848
    %6719 = vmatpush1.bf16.msra.mxu0 %v5847
    %6720 = vmatprep.subr.bf16.mxu0 %v5856
    %6721 = vmatpush1.bf16.msra.mxu0 %v5855
    %6722 = vmatprep.subr.bf16.mxu0 %v5864
    %6723 = vmatpush1.bf16.msra.mxu0 %v5863
    %6724 = vmatprep.subr.bf16.mxu0 %v5872
    %6725 = vmatpush1.bf16.msra.mxu0 %v5871
    %6726 = vmatprep.subr.bf16.mxu0 %v5880
    %6727 = vmatpush1.bf16.msra.mxu0 %v5879
    %6728 = vmatprep.subr.bf16.mxu0 %v5888
    %6729 = vmatpush1.bf16.msra.mxu0 %v5887
    %6730 = vmatprep.subr.bf16.mxu0 %v5896
    %6731 = vmatpush1.bf16.msra.mxu0 %v5895
    %6732 = vmatprep.mubr.bf16.mxu0 %v3298
    %6733 = vmatmul.mubr.bf16.gmra.mrb[0].mxu0 %v3297
    %v6734 = vpop.f32.mrb[0].mxu0
    %v6735 = vadd.f32 %v6694, %v6734
    %v6736 = vpop.f32.mrb[0].mxu0
    %v6737 = vadd.f32 %v6696, %v6736
    %v6738 = vpop.f32.mrb[0].mxu0
    %v6739 = vpop.f32.mrb[0].mxu0
    %6740 = vdwg.mxu0
    %6741 = vmatprep.subr.bf16.mxu0 %v5394
    %6742 = vmatpush1.bf16.msra.mxu0 %v5393
    %6743 = vmatprep.subr.bf16.mxu0 %v5402
    %6744 = vmatpush1.bf16.msra.mxu0 %v5401
    %6745 = vmatprep.subr.bf16.mxu0 %v5410
    %6746 = vmatpush1.bf16.msra.mxu0 %v5409
    %6747 = vmatprep.subr.bf16.mxu0 %v5418
    %6748 = vmatpush1.bf16.msra.mxu0 %v5417
    %6749 = vmatprep.subr.bf16.mxu0 %v5426
    %6750 = vmatpush1.bf16.msra.mxu0 %v5425
    %6751 = vmatprep.subr.bf16.mxu0 %v5434
    %6752 = vmatpush1.bf16.msra.mxu0 %v5433
    %6753 = vmatprep.subr.bf16.mxu0 %v5442
    %6754 = vmatpush1.bf16.msra.mxu0 %v5441
    %6755 = vmatprep.subr.bf16.mxu0 %v5450
    %6756 = vmatpush1.bf16.msra.mxu0 %v5449
    %6757 = vmatprep.subr.bf16.mxu0 %v5458
    %6758 = vmatpush1.bf16.msra.mxu0 %v5457
    %6759 = vmatprep.subr.bf16.mxu0 %v5466
    %6760 = vmatpush1.bf16.msra.mxu0 %v5465
    %6761 = vmatprep.subr.bf16.mxu0 %v5474
    %6762 = vmatpush1.bf16.msra.mxu0 %v5473
    %6763 = vmatprep.subr.bf16.mxu0 %v5482
    %6764 = vmatpush1.bf16.msra.mxu0 %v5481
    %6765 = vmatprep.subr.bf16.mxu0 %v5490
    %6766 = vmatpush1.bf16.msra.mxu0 %v5489
    %6767 = vmatprep.subr.bf16.mxu0 %v5498
    %6768 = vmatpush1.bf16.msra.mxu0 %v5497
    %6769 = vmatprep.subr.bf16.mxu0 %v5506
    %6770 = vmatpush1.bf16.msra.mxu0 %v5505
    %6771 = vmatprep.subr.bf16.mxu0 %v5514
    %6772 = vmatpush1.bf16.msra.mxu0 %v5513
    %6773 = vmatprep.mubr.bf16.mxu0 %v3292
    %6774 = vmatmul.mubr.bf16.gmra.mrb[0].mxu0 %v3291
    %v6775 = vpop.f32.mrb[0].mxu0
    %v6776 = vadd.f32 %v3832, %v6775
    %v6777 = vpop.f32.mrb[0].mxu0
    %v6778 = vadd.f32 %v3836, %v6777
    %v6779 = vpop.f32.mrb[0].mxu0
    %v6780 = vpop.f32.mrb[0].mxu0
    %6781 = vdwg.mxu0
    %6782 = vmatprep.subr.bf16.mxu0 %v5522
    %6783 = vmatpush1.bf16.msra.mxu0 %v5521
    %6784 = vmatprep.subr.bf16.mxu0 %v5530
    %6785 = vmatpush1.bf16.msra.mxu0 %v5529
    %6786 = vmatprep.subr.bf16.mxu0 %v5538
    %6787 = vmatpush1.bf16.msra.mxu0 %v5537
    %6788 = vmatprep.subr.bf16.mxu0 %v5546
    %6789 = vmatpush1.bf16.msra.mxu0 %v5545
    %6790 = vmatprep.subr.bf16.mxu0 %v5554
    %6791 = vmatpush1.bf16.msra.mxu0 %v5553
    %6792 = vmatprep.subr.bf16.mxu0 %v5562
    %6793 = vmatpush1.bf16.msra.mxu0 %v5561
    %6794 = vmatprep.subr.bf16.mxu0 %v5570
    %6795 = vmatpush1.bf16.msra.mxu0 %v5569
    %6796 = vmatprep.subr.bf16.mxu0 %v5578
    %6797 = vmatpush1.bf16.msra.mxu0 %v5577
    %6798 = vmatprep.subr.bf16.mxu0 %v5586
    %6799 = vmatpush1.bf16.msra.mxu0 %v5585
    %6800 = vmatprep.subr.bf16.mxu0 %v5594
    %6801 = vmatpush1.bf16.msra.mxu0 %v5593
    %6802 = vmatprep.subr.bf16.mxu0 %v5602
    %6803 = vmatpush1.bf16.msra.mxu0 %v5601
    %6804 = vmatprep.subr.bf16.mxu0 %v5610
    %6805 = vmatpush1.bf16.msra.mxu0 %v5609
    %6806 = vmatprep.subr.bf16.mxu0 %v5618
    %6807 = vmatpush1.bf16.msra.mxu0 %v5617
    %6808 = vmatprep.subr.bf16.mxu0 %v5626
    %6809 = vmatpush1.bf16.msra.mxu0 %v5625
    %6810 = vmatprep.subr.bf16.mxu0 %v5634
    %6811 = vmatpush1.bf16.msra.mxu0 %v5633
    %6812 = vmatprep.subr.bf16.mxu0 %v5642
    %6813 = vmatpush1.bf16.msra.mxu0 %v5641
    %6814 = vmatprep.mubr.bf16.mxu0 %v3294
    %6815 = vmatmul.mubr.bf16.gmra.mrb[0].mxu0 %v3293
    %v6816 = vpop.f32.mrb[0].mxu0
    %v6817 = vadd.f32 %v6776, %v6816
    %v6818 = vpop.f32.mrb[0].mxu0
    %v6819 = vadd.f32 %v6778, %v6818
    %v6820 = vpop.f32.mrb[0].mxu0
    %v6821 = vpop.f32.mrb[0].mxu0
    %6822 = vdwg.mxu0
    %6823 = vmatprep.subr.bf16.mxu0 %v5650
    %6824 = vmatpush1.bf16.msra.mxu0 %v5649
    %6825 = vmatprep.subr.bf16.mxu0 %v5658
    %6826 = vmatpush1.bf16.msra.mxu0 %v5657
    %6827 = vmatprep.subr.bf16.mxu0 %v5666
    %6828 = vmatpush1.bf16.msra.mxu0 %v5665
    %6829 = vmatprep.subr.bf16.mxu0 %v5674
    %6830 = vmatpush1.bf16.msra.mxu0 %v5673
    %6831 = vmatprep.subr.bf16.mxu0 %v5682
    %6832 = vmatpush1.bf16.msra.mxu0 %v5681
    %6833 = vmatprep.subr.bf16.mxu0 %v5690
    %6834 = vmatpush1.bf16.msra.mxu0 %v5689
    %6835 = vmatprep.subr.bf16.mxu0 %v5698
    %6836 = vmatpush1.bf16.msra.mxu0 %v5697
    %6837 = vmatprep.subr.bf16.mxu0 %v5706
    %6838 = vmatpush1.bf16.msra.mxu0 %v5705
    %6839 = vmatprep.subr.bf16.mxu0 %v5714
    %6840 = vmatpush1.bf16.msra.mxu0 %v5713
    %6841 = vmatprep.subr.bf16.mxu0 %v5722
    %6842 = vmatpush1.bf16.msra.mxu0 %v5721
    %6843 = vmatprep.subr.bf16.mxu0 %v5730
    %6844 = vmatpush1.bf16.msra.mxu0 %v5729
    %6845 = vmatprep.subr.bf16.mxu0 %v5738
    %6846 = vmatpush1.bf16.msra.mxu0 %v5737
    %6847 = vmatprep.subr.bf16.mxu0 %v5746
    %6848 = vmatpush1.bf16.msra.mxu0 %v5745
    %6849 = vmatprep.subr.bf16.mxu0 %v5754
    %6850 = vmatpush1.bf16.msra.mxu0 %v5753
    %6851 = vmatprep.subr.bf16.mxu0 %v5762
    %6852 = vmatpush1.bf16.msra.mxu0 %v5761
    %6853 = vmatprep.subr.bf16.mxu0 %v5770
    %6854 = vmatpush1.bf16.msra.mxu0 %v5769
    %6855 = vmatprep.mubr.bf16.mxu0 %v3296
    %6856 = vmatmul.mubr.bf16.gmra.mrb[0].mxu0 %v3295
    %v6857 = vpop.f32.mrb[0].mxu0
    %v6858 = vadd.f32 %v6817, %v6857
    %v6859 = vpop.f32.mrb[0].mxu0
    %v6860 = vadd.f32 %v6819, %v6859
    %v6861 = vpop.f32.mrb[0].mxu0
    %v6862 = vpop.f32.mrb[0].mxu0
    %6863 = vdwg.mxu0
    %6864 = vmatprep.subr.bf16.mxu0 %v5778
    %6865 = vmatpush1.bf16.msra.mxu0 %v5777
    %6866 = vmatprep.subr.bf16.mxu0 %v5786
    %6867 = vmatpush1.bf16.msra.mxu0 %v5785
    %6868 = vmatprep.subr.bf16.mxu0 %v5794
    %6869 = vmatpush1.bf16.msra.mxu0 %v5793
    %6870 = vmatprep.subr.bf16.mxu0 %v5802
    %6871 = vmatpush1.bf16.msra.mxu0 %v5801
    %6872 = vmatprep.subr.bf16.mxu0 %v5810
    %6873 = vmatpush1.bf16.msra.mxu0 %v5809
    %6874 = vmatprep.subr.bf16.mxu0 %v5818
    %6875 = vmatpush1.bf16.msra.mxu0 %v5817
    %6876 = vmatprep.subr.bf16.mxu0 %v5826
    %6877 = vmatpush1.bf16.msra.mxu0 %v5825
    %6878 = vmatprep.subr.bf16.mxu0 %v5834
    %6879 = vmatpush1.bf16.msra.mxu0 %v5833
    %6880 = vmatprep.subr.bf16.mxu0 %v5842
    %6881 = vmatpush1.bf16.msra.mxu0 %v5841
    %6882 = vmatprep.subr.bf16.mxu0 %v5850
    %6883 = vmatpush1.bf16.msra.mxu0 %v5849
    %6884 = vmatprep.subr.bf16.mxu0 %v5858
    %6885 = vmatpush1.bf16.msra.mxu0 %v5857
    %6886 = vmatprep.subr.bf16.mxu0 %v5866
    %6887 = vmatpush1.bf16.msra.mxu0 %v5865
    %6888 = vmatprep.subr.bf16.mxu0 %v5874
    %6889 = vmatpush1.bf16.msra.mxu0 %v5873
    %6890 = vmatprep.subr.bf16.mxu0 %v5882
    %6891 = vmatpush1.bf16.msra.mxu0 %v5881
    %6892 = vmatprep.subr.bf16.mxu0 %v5890
    %6893 = vmatpush1.bf16.msra.mxu0 %v5889
    %6894 = vmatprep.subr.bf16.mxu0 %v5898
    %6895 = vmatpush1.bf16.msra.mxu0 %v5897
    %6896 = vmatprep.mubr.bf16.mxu0 %v3298
    %6897 = vmatmul.mubr.bf16.gmra.mrb[0].mxu0 %v3297
    %v6898 = vpop.f32.mrb[0].mxu0
    %v6899 = vadd.f32 %v6858, %v6898
    %v6900 = vpop.f32.mrb[0].mxu0
    %v6901 = vadd.f32 %v6860, %v6900
    %v6902 = vpop.f32.mrb[0].mxu0
    %v6903 = vpop.f32.mrb[0].mxu0
    %6904 = vdwg.mxu0
    %6905 = vmatprep.subr.bf16.mxu0 %v5396
    %6906 = vmatpush1.bf16.msra.mxu0 %v5395
    %6907 = vmatprep.subr.bf16.mxu0 %v5404
    %6908 = vmatpush1.bf16.msra.mxu0 %v5403
    %6909 = vmatprep.subr.bf16.mxu0 %v5412
    %6910 = vmatpush1.bf16.msra.mxu0 %v5411
    %6911 = vmatprep.subr.bf16.mxu0 %v5420
    %6912 = vmatpush1.bf16.msra.mxu0 %v5419
    %6913 = vmatprep.subr.bf16.mxu0 %v5428
    %6914 = vmatpush1.bf16.msra.mxu0 %v5427
    %6915 = vmatprep.subr.bf16.mxu0 %v5436
    %6916 = vmatpush1.bf16.msra.mxu0 %v5435
    %6917 = vmatprep.subr.bf16.mxu0 %v5444
    %6918 = vmatpush1.bf16.msra.mxu0 %v5443
    %6919 = vmatprep.subr.bf16.mxu0 %v5452
    %6920 = vmatpush1.bf16.msra.mxu0 %v5451
    %6921 = vmatprep.subr.bf16.mxu0 %v5460
    %6922 = vmatpush1.bf16.msra.mxu0 %v5459
    %6923 = vmatprep.subr.bf16.mxu0 %v5468
    %6924 = vmatpush1.bf16.msra.mxu0 %v5467
    %6925 = vmatprep.subr.bf16.mxu0 %v5476
    %6926 = vmatpush1.bf16.msra.mxu0 %v5475
    %6927 = vmatprep.subr.bf16.mxu0 %v5484
    %6928 = vmatpush1.bf16.msra.mxu0 %v5483
    %6929 = vmatprep.subr.bf16.mxu0 %v5492
    %6930 = vmatpush1.bf16.msra.mxu0 %v5491
    %6931 = vmatprep.subr.bf16.mxu0 %v5500
    %6932 = vmatpush1.bf16.msra.mxu0 %v5499
    %6933 = vmatprep.subr.bf16.mxu0 %v5508
    %6934 = vmatpush1.bf16.msra.mxu0 %v5507
    %6935 = vmatprep.subr.bf16.mxu0 %v5516
    %6936 = vmatpush1.bf16.msra.mxu0 %v5515
    %6937 = vmatprep.mubr.bf16.mxu0 %v3292
    %6938 = vmatmul.mubr.bf16.gmra.mrb[0].mxu0 %v3291
    %v6939 = vpop.f32.mrb[0].mxu0
    %v6940 = vadd.f32 %v3840, %v6939
    %v6941 = vpop.f32.mrb[0].mxu0
    %v6942 = vadd.f32 %v3844, %v6941
    %v6943 = vpop.f32.mrb[0].mxu0
    %v6944 = vpop.f32.mrb[0].mxu0
    %6945 = vdwg.mxu0
    %6946 = vmatprep.subr.bf16.mxu0 %v5524
    %6947 = vmatpush1.bf16.msra.mxu0 %v5523
    %6948 = vmatprep.subr.bf16.mxu0 %v5532
    %6949 = vmatpush1.bf16.msra.mxu0 %v5531
    %6950 = vmatprep.subr.bf16.mxu0 %v5540
    %6951 = vmatpush1.bf16.msra.mxu0 %v5539
    %6952 = vmatprep.subr.bf16.mxu0 %v5548
    %6953 = vmatpush1.bf16.msra.mxu0 %v5547
    %6954 = vmatprep.subr.bf16.mxu0 %v5556
    %6955 = vmatpush1.bf16.msra.mxu0 %v5555
    %6956 = vmatprep.subr.bf16.mxu0 %v5564
    %6957 = vmatpush1.bf16.msra.mxu0 %v5563
    %6958 = vmatprep.subr.bf16.mxu0 %v5572
    %6959 = vmatpush1.bf16.msra.mxu0 %v5571
    %6960 = vmatprep.subr.bf16.mxu0 %v5580
    %6961 = vmatpush1.bf16.msra.mxu0 %v5579
    %6962 = vmatprep.subr.bf16.mxu0 %v5588
    %6963 = vmatpush1.bf16.msra.mxu0 %v5587
    %6964 = vmatprep.subr.bf16.mxu0 %v5596
    %6965 = vmatpush1.bf16.msra.mxu0 %v5595
    %6966 = vmatprep.subr.bf16.mxu0 %v5604
    %6967 = vmatpush1.bf16.msra.mxu0 %v5603
    %6968 = vmatprep.subr.bf16.mxu0 %v5612
    %6969 = vmatpush1.bf16.msra.mxu0 %v5611
    %6970 = vmatprep.subr.bf16.mxu0 %v5620
    %6971 = vmatpush1.bf16.msra.mxu0 %v5619
    %6972 = vmatprep.subr.bf16.mxu0 %v5628
    %6973 = vmatpush1.bf16.msra.mxu0 %v5627
    %6974 = vmatprep.subr.bf16.mxu0 %v5636
    %6975 = vmatpush1.bf16.msra.mxu0 %v5635
    %6976 = vmatprep.subr.bf16.mxu0 %v5644
    %6977 = vmatpush1.bf16.msra.mxu0 %v5643
    %6978 = vmatprep.mubr.bf16.mxu0 %v3294
    %6979 = vmatmul.mubr.bf16.gmra.mrb[0].mxu0 %v3293
    %v6980 = vpop.f32.mrb[0].mxu0
    %v6981 = vadd.f32 %v6940, %v6980
    %v6982 = vpop.f32.mrb[0].mxu0
    %v6983 = vadd.f32 %v6942, %v6982
    %v6984 = vpop.f32.mrb[0].mxu0
    %v6985 = vpop.f32.mrb[0].mxu0
    %6986 = vdwg.mxu0
    %6987 = vmatprep.subr.bf16.mxu0 %v5652
    %6988 = vmatpush1.bf16.msra.mxu0 %v5651
    %6989 = vmatprep.subr.bf16.mxu0 %v5660
    %6990 = vmatpush1.bf16.msra.mxu0 %v5659
    %6991 = vmatprep.subr.bf16.mxu0 %v5668
    %6992 = vmatpush1.bf16.msra.mxu0 %v5667
    %6993 = vmatprep.subr.bf16.mxu0 %v5676
    %6994 = vmatpush1.bf16.msra.mxu0 %v5675
    %6995 = vmatprep.subr.bf16.mxu0 %v5684
    %6996 = vmatpush1.bf16.msra.mxu0 %v5683
    %6997 = vmatprep.subr.bf16.mxu0 %v5692
    %6998 = vmatpush1.bf16.msra.mxu0 %v5691
    %6999 = vmatprep.subr.bf16.mxu0 %v5700
    %7000 = vmatpush1.bf16.msra.mxu0 %v5699
    %7001 = vmatprep.subr.bf16.mxu0 %v5708
    %7002 = vmatpush1.bf16.msra.mxu0 %v5707
    %7003 = vmatprep.subr.bf16.mxu0 %v5716
    %7004 = vmatpush1.bf16.msra.mxu0 %v5715
    %7005 = vmatprep.subr.bf16.mxu0 %v5724
    %7006 = vmatpush1.bf16.msra.mxu0 %v5723
    %7007 = vmatprep.subr.bf16.mxu0 %v5732
    %7008 = vmatpush1.bf16.msra.mxu0 %v5731
    %7009 = vmatprep.subr.bf16.mxu0 %v5740
    %7010 = vmatpush1.bf16.msra.mxu0 %v5739
    %7011 = vmatprep.subr.bf16.mxu0 %v5748
    %7012 = vmatpush1.bf16.msra.mxu0 %v5747
    %7013 = vmatprep.subr.bf16.mxu0 %v5756
    %7014 = vmatpush1.bf16.msra.mxu0 %v5755
    %7015 = vmatprep.subr.bf16.mxu0 %v5764
    %7016 = vmatpush1.bf16.msra.mxu0 %v5763
    %7017 = vmatprep.subr.bf16.mxu0 %v5772
    %7018 = vmatpush1.bf16.msra.mxu0 %v5771
    %7019 = vmatprep.mubr.bf16.mxu0 %v3296
    %7020 = vmatmul.mubr.bf16.gmra.mrb[0].mxu0 %v3295
    %v7021 = vpop.f32.mrb[0].mxu0
    %v7022 = vadd.f32 %v6981, %v7021
    %v7023 = vpop.f32.mrb[0].mxu0
    %v7024 = vadd.f32 %v6983, %v7023
    %v7025 = vpop.f32.mrb[0].mxu0
    %v7026 = vpop.f32.mrb[0].mxu0
    %7027 = vdwg.mxu0
    %7028 = vmatprep.subr.bf16.mxu0 %v5780
    %7029 = vmatpush1.bf16.msra.mxu0 %v5779
    %7030 = vmatprep.subr.bf16.mxu0 %v5788
    %7031 = vmatpush1.bf16.msra.mxu0 %v5787
    %7032 = vmatprep.subr.bf16.mxu0 %v5796
    %7033 = vmatpush1.bf16.msra.mxu0 %v5795
    %7034 = vmatprep.subr.bf16.mxu0 %v5804
    %7035 = vmatpush1.bf16.msra.mxu0 %v5803
    %7036 = vmatprep.subr.bf16.mxu0 %v5812
    %7037 = vmatpush1.bf16.msra.mxu0 %v5811
    %7038 = vmatprep.subr.bf16.mxu0 %v5820
    %7039 = vmatpush1.bf16.msra.mxu0 %v5819
    %7040 = vmatprep.subr.bf16.mxu0 %v5828
    %7041 = vmatpush1.bf16.msra.mxu0 %v5827
    %7042 = vmatprep.subr.bf16.mxu0 %v5836
    %7043 = vmatpush1.bf16.msra.mxu0 %v5835
    %7044 = vmatprep.subr.bf16.mxu0 %v5844
    %7045 = vmatpush1.bf16.msra.mxu0 %v5843
    %7046 = vmatprep.subr.bf16.mxu0 %v5852
    %7047 = vmatpush1.bf16.msra.mxu0 %v5851
    %7048 = vmatprep.subr.bf16.mxu0 %v5860
    %7049 = vmatpush1.bf16.msra.mxu0 %v5859
    %7050 = vmatprep.subr.bf16.mxu0 %v5868
    %7051 = vmatpush1.bf16.msra.mxu0 %v5867
    %7052 = vmatprep.subr.bf16.mxu0 %v5876
    %7053 = vmatpush1.bf16.msra.mxu0 %v5875
    %7054 = vmatprep.subr.bf16.mxu0 %v5884
    %7055 = vmatpush1.bf16.msra.mxu0 %v5883
    %7056 = vmatprep.subr.bf16.mxu0 %v5892
    %7057 = vmatpush1.bf16.msra.mxu0 %v5891
    %7058 = vmatprep.subr.bf16.mxu0 %v5900
    %7059 = vmatpush1.bf16.msra.mxu0 %v5899
    %7060 = vmatprep.mubr.bf16.mxu0 %v3298
    %7061 = vmatmul.mubr.bf16.gmra.mrb[0].mxu0 %v3297
    %v7062 = vpop.f32.mrb[0].mxu0
    %v7063 = vadd.f32 %v7022, %v7062
    %v7064 = vpop.f32.mrb[0].mxu0
    %v7065 = vadd.f32 %v7024, %v7064
    %v7066 = vpop.f32.mrb[0].mxu0
    %v7067 = vpop.f32.mrb[0].mxu0
    %7068 = vdwg.mxu0
    %v7069 = vmax.f32 %v6571, 0.0
    %v7070 = vmax.f32 %v6573, 0.0
    %v7071 = vmax.f32 %v6735, 0.0
    %v7072 = vmax.f32 %v6737, 0.0
    %v7073 = vmax.f32 %v6899, 0.0
    %v7074 = vmax.f32 %v6901, 0.0
    %v7075 = vmax.f32 %v7063, 0.0
    %v7076 = vmax.f32 %v7065, 0.0
    %v7077 = vld [vmem:[#allocation7] sm:$0xff]
    %v7078 = vld [vmem:[#allocation7 + $0x8] sm:$0xff]
    %v7079 = vld [vmem:[#allocation7 + $0x10] sm:$0xff]
    %v7080 = vld [vmem:[#allocation7 + $0x18] sm:$0xff]
    %v7081 = vunpack.c.l.bf16 %v7077
    %v7082 = vunpack.c.h.bf16 %v7077
    %v7083 = vunpack.c.l.bf16 %v7078
    %v7084 = vunpack.c.h.bf16 %v7078
    %v7085 = vunpack.c.l.bf16 %v7079
    %v7086 = vunpack.c.h.bf16 %v7079
    %v7087 = vunpack.c.l.bf16 %v7080
    %v7088 = vunpack.c.h.bf16 %v7080
    %v7089 = vmul.f32 %v7069, %v7081
    %v7090 = vmul.f32 %v7070, %v7082
    %v7091 = vmul.f32 %v7071, %v7083
    %v7092 = vmul.f32 %v7072, %v7084
    %v7093 = vmul.f32 %v7073, %v7085
    %v7094 = vmul.f32 %v7074, %v7086
    %v7095 = vmul.f32 %v7075, %v7087
    %v7096 = vmul.f32 %v7076, %v7088
    %v7097 = vpack.c.bf16 %v7089, %v7089
    %v7098 = vpack.c.bf16 %v7090, %v7090
    %v7099 = vpack.c.bf16 %v7091, %v7091
    %v7100 = vpack.c.bf16 %v7092, %v7092
    %v7101 = vpack.c.bf16 %v7093, %v7093
    %v7102 = vpack.c.bf16 %v7094, %v7094
    %v7103 = vpack.c.bf16 %v7095, %v7095
    %v7104 = vpack.c.bf16 %v7096, %v7096
    %v7105 = vld [vmem:[#allocation19] sm:$0xf]
    %v7106 = vld [vmem:[#allocation19 + $0x4] sm:$0xf]
    %v7107 = vld [vmem:[#allocation19 + $0x8] sm:$0xf]
    %v7108 = vld [vmem:[#allocation19 + $0xc] sm:$0xf]
    %v7109 = vld [vmem:[#allocation19 + $0x10] sm:$0xf]
    %v7110 = vld [vmem:[#allocation19 + $0x14] sm:$0xf]
    %v7111 = vld [vmem:[#allocation19 + $0x18] sm:$0xf]
    %v7112 = vld [vmem:[#allocation19 + $0x1c] sm:$0xf]
    %v7113 = vld [vmem:[#allocation19 + $0x20] sm:$0xf]
    %v7114 = vld [vmem:[#allocation19 + $0x24] sm:$0xf]
    %v7115 = vld [vmem:[#allocation19 + $0x28] sm:$0xf]
    %v7116 = vld [vmem:[#allocation19 + $0x2c] sm:$0xf]
    %v7117 = vld [vmem:[#allocation19 + $0x30] sm:$0xf]
    %v7118 = vld [vmem:[#allocation19 + $0x34] sm:$0xf]
    %v7119 = vld [vmem:[#allocation19 + $0x38] sm:$0xf]
    %v7120 = vld [vmem:[#allocation19 + $0x3c] sm:$0xf]
    %v7121 = vld [vmem:[#allocation19 + $0x40] sm:$0xf]
    %v7122 = vld [vmem:[#allocation19 + $0x44] sm:$0xf]
    %v7123 = vld [vmem:[#allocation19 + $0x48] sm:$0xf]
    %v7124 = vld [vmem:[#allocation19 + $0x4c] sm:$0xf]
    %v7125 = vld [vmem:[#allocation19 + $0x50] sm:$0xf]
    %v7126 = vld [vmem:[#allocation19 + $0x54] sm:$0xf]
    %v7127 = vld [vmem:[#allocation19 + $0x58] sm:$0xf]
    %v7128 = vld [vmem:[#allocation19 + $0x5c] sm:$0xf]
    %v7129 = vld [vmem:[#allocation19 + $0x60] sm:$0xf]
    %v7130 = vld [vmem:[#allocation19 + $0x64] sm:$0xf]
    %v7131 = vld [vmem:[#allocation19 + $0x68] sm:$0xf]
    %v7132 = vld [vmem:[#allocation19 + $0x6c] sm:$0xf]
    %v7133 = vld [vmem:[#allocation19 + $0x70] sm:$0xf]
    %v7134 = vld [vmem:[#allocation19 + $0x74] sm:$0xf]
    %v7135 = vld [vmem:[#allocation19 + $0x78] sm:$0xf]
    %v7136 = vld [vmem:[#allocation19 + $0x7c] sm:$0xf]
    %v7137 = vld [vmem:[#allocation19 + $0x80] sm:$0xf]
    %v7138 = vld [vmem:[#allocation19 + $0x84] sm:$0xf]
    %v7139 = vld [vmem:[#allocation19 + $0x88] sm:$0xf]
    %v7140 = vld [vmem:[#allocation19 + $0x8c] sm:$0xf]
    %v7141 = vld [vmem:[#allocation19 + $0x90] sm:$0xf]
    %v7142 = vld [vmem:[#allocation19 + $0x94] sm:$0xf]
    %v7143 = vld [vmem:[#allocation19 + $0x98] sm:$0xf]
    %v7144 = vld [vmem:[#allocation19 + $0x9c] sm:$0xf]
    %v7145 = vld [vmem:[#allocation19 + $0xa0] sm:$0xf]
    %v7146 = vld [vmem:[#allocation19 + $0xa4] sm:$0xf]
    %v7147 = vld [vmem:[#allocation19 + $0xa8] sm:$0xf]
    %v7148 = vld [vmem:[#allocation19 + $0xac] sm:$0xf]
    %v7149 = vld [vmem:[#allocation19 + $0xb0] sm:$0xf]
    %v7150 = vld [vmem:[#allocation19 + $0xb4] sm:$0xf]
    %v7151 = vld [vmem:[#allocation19 + $0xb8] sm:$0xf]
    %v7152 = vld [vmem:[#allocation19 + $0xbc] sm:$0xf]
    %v7153 = vld [vmem:[#allocation19 + $0xc0] sm:$0xf]
    %v7154 = vld [vmem:[#allocation19 + $0xc4] sm:$0xf]
    %v7155 = vld [vmem:[#allocation19 + $0xc8] sm:$0xf]
    %v7156 = vld [vmem:[#allocation19 + $0xcc] sm:$0xf]
    %v7157 = vld [vmem:[#allocation19 + $0xd0] sm:$0xf]
    %v7158 = vld [vmem:[#allocation19 + $0xd4] sm:$0xf]
    %v7159 = vld [vmem:[#allocation19 + $0xd8] sm:$0xf]
    %v7160 = vld [vmem:[#allocation19 + $0xdc] sm:$0xf]
    %v7161 = vld [vmem:[#allocation19 + $0xe0] sm:$0xf]
    %v7162 = vld [vmem:[#allocation19 + $0xe4] sm:$0xf]
    %v7163 = vld [vmem:[#allocation19 + $0xe8] sm:$0xf]
    %v7164 = vld [vmem:[#allocation19 + $0xec] sm:$0xf]
    %v7165 = vld [vmem:[#allocation19 + $0xf0] sm:$0xf]
    %v7166 = vld [vmem:[#allocation19 + $0xf4] sm:$0xf]
    %v7167 = vld [vmem:[#allocation19 + $0xf8] sm:$0xf]
    %v7168 = vld [vmem:[#allocation19 + $0xfc] sm:$0xf]
    %v7169 = vld [vmem:[#allocation19 + $0x100] sm:$0xf]
    %v7170 = vld [vmem:[#allocation19 + $0x104] sm:$0xf]
    %v7171 = vld [vmem:[#allocation19 + $0x108] sm:$0xf]
    %v7172 = vld [vmem:[#allocation19 + $0x10c] sm:$0xf]
    %v7173 = vld [vmem:[#allocation19 + $0x110] sm:$0xf]
    %v7174 = vld [vmem:[#allocation19 + $0x114] sm:$0xf]
    %v7175 = vld [vmem:[#allocation19 + $0x118] sm:$0xf]
    %v7176 = vld [vmem:[#allocation19 + $0x11c] sm:$0xf]
    %v7177 = vld [vmem:[#allocation19 + $0x120] sm:$0xf]
    %v7178 = vld [vmem:[#allocation19 + $0x124] sm:$0xf]
    %v7179 = vld [vmem:[#allocation19 + $0x128] sm:$0xf]
    %v7180 = vld [vmem:[#allocation19 + $0x12c] sm:$0xf]
    %v7181 = vld [vmem:[#allocation19 + $0x130] sm:$0xf]
    %v7182 = vld [vmem:[#allocation19 + $0x134] sm:$0xf]
    %v7183 = vld [vmem:[#allocation19 + $0x138] sm:$0xf]
    %v7184 = vld [vmem:[#allocation19 + $0x13c] sm:$0xf]
    %v7185 = vld [vmem:[#allocation19 + $0x140] sm:$0xf]
    %v7186 = vld [vmem:[#allocation19 + $0x144] sm:$0xf]
    %v7187 = vld [vmem:[#allocation19 + $0x148] sm:$0xf]
    %v7188 = vld [vmem:[#allocation19 + $0x14c] sm:$0xf]
    %v7189 = vld [vmem:[#allocation19 + $0x150] sm:$0xf]
    %v7190 = vld [vmem:[#allocation19 + $0x154] sm:$0xf]
    %v7191 = vld [vmem:[#allocation19 + $0x158] sm:$0xf]
    %v7192 = vld [vmem:[#allocation19 + $0x15c] sm:$0xf]
    %v7193 = vld [vmem:[#allocation19 + $0x160] sm:$0xf]
    %v7194 = vld [vmem:[#allocation19 + $0x164] sm:$0xf]
    %v7195 = vld [vmem:[#allocation19 + $0x168] sm:$0xf]
    %v7196 = vld [vmem:[#allocation19 + $0x16c] sm:$0xf]
    %v7197 = vld [vmem:[#allocation19 + $0x170] sm:$0xf]
    %v7198 = vld [vmem:[#allocation19 + $0x174] sm:$0xf]
    %v7199 = vld [vmem:[#allocation19 + $0x178] sm:$0xf]
    %v7200 = vld [vmem:[#allocation19 + $0x17c] sm:$0xf]
    %v7201 = vld [vmem:[#allocation19 + $0x180] sm:$0xf]
    %v7202 = vld [vmem:[#allocation19 + $0x184] sm:$0xf]
    %v7203 = vld [vmem:[#allocation19 + $0x188] sm:$0xf]
    %v7204 = vld [vmem:[#allocation19 + $0x18c] sm:$0xf]
    %v7205 = vld [vmem:[#allocation19 + $0x190] sm:$0xf]
    %v7206 = vld [vmem:[#allocation19 + $0x194] sm:$0xf]
    %v7207 = vld [vmem:[#allocation19 + $0x198] sm:$0xf]
    %v7208 = vld [vmem:[#allocation19 + $0x19c] sm:$0xf]
    %v7209 = vld [vmem:[#allocation19 + $0x1a0] sm:$0xf]
    %v7210 = vld [vmem:[#allocation19 + $0x1a4] sm:$0xf]
    %v7211 = vld [vmem:[#allocation19 + $0x1a8] sm:$0xf]
    %v7212 = vld [vmem:[#allocation19 + $0x1ac] sm:$0xf]
    %v7213 = vld [vmem:[#allocation19 + $0x1b0] sm:$0xf]
    %v7214 = vld [vmem:[#allocation19 + $0x1b4] sm:$0xf]
    %v7215 = vld [vmem:[#allocation19 + $0x1b8] sm:$0xf]
    %v7216 = vld [vmem:[#allocation19 + $0x1bc] sm:$0xf]
    %v7217 = vld [vmem:[#allocation19 + $0x1c0] sm:$0xf]
    %v7218 = vld [vmem:[#allocation19 + $0x1c4] sm:$0xf]
    %v7219 = vld [vmem:[#allocation19 + $0x1c8] sm:$0xf]
    %v7220 = vld [vmem:[#allocation19 + $0x1cc] sm:$0xf]
    %v7221 = vld [vmem:[#allocation19 + $0x1d0] sm:$0xf]
    %v7222 = vld [vmem:[#allocation19 + $0x1d4] sm:$0xf]
    %v7223 = vld [vmem:[#allocation19 + $0x1d8] sm:$0xf]
    %v7224 = vld [vmem:[#allocation19 + $0x1dc] sm:$0xf]
    %v7225 = vld [vmem:[#allocation19 + $0x1e0] sm:$0xf]
    %v7226 = vld [vmem:[#allocation19 + $0x1e4] sm:$0xf]
    %v7227 = vld [vmem:[#allocation19 + $0x1e8] sm:$0xf]
    %v7228 = vld [vmem:[#allocation19 + $0x1ec] sm:$0xf]
    %v7229 = vld [vmem:[#allocation19 + $0x1f0] sm:$0xf]
    %v7230 = vld [vmem:[#allocation19 + $0x1f4] sm:$0xf]
    %v7231 = vld [vmem:[#allocation19 + $0x1f8] sm:$0xf]
    %v7232 = vld [vmem:[#allocation19 + $0x1fc] sm:$0xf]
    %v7233 = vld [vmem:[#allocation20] sm:$0x1]
    %v7235 = vlaneseq
    %v7236 = vshrl.u32 %v7235, 7
    %v7237 = vsub.s32 0, %v7236
    %v7238 = vrot.slane %v7233, %v7237
    %v7368 = vunpack.c.l.b16 %v7105
    %v7369 = vunpack.c.l.b16 %v7106
    %v7370 = vunpack.c.l.b16 %v7107
    %v7371 = vunpack.c.l.b16 %v7108
    %v7372 = vunpack.c.l.b16 %v7109
    %v7373 = vunpack.c.l.b16 %v7110
    %v7374 = vunpack.c.l.b16 %v7111
    %v7375 = vunpack.c.l.b16 %v7112
    %v7376 = vunpack.c.l.b16 %v7113
    %v7377 = vunpack.c.l.b16 %v7114
    %v7378 = vunpack.c.l.b16 %v7115
    %v7379 = vunpack.c.l.b16 %v7116
    %v7380 = vunpack.c.l.b16 %v7117
    %v7381 = vunpack.c.l.b16 %v7118
    %v7382 = vunpack.c.l.b16 %v7119
    %v7383 = vunpack.c.l.b16 %v7120
    %v7384 = vunpack.c.l.b16 %v7121
    %v7385 = vunpack.c.l.b16 %v7122
    %v7386 = vunpack.c.l.b16 %v7123
    %v7387 = vunpack.c.l.b16 %v7124
    %v7388 = vunpack.c.l.b16 %v7125
    %v7389 = vunpack.c.l.b16 %v7126
    %v7390 = vunpack.c.l.b16 %v7127
    %v7391 = vunpack.c.l.b16 %v7128
    %v7392 = vunpack.c.l.b16 %v7129
    %v7393 = vunpack.c.l.b16 %v7130
    %v7394 = vunpack.c.l.b16 %v7131
    %v7395 = vunpack.c.l.b16 %v7132
    %v7396 = vunpack.c.l.b16 %v7133
    %v7397 = vunpack.c.l.b16 %v7134
    %v7398 = vunpack.c.l.b16 %v7135
    %v7399 = vunpack.c.l.b16 %v7136
    %v7400 = vunpack.c.l.b16 %v7137
    %v7401 = vunpack.c.l.b16 %v7138
    %v7402 = vunpack.c.l.b16 %v7139
    %v7403 = vunpack.c.l.b16 %v7140
    %v7404 = vunpack.c.l.b16 %v7141
    %v7405 = vunpack.c.l.b16 %v7142
    %v7406 = vunpack.c.l.b16 %v7143
    %v7407 = vunpack.c.l.b16 %v7144
    %v7408 = vunpack.c.l.b16 %v7145
    %v7409 = vunpack.c.l.b16 %v7146
    %v7410 = vunpack.c.l.b16 %v7147
    %v7411 = vunpack.c.l.b16 %v7148
    %v7412 = vunpack.c.l.b16 %v7149
    %v7413 = vunpack.c.l.b16 %v7150
    %v7414 = vunpack.c.l.b16 %v7151
    %v7415 = vunpack.c.l.b16 %v7152
    %v7416 = vunpack.c.l.b16 %v7153
    %v7417 = vunpack.c.l.b16 %v7154
    %v7418 = vunpack.c.l.b16 %v7155
    %v7419 = vunpack.c.l.b16 %v7156
    %v7420 = vunpack.c.l.b16 %v7157
    %v7421 = vunpack.c.l.b16 %v7158
    %v7422 = vunpack.c.l.b16 %v7159
    %v7423 = vunpack.c.l.b16 %v7160
    %v7424 = vunpack.c.l.b16 %v7161
    %v7425 = vunpack.c.l.b16 %v7162
    %v7426 = vunpack.c.l.b16 %v7163
    %v7427 = vunpack.c.l.b16 %v7164
    %v7428 = vunpack.c.l.b16 %v7165
    %v7429 = vunpack.c.l.b16 %v7166
    %v7430 = vunpack.c.l.b16 %v7167
    %v7431 = vunpack.c.l.b16 %v7168
    %v7432 = vunpack.c.l.b16 %v7169
    %v7433 = vunpack.c.l.b16 %v7170
    %v7434 = vunpack.c.l.b16 %v7171
    %v7435 = vunpack.c.l.b16 %v7172
    %v7436 = vunpack.c.l.b16 %v7173
    %v7437 = vunpack.c.l.b16 %v7174
    %v7438 = vunpack.c.l.b16 %v7175
    %v7439 = vunpack.c.l.b16 %v7176
    %v7440 = vunpack.c.l.b16 %v7177
    %v7441 = vunpack.c.l.b16 %v7178
    %v7442 = vunpack.c.l.b16 %v7179
    %v7443 = vunpack.c.l.b16 %v7180
    %v7444 = vunpack.c.l.b16 %v7181
    %v7445 = vunpack.c.l.b16 %v7182
    %v7446 = vunpack.c.l.b16 %v7183
    %v7447 = vunpack.c.l.b16 %v7184
    %v7448 = vunpack.c.l.b16 %v7185
    %v7449 = vunpack.c.l.b16 %v7186
    %v7450 = vunpack.c.l.b16 %v7187
    %v7451 = vunpack.c.l.b16 %v7188
    %v7452 = vunpack.c.l.b16 %v7189
    %v7453 = vunpack.c.l.b16 %v7190
    %v7454 = vunpack.c.l.b16 %v7191
    %v7455 = vunpack.c.l.b16 %v7192
    %v7456 = vunpack.c.l.b16 %v7193
    %v7457 = vunpack.c.l.b16 %v7194
    %v7458 = vunpack.c.l.b16 %v7195
    %v7459 = vunpack.c.l.b16 %v7196
    %v7460 = vunpack.c.l.b16 %v7197
    %v7461 = vunpack.c.l.b16 %v7198
    %v7462 = vunpack.c.l.b16 %v7199
    %v7463 = vunpack.c.l.b16 %v7200
    %v7464 = vunpack.c.l.b16 %v7201
    %v7465 = vunpack.c.l.b16 %v7202
    %v7466 = vunpack.c.l.b16 %v7203
    %v7467 = vunpack.c.l.b16 %v7204
    %v7468 = vunpack.c.l.b16 %v7205
    %v7469 = vunpack.c.l.b16 %v7206
    %v7470 = vunpack.c.l.b16 %v7207
    %v7471 = vunpack.c.l.b16 %v7208
    %v7472 = vunpack.c.l.b16 %v7209
    %v7473 = vunpack.c.l.b16 %v7210
    %v7474 = vunpack.c.l.b16 %v7211
    %v7475 = vunpack.c.l.b16 %v7212
    %v7476 = vunpack.c.l.b16 %v7213
    %v7477 = vunpack.c.l.b16 %v7214
    %v7478 = vunpack.c.l.b16 %v7215
    %v7479 = vunpack.c.l.b16 %v7216
    %v7480 = vunpack.c.l.b16 %v7217
    %v7481 = vunpack.c.l.b16 %v7218
    %v7482 = vunpack.c.l.b16 %v7219
    %v7483 = vunpack.c.l.b16 %v7220
    %v7484 = vunpack.c.l.b16 %v7221
    %v7485 = vunpack.c.l.b16 %v7222
    %v7486 = vunpack.c.l.b16 %v7223
    %v7487 = vunpack.c.l.b16 %v7224
    %v7488 = vunpack.c.l.b16 %v7225
    %v7489 = vunpack.c.l.b16 %v7226
    %v7490 = vunpack.c.l.b16 %v7227
    %v7491 = vunpack.c.l.b16 %v7228
    %v7492 = vunpack.c.l.b16 %v7229
    %v7493 = vunpack.c.l.b16 %v7230
    %v7494 = vunpack.c.l.b16 %v7231
    %v7495 = vunpack.c.l.b16 %v7232
    %v7496 = vpack.c.b16 %v7369, %v7368
    %v7497 = vpack.c.b16 %v7371, %v7370
    %v7498 = vpack.c.b16 %v7373, %v7372
    %v7499 = vpack.c.b16 %v7375, %v7374
    %v7500 = vpack.c.b16 %v7377, %v7376
    %v7501 = vpack.c.b16 %v7379, %v7378
    %v7502 = vpack.c.b16 %v7381, %v7380
    %v7503 = vpack.c.b16 %v7383, %v7382
    %v7504 = vpack.c.b16 %v7385, %v7384
    %v7505 = vpack.c.b16 %v7387, %v7386
    %v7506 = vpack.c.b16 %v7389, %v7388
    %v7507 = vpack.c.b16 %v7391, %v7390
    %v7508 = vpack.c.b16 %v7393, %v7392
    %v7509 = vpack.c.b16 %v7395, %v7394
    %v7510 = vpack.c.b16 %v7397, %v7396
    %v7511 = vpack.c.b16 %v7399, %v7398
    %v7512 = vpack.c.b16 %v7401, %v7400
    %v7513 = vpack.c.b16 %v7403, %v7402
    %v7514 = vpack.c.b16 %v7405, %v7404
    %v7515 = vpack.c.b16 %v7407, %v7406
    %v7516 = vpack.c.b16 %v7409, %v7408
    %v7517 = vpack.c.b16 %v7411, %v7410
    %v7518 = vpack.c.b16 %v7413, %v7412
    %v7519 = vpack.c.b16 %v7415, %v7414
    %v7520 = vpack.c.b16 %v7417, %v7416
    %v7521 = vpack.c.b16 %v7419, %v7418
    %v7522 = vpack.c.b16 %v7421, %v7420
    %v7523 = vpack.c.b16 %v7423, %v7422
    %v7524 = vpack.c.b16 %v7425, %v7424
    %v7525 = vpack.c.b16 %v7427, %v7426
    %v7526 = vpack.c.b16 %v7429, %v7428
    %v7527 = vpack.c.b16 %v7431, %v7430
    %v7528 = vpack.c.b16 %v7433, %v7432
    %v7529 = vpack.c.b16 %v7435, %v7434
    %v7530 = vpack.c.b16 %v7437, %v7436
    %v7531 = vpack.c.b16 %v7439, %v7438
    %v7532 = vpack.c.b16 %v7441, %v7440
    %v7533 = vpack.c.b16 %v7443, %v7442
    %v7534 = vpack.c.b16 %v7445, %v7444
    %v7535 = vpack.c.b16 %v7447, %v7446
    %v7536 = vpack.c.b16 %v7449, %v7448
    %v7537 = vpack.c.b16 %v7451, %v7450
    %v7538 = vpack.c.b16 %v7453, %v7452
    %v7539 = vpack.c.b16 %v7455, %v7454
    %v7540 = vpack.c.b16 %v7457, %v7456
    %v7541 = vpack.c.b16 %v7459, %v7458
    %v7542 = vpack.c.b16 %v7461, %v7460
    %v7543 = vpack.c.b16 %v7463, %v7462
    %v7544 = vpack.c.b16 %v7465, %v7464
    %v7545 = vpack.c.b16 %v7467, %v7466
    %v7546 = vpack.c.b16 %v7469, %v7468
    %v7547 = vpack.c.b16 %v7471, %v7470
    %v7548 = vpack.c.b16 %v7473, %v7472
    %v7549 = vpack.c.b16 %v7475, %v7474
    %v7550 = vpack.c.b16 %v7477, %v7476
    %v7551 = vpack.c.b16 %v7479, %v7478
    %v7552 = vpack.c.b16 %v7481, %v7480
    %v7553 = vpack.c.b16 %v7483, %v7482
    %v7554 = vpack.c.b16 %v7485, %v7484
    %v7555 = vpack.c.b16 %v7487, %v7486
    %v7556 = vpack.c.b16 %v7489, %v7488
    %v7557 = vpack.c.b16 %v7491, %v7490
    %v7558 = vpack.c.b16 %v7493, %v7492
    %v7559 = vpack.c.b16 %v7495, %v7494
    %7624 = vmatprep.subr.bf16.mxu0 0
    %7625 = vmatpush1.bf16.msra.mxu0 %v7496
    %7626 = vmatprep.subr.bf16.mxu0 0
    %7627 = vmatpush1.bf16.msra.mxu0 %v7497
    %7628 = vmatprep.subr.bf16.mxu0 0
    %7629 = vmatpush1.bf16.msra.mxu0 %v7498
    %7630 = vmatprep.subr.bf16.mxu0 0
    %7631 = vmatpush1.bf16.msra.mxu0 %v7499
    %7632 = vmatprep.subr.bf16.mxu0 0
    %7633 = vmatpush1.bf16.msra.mxu0 %v7500
    %7634 = vmatprep.subr.bf16.mxu0 0
    %7635 = vmatpush1.bf16.msra.mxu0 %v7501
    %7636 = vmatprep.subr.bf16.mxu0 0
    %7637 = vmatpush1.bf16.msra.mxu0 %v7502
    %7638 = vmatprep.subr.bf16.mxu0 0
    %7639 = vmatpush1.bf16.msra.mxu0 %v7503
    %7640 = vmatprep.subr.bf16.mxu0 0
    %7641 = vmatpush1.bf16.msra.mxu0 %v7504
    %7642 = vmatprep.subr.bf16.mxu0 0
    %7643 = vmatpush1.bf16.msra.mxu0 %v7505
    %7644 = vmatprep.subr.bf16.mxu0 0
    %7645 = vmatpush1.bf16.msra.mxu0 %v7506
    %7646 = vmatprep.subr.bf16.mxu0 0
    %7647 = vmatpush1.bf16.msra.mxu0 %v7507
    %7648 = vmatprep.subr.bf16.mxu0 0
    %7649 = vmatpush1.bf16.msra.mxu0 %v7508
    %7650 = vmatprep.subr.bf16.mxu0 0
    %7651 = vmatpush1.bf16.msra.mxu0 %v7509
    %7652 = vmatprep.subr.bf16.mxu0 0
    %7653 = vmatpush1.bf16.msra.mxu0 %v7510
    %7654 = vmatprep.subr.bf16.mxu0 0
    %7655 = vmatpush1.bf16.msra.mxu0 %v7511
    %7656 = vmatprep.mubr.bf16.mxu0 %v7098
    %7657 = vmatmul.mubr.bf16.gmra.mrb[0].mxu0 %v7097
    %v7658 = vpop.f32.mrb[0].mxu0
    %v7659 = vadd.f32 %v7238, %v7658
    %v7660 = vpop.f32.mrb[0].mxu0
    %v7661 = vpop.f32.mrb[0].mxu0
    %v7662 = vpop.f32.mrb[0].mxu0
    %7663 = vdwg.mxu0
    %7664 = vmatprep.subr.bf16.mxu0 0
    %7665 = vmatpush1.bf16.msra.mxu0 %v7512
    %7666 = vmatprep.subr.bf16.mxu0 0
    %7667 = vmatpush1.bf16.msra.mxu0 %v7513
    %7668 = vmatprep.subr.bf16.mxu0 0
    %7669 = vmatpush1.bf16.msra.mxu0 %v7514
    %7670 = vmatprep.subr.bf16.mxu0 0
    %7671 = vmatpush1.bf16.msra.mxu0 %v7515
    %7672 = vmatprep.subr.bf16.mxu0 0
    %7673 = vmatpush1.bf16.msra.mxu0 %v7516
    %7674 = vmatprep.subr.bf16.mxu0 0
    %7675 = vmatpush1.bf16.msra.mxu0 %v7517
    %7676 = vmatprep.subr.bf16.mxu0 0
    %7677 = vmatpush1.bf16.msra.mxu0 %v7518
    %7678 = vmatprep.subr.bf16.mxu0 0
    %7679 = vmatpush1.bf16.msra.mxu0 %v7519
    %7680 = vmatprep.subr.bf16.mxu0 0
    %7681 = vmatpush1.bf16.msra.mxu0 %v7520
    %7682 = vmatprep.subr.bf16.mxu0 0
    %7683 = vmatpush1.bf16.msra.mxu0 %v7521
    %7684 = vmatprep.subr.bf16.mxu0 0
    %7685 = vmatpush1.bf16.msra.mxu0 %v7522
    %7686 = vmatprep.subr.bf16.mxu0 0
    %7687 = vmatpush1.bf16.msra.mxu0 %v7523
    %7688 = vmatprep.subr.bf16.mxu0 0
    %7689 = vmatpush1.bf16.msra.mxu0 %v7524
    %7690 = vmatprep.subr.bf16.mxu0 0
    %7691 = vmatpush1.bf16.msra.mxu0 %v7525
    %7692 = vmatprep.subr.bf16.mxu0 0
    %7693 = vmatpush1.bf16.msra.mxu0 %v7526
    %7694 = vmatprep.subr.bf16.mxu0 0
    %7695 = vmatpush1.bf16.msra.mxu0 %v7527
    %7696 = vmatprep.mubr.bf16.mxu0 %v7100
    %7697 = vmatmul.mubr.bf16.gmra.mrb[0].mxu0 %v7099
    %v7698 = vpop.f32.mrb[0].mxu0
    %v7699 = vadd.f32 %v7659, %v7698
    %v7700 = vpop.f32.mrb[0].mxu0
    %v7701 = vpop.f32.mrb[0].mxu0
    %v7702 = vpop.f32.mrb[0].mxu0
    %7703 = vdwg.mxu0
    %7704 = vmatprep.subr.bf16.mxu0 0
    %7705 = vmatpush1.bf16.msra.mxu0 %v7528
    %7706 = vmatprep.subr.bf16.mxu0 0
    %7707 = vmatpush1.bf16.msra.mxu0 %v7529
    %7708 = vmatprep.subr.bf16.mxu0 0
    %7709 = vmatpush1.bf16.msra.mxu0 %v7530
    %7710 = vmatprep.subr.bf16.mxu0 0
    %7711 = vmatpush1.bf16.msra.mxu0 %v7531
    %7712 = vmatprep.subr.bf16.mxu0 0
    %7713 = vmatpush1.bf16.msra.mxu0 %v7532
    %7714 = vmatprep.subr.bf16.mxu0 0
    %7715 = vmatpush1.bf16.msra.mxu0 %v7533
    %7716 = vmatprep.subr.bf16.mxu0 0
    %7717 = vmatpush1.bf16.msra.mxu0 %v7534
    %7718 = vmatprep.subr.bf16.mxu0 0
    %7719 = vmatpush1.bf16.msra.mxu0 %v7535
    %7720 = vmatprep.subr.bf16.mxu0 0
    %7721 = vmatpush1.bf16.msra.mxu0 %v7536
    %7722 = vmatprep.subr.bf16.mxu0 0
    %7723 = vmatpush1.bf16.msra.mxu0 %v7537
    %7724 = vmatprep.subr.bf16.mxu0 0
    %7725 = vmatpush1.bf16.msra.mxu0 %v7538
    %7726 = vmatprep.subr.bf16.mxu0 0
    %7727 = vmatpush1.bf16.msra.mxu0 %v7539
    %7728 = vmatprep.subr.bf16.mxu0 0
    %7729 = vmatpush1.bf16.msra.mxu0 %v7540
    %7730 = vmatprep.subr.bf16.mxu0 0
    %7731 = vmatpush1.bf16.msra.mxu0 %v7541
    %7732 = vmatprep.subr.bf16.mxu0 0
    %7733 = vmatpush1.bf16.msra.mxu0 %v7542
    %7734 = vmatprep.subr.bf16.mxu0 0
    %7735 = vmatpush1.bf16.msra.mxu0 %v7543
    %7736 = vmatprep.mubr.bf16.mxu0 %v7102
    %7737 = vmatmul.mubr.bf16.gmra.mrb[0].mxu0 %v7101
    %v7738 = vpop.f32.mrb[0].mxu0
    %v7739 = vadd.f32 %v7699, %v7738
    %v7740 = vpop.f32.mrb[0].mxu0
    %v7741 = vpop.f32.mrb[0].mxu0
    %v7742 = vpop.f32.mrb[0].mxu0
    %7743 = vdwg.mxu0
    %7744 = vmatprep.subr.bf16.mxu0 0
    %7745 = vmatpush1.bf16.msra.mxu0 %v7544
    %7746 = vmatprep.subr.bf16.mxu0 0
    %7747 = vmatpush1.bf16.msra.mxu0 %v7545
    %7748 = vmatprep.subr.bf16.mxu0 0
    %7749 = vmatpush1.bf16.msra.mxu0 %v7546
    %7750 = vmatprep.subr.bf16.mxu0 0
    %7751 = vmatpush1.bf16.msra.mxu0 %v7547
    %7752 = vmatprep.subr.bf16.mxu0 0
    %7753 = vmatpush1.bf16.msra.mxu0 %v7548
    %7754 = vmatprep.subr.bf16.mxu0 0
    %7755 = vmatpush1.bf16.msra.mxu0 %v7549
    %7756 = vmatprep.subr.bf16.mxu0 0
    %7757 = vmatpush1.bf16.msra.mxu0 %v7550
    %7758 = vmatprep.subr.bf16.mxu0 0
    %7759 = vmatpush1.bf16.msra.mxu0 %v7551
    %7760 = vmatprep.subr.bf16.mxu0 0
    %7761 = vmatpush1.bf16.msra.mxu0 %v7552
    %7762 = vmatprep.subr.bf16.mxu0 0
    %7763 = vmatpush1.bf16.msra.mxu0 %v7553
    %7764 = vmatprep.subr.bf16.mxu0 0
    %7765 = vmatpush1.bf16.msra.mxu0 %v7554
    %7766 = vmatprep.subr.bf16.mxu0 0
    %7767 = vmatpush1.bf16.msra.mxu0 %v7555
    %7768 = vmatprep.subr.bf16.mxu0 0
    %7769 = vmatpush1.bf16.msra.mxu0 %v7556
    %7770 = vmatprep.subr.bf16.mxu0 0
    %7771 = vmatpush1.bf16.msra.mxu0 %v7557
    %7772 = vmatprep.subr.bf16.mxu0 0
    %7773 = vmatpush1.bf16.msra.mxu0 %v7558
    %7774 = vmatprep.subr.bf16.mxu0 0
    %7775 = vmatpush1.bf16.msra.mxu0 %v7559
    %7776 = vmatprep.mubr.bf16.mxu0 %v7104
    %7777 = vmatmul.mubr.bf16.gmra.mrb[0].mxu0 %v7103
    %v7778 = vpop.f32.mrb[0].mxu0
    %v7779 = vadd.f32 %v7739, %v7778
    %v7780 = vpop.f32.mrb[0].mxu0
    %v7781 = vpop.f32.mrb[0].mxu0
    %v7782 = vpop.f32.mrb[0].mxu0
    %7783 = vdwg.mxu0
    %7784 = vst [vmem:[#allocation25] sm:$0xff] %v7779
    // Predicated region
    $region98: #{tpu_custom_call.1} parent=1 // pred_check
      _
    $region99: #{tpu_custom_call.1} parent=1 // pred_check_branch
      %7786 = sbr.rel (0) target = $region101
    $region100: #{tpu_custom_call.1} parent=1 // pred_region
      %s7788 = ssub.s32 256, 256
      %7789 = vsyncadd [#allocation4], %s7788
      %s7791 = sshll.u32 [#allocation22], 4
      %s7792 = int_to_ptr.vmem [resolvable:$true] %s7791
      %7794 = dma.vmem_to_hbm [thread:$0]  %s7792, 256, %s12, [#allocation4]
    $region101: #{tpu_custom_call.1} parent=1 // pred_fallthru
      _
    // Predicated region
    $region102: #{tpu_custom_call.1} parent=1 // pred_check
      _
    $region103: #{tpu_custom_call.1} parent=1 // pred_check_branch
      %7796 = sbr.rel (0) target = $region105
    $region104: #{tpu_custom_call.1} parent=1 // pred_region
      %s7798 = ssub.s32 128, 128
      %7799 = vsyncadd [#allocation24], %s7798
      %s7801 = sshll.u32 [#allocation23], 4
      %s7802 = int_to_ptr.vmem [resolvable:$true] %s7801
      %7804 = dma.vmem_to_hbm [thread:$0]  %s7802, 128, %s13, [#allocation24]
    $region105: #{tpu_custom_call.1} parent=1 // pred_fallthru
      _
    // Predicated region
    $region106: #{tpu_custom_call.1} parent=1 // pred_check
      _
    $region107: #{tpu_custom_call.1} parent=1 // pred_check_branch
      %7806 = sbr.rel (0) target = $region109
    $region108: #{tpu_custom_call.1} parent=1 // pred_region
      %s7808 = ssub.s32 128, 128
      %7809 = vsyncadd [#allocation24], %s7808
      %s7811 = sshll.u32 [#allocation25], 4
      %s7812 = int_to_ptr.vmem [resolvable:$true] %s7811
      %7814 = dma.vmem_to_hbm [thread:$0]  %s7812, 128, %s14, [#allocation24]
    $region109: #{tpu_custom_call.1} parent=1 // pred_fallthru
      _
    // Predicated region
    $region110: #{tpu_custom_call.1} parent=1 // pred_check
      _
    $region111: #{tpu_custom_call.1} parent=1 // pred_check_branch
      %7816 = sbr.rel (0) target = $region113
    $region112: #{tpu_custom_call.1} parent=1 // pred_region
      %7817 = dma.done [#allocation4], 256
    $region113: #{tpu_custom_call.1} parent=1 // pred_fallthru
      _
    // Predicated region
    $region114: #{tpu_custom_call.1} parent=1 // pred_check
      _
    $region115: #{tpu_custom_call.1} parent=1 // pred_check_branch
      %7819 = sbr.rel (0) target = $region117
    $region116: #{tpu_custom_call.1} parent=1 // pred_region
      %7820 = dma.done [#allocation24], 128
    $region117: #{tpu_custom_call.1} parent=1 // pred_fallthru
      _
    // Predicated region
    $region118: #{tpu_custom_call.1} parent=1 // pred_check
      _
    $region119: #{tpu_custom_call.1} parent=1 // pred_check_branch
      %7822 = sbr.rel (0) target = $region121
    $region120: #{tpu_custom_call.1} parent=1 // pred_region
      %7823 = dma.done [#allocation24], 128
    $region121: #{tpu_custom_call.1} parent=1 // pred_fallthru
      _
    %7824 = vsyncpa [#allocation3], 1
    %7825 = vsyncpa [#allocation6], 1
    %7826 = vsyncpa [#allocation9], 1
    %7827 = vsyncpa [#allocation12], 1
    %7828 = vsyncpa [#allocation15], 1
    %7829 = vsyncpa [#allocation18], 1
    %7830 = vsyncpa [#allocation21], 1
    %7831 = vsyncpa [#allocation4], 1
    %7832 = vsyncpa [#allocation24], 1

</llo_original>
